<compile_context>
chip_gen: v6e
topology: v6e:2x2x1
jax: 0.10.0
libtpu: 0.0.40
codegen_flags: <defaults>
</compile_context>

<pallas_src>
import functools

import numpy as np
import jax
import jax.numpy as jnp
from jax import lax
from jax.experimental import pallas as pl
from jax.experimental.pallas import tpu as pltpu


def _round_up(x, m):
    return ((x + m - 1) // m) * m


def _largest_divisor(n, cap):
    for d in range(min(n, cap), 0, -1):
        if n % d == 0:
            return d
    return 1


# -----------------------------------------------------------------------------
# Fused Pallas kernel: multi-layer LSTM over the merged batch + MLP head
# -----------------------------------------------------------------------------
def lstm_nli_kernel(x_ref, w_ih_ref, w_hh_ref, b_ref,
                    w1a_ref, w1b_ref, b1_ref, w2_ref, b2_ref,
                    out_ref, seq_ref, proj_ref,
                    *, len_a, len_b, num_layers):
    """Whole forward pass for one merged batch (premise rows | hypothesis rows).

    x_ref    : (T, BT, Hp)   bf16 embedded input, time-major, lane-padded
    w_ih_ref : (L, Hp, 4Hp)  bf16 input->gates weights (gate blocks 128-aligned)
    w_hh_ref : (L, Hp, 4Hp)  bf16 hidden->gates weights
    b_ref    : (L, 1, 4Hp)   f32  b_ih + b_hh
    w1a/w1b  : (Hp, Hp)      bf16 split int_layer weights (premise / hypothesis)
    b1       : (1, Hp)       f32
    w2       : (Hp, Cp)      bf16 out_layer weights
    b2       : (1, Cp)       f32
    out_ref  : (BT//2, Cp)   f32  lane-dense logits slab
    seq_ref  : (T, BT, Hp)   bf16 scratch, inter-layer h (only used for L >= 2)
    proj_ref : (T, BT, 4Hp)  bf16 scratch, hoisted x @ W_ih
    """
    T, BT, Hp = x_ref.shape
    G = 4 * Hp
    half = BT // 2

    # Static per-row length mask (premise rows run len_a steps, hypothesis len_b).
    # Both lengths are trace-time constants; masking is skipped when equal.
    needs_mask = (len_a != len_b)
    if needs_mask:
        row = lax.broadcasted_iota(jnp.int32, (BT, 1), 0)
        lens = jnp.where(row < half, jnp.int32(len_a), jnp.int32(len_b))

    U = _largest_divisor(T, 8)                         # time-loop unroll
    PC = _largest_divisor(T, max(1, 2048 // BT))       # proj chunk (timesteps)

    c = jnp.zeros((BT, Hp), jnp.float32)
    for layer in range(num_layers):                    # static layer loop
        # ---- hoisted input projection, chunked over time (caps peak VMEM) ----
        for tc in range(T // PC):
            t0 = tc * PC
            src = (x_ref[pl.ds(t0, PC)] if layer == 0
                   else seq_ref[pl.ds(t0, PC)])                    # (PC,BT,Hp) bf16
            p = jnp.dot(src.reshape(PC * BT, Hp), w_ih_ref[layer],
                        preferred_element_type=jnp.float32)        # f32 MXU acc
            proj_ref[pl.ds(t0, PC)] = p.astype(jnp.bfloat16).reshape(PC, BT, G)

        b_l = b_ref[layer]                              # (1, G) f32, hoisted
        write_seq = (layer + 1 < num_layers)

        h0 = jnp.zeros((BT, Hp), jnp.float32)
        c0 = jnp.zeros((BT, Hp), jnp.float32)

        def chunk(ci, carry):
            h, c = carry
            for j in range(U):                          # static unroll
                t = ci * U + j
                # serial path: only h @ W_hh stays inside the recurrence
                gates = (proj_ref[t].astype(jnp.float32) + b_l
                         + jnp.dot(h.astype(jnp.bfloat16), w_hh_ref[layer],
                                   preferred_element_type=jnp.float32))
                # 128-lane-aligned gate blocks (i, f, g, o); f32 EUP math (v5e-safe)
                i_g = jax.nn.sigmoid(gates[:, 0 * Hp:1 * Hp])
                f_g = jax.nn.sigmoid(gates[:, 1 * Hp:2 * Hp])
                g_g = jnp.tanh(gates[:, 2 * Hp:3 * Hp])
                o_g = jax.nn.sigmoid(gates[:, 3 * Hp:4 * Hp])
                c_new = f_g * c + i_g * g_g
                h_new = o_g * jnp.tanh(c_new)
                if needs_mask:
                    live = t < lens                     # (BT, 1) bool
                    h = jnp.where(live, h_new, h)
                    c = jnp.where(live, c_new, c)
                else:
                    h, c = h_new, c_new
                if write_seq:
                    seq_ref[t] = h.astype(jnp.bfloat16)  # next layer's input
            return h, c

        h, c = lax.fori_loop(0, T // U, chunk, (h0, c0))

    # ---- fused MLP head: (c_a | c_b) -> Linear(2H,H) -> ReLU -> Linear(H,C) ----
    ca = c[0:half, :].astype(jnp.bfloat16)
    cb = c[half:BT, :].astype(jnp.bfloat16)
    hid = (jnp.dot(ca, w1a_ref[...], preferred_element_type=jnp.float32)
           + jnp.dot(cb, w1b_ref[...], preferred_element_type=jnp.float32)
           + b1_ref[...])
    hid = jnp.maximum(hid, 0.0)
    out_ref[...] = (jnp.dot(hid.astype(jnp.bfloat16), w2_ref[...],
                            preferred_element_type=jnp.float32) + b2_ref[...])


# -----------------------------------------------------------------------------
# Wrapper around pallas_call
# -----------------------------------------------------------------------------
def run_nli_forward(x, w_ih, w_hh, b, w1a, w1b, b1, w2, b2, *, len_a, len_b):
    T, Btot, Hp = x.shape
    L = w_ih.shape[0]
    G = 4 * Hp
    Bp = Btot // 2
    Cp = w2.shape[1]

    kernel = functools.partial(lstm_nli_kernel, len_a=len_a, len_b=len_b,
                               num_layers=L)

    # explicit scoped-VMEM budget (inputs + scratch + output, with headroom),
    # capped at 64 MiB so the same setting is safe on v7x.
    bytes_total = (x.size * 2 + w_ih.size * 2 + w_hh.size * 2 + b.size * 4
                   + w1a.size * 2 + w1b.size * 2 + b1.size * 4
                   + w2.size * 2 + b2.size * 4
                   + T * Btot * Hp * 2 + T * Btot * G * 2
                   + Bp * Cp * 4)
    vmem_limit = int(min(64 << 20, max(32 << 20, 2 * bytes_total + (4 << 20))))

    # TODO(synk): for v7x megacore, split the merged batch into 2 grid tiles
    #   marked "parallel"; at demo sizes a single gridless call is optimal.
    return pl.pallas_call(
        kernel,
        out_shape=jax.ShapeDtypeStruct((Bp, Cp), jnp.float32),
        in_specs=[pl.BlockSpec(memory_space=pltpu.MemorySpace.VMEM)] * 9,
        out_specs=pl.BlockSpec(memory_space=pltpu.MemorySpace.VMEM),
        scratch_shapes=[
            pltpu.VMEM((T, Btot, Hp), jnp.bfloat16),    # inter-layer h sequence
            pltpu.VMEM((T, Btot, G), jnp.bfloat16),     # hoisted x @ W_ih (bf16)
        ],
        compiler_params=pltpu.CompilerParams(vmem_limit_bytes=vmem_limit),
    )(x, w_ih, w_hh, b, w1a, w1b, b1, w2, b2)


# -----------------------------------------------------------------------------
# Weight re-layout (plain-JAX glue)
# -----------------------------------------------------------------------------
def _pad_gate_weights(w, H, Hp):
    """(L, 4H, H) PyTorch layout -> (L, Hp, 4Hp) bf16, gate blocks 128-aligned."""
    L = w.shape[0]
    out = jnp.zeros((L, Hp, 4 * Hp), jnp.float32)
    for g in range(4):
        blk = jnp.transpose(w[:, g * H:(g + 1) * H, :], (0, 2, 1))  # (L,H_in,H_out)
        out = out.at[:, :H, g * Hp:g * Hp + H].set(blk)
    return out.astype(jnp.bfloat16)


def _pad_gate_bias(b, H, Hp):
    """(L, 4H) -> (L, 1, 4Hp) f32, gate blocks 128-aligned."""
    L = b.shape[0]
    out = jnp.zeros((L, 1, 4 * Hp), jnp.float32)
    for g in range(4):
        out = out.at[:, 0, g * Hp:g * Hp + H].set(b[:, g * H:(g + 1) * H])
    return out


# -----------------------------------------------------------------------------
# UniLSTM forward (Pallas version)
# -----------------------------------------------------------------------------
def fix_padding_np(batch_premises, batch_hypotheses):
    """Equivalent of fix_padding (reversed copies are unused by UniLSTM.forward)."""
    def pad(lists):
        t_max = max(len(l) for l in lists)
        arr = np.zeros((len(lists), t_max), dtype=np.int32)
        for i, l in enumerate(lists):
            arr[i, :len(l)] = np.asarray(l, dtype=np.int32)
        return jnp.asarray(arr)
    return pad(batch_premises), pad(batch_hypotheses)


def init_params(key, vocab_size, hidden_dim, num_layers, num_classes):
    H, L, C = hidden_dim, num_layers, num_classes
    k = 1.0 / np.sqrt(H)
    keys = jax.random.split(key, 9)
    emb = jax.random.normal(keys[0], (vocab_size, H), jnp.float32)
    emb = emb.at[0].set(0.0)                                    # padding_idx=0
    return dict(
        embedding=emb,
        w_ih=jax.random.uniform(keys[1], (L, 4 * H, H), jnp.float32, -k, k),
        w_hh=jax.random.uniform(keys[2], (L, 4 * H, H), jnp.float32, -k, k),
        b_ih=jax.random.uniform(keys[3], (L, 4 * H), jnp.float32, -k, k),
        b_hh=jax.random.uniform(keys[4], (L, 4 * H), jnp.float32, -k, k),
        w_int=jax.random.uniform(keys[5], (H, 2 * H), jnp.float32, -k, k),
        b_int=jax.random.uniform(keys[6], (H,), jnp.float32, -k, k),
        w_out=jax.random.uniform(keys[7], (C, H), jnp.float32, -k, k),
        b_out=jax.random.uniform(keys[8], (C,), jnp.float32, -k, k),
    )


def uni_lstm_forward_pallas(params, a_ids, b_ids, num_layers, hidden_dim):
    H = hidden_dim
    Hp = _round_up(H, 128)                        # lane-aligned hidden/gates
    C = params["w_out"].shape[0]
    Cp = _round_up(C, 128)                        # lane-dense logits slab
    B = a_ids.shape[0]
    Ta, Tb = a_ids.shape[1], b_ids.shape[1]
    T = max(Ta, Tb)
    # Each group padded to the f32 sublane (8); merged batch is then a multiple
    # of the bf16 sublane pack (16).  For production throughput, round the
    # per-group batch up to 128 (v5e) / 256 (v6e, v7x) rows so the per-step
    # h @ W_hh matmul fills the MXU.
    Bp = _round_up(B, 8)
    Btot = 2 * Bp                                 # premise rows | hypothesis rows

    # merged, padded token ids: rows [0,B) premise, [Bp,Bp+B) hypothesis
    ids = jnp.zeros((Btot, T), jnp.int32)
    ids = ids.at[:B, :Ta].set(a_ids.astype(jnp.int32))
    ids = ids.at[Bp:Bp + B, :Tb].set(b_ids.astype(jnp.int32))

    # TODO(synk): embedding gather (nn.Embedding) stays in plain JAX; a DMA
    # gather kernel is possible but not worth it at these sizes.
    x = jnp.take(params["embedding"], ids, axis=0)            # (Btot, T, H)
    x = jnp.transpose(x, (1, 0, 2))                           # (T, Btot, H)
    x = jnp.pad(x, ((0, 0), (0, 0), (0, Hp - H))).astype(jnp.bfloat16)

    # pre-transposed, gate-block-padded, bf16 LSTM weights
    w_ih_t = _pad_gate_weights(params["w_ih"], H, Hp)          # (L, Hp, 4Hp)
    w_hh_t = _pad_gate_weights(params["w_hh"], H, Hp)          # (L, Hp, 4Hp)
    b_sum = _pad_gate_bias(params["b_ih"] + params["b_hh"], H, Hp)

    # split + padded head weights (concat-free head), bf16 matmul operands
    w1 = params["w_int"].T                                      # (2H, H)
    w1a = jnp.zeros((Hp, Hp), jnp.float32).at[:H, :H].set(w1[:H]).astype(jnp.bfloat16)
    w1b = jnp.zeros((Hp, Hp), jnp.float32).at[:H, :H].set(w1[H:]).astype(jnp.bfloat16)
    b1 = jnp.zeros((1, Hp), jnp.float32).at[0, :H].set(params["b_int"])
    w2 = jnp.zeros((Hp, Cp), jnp.float32).at[:H, :C].set(params["w_out"].T).astype(jnp.bfloat16)
    b2 = jnp.zeros((1, Cp), jnp.float32).at[0, :C].set(params["b_out"])

    logits_pad = run_nli_forward(x, w_ih_t, w_hh_t, b_sum,
                                 w1a, w1b, b1, w2, b2,
                                 len_a=Ta, len_b=Tb)            # (Bp, Cp)
    return logits_pad[:B, :C]


# -----------------------------------------------------------------------------
# Pure-JAX reference (mirrors the PyTorch forward) for sanity checks.
# matmul_dtype=jnp.bfloat16 gives a precision-matched reference for the kernel.
# -----------------------------------------------------------------------------
def uni_lstm_forward_ref(params, a_ids, b_ids, num_layers, hidden_dim,
                         matmul_dtype=jnp.float32):
    H = hidden_dim
    emb = params["embedding"]
    md = matmul_dtype

    def mm(a, b):
        return jnp.dot(a.astype(md), b.astype(md),
                       preferred_element_type=jnp.float32)

    def lstm_last_cell(ids):
        x = jnp.take(emb, ids, axis=0)                          # (B, T, H)
        B = x.shape[0]
        inp = x
        c_last = None
        for l in range(num_layers):
            w_ih = params["w_ih"][l]
            w_hh = params["w_hh"][l]
            b = params["b_ih"][l] + params["b_hh"][l]

            def step(carry, x_t):
                h, c = carry
                g = mm(x_t, w_ih.T) + mm(h, w_hh.T) + b
                i = jax.nn.sigmoid(g[:, :H])
                f = jax.nn.sigmoid(g[:, H:2 * H])
                gg = jnp.tanh(g[:, 2 * H:3 * H])
                o = jax.nn.sigmoid(g[:, 3 * H:])
                c = f * c + i * gg
                h = o * jnp.tanh(c)
                return (h, c), h

            (h, c), hs = lax.scan(step,
                                  (jnp.zeros((B, H), jnp.float32),
                                   jnp.zeros((B, H), jnp.float32)),
                                  jnp.transpose(inp, (1, 0, 2)))
            inp = jnp.transpose(hs, (1, 0, 2))
            c_last = c
        return c_last

    ca = lstm_last_cell(a_ids)
    cb = lstm_last_cell(b_ids)
    ab = jnp.concatenate([ca, cb], axis=-1)
    h = jnp.maximum(mm(ab, params["w_int"].T) + params["b_int"], 0.0)
    return mm(h, params["w_out"].T) + params["b_out"]


# -----------------------------------------------------------------------------
if __name__ == "__main__":
    vocab_size, hidden_dim, num_layers, num_classes = 50, 32, 2, 3

    key = jax.random.PRNGKey(0)
    params = init_params(key, vocab_size, hidden_dim, num_layers, num_classes)

    # small ragged batches of token ids (batch=2), like the SNLI dataloader
    rng = np.random.RandomState(0)
    batch_premises = [list(rng.randint(1, vocab_size, size=5)),
                      list(rng.randint(1, vocab_size, size=8))]
    batch_hypotheses = [list(rng.randint(1, vocab_size, size=6)),
                        list(rng.randint(1, vocab_size, size=4))]
    a_pad, b_pad = fix_padding_np(batch_premises, batch_hypotheses)

    fwd = jax.jit(uni_lstm_forward_pallas, static_argnums=(3, 4))
    out = jax.block_until_ready(fwd(params, a_pad, b_pad, num_layers, hidden_dim))

    # precision-matched reference (bf16 matmul operands, f32 accumulation)
    ref_bf16 = jax.block_until_ready(
        uni_lstm_forward_ref(params, a_pad, b_pad, num_layers, hidden_dim,
                             matmul_dtype=jnp.bfloat16))
    # full-f32 reference (original module math) as a loose sanity check
    ref_f32 = jax.block_until_ready(
        uni_lstm_forward_ref(params, a_pad, b_pad, num_layers, hidden_dim))

    np.testing.assert_allclose(np.asarray(out), np.asarray(ref_bf16),
                               rtol=5e-2, atol=5e-2)
    np.testing.assert_allclose(np.asarray(out), np.asarray(ref_f32),
                               rtol=2e-1, atol=2e-1)
    print("KERNEL_OK")
</pallas_src>

<mosaic_0001>
module attributes {stable_mosaic.version = 11 : i64} {
  func.func @lstm_nli_kernel(%arg0: memref<8x16x128xbf16, #tpu.memory_space<vmem>>, %arg1: memref<2x128x512xbf16, #tpu.memory_space<vmem>>, %arg2: memref<2x128x512xbf16, #tpu.memory_space<vmem>>, %arg3: memref<2x1x512xf32, #tpu.memory_space<vmem>>, %arg4: memref<128x128xbf16, #tpu.memory_space<vmem>>, %arg5: memref<128x128xbf16, #tpu.memory_space<vmem>>, %arg6: memref<1x128xf32, #tpu.memory_space<vmem>>, %arg7: memref<128x128xbf16, #tpu.memory_space<vmem>>, %arg8: memref<1x128xf32, #tpu.memory_space<vmem>>, %arg9: memref<8x128xf32, #tpu.memory_space<vmem>>, %arg10: memref<8x16x128xbf16, #tpu.memory_space<vmem>>, %arg11: memref<8x16x512xbf16, #tpu.memory_space<vmem>>) attributes {dimension_semantics = [], scalar_prefetch = 0 : i64, scratch_operands = 2 : i64, tpu.core_type = #tpu.core_type<tc>} {
    %0 = tpu.iota {dimensions = array<i32: 0>} : vector<16x1xi32>
    %c8_i32 = arith.constant 8 : i32
    %1 = vector.broadcast %c8_i32 : i32 to vector<16x1xi32>
    %2 = arith.cmpi slt, %0, %1 : vector<16x1xi32>
    %c8_i32_0 = arith.constant 8 : i32
    %c6_i32 = arith.constant 6 : i32
    %3 = vector.broadcast %c8_i32_0 : i32 to vector<16x1xi32>
    %4 = vector.broadcast %c6_i32 : i32 to vector<16x1xi32>
    %5 = arith.select %2, %3, %4 : vector<16x1xi1>, vector<16x1xi32>
    %c0 = arith.constant 0 : index
    %c0_1 = arith.constant 0 : index
    %c0_2 = arith.constant 0 : index
    %6 = vector.load %arg0[%c0, %c0_1, %c0_2] : memref<8x16x128xbf16, #tpu.memory_space<vmem>>, vector<8x16x128xbf16>
    %7 = vector.shape_cast %6 : vector<8x16x128xbf16> to vector<128x128xbf16>
    %c0_3 = arith.constant 0 : index
    %c0_4 = arith.constant 0 : index
    %c0_5 = arith.constant 0 : index
    %8 = vector.load %arg1[%c0_3, %c0_4, %c0_5] : memref<2x128x512xbf16, #tpu.memory_space<vmem>>, vector<1x128x512xbf16>
    %9 = vector.shape_cast %8 : vector<1x128x512xbf16> to vector<128x512xbf16>
    %cst = arith.constant dense<0.000000e+00> : vector<128x512xf32>
    %10 = tpu.matmul %7, %9, %cst {dimension_numbers = #tpu.dot_dimension_numbers<[1], [0], [0], [1], [0, 0, 1, 1], [], []>} : vector<128x128xbf16>, vector<128x512xbf16>, vector<128x512xf32> -> vector<128x512xf32>
    %11 = arith.truncf %10 : vector<128x512xf32> to vector<128x512xbf16>
    %12 = vector.shape_cast %11 : vector<128x512xbf16> to vector<8x16x512xbf16>
    %c0_6 = arith.constant 0 : index
    %c0_7 = arith.constant 0 : index
    %c0_8 = arith.constant 0 : index
    %13 = vector.load %arg11[%c0_6, %c0_7, %c0_8] : memref<8x16x512xbf16, #tpu.memory_space<vmem>>, vector<8x16x512xbf16>
    tpu.vector_store %arg11[%c0_6, %c0_7, %c0_8], %12 {strides = array<i32>} : memref<8x16x512xbf16, #tpu.memory_space<vmem>>, vector<8x16x512xbf16>,
    %c0_9 = arith.constant 0 : index
    %c0_10 = arith.constant 0 : index
    %c0_11 = arith.constant 0 : index
    %14 = vector.load %arg3[%c0_9, %c0_10, %c0_11] : memref<2x1x512xf32, #tpu.memory_space<vmem>>, vector<1x1x512xf32>
    %15 = vector.shape_cast %14 : vector<1x1x512xf32> to vector<1x512xf32>
    %cst_12 = arith.constant 0.000000e+00 : f32
    %16 = vector.broadcast %cst_12 : f32 to vector<16x128xf32>
    %cst_13 = arith.constant 0.000000e+00 : f32
    %17 = vector.broadcast %cst_13 : f32 to vector<16x128xf32>
    %c0_i32 = arith.constant 0 : i32
    %c8_i32_14 = arith.constant 8 : i32
    %18 = arith.muli %c0_i32, %c8_i32_14 : i32
    %c0_i32_15 = arith.constant 0 : i32
    %19 = arith.addi %18, %c0_i32_15 : i32
    %20 = arith.index_cast %19 : i32 to index
    %c0_16 = arith.constant 0 : index
    %c0_17 = arith.constant 0 : index
    %21 = vector.load %arg11[%20, %c0_16, %c0_17] : memref<8x16x512xbf16, #tpu.memory_space<vmem>>, vector<1x16x512xbf16>
    %22 = vector.shape_cast %21 : vector<1x16x512xbf16> to vector<16x512xbf16>
    %23 = arith.extf %22 : vector<16x512xbf16> to vector<16x512xf32>
    %24 = vector.broadcast %15 : vector<1x512xf32> to vector<16x512xf32>
    %25 = arith.addf %23, %24 : vector<16x512xf32>
    %26 = arith.truncf %16 : vector<16x128xf32> to vector<16x128xbf16>
    %c0_18 = arith.constant 0 : index
    %c0_19 = arith.constant 0 : index
    %c0_20 = arith.constant 0 : index
    %27 = vector.load %arg2[%c0_18, %c0_19, %c0_20] : memref<2x128x512xbf16, #tpu.memory_space<vmem>>, vector<1x128x512xbf16>
    %28 = vector.shape_cast %27 : vector<1x128x512xbf16> to vector<128x512xbf16>
    %cst_21 = arith.constant dense<0.000000e+00> : vector<16x512xf32>
    %29 = tpu.matmul %26, %28, %cst_21 {dimension_numbers = #tpu.dot_dimension_numbers<[1], [0], [0], [1], [0, 0, 1, 1], [], []>} : vector<16x128xbf16>, vector<128x512xbf16>, vector<16x512xf32> -> vector<16x512xf32>
    %30 = arith.addf %25, %29 : vector<16x512xf32>
    %31 = vector.extract_strided_slice %30 {offsets = [0, 0], sizes = [16, 128], strides = [1, 1]} : vector<16x512xf32> to vector<16x128xf32>
    %32 = arith.negf %31 : vector<16x128xf32>
    %33 = math.exp %32 : vector<16x128xf32>
    %cst_22 = arith.constant 1.000000e+00 : f32
    %34 = vector.broadcast %cst_22 : f32 to vector<16x128xf32>
    %35 = arith.addf %34, %33 : vector<16x128xf32>
    %36 = arith.divf %34, %35 : vector<16x128xf32>
    %37 = vector.extract_strided_slice %30 {offsets = [0, 128], sizes = [16, 128], strides = [1, 1]} : vector<16x512xf32> to vector<16x128xf32>
    %38 = arith.negf %37 : vector<16x128xf32>
    %39 = math.exp %38 : vector<16x128xf32>
    %cst_23 = arith.constant 1.000000e+00 : f32
    %40 = vector.broadcast %cst_23 : f32 to vector<16x128xf32>
    %41 = arith.addf %40, %39 : vector<16x128xf32>
    %42 = arith.divf %40, %41 : vector<16x128xf32>
    %43 = vector.extract_strided_slice %30 {offsets = [0, 256], sizes = [16, 128], strides = [1, 1]} : vector<16x512xf32> to vector<16x128xf32>
    %44 = math.tanh %43 : vector<16x128xf32>
    %45 = vector.extract_strided_slice %30 {offsets = [0, 384], sizes = [16, 128], strides = [1, 1]} : vector<16x512xf32> to vector<16x128xf32>
    %46 = arith.negf %45 : vector<16x128xf32>
    %47 = math.exp %46 : vector<16x128xf32>
    %cst_24 = arith.constant 1.000000e+00 : f32
    %48 = vector.broadcast %cst_24 : f32 to vector<16x128xf32>
    %49 = arith.addf %48, %47 : vector<16x128xf32>
    %50 = arith.divf %48, %49 : vector<16x128xf32>
    %51 = arith.mulf %42, %17 : vector<16x128xf32>
    %52 = arith.mulf %36, %44 : vector<16x128xf32>
    %53 = arith.addf %51, %52 : vector<16x128xf32>
    %54 = math.tanh %53 : vector<16x128xf32>
    %55 = arith.mulf %50, %54 : vector<16x128xf32>
    %56 = vector.broadcast %19 : i32 to vector<16x1xi32>
    %57 = arith.cmpi slt, %56, %5 : vector<16x1xi32>
    %58 = vector.shape_cast %57 : vector<16x1xi1> to vector<16x1xi1>
    %59 = vector.broadcast %58 : vector<16x1xi1> to vector<16x128xi1>
    %60 = arith.select %59, %55, %16 : vector<16x128xi1>, vector<16x128xf32>
    %61 = vector.shape_cast %57 : vector<16x1xi1> to vector<16x1xi1>
    %62 = vector.broadcast %61 : vector<16x1xi1> to vector<16x128xi1>
    %63 = arith.select %62, %53, %17 : vector<16x128xi1>, vector<16x128xf32>
    %64 = arith.truncf %60 : vector<16x128xf32> to vector<16x128xbf16>
    %65 = arith.index_cast %19 : i32 to index
    %c0_25 = arith.constant 0 : index
    %c0_26 = arith.constant 0 : index
    %66 = vector.load %arg10[%65, %c0_25, %c0_26] : memref<8x16x128xbf16, #tpu.memory_space<vmem>>, vector<1x16x128xbf16>
    %67 = vector.shape_cast %66 : vector<1x16x128xbf16> to vector<16x128xbf16>
    %68 = vector.shape_cast %64 : vector<16x128xbf16> to vector<1x16x128xbf16>
    tpu.vector_store %arg10[%65, %c0_25, %c0_26], %68 {strides = array<i32>} : memref<8x16x128xbf16, #tpu.memory_space<vmem>>, vector<1x16x128xbf16>,
    %c8_i32_27 = arith.constant 8 : i32
    %69 = arith.muli %c0_i32, %c8_i32_27 : i32
    %c1_i32 = arith.constant 1 : i32
    %70 = arith.addi %69, %c1_i32 : i32
    %71 = arith.index_cast %70 : i32 to index
    %c0_28 = arith.constant 0 : index
    %c0_29 = arith.constant 0 : index
    %72 = vector.load %arg11[%71, %c0_28, %c0_29] : memref<8x16x512xbf16, #tpu.memory_space<vmem>>, vector<1x16x512xbf16>
    %73 = vector.shape_cast %72 : vector<1x16x512xbf16> to vector<16x512xbf16>
    %74 = arith.extf %73 : vector<16x512xbf16> to vector<16x512xf32>
    %75 = vector.broadcast %15 : vector<1x512xf32> to vector<16x512xf32>
    %76 = arith.addf %74, %75 : vector<16x512xf32>
    %77 = arith.truncf %60 : vector<16x128xf32> to vector<16x128xbf16>
    %c0_30 = arith.constant 0 : index
    %c0_31 = arith.constant 0 : index
    %c0_32 = arith.constant 0 : index
    %78 = vector.load %arg2[%c0_30, %c0_31, %c0_32] : memref<2x128x512xbf16, #tpu.memory_space<vmem>>, vector<1x128x512xbf16>
    %79 = vector.shape_cast %78 : vector<1x128x512xbf16> to vector<128x512xbf16>
    %cst_33 = arith.constant dense<0.000000e+00> : vector<16x512xf32>
    %80 = tpu.matmul %77, %79, %cst_33 {dimension_numbers = #tpu.dot_dimension_numbers<[1], [0], [0], [1], [0, 0, 1, 1], [], []>} : vector<16x128xbf16>, vector<128x512xbf16>, vector<16x512xf32> -> vector<16x512xf32>
    %81 = arith.addf %76, %80 : vector<16x512xf32>
    %82 = vector.extract_strided_slice %81 {offsets = [0, 0], sizes = [16, 128], strides = [1, 1]} : vector<16x512xf32> to vector<16x128xf32>
    %83 = arith.negf %82 : vector<16x128xf32>
    %84 = math.exp %83 : vector<16x128xf32>
    %cst_34 = arith.constant 1.000000e+00 : f32
    %85 = vector.broadcast %cst_34 : f32 to vector<16x128xf32>
    %86 = arith.addf %85, %84 : vector<16x128xf32>
    %87 = arith.divf %85, %86 : vector<16x128xf32>
    %88 = vector.extract_strided_slice %81 {offsets = [0, 128], sizes = [16, 128], strides = [1, 1]} : vector<16x512xf32> to vector<16x128xf32>
    %89 = arith.negf %88 : vector<16x128xf32>
    %90 = math.exp %89 : vector<16x128xf32>
    %cst_35 = arith.constant 1.000000e+00 : f32
    %91 = vector.broadcast %cst_35 : f32 to vector<16x128xf32>
    %92 = arith.addf %91, %90 : vector<16x128xf32>
    %93 = arith.divf %91, %92 : vector<16x128xf32>
    %94 = vector.extract_strided_slice %81 {offsets = [0, 256], sizes = [16, 128], strides = [1, 1]} : vector<16x512xf32> to vector<16x128xf32>
    %95 = math.tanh %94 : vector<16x128xf32>
    %96 = vector.extract_strided_slice %81 {offsets = [0, 384], sizes = [16, 128], strides = [1, 1]} : vector<16x512xf32> to vector<16x128xf32>
    %97 = arith.negf %96 : vector<16x128xf32>
    %98 = math.exp %97 : vector<16x128xf32>
    %cst_36 = arith.constant 1.000000e+00 : f32
    %99 = vector.broadcast %cst_36 : f32 to vector<16x128xf32>
    %100 = arith.addf %99, %98 : vector<16x128xf32>
    %101 = arith.divf %99, %100 : vector<16x128xf32>
    %102 = arith.mulf %93, %63 : vector<16x128xf32>
    %103 = arith.mulf %87, %95 : vector<16x128xf32>
    %104 = arith.addf %102, %103 : vector<16x128xf32>
    %105 = math.tanh %104 : vector<16x128xf32>
    %106 = arith.mulf %101, %105 : vector<16x128xf32>
    %107 = vector.broadcast %70 : i32 to vector<16x1xi32>
    %108 = arith.cmpi slt, %107, %5 : vector<16x1xi32>
    %109 = vector.shape_cast %108 : vector<16x1xi1> to vector<16x1xi1>
    %110 = vector.broadcast %109 : vector<16x1xi1> to vector<16x128xi1>
    %111 = arith.select %110, %106, %60 : vector<16x128xi1>, vector<16x128xf32>
    %112 = vector.shape_cast %108 : vector<16x1xi1> to vector<16x1xi1>
    %113 = vector.broadcast %112 : vector<16x1xi1> to vector<16x128xi1>
    %114 = arith.select %113, %104, %63 : vector<16x128xi1>, vector<16x128xf32>
    %115 = arith.truncf %111 : vector<16x128xf32> to vector<16x128xbf16>
    %116 = arith.index_cast %70 : i32 to index
    %c0_37 = arith.constant 0 : index
    %c0_38 = arith.constant 0 : index
    %117 = vector.load %arg10[%116, %c0_37, %c0_38] : memref<8x16x128xbf16, #tpu.memory_space<vmem>>, vector<1x16x128xbf16>
    %118 = vector.shape_cast %117 : vector<1x16x128xbf16> to vector<16x128xbf16>
    %119 = vector.shape_cast %115 : vector<16x128xbf16> to vector<1x16x128xbf16>
    tpu.vector_store %arg10[%116, %c0_37, %c0_38], %119 {strides = array<i32>} : memref<8x16x128xbf16, #tpu.memory_space<vmem>>, vector<1x16x128xbf16>,
    %c8_i32_39 = arith.constant 8 : i32
    %120 = arith.muli %c0_i32, %c8_i32_39 : i32
    %c2_i32 = arith.constant 2 : i32
    %121 = arith.addi %120, %c2_i32 : i32
    %122 = arith.index_cast %121 : i32 to index
    %c0_40 = arith.constant 0 : index
    %c0_41 = arith.constant 0 : index
    %123 = vector.load %arg11[%122, %c0_40, %c0_41] : memref<8x16x512xbf16, #tpu.memory_space<vmem>>, vector<1x16x512xbf16>
    %124 = vector.shape_cast %123 : vector<1x16x512xbf16> to vector<16x512xbf16>
    %125 = arith.extf %124 : vector<16x512xbf16> to vector<16x512xf32>
    %126 = vector.broadcast %15 : vector<1x512xf32> to vector<16x512xf32>
    %127 = arith.addf %125, %126 : vector<16x512xf32>
    %128 = arith.truncf %111 : vector<16x128xf32> to vector<16x128xbf16>
    %c0_42 = arith.constant 0 : index
    %c0_43 = arith.constant 0 : index
    %c0_44 = arith.constant 0 : index
    %129 = vector.load %arg2[%c0_42, %c0_43, %c0_44] : memref<2x128x512xbf16, #tpu.memory_space<vmem>>, vector<1x128x512xbf16>
    %130 = vector.shape_cast %129 : vector<1x128x512xbf16> to vector<128x512xbf16>
    %cst_45 = arith.constant dense<0.000000e+00> : vector<16x512xf32>
    %131 = tpu.matmul %128, %130, %cst_45 {dimension_numbers = #tpu.dot_dimension_numbers<[1], [0], [0], [1], [0, 0, 1, 1], [], []>} : vector<16x128xbf16>, vector<128x512xbf16>, vector<16x512xf32> -> vector<16x512xf32>
    %132 = arith.addf %127, %131 : vector<16x512xf32>
    %133 = vector.extract_strided_slice %132 {offsets = [0, 0], sizes = [16, 128], strides = [1, 1]} : vector<16x512xf32> to vector<16x128xf32>
    %134 = arith.negf %133 : vector<16x128xf32>
    %135 = math.exp %134 : vector<16x128xf32>
    %cst_46 = arith.constant 1.000000e+00 : f32
    %136 = vector.broadcast %cst_46 : f32 to vector<16x128xf32>
    %137 = arith.addf %136, %135 : vector<16x128xf32>
    %138 = arith.divf %136, %137 : vector<16x128xf32>
    %139 = vector.extract_strided_slice %132 {offsets = [0, 128], sizes = [16, 128], strides = [1, 1]} : vector<16x512xf32> to vector<16x128xf32>
    %140 = arith.negf %139 : vector<16x128xf32>
    %141 = math.exp %140 : vector<16x128xf32>
    %cst_47 = arith.constant 1.000000e+00 : f32
    %142 = vector.broadcast %cst_47 : f32 to vector<16x128xf32>
    %143 = arith.addf %142, %141 : vector<16x128xf32>
    %144 = arith.divf %142, %143 : vector<16x128xf32>
    %145 = vector.extract_strided_slice %132 {offsets = [0, 256], sizes = [16, 128], strides = [1, 1]} : vector<16x512xf32> to vector<16x128xf32>
    %146 = math.tanh %145 : vector<16x128xf32>
    %147 = vector.extract_strided_slice %132 {offsets = [0, 384], sizes = [16, 128], strides = [1, 1]} : vector<16x512xf32> to vector<16x128xf32>
    %148 = arith.negf %147 : vector<16x128xf32>
    %149 = math.exp %148 : vector<16x128xf32>
    %cst_48 = arith.constant 1.000000e+00 : f32
    %150 = vector.broadcast %cst_48 : f32 to vector<16x128xf32>
    %151 = arith.addf %150, %149 : vector<16x128xf32>
    %152 = arith.divf %150, %151 : vector<16x128xf32>
    %153 = arith.mulf %144, %114 : vector<16x128xf32>
    %154 = arith.mulf %138, %146 : vector<16x128xf32>
    %155 = arith.addf %153, %154 : vector<16x128xf32>
    %156 = math.tanh %155 : vector<16x128xf32>
    %157 = arith.mulf %152, %156 : vector<16x128xf32>
    %158 = vector.broadcast %121 : i32 to vector<16x1xi32>
    %159 = arith.cmpi slt, %158, %5 : vector<16x1xi32>
    %160 = vector.shape_cast %159 : vector<16x1xi1> to vector<16x1xi1>
    %161 = vector.broadcast %160 : vector<16x1xi1> to vector<16x128xi1>
    %162 = arith.select %161, %157, %111 : vector<16x128xi1>, vector<16x128xf32>
    %163 = vector.shape_cast %159 : vector<16x1xi1> to vector<16x1xi1>
    %164 = vector.broadcast %163 : vector<16x1xi1> to vector<16x128xi1>
    %165 = arith.select %164, %155, %114 : vector<16x128xi1>, vector<16x128xf32>
    %166 = arith.truncf %162 : vector<16x128xf32> to vector<16x128xbf16>
    %167 = arith.index_cast %121 : i32 to index
    %c0_49 = arith.constant 0 : index
    %c0_50 = arith.constant 0 : index
    %168 = vector.load %arg10[%167, %c0_49, %c0_50] : memref<8x16x128xbf16, #tpu.memory_space<vmem>>, vector<1x16x128xbf16>
    %169 = vector.shape_cast %168 : vector<1x16x128xbf16> to vector<16x128xbf16>
    %170 = vector.shape_cast %166 : vector<16x128xbf16> to vector<1x16x128xbf16>
    tpu.vector_store %arg10[%167, %c0_49, %c0_50], %170 {strides = array<i32>} : memref<8x16x128xbf16, #tpu.memory_space<vmem>>, vector<1x16x128xbf16>,
    %c8_i32_51 = arith.constant 8 : i32
    %171 = arith.muli %c0_i32, %c8_i32_51 : i32
    %c3_i32 = arith.constant 3 : i32
    %172 = arith.addi %171, %c3_i32 : i32
    %173 = arith.index_cast %172 : i32 to index
    %c0_52 = arith.constant 0 : index
    %c0_53 = arith.constant 0 : index
    %174 = vector.load %arg11[%173, %c0_52, %c0_53] : memref<8x16x512xbf16, #tpu.memory_space<vmem>>, vector<1x16x512xbf16>
    %175 = vector.shape_cast %174 : vector<1x16x512xbf16> to vector<16x512xbf16>
    %176 = arith.extf %175 : vector<16x512xbf16> to vector<16x512xf32>
    %177 = vector.broadcast %15 : vector<1x512xf32> to vector<16x512xf32>
    %178 = arith.addf %176, %177 : vector<16x512xf32>
    %179 = arith.truncf %162 : vector<16x128xf32> to vector<16x128xbf16>
    %c0_54 = arith.constant 0 : index
    %c0_55 = arith.constant 0 : index
    %c0_56 = arith.constant 0 : index
    %180 = vector.load %arg2[%c0_54, %c0_55, %c0_56] : memref<2x128x512xbf16, #tpu.memory_space<vmem>>, vector<1x128x512xbf16>
    %181 = vector.shape_cast %180 : vector<1x128x512xbf16> to vector<128x512xbf16>
    %cst_57 = arith.constant dense<0.000000e+00> : vector<16x512xf32>
    %182 = tpu.matmul %179, %181, %cst_57 {dimension_numbers = #tpu.dot_dimension_numbers<[1], [0], [0], [1], [0, 0, 1, 1], [], []>} : vector<16x128xbf16>, vector<128x512xbf16>, vector<16x512xf32> -> vector<16x512xf32>
    %183 = arith.addf %178, %182 : vector<16x512xf32>
    %184 = vector.extract_strided_slice %183 {offsets = [0, 0], sizes = [16, 128], strides = [1, 1]} : vector<16x512xf32> to vector<16x128xf32>
    %185 = arith.negf %184 : vector<16x128xf32>
    %186 = math.exp %185 : vector<16x128xf32>
    %cst_58 = arith.constant 1.000000e+00 : f32
    %187 = vector.broadcast %cst_58 : f32 to vector<16x128xf32>
    %188 = arith.addf %187, %186 : vector<16x128xf32>
    %189 = arith.divf %187, %188 : vector<16x128xf32>
    %190 = vector.extract_strided_slice %183 {offsets = [0, 128], sizes = [16, 128], strides = [1, 1]} : vector<16x512xf32> to vector<16x128xf32>
    %191 = arith.negf %190 : vector<16x128xf32>
    %192 = math.exp %191 : vector<16x128xf32>
    %cst_59 = arith.constant 1.000000e+00 : f32
    %193 = vector.broadcast %cst_59 : f32 to vector<16x128xf32>
    %194 = arith.addf %193, %192 : vector<16x128xf32>
    %195 = arith.divf %193, %194 : vector<16x128xf32>
    %196 = vector.extract_strided_slice %183 {offsets = [0, 256], sizes = [16, 128], strides = [1, 1]} : vector<16x512xf32> to vector<16x128xf32>
    %197 = math.tanh %196 : vector<16x128xf32>
    %198 = vector.extract_strided_slice %183 {offsets = [0, 384], sizes = [16, 128], strides = [1, 1]} : vector<16x512xf32> to vector<16x128xf32>
    %199 = arith.negf %198 : vector<16x128xf32>
    %200 = math.exp %199 : vector<16x128xf32>
    %cst_60 = arith.constant 1.000000e+00 : f32
    %201 = vector.broadcast %cst_60 : f32 to vector<16x128xf32>
    %202 = arith.addf %201, %200 : vector<16x128xf32>
    %203 = arith.divf %201, %202 : vector<16x128xf32>
    %204 = arith.mulf %195, %165 : vector<16x128xf32>
    %205 = arith.mulf %189, %197 : vector<16x128xf32>
    %206 = arith.addf %204, %205 : vector<16x128xf32>
    %207 = math.tanh %206 : vector<16x128xf32>
    %208 = arith.mulf %203, %207 : vector<16x128xf32>
    %209 = vector.broadcast %172 : i32 to vector<16x1xi32>
    %210 = arith.cmpi slt, %209, %5 : vector<16x1xi32>
    %211 = vector.shape_cast %210 : vector<16x1xi1> to vector<16x1xi1>
    %212 = vector.broadcast %211 : vector<16x1xi1> to vector<16x128xi1>
    %213 = arith.select %212, %208, %162 : vector<16x128xi1>, vector<16x128xf32>
    %214 = vector.shape_cast %210 : vector<16x1xi1> to vector<16x1xi1>
    %215 = vector.broadcast %214 : vector<16x1xi1> to vector<16x128xi1>
    %216 = arith.select %215, %206, %165 : vector<16x128xi1>, vector<16x128xf32>
    %217 = arith.truncf %213 : vector<16x128xf32> to vector<16x128xbf16>
    %218 = arith.index_cast %172 : i32 to index
    %c0_61 = arith.constant 0 : index
    %c0_62 = arith.constant 0 : index
    %219 = vector.load %arg10[%218, %c0_61, %c0_62] : memref<8x16x128xbf16, #tpu.memory_space<vmem>>, vector<1x16x128xbf16>
    %220 = vector.shape_cast %219 : vector<1x16x128xbf16> to vector<16x128xbf16>
    %221 = vector.shape_cast %217 : vector<16x128xbf16> to vector<1x16x128xbf16>
    tpu.vector_store %arg10[%218, %c0_61, %c0_62], %221 {strides = array<i32>} : memref<8x16x128xbf16, #tpu.memory_space<vmem>>, vector<1x16x128xbf16>,
    %c8_i32_63 = arith.constant 8 : i32
    %222 = arith.muli %c0_i32, %c8_i32_63 : i32
    %c4_i32 = arith.constant 4 : i32
    %223 = arith.addi %222, %c4_i32 : i32
    %224 = arith.index_cast %223 : i32 to index
    %c0_64 = arith.constant 0 : index
    %c0_65 = arith.constant 0 : index
    %225 = vector.load %arg11[%224, %c0_64, %c0_65] : memref<8x16x512xbf16, #tpu.memory_space<vmem>>, vector<1x16x512xbf16>
    %226 = vector.shape_cast %225 : vector<1x16x512xbf16> to vector<16x512xbf16>
    %227 = arith.extf %226 : vector<16x512xbf16> to vector<16x512xf32>
    %228 = vector.broadcast %15 : vector<1x512xf32> to vector<16x512xf32>
    %229 = arith.addf %227, %228 : vector<16x512xf32>
    %230 = arith.truncf %213 : vector<16x128xf32> to vector<16x128xbf16>
    %c0_66 = arith.constant 0 : index
    %c0_67 = arith.constant 0 : index
    %c0_68 = arith.constant 0 : index
    %231 = vector.load %arg2[%c0_66, %c0_67, %c0_68] : memref<2x128x512xbf16, #tpu.memory_space<vmem>>, vector<1x128x512xbf16>
    %232 = vector.shape_cast %231 : vector<1x128x512xbf16> to vector<128x512xbf16>
    %cst_69 = arith.constant dense<0.000000e+00> : vector<16x512xf32>
    %233 = tpu.matmul %230, %232, %cst_69 {dimension_numbers = #tpu.dot_dimension_numbers<[1], [0], [0], [1], [0, 0, 1, 1], [], []>} : vector<16x128xbf16>, vector<128x512xbf16>, vector<16x512xf32> -> vector<16x512xf32>
    %234 = arith.addf %229, %233 : vector<16x512xf32>
    %235 = vector.extract_strided_slice %234 {offsets = [0, 0], sizes = [16, 128], strides = [1, 1]} : vector<16x512xf32> to vector<16x128xf32>
    %236 = arith.negf %235 : vector<16x128xf32>
    %237 = math.exp %236 : vector<16x128xf32>
    %cst_70 = arith.constant 1.000000e+00 : f32
    %238 = vector.broadcast %cst_70 : f32 to vector<16x128xf32>
    %239 = arith.addf %238, %237 : vector<16x128xf32>
    %240 = arith.divf %238, %239 : vector<16x128xf32>
    %241 = vector.extract_strided_slice %234 {offsets = [0, 128], sizes = [16, 128], strides = [1, 1]} : vector<16x512xf32> to vector<16x128xf32>
    %242 = arith.negf %241 : vector<16x128xf32>
    %243 = math.exp %242 : vector<16x128xf32>
    %cst_71 = arith.constant 1.000000e+00 : f32
    %244 = vector.broadcast %cst_71 : f32 to vector<16x128xf32>
    %245 = arith.addf %244, %243 : vector<16x128xf32>
    %246 = arith.divf %244, %245 : vector<16x128xf32>
    %247 = vector.extract_strided_slice %234 {offsets = [0, 256], sizes = [16, 128], strides = [1, 1]} : vector<16x512xf32> to vector<16x128xf32>
    %248 = math.tanh %247 : vector<16x128xf32>
    %249 = vector.extract_strided_slice %234 {offsets = [0, 384], sizes = [16, 128], strides = [1, 1]} : vector<16x512xf32> to vector<16x128xf32>
    %250 = arith.negf %249 : vector<16x128xf32>
    %251 = math.exp %250 : vector<16x128xf32>
    %cst_72 = arith.constant 1.000000e+00 : f32
    %252 = vector.broadcast %cst_72 : f32 to vector<16x128xf32>
    %253 = arith.addf %252, %251 : vector<16x128xf32>
    %254 = arith.divf %252, %253 : vector<16x128xf32>
    %255 = arith.mulf %246, %216 : vector<16x128xf32>
    %256 = arith.mulf %240, %248 : vector<16x128xf32>
    %257 = arith.addf %255, %256 : vector<16x128xf32>
    %258 = math.tanh %257 : vector<16x128xf32>
    %259 = arith.mulf %254, %258 : vector<16x128xf32>
    %260 = vector.broadcast %223 : i32 to vector<16x1xi32>
    %261 = arith.cmpi slt, %260, %5 : vector<16x1xi32>
    %262 = vector.shape_cast %261 : vector<16x1xi1> to vector<16x1xi1>
    %263 = vector.broadcast %262 : vector<16x1xi1> to vector<16x128xi1>
    %264 = arith.select %263, %259, %213 : vector<16x128xi1>, vector<16x128xf32>
    %265 = vector.shape_cast %261 : vector<16x1xi1> to vector<16x1xi1>
    %266 = vector.broadcast %265 : vector<16x1xi1> to vector<16x128xi1>
    %267 = arith.select %266, %257, %216 : vector<16x128xi1>, vector<16x128xf32>
    %268 = arith.truncf %264 : vector<16x128xf32> to vector<16x128xbf16>
    %269 = arith.index_cast %223 : i32 to index
    %c0_73 = arith.constant 0 : index
    %c0_74 = arith.constant 0 : index
    %270 = vector.load %arg10[%269, %c0_73, %c0_74] : memref<8x16x128xbf16, #tpu.memory_space<vmem>>, vector<1x16x128xbf16>
    %271 = vector.shape_cast %270 : vector<1x16x128xbf16> to vector<16x128xbf16>
    %272 = vector.shape_cast %268 : vector<16x128xbf16> to vector<1x16x128xbf16>
    tpu.vector_store %arg10[%269, %c0_73, %c0_74], %272 {strides = array<i32>} : memref<8x16x128xbf16, #tpu.memory_space<vmem>>, vector<1x16x128xbf16>,
    %c8_i32_75 = arith.constant 8 : i32
    %273 = arith.muli %c0_i32, %c8_i32_75 : i32
    %c5_i32 = arith.constant 5 : i32
    %274 = arith.addi %273, %c5_i32 : i32
    %275 = arith.index_cast %274 : i32 to index
    %c0_76 = arith.constant 0 : index
    %c0_77 = arith.constant 0 : index
    %276 = vector.load %arg11[%275, %c0_76, %c0_77] : memref<8x16x512xbf16, #tpu.memory_space<vmem>>, vector<1x16x512xbf16>
    %277 = vector.shape_cast %276 : vector<1x16x512xbf16> to vector<16x512xbf16>
    %278 = arith.extf %277 : vector<16x512xbf16> to vector<16x512xf32>
    %279 = vector.broadcast %15 : vector<1x512xf32> to vector<16x512xf32>
    %280 = arith.addf %278, %279 : vector<16x512xf32>
    %281 = arith.truncf %264 : vector<16x128xf32> to vector<16x128xbf16>
    %c0_78 = arith.constant 0 : index
    %c0_79 = arith.constant 0 : index
    %c0_80 = arith.constant 0 : index
    %282 = vector.load %arg2[%c0_78, %c0_79, %c0_80] : memref<2x128x512xbf16, #tpu.memory_space<vmem>>, vector<1x128x512xbf16>
    %283 = vector.shape_cast %282 : vector<1x128x512xbf16> to vector<128x512xbf16>
    %cst_81 = arith.constant dense<0.000000e+00> : vector<16x512xf32>
    %284 = tpu.matmul %281, %283, %cst_81 {dimension_numbers = #tpu.dot_dimension_numbers<[1], [0], [0], [1], [0, 0, 1, 1], [], []>} : vector<16x128xbf16>, vector<128x512xbf16>, vector<16x512xf32> -> vector<16x512xf32>
    %285 = arith.addf %280, %284 : vector<16x512xf32>
    %286 = vector.extract_strided_slice %285 {offsets = [0, 0], sizes = [16, 128], strides = [1, 1]} : vector<16x512xf32> to vector<16x128xf32>
    %287 = arith.negf %286 : vector<16x128xf32>
    %288 = math.exp %287 : vector<16x128xf32>
    %cst_82 = arith.constant 1.000000e+00 : f32
    %289 = vector.broadcast %cst_82 : f32 to vector<16x128xf32>
    %290 = arith.addf %289, %288 : vector<16x128xf32>
    %291 = arith.divf %289, %290 : vector<16x128xf32>
    %292 = vector.extract_strided_slice %285 {offsets = [0, 128], sizes = [16, 128], strides = [1, 1]} : vector<16x512xf32> to vector<16x128xf32>
    %293 = arith.negf %292 : vector<16x128xf32>
    %294 = math.exp %293 : vector<16x128xf32>
    %cst_83 = arith.constant 1.000000e+00 : f32
    %295 = vector.broadcast %cst_83 : f32 to vector<16x128xf32>
    %296 = arith.addf %295, %294 : vector<16x128xf32>
    %297 = arith.divf %295, %296 : vector<16x128xf32>
    %298 = vector.extract_strided_slice %285 {offsets = [0, 256], sizes = [16, 128], strides = [1, 1]} : vector<16x512xf32> to vector<16x128xf32>
    %299 = math.tanh %298 : vector<16x128xf32>
    %300 = vector.extract_strided_slice %285 {offsets = [0, 384], sizes = [16, 128], strides = [1, 1]} : vector<16x512xf32> to vector<16x128xf32>
    %301 = arith.negf %300 : vector<16x128xf32>
    %302 = math.exp %301 : vector<16x128xf32>
    %cst_84 = arith.constant 1.000000e+00 : f32
    %303 = vector.broadcast %cst_84 : f32 to vector<16x128xf32>
    %304 = arith.addf %303, %302 : vector<16x128xf32>
    %305 = arith.divf %303, %304 : vector<16x128xf32>
    %306 = arith.mulf %297, %267 : vector<16x128xf32>
    %307 = arith.mulf %291, %299 : vector<16x128xf32>
    %308 = arith.addf %306, %307 : vector<16x128xf32>
    %309 = math.tanh %308 : vector<16x128xf32>
    %310 = arith.mulf %305, %309 : vector<16x128xf32>
    %311 = vector.broadcast %274 : i32 to vector<16x1xi32>
    %312 = arith.cmpi slt, %311, %5 : vector<16x1xi32>
    %313 = vector.shape_cast %312 : vector<16x1xi1> to vector<16x1xi1>
    %314 = vector.broadcast %313 : vector<16x1xi1> to vector<16x128xi1>
    %315 = arith.select %314, %310, %264 : vector<16x128xi1>, vector<16x128xf32>
    %316 = vector.shape_cast %312 : vector<16x1xi1> to vector<16x1xi1>
    %317 = vector.broadcast %316 : vector<16x1xi1> to vector<16x128xi1>
    %318 = arith.select %317, %308, %267 : vector<16x128xi1>, vector<16x128xf32>
    %319 = arith.truncf %315 : vector<16x128xf32> to vector<16x128xbf16>
    %320 = arith.index_cast %274 : i32 to index
    %c0_85 = arith.constant 0 : index
    %c0_86 = arith.constant 0 : index
    %321 = vector.load %arg10[%320, %c0_85, %c0_86] : memref<8x16x128xbf16, #tpu.memory_space<vmem>>, vector<1x16x128xbf16>
    %322 = vector.shape_cast %321 : vector<1x16x128xbf16> to vector<16x128xbf16>
    %323 = vector.shape_cast %319 : vector<16x128xbf16> to vector<1x16x128xbf16>
    tpu.vector_store %arg10[%320, %c0_85, %c0_86], %323 {strides = array<i32>} : memref<8x16x128xbf16, #tpu.memory_space<vmem>>, vector<1x16x128xbf16>,
    %c8_i32_87 = arith.constant 8 : i32
    %324 = arith.muli %c0_i32, %c8_i32_87 : i32
    %c6_i32_88 = arith.constant 6 : i32
    %325 = arith.addi %324, %c6_i32_88 : i32
    %326 = arith.index_cast %325 : i32 to index
    %c0_89 = arith.constant 0 : index
    %c0_90 = arith.constant 0 : index
    %327 = vector.load %arg11[%326, %c0_89, %c0_90] : memref<8x16x512xbf16, #tpu.memory_space<vmem>>, vector<1x16x512xbf16>
    %328 = vector.shape_cast %327 : vector<1x16x512xbf16> to vector<16x512xbf16>
    %329 = arith.extf %328 : vector<16x512xbf16> to vector<16x512xf32>
    %330 = vector.broadcast %15 : vector<1x512xf32> to vector<16x512xf32>
    %331 = arith.addf %329, %330 : vector<16x512xf32>
    %332 = arith.truncf %315 : vector<16x128xf32> to vector<16x128xbf16>
    %c0_91 = arith.constant 0 : index
    %c0_92 = arith.constant 0 : index
    %c0_93 = arith.constant 0 : index
    %333 = vector.load %arg2[%c0_91, %c0_92, %c0_93] : memref<2x128x512xbf16, #tpu.memory_space<vmem>>, vector<1x128x512xbf16>
    %334 = vector.shape_cast %333 : vector<1x128x512xbf16> to vector<128x512xbf16>
    %cst_94 = arith.constant dense<0.000000e+00> : vector<16x512xf32>
    %335 = tpu.matmul %332, %334, %cst_94 {dimension_numbers = #tpu.dot_dimension_numbers<[1], [0], [0], [1], [0, 0, 1, 1], [], []>} : vector<16x128xbf16>, vector<128x512xbf16>, vector<16x512xf32> -> vector<16x512xf32>
    %336 = arith.addf %331, %335 : vector<16x512xf32>
    %337 = vector.extract_strided_slice %336 {offsets = [0, 0], sizes = [16, 128], strides = [1, 1]} : vector<16x512xf32> to vector<16x128xf32>
    %338 = arith.negf %337 : vector<16x128xf32>
    %339 = math.exp %338 : vector<16x128xf32>
    %cst_95 = arith.constant 1.000000e+00 : f32
    %340 = vector.broadcast %cst_95 : f32 to vector<16x128xf32>
    %341 = arith.addf %340, %339 : vector<16x128xf32>
    %342 = arith.divf %340, %341 : vector<16x128xf32>
    %343 = vector.extract_strided_slice %336 {offsets = [0, 128], sizes = [16, 128], strides = [1, 1]} : vector<16x512xf32> to vector<16x128xf32>
    %344 = arith.negf %343 : vector<16x128xf32>
    %345 = math.exp %344 : vector<16x128xf32>
    %cst_96 = arith.constant 1.000000e+00 : f32
    %346 = vector.broadcast %cst_96 : f32 to vector<16x128xf32>
    %347 = arith.addf %346, %345 : vector<16x128xf32>
    %348 = arith.divf %346, %347 : vector<16x128xf32>
    %349 = vector.extract_strided_slice %336 {offsets = [0, 256], sizes = [16, 128], strides = [1, 1]} : vector<16x512xf32> to vector<16x128xf32>
    %350 = math.tanh %349 : vector<16x128xf32>
    %351 = vector.extract_strided_slice %336 {offsets = [0, 384], sizes = [16, 128], strides = [1, 1]} : vector<16x512xf32> to vector<16x128xf32>
    %352 = arith.negf %351 : vector<16x128xf32>
    %353 = math.exp %352 : vector<16x128xf32>
    %cst_97 = arith.constant 1.000000e+00 : f32
    %354 = vector.broadcast %cst_97 : f32 to vector<16x128xf32>
    %355 = arith.addf %354, %353 : vector<16x128xf32>
    %356 = arith.divf %354, %355 : vector<16x128xf32>
    %357 = arith.mulf %348, %318 : vector<16x128xf32>
    %358 = arith.mulf %342, %350 : vector<16x128xf32>
    %359 = arith.addf %357, %358 : vector<16x128xf32>
    %360 = math.tanh %359 : vector<16x128xf32>
    %361 = arith.mulf %356, %360 : vector<16x128xf32>
    %362 = vector.broadcast %325 : i32 to vector<16x1xi32>
    %363 = arith.cmpi slt, %362, %5 : vector<16x1xi32>
    %364 = vector.shape_cast %363 : vector<16x1xi1> to vector<16x1xi1>
    %365 = vector.broadcast %364 : vector<16x1xi1> to vector<16x128xi1>
    %366 = arith.select %365, %361, %315 : vector<16x128xi1>, vector<16x128xf32>
    %367 = vector.shape_cast %363 : vector<16x1xi1> to vector<16x1xi1>
    %368 = vector.broadcast %367 : vector<16x1xi1> to vector<16x128xi1>
    %369 = arith.select %368, %359, %318 : vector<16x128xi1>, vector<16x128xf32>
    %370 = arith.truncf %366 : vector<16x128xf32> to vector<16x128xbf16>
    %371 = arith.index_cast %325 : i32 to index
    %c0_98 = arith.constant 0 : index
    %c0_99 = arith.constant 0 : index
    %372 = vector.load %arg10[%371, %c0_98, %c0_99] : memref<8x16x128xbf16, #tpu.memory_space<vmem>>, vector<1x16x128xbf16>
    %373 = vector.shape_cast %372 : vector<1x16x128xbf16> to vector<16x128xbf16>
    %374 = vector.shape_cast %370 : vector<16x128xbf16> to vector<1x16x128xbf16>
    tpu.vector_store %arg10[%371, %c0_98, %c0_99], %374 {strides = array<i32>} : memref<8x16x128xbf16, #tpu.memory_space<vmem>>, vector<1x16x128xbf16>,
    %c8_i32_100 = arith.constant 8 : i32
    %375 = arith.muli %c0_i32, %c8_i32_100 : i32
    %c7_i32 = arith.constant 7 : i32
    %376 = arith.addi %375, %c7_i32 : i32
    %377 = arith.index_cast %376 : i32 to index
    %c0_101 = arith.constant 0 : index
    %c0_102 = arith.constant 0 : index
    %378 = vector.load %arg11[%377, %c0_101, %c0_102] : memref<8x16x512xbf16, #tpu.memory_space<vmem>>, vector<1x16x512xbf16>
    %379 = vector.shape_cast %378 : vector<1x16x512xbf16> to vector<16x512xbf16>
    %380 = arith.extf %379 : vector<16x512xbf16> to vector<16x512xf32>
    %381 = vector.broadcast %15 : vector<1x512xf32> to vector<16x512xf32>
    %382 = arith.addf %380, %381 : vector<16x512xf32>
    %383 = arith.truncf %366 : vector<16x128xf32> to vector<16x128xbf16>
    %c0_103 = arith.constant 0 : index
    %c0_104 = arith.constant 0 : index
    %c0_105 = arith.constant 0 : index
    %384 = vector.load %arg2[%c0_103, %c0_104, %c0_105] : memref<2x128x512xbf16, #tpu.memory_space<vmem>>, vector<1x128x512xbf16>
    %385 = vector.shape_cast %384 : vector<1x128x512xbf16> to vector<128x512xbf16>
    %cst_106 = arith.constant dense<0.000000e+00> : vector<16x512xf32>
    %386 = tpu.matmul %383, %385, %cst_106 {dimension_numbers = #tpu.dot_dimension_numbers<[1], [0], [0], [1], [0, 0, 1, 1], [], []>} : vector<16x128xbf16>, vector<128x512xbf16>, vector<16x512xf32> -> vector<16x512xf32>
    %387 = arith.addf %382, %386 : vector<16x512xf32>
    %388 = vector.extract_strided_slice %387 {offsets = [0, 0], sizes = [16, 128], strides = [1, 1]} : vector<16x512xf32> to vector<16x128xf32>
    %389 = arith.negf %388 : vector<16x128xf32>
    %390 = math.exp %389 : vector<16x128xf32>
    %cst_107 = arith.constant 1.000000e+00 : f32
    %391 = vector.broadcast %cst_107 : f32 to vector<16x128xf32>
    %392 = arith.addf %391, %390 : vector<16x128xf32>
    %393 = arith.divf %391, %392 : vector<16x128xf32>
    %394 = vector.extract_strided_slice %387 {offsets = [0, 128], sizes = [16, 128], strides = [1, 1]} : vector<16x512xf32> to vector<16x128xf32>
    %395 = arith.negf %394 : vector<16x128xf32>
    %396 = math.exp %395 : vector<16x128xf32>
    %cst_108 = arith.constant 1.000000e+00 : f32
    %397 = vector.broadcast %cst_108 : f32 to vector<16x128xf32>
    %398 = arith.addf %397, %396 : vector<16x128xf32>
    %399 = arith.divf %397, %398 : vector<16x128xf32>
    %400 = vector.extract_strided_slice %387 {offsets = [0, 256], sizes = [16, 128], strides = [1, 1]} : vector<16x512xf32> to vector<16x128xf32>
    %401 = math.tanh %400 : vector<16x128xf32>
    %402 = vector.extract_strided_slice %387 {offsets = [0, 384], sizes = [16, 128], strides = [1, 1]} : vector<16x512xf32> to vector<16x128xf32>
    %403 = arith.negf %402 : vector<16x128xf32>
    %404 = math.exp %403 : vector<16x128xf32>
    %cst_109 = arith.constant 1.000000e+00 : f32
    %405 = vector.broadcast %cst_109 : f32 to vector<16x128xf32>
    %406 = arith.addf %405, %404 : vector<16x128xf32>
    %407 = arith.divf %405, %406 : vector<16x128xf32>
    %408 = arith.mulf %399, %369 : vector<16x128xf32>
    %409 = arith.mulf %393, %401 : vector<16x128xf32>
    %410 = arith.addf %408, %409 : vector<16x128xf32>
    %411 = math.tanh %410 : vector<16x128xf32>
    %412 = arith.mulf %407, %411 : vector<16x128xf32>
    %413 = vector.broadcast %376 : i32 to vector<16x1xi32>
    %414 = arith.cmpi slt, %413, %5 : vector<16x1xi32>
    %415 = vector.shape_cast %414 : vector<16x1xi1> to vector<16x1xi1>
    %416 = vector.broadcast %415 : vector<16x1xi1> to vector<16x128xi1>
    %417 = arith.select %416, %412, %366 : vector<16x128xi1>, vector<16x128xf32>
    %418 = vector.shape_cast %414 : vector<16x1xi1> to vector<16x1xi1>
    %419 = vector.broadcast %418 : vector<16x1xi1> to vector<16x128xi1>
    %420 = arith.select %419, %410, %369 : vector<16x128xi1>, vector<16x128xf32>
    %421 = arith.truncf %417 : vector<16x128xf32> to vector<16x128xbf16>
    %422 = arith.index_cast %376 : i32 to index
    %c0_110 = arith.constant 0 : index
    %c0_111 = arith.constant 0 : index
    %423 = vector.load %arg10[%422, %c0_110, %c0_111] : memref<8x16x128xbf16, #tpu.memory_space<vmem>>, vector<1x16x128xbf16>
    %424 = vector.shape_cast %423 : vector<1x16x128xbf16> to vector<16x128xbf16>
    %425 = vector.shape_cast %421 : vector<16x128xbf16> to vector<1x16x128xbf16>
    tpu.vector_store %arg10[%422, %c0_110, %c0_111], %425 {strides = array<i32>} : memref<8x16x128xbf16, #tpu.memory_space<vmem>>, vector<1x16x128xbf16>,
    %c1_i32_112 = arith.constant 1 : i32
    %c0_113 = arith.constant 0 : index
    %c0_114 = arith.constant 0 : index
    %c0_115 = arith.constant 0 : index
    %426 = vector.load %arg10[%c0_113, %c0_114, %c0_115] : memref<8x16x128xbf16, #tpu.memory_space<vmem>>, vector<8x16x128xbf16>
    %427 = vector.shape_cast %426 : vector<8x16x128xbf16> to vector<128x128xbf16>
    %c1 = arith.constant 1 : index
    %c0_116 = arith.constant 0 : index
    %c0_117 = arith.constant 0 : index
    %428 = vector.load %arg1[%c1, %c0_116, %c0_117] : memref<2x128x512xbf16, #tpu.memory_space<vmem>>, vector<1x128x512xbf16>
    %429 = vector.shape_cast %428 : vector<1x128x512xbf16> to vector<128x512xbf16>
    %cst_118 = arith.constant dense<0.000000e+00> : vector<128x512xf32>
    %430 = tpu.matmul %427, %429, %cst_118 {dimension_numbers = #tpu.dot_dimension_numbers<[1], [0], [0], [1], [0, 0, 1, 1], [], []>} : vector<128x128xbf16>, vector<128x512xbf16>, vector<128x512xf32> -> vector<128x512xf32>
    %431 = arith.truncf %430 : vector<128x512xf32> to vector<128x512xbf16>
    %432 = vector.shape_cast %431 : vector<128x512xbf16> to vector<8x16x512xbf16>
    %c0_119 = arith.constant 0 : index
    %c0_120 = arith.constant 0 : index
    %c0_121 = arith.constant 0 : index
    %433 = vector.load %arg11[%c0_119, %c0_120, %c0_121] : memref<8x16x512xbf16, #tpu.memory_space<vmem>>, vector<8x16x512xbf16>
    tpu.vector_store %arg11[%c0_119, %c0_120, %c0_121], %432 {strides = array<i32>} : memref<8x16x512xbf16, #tpu.memory_space<vmem>>, vector<8x16x512xbf16>,
    %c1_122 = arith.constant 1 : index
    %c0_123 = arith.constant 0 : index
    %c0_124 = arith.constant 0 : index
    %434 = vector.load %arg3[%c1_122, %c0_123, %c0_124] : memref<2x1x512xf32, #tpu.memory_space<vmem>>, vector<1x1x512xf32>
    %435 = vector.shape_cast %434 : vector<1x1x512xf32> to vector<1x512xf32>
    %cst_125 = arith.constant 0.000000e+00 : f32
    %436 = vector.broadcast %cst_125 : f32 to vector<16x128xf32>
    %cst_126 = arith.constant 0.000000e+00 : f32
    %437 = vector.broadcast %cst_126 : f32 to vector<16x128xf32>
    %c0_i32_127 = arith.constant 0 : i32
    %c8_i32_128 = arith.constant 8 : i32
    %438 = arith.muli %c0_i32_127, %c8_i32_128 : i32
    %c0_i32_129 = arith.constant 0 : i32
    %439 = arith.addi %438, %c0_i32_129 : i32
    %440 = arith.index_cast %439 : i32 to index
    %c0_130 = arith.constant 0 : index
    %c0_131 = arith.constant 0 : index
    %441 = vector.load %arg11[%440, %c0_130, %c0_131] : memref<8x16x512xbf16, #tpu.memory_space<vmem>>, vector<1x16x512xbf16>
    %442 = vector.shape_cast %441 : vector<1x16x512xbf16> to vector<16x512xbf16>
    %443 = arith.extf %442 : vector<16x512xbf16> to vector<16x512xf32>
    %444 = vector.broadcast %435 : vector<1x512xf32> to vector<16x512xf32>
    %445 = arith.addf %443, %444 : vector<16x512xf32>
    %446 = arith.truncf %436 : vector<16x128xf32> to vector<16x128xbf16>
    %c1_132 = arith.constant 1 : index
    %c0_133 = arith.constant 0 : index
    %c0_134 = arith.constant 0 : index
    %447 = vector.load %arg2[%c1_132, %c0_133, %c0_134] : memref<2x128x512xbf16, #tpu.memory_space<vmem>>, vector<1x128x512xbf16>
    %448 = vector.shape_cast %447 : vector<1x128x512xbf16> to vector<128x512xbf16>
    %cst_135 = arith.constant dense<0.000000e+00> : vector<16x512xf32>
    %449 = tpu.matmul %446, %448, %cst_135 {dimension_numbers = #tpu.dot_dimension_numbers<[1], [0], [0], [1], [0, 0, 1, 1], [], []>} : vector<16x128xbf16>, vector<128x512xbf16>, vector<16x512xf32> -> vector<16x512xf32>
    %450 = arith.addf %445, %449 : vector<16x512xf32>
    %451 = vector.extract_strided_slice %450 {offsets = [0, 0], sizes = [16, 128], strides = [1, 1]} : vector<16x512xf32> to vector<16x128xf32>
    %452 = arith.negf %451 : vector<16x128xf32>
    %453 = math.exp %452 : vector<16x128xf32>
    %cst_136 = arith.constant 1.000000e+00 : f32
    %454 = vector.broadcast %cst_136 : f32 to vector<16x128xf32>
    %455 = arith.addf %454, %453 : vector<16x128xf32>
    %456 = arith.divf %454, %455 : vector<16x128xf32>
    %457 = vector.extract_strided_slice %450 {offsets = [0, 128], sizes = [16, 128], strides = [1, 1]} : vector<16x512xf32> to vector<16x128xf32>
    %458 = arith.negf %457 : vector<16x128xf32>
    %459 = math.exp %458 : vector<16x128xf32>
    %cst_137 = arith.constant 1.000000e+00 : f32
    %460 = vector.broadcast %cst_137 : f32 to vector<16x128xf32>
    %461 = arith.addf %460, %459 : vector<16x128xf32>
    %462 = arith.divf %460, %461 : vector<16x128xf32>
    %463 = vector.extract_strided_slice %450 {offsets = [0, 256], sizes = [16, 128], strides = [1, 1]} : vector<16x512xf32> to vector<16x128xf32>
    %464 = math.tanh %463 : vector<16x128xf32>
    %465 = vector.extract_strided_slice %450 {offsets = [0, 384], sizes = [16, 128], strides = [1, 1]} : vector<16x512xf32> to vector<16x128xf32>
    %466 = arith.negf %465 : vector<16x128xf32>
    %467 = math.exp %466 : vector<16x128xf32>
    %cst_138 = arith.constant 1.000000e+00 : f32
    %468 = vector.broadcast %cst_138 : f32 to vector<16x128xf32>
    %469 = arith.addf %468, %467 : vector<16x128xf32>
    %470 = arith.divf %468, %469 : vector<16x128xf32>
    %471 = arith.mulf %462, %437 : vector<16x128xf32>
    %472 = arith.mulf %456, %464 : vector<16x128xf32>
    %473 = arith.addf %471, %472 : vector<16x128xf32>
    %474 = math.tanh %473 : vector<16x128xf32>
    %475 = arith.mulf %470, %474 : vector<16x128xf32>
    %476 = vector.broadcast %439 : i32 to vector<16x1xi32>
    %477 = arith.cmpi slt, %476, %5 : vector<16x1xi32>
    %478 = vector.shape_cast %477 : vector<16x1xi1> to vector<16x1xi1>
    %479 = vector.broadcast %478 : vector<16x1xi1> to vector<16x128xi1>
    %480 = arith.select %479, %475, %436 : vector<16x128xi1>, vector<16x128xf32>
    %481 = vector.shape_cast %477 : vector<16x1xi1> to vector<16x1xi1>
    %482 = vector.broadcast %481 : vector<16x1xi1> to vector<16x128xi1>
    %483 = arith.select %482, %473, %437 : vector<16x128xi1>, vector<16x128xf32>
    %c8_i32_139 = arith.constant 8 : i32
    %484 = arith.muli %c0_i32_127, %c8_i32_139 : i32
    %c1_i32_140 = arith.constant 1 : i32
    %485 = arith.addi %484, %c1_i32_140 : i32
    %486 = arith.index_cast %485 : i32 to index
    %c0_141 = arith.constant 0 : index
    %c0_142 = arith.constant 0 : index
    %487 = vector.load %arg11[%486, %c0_141, %c0_142] : memref<8x16x512xbf16, #tpu.memory_space<vmem>>, vector<1x16x512xbf16>
    %488 = vector.shape_cast %487 : vector<1x16x512xbf16> to vector<16x512xbf16>
    %489 = arith.extf %488 : vector<16x512xbf16> to vector<16x512xf32>
    %490 = vector.broadcast %435 : vector<1x512xf32> to vector<16x512xf32>
    %491 = arith.addf %489, %490 : vector<16x512xf32>
    %492 = arith.truncf %480 : vector<16x128xf32> to vector<16x128xbf16>
    %c1_143 = arith.constant 1 : index
    %c0_144 = arith.constant 0 : index
    %c0_145 = arith.constant 0 : index
    %493 = vector.load %arg2[%c1_143, %c0_144, %c0_145] : memref<2x128x512xbf16, #tpu.memory_space<vmem>>, vector<1x128x512xbf16>
    %494 = vector.shape_cast %493 : vector<1x128x512xbf16> to vector<128x512xbf16>
    %cst_146 = arith.constant dense<0.000000e+00> : vector<16x512xf32>
    %495 = tpu.matmul %492, %494, %cst_146 {dimension_numbers = #tpu.dot_dimension_numbers<[1], [0], [0], [1], [0, 0, 1, 1], [], []>} : vector<16x128xbf16>, vector<128x512xbf16>, vector<16x512xf32> -> vector<16x512xf32>
    %496 = arith.addf %491, %495 : vector<16x512xf32>
    %497 = vector.extract_strided_slice %496 {offsets = [0, 0], sizes = [16, 128], strides = [1, 1]} : vector<16x512xf32> to vector<16x128xf32>
    %498 = arith.negf %497 : vector<16x128xf32>
    %499 = math.exp %498 : vector<16x128xf32>
    %cst_147 = arith.constant 1.000000e+00 : f32
    %500 = vector.broadcast %cst_147 : f32 to vector<16x128xf32>
    %501 = arith.addf %500, %499 : vector<16x128xf32>
    %502 = arith.divf %500, %501 : vector<16x128xf32>
    %503 = vector.extract_strided_slice %496 {offsets = [0, 128], sizes = [16, 128], strides = [1, 1]} : vector<16x512xf32> to vector<16x128xf32>
    %504 = arith.negf %503 : vector<16x128xf32>
    %505 = math.exp %504 : vector<16x128xf32>
    %cst_148 = arith.constant 1.000000e+00 : f32
    %506 = vector.broadcast %cst_148 : f32 to vector<16x128xf32>
    %507 = arith.addf %506, %505 : vector<16x128xf32>
    %508 = arith.divf %506, %507 : vector<16x128xf32>
    %509 = vector.extract_strided_slice %496 {offsets = [0, 256], sizes = [16, 128], strides = [1, 1]} : vector<16x512xf32> to vector<16x128xf32>
    %510 = math.tanh %509 : vector<16x128xf32>
    %511 = vector.extract_strided_slice %496 {offsets = [0, 384], sizes = [16, 128], strides = [1, 1]} : vector<16x512xf32> to vector<16x128xf32>
    %512 = arith.negf %511 : vector<16x128xf32>
    %513 = math.exp %512 : vector<16x128xf32>
    %cst_149 = arith.constant 1.000000e+00 : f32
    %514 = vector.broadcast %cst_149 : f32 to vector<16x128xf32>
    %515 = arith.addf %514, %513 : vector<16x128xf32>
    %516 = arith.divf %514, %515 : vector<16x128xf32>
    %517 = arith.mulf %508, %483 : vector<16x128xf32>
    %518 = arith.mulf %502, %510 : vector<16x128xf32>
    %519 = arith.addf %517, %518 : vector<16x128xf32>
    %520 = math.tanh %519 : vector<16x128xf32>
    %521 = arith.mulf %516, %520 : vector<16x128xf32>
    %522 = vector.broadcast %485 : i32 to vector<16x1xi32>
    %523 = arith.cmpi slt, %522, %5 : vector<16x1xi32>
    %524 = vector.shape_cast %523 : vector<16x1xi1> to vector<16x1xi1>
    %525 = vector.broadcast %524 : vector<16x1xi1> to vector<16x128xi1>
    %526 = arith.select %525, %521, %480 : vector<16x128xi1>, vector<16x128xf32>
    %527 = vector.shape_cast %523 : vector<16x1xi1> to vector<16x1xi1>
    %528 = vector.broadcast %527 : vector<16x1xi1> to vector<16x128xi1>
    %529 = arith.select %528, %519, %483 : vector<16x128xi1>, vector<16x128xf32>
    %c8_i32_150 = arith.constant 8 : i32
    %530 = arith.muli %c0_i32_127, %c8_i32_150 : i32
    %c2_i32_151 = arith.constant 2 : i32
    %531 = arith.addi %530, %c2_i32_151 : i32
    %532 = arith.index_cast %531 : i32 to index
    %c0_152 = arith.constant 0 : index
    %c0_153 = arith.constant 0 : index
    %533 = vector.load %arg11[%532, %c0_152, %c0_153] : memref<8x16x512xbf16, #tpu.memory_space<vmem>>, vector<1x16x512xbf16>
    %534 = vector.shape_cast %533 : vector<1x16x512xbf16> to vector<16x512xbf16>
    %535 = arith.extf %534 : vector<16x512xbf16> to vector<16x512xf32>
    %536 = vector.broadcast %435 : vector<1x512xf32> to vector<16x512xf32>
    %537 = arith.addf %535, %536 : vector<16x512xf32>
    %538 = arith.truncf %526 : vector<16x128xf32> to vector<16x128xbf16>
    %c1_154 = arith.constant 1 : index
    %c0_155 = arith.constant 0 : index
    %c0_156 = arith.constant 0 : index
    %539 = vector.load %arg2[%c1_154, %c0_155, %c0_156] : memref<2x128x512xbf16, #tpu.memory_space<vmem>>, vector<1x128x512xbf16>
    %540 = vector.shape_cast %539 : vector<1x128x512xbf16> to vector<128x512xbf16>
    %cst_157 = arith.constant dense<0.000000e+00> : vector<16x512xf32>
    %541 = tpu.matmul %538, %540, %cst_157 {dimension_numbers = #tpu.dot_dimension_numbers<[1], [0], [0], [1], [0, 0, 1, 1], [], []>} : vector<16x128xbf16>, vector<128x512xbf16>, vector<16x512xf32> -> vector<16x512xf32>
    %542 = arith.addf %537, %541 : vector<16x512xf32>
    %543 = vector.extract_strided_slice %542 {offsets = [0, 0], sizes = [16, 128], strides = [1, 1]} : vector<16x512xf32> to vector<16x128xf32>
    %544 = arith.negf %543 : vector<16x128xf32>
    %545 = math.exp %544 : vector<16x128xf32>
    %cst_158 = arith.constant 1.000000e+00 : f32
    %546 = vector.broadcast %cst_158 : f32 to vector<16x128xf32>
    %547 = arith.addf %546, %545 : vector<16x128xf32>
    %548 = arith.divf %546, %547 : vector<16x128xf32>
    %549 = vector.extract_strided_slice %542 {offsets = [0, 128], sizes = [16, 128], strides = [1, 1]} : vector<16x512xf32> to vector<16x128xf32>
    %550 = arith.negf %549 : vector<16x128xf32>
    %551 = math.exp %550 : vector<16x128xf32>
    %cst_159 = arith.constant 1.000000e+00 : f32
    %552 = vector.broadcast %cst_159 : f32 to vector<16x128xf32>
    %553 = arith.addf %552, %551 : vector<16x128xf32>
    %554 = arith.divf %552, %553 : vector<16x128xf32>
    %555 = vector.extract_strided_slice %542 {offsets = [0, 256], sizes = [16, 128], strides = [1, 1]} : vector<16x512xf32> to vector<16x128xf32>
    %556 = math.tanh %555 : vector<16x128xf32>
    %557 = vector.extract_strided_slice %542 {offsets = [0, 384], sizes = [16, 128], strides = [1, 1]} : vector<16x512xf32> to vector<16x128xf32>
    %558 = arith.negf %557 : vector<16x128xf32>
    %559 = math.exp %558 : vector<16x128xf32>
    %cst_160 = arith.constant 1.000000e+00 : f32
    %560 = vector.broadcast %cst_160 : f32 to vector<16x128xf32>
    %561 = arith.addf %560, %559 : vector<16x128xf32>
    %562 = arith.divf %560, %561 : vector<16x128xf32>
    %563 = arith.mulf %554, %529 : vector<16x128xf32>
    %564 = arith.mulf %548, %556 : vector<16x128xf32>
    %565 = arith.addf %563, %564 : vector<16x128xf32>
    %566 = math.tanh %565 : vector<16x128xf32>
    %567 = arith.mulf %562, %566 : vector<16x128xf32>
    %568 = vector.broadcast %531 : i32 to vector<16x1xi32>
    %569 = arith.cmpi slt, %568, %5 : vector<16x1xi32>
    %570 = vector.shape_cast %569 : vector<16x1xi1> to vector<16x1xi1>
    %571 = vector.broadcast %570 : vector<16x1xi1> to vector<16x128xi1>
    %572 = arith.select %571, %567, %526 : vector<16x128xi1>, vector<16x128xf32>
    %573 = vector.shape_cast %569 : vector<16x1xi1> to vector<16x1xi1>
    %574 = vector.broadcast %573 : vector<16x1xi1> to vector<16x128xi1>
    %575 = arith.select %574, %565, %529 : vector<16x128xi1>, vector<16x128xf32>
    %c8_i32_161 = arith.constant 8 : i32
    %576 = arith.muli %c0_i32_127, %c8_i32_161 : i32
    %c3_i32_162 = arith.constant 3 : i32
    %577 = arith.addi %576, %c3_i32_162 : i32
    %578 = arith.index_cast %577 : i32 to index
    %c0_163 = arith.constant 0 : index
    %c0_164 = arith.constant 0 : index
    %579 = vector.load %arg11[%578, %c0_163, %c0_164] : memref<8x16x512xbf16, #tpu.memory_space<vmem>>, vector<1x16x512xbf16>
    %580 = vector.shape_cast %579 : vector<1x16x512xbf16> to vector<16x512xbf16>
    %581 = arith.extf %580 : vector<16x512xbf16> to vector<16x512xf32>
    %582 = vector.broadcast %435 : vector<1x512xf32> to vector<16x512xf32>
    %583 = arith.addf %581, %582 : vector<16x512xf32>
    %584 = arith.truncf %572 : vector<16x128xf32> to vector<16x128xbf16>
    %c1_165 = arith.constant 1 : index
    %c0_166 = arith.constant 0 : index
    %c0_167 = arith.constant 0 : index
    %585 = vector.load %arg2[%c1_165, %c0_166, %c0_167] : memref<2x128x512xbf16, #tpu.memory_space<vmem>>, vector<1x128x512xbf16>
    %586 = vector.shape_cast %585 : vector<1x128x512xbf16> to vector<128x512xbf16>
    %cst_168 = arith.constant dense<0.000000e+00> : vector<16x512xf32>
    %587 = tpu.matmul %584, %586, %cst_168 {dimension_numbers = #tpu.dot_dimension_numbers<[1], [0], [0], [1], [0, 0, 1, 1], [], []>} : vector<16x128xbf16>, vector<128x512xbf16>, vector<16x512xf32> -> vector<16x512xf32>
    %588 = arith.addf %583, %587 : vector<16x512xf32>
    %589 = vector.extract_strided_slice %588 {offsets = [0, 0], sizes = [16, 128], strides = [1, 1]} : vector<16x512xf32> to vector<16x128xf32>
    %590 = arith.negf %589 : vector<16x128xf32>
    %591 = math.exp %590 : vector<16x128xf32>
    %cst_169 = arith.constant 1.000000e+00 : f32
    %592 = vector.broadcast %cst_169 : f32 to vector<16x128xf32>
    %593 = arith.addf %592, %591 : vector<16x128xf32>
    %594 = arith.divf %592, %593 : vector<16x128xf32>
    %595 = vector.extract_strided_slice %588 {offsets = [0, 128], sizes = [16, 128], strides = [1, 1]} : vector<16x512xf32> to vector<16x128xf32>
    %596 = arith.negf %595 : vector<16x128xf32>
    %597 = math.exp %596 : vector<16x128xf32>
    %cst_170 = arith.constant 1.000000e+00 : f32
    %598 = vector.broadcast %cst_170 : f32 to vector<16x128xf32>
    %599 = arith.addf %598, %597 : vector<16x128xf32>
    %600 = arith.divf %598, %599 : vector<16x128xf32>
    %601 = vector.extract_strided_slice %588 {offsets = [0, 256], sizes = [16, 128], strides = [1, 1]} : vector<16x512xf32> to vector<16x128xf32>
    %602 = math.tanh %601 : vector<16x128xf32>
    %603 = vector.extract_strided_slice %588 {offsets = [0, 384], sizes = [16, 128], strides = [1, 1]} : vector<16x512xf32> to vector<16x128xf32>
    %604 = arith.negf %603 : vector<16x128xf32>
    %605 = math.exp %604 : vector<16x128xf32>
    %cst_171 = arith.constant 1.000000e+00 : f32
    %606 = vector.broadcast %cst_171 : f32 to vector<16x128xf32>
    %607 = arith.addf %606, %605 : vector<16x128xf32>
    %608 = arith.divf %606, %607 : vector<16x128xf32>
    %609 = arith.mulf %600, %575 : vector<16x128xf32>
    %610 = arith.mulf %594, %602 : vector<16x128xf32>
    %611 = arith.addf %609, %610 : vector<16x128xf32>
    %612 = math.tanh %611 : vector<16x128xf32>
    %613 = arith.mulf %608, %612 : vector<16x128xf32>
    %614 = vector.broadcast %577 : i32 to vector<16x1xi32>
    %615 = arith.cmpi slt, %614, %5 : vector<16x1xi32>
    %616 = vector.shape_cast %615 : vector<16x1xi1> to vector<16x1xi1>
    %617 = vector.broadcast %616 : vector<16x1xi1> to vector<16x128xi1>
    %618 = arith.select %617, %613, %572 : vector<16x128xi1>, vector<16x128xf32>
    %619 = vector.shape_cast %615 : vector<16x1xi1> to vector<16x1xi1>
    %620 = vector.broadcast %619 : vector<16x1xi1> to vector<16x128xi1>
    %621 = arith.select %620, %611, %575 : vector<16x128xi1>, vector<16x128xf32>
    %c8_i32_172 = arith.constant 8 : i32
    %622 = arith.muli %c0_i32_127, %c8_i32_172 : i32
    %c4_i32_173 = arith.constant 4 : i32
    %623 = arith.addi %622, %c4_i32_173 : i32
    %624 = arith.index_cast %623 : i32 to index
    %c0_174 = arith.constant 0 : index
    %c0_175 = arith.constant 0 : index
    %625 = vector.load %arg11[%624, %c0_174, %c0_175] : memref<8x16x512xbf16, #tpu.memory_space<vmem>>, vector<1x16x512xbf16>
    %626 = vector.shape_cast %625 : vector<1x16x512xbf16> to vector<16x512xbf16>
    %627 = arith.extf %626 : vector<16x512xbf16> to vector<16x512xf32>
    %628 = vector.broadcast %435 : vector<1x512xf32> to vector<16x512xf32>
    %629 = arith.addf %627, %628 : vector<16x512xf32>
    %630 = arith.truncf %618 : vector<16x128xf32> to vector<16x128xbf16>
    %c1_176 = arith.constant 1 : index
    %c0_177 = arith.constant 0 : index
    %c0_178 = arith.constant 0 : index
    %631 = vector.load %arg2[%c1_176, %c0_177, %c0_178] : memref<2x128x512xbf16, #tpu.memory_space<vmem>>, vector<1x128x512xbf16>
    %632 = vector.shape_cast %631 : vector<1x128x512xbf16> to vector<128x512xbf16>
    %cst_179 = arith.constant dense<0.000000e+00> : vector<16x512xf32>
    %633 = tpu.matmul %630, %632, %cst_179 {dimension_numbers = #tpu.dot_dimension_numbers<[1], [0], [0], [1], [0, 0, 1, 1], [], []>} : vector<16x128xbf16>, vector<128x512xbf16>, vector<16x512xf32> -> vector<16x512xf32>
    %634 = arith.addf %629, %633 : vector<16x512xf32>
    %635 = vector.extract_strided_slice %634 {offsets = [0, 0], sizes = [16, 128], strides = [1, 1]} : vector<16x512xf32> to vector<16x128xf32>
    %636 = arith.negf %635 : vector<16x128xf32>
    %637 = math.exp %636 : vector<16x128xf32>
    %cst_180 = arith.constant 1.000000e+00 : f32
    %638 = vector.broadcast %cst_180 : f32 to vector<16x128xf32>
    %639 = arith.addf %638, %637 : vector<16x128xf32>
    %640 = arith.divf %638, %639 : vector<16x128xf32>
    %641 = vector.extract_strided_slice %634 {offsets = [0, 128], sizes = [16, 128], strides = [1, 1]} : vector<16x512xf32> to vector<16x128xf32>
    %642 = arith.negf %641 : vector<16x128xf32>
    %643 = math.exp %642 : vector<16x128xf32>
    %cst_181 = arith.constant 1.000000e+00 : f32
    %644 = vector.broadcast %cst_181 : f32 to vector<16x128xf32>
    %645 = arith.addf %644, %643 : vector<16x128xf32>
    %646 = arith.divf %644, %645 : vector<16x128xf32>
    %647 = vector.extract_strided_slice %634 {offsets = [0, 256], sizes = [16, 128], strides = [1, 1]} : vector<16x512xf32> to vector<16x128xf32>
    %648 = math.tanh %647 : vector<16x128xf32>
    %649 = vector.extract_strided_slice %634 {offsets = [0, 384], sizes = [16, 128], strides = [1, 1]} : vector<16x512xf32> to vector<16x128xf32>
    %650 = arith.negf %649 : vector<16x128xf32>
    %651 = math.exp %650 : vector<16x128xf32>
    %cst_182 = arith.constant 1.000000e+00 : f32
    %652 = vector.broadcast %cst_182 : f32 to vector<16x128xf32>
    %653 = arith.addf %652, %651 : vector<16x128xf32>
    %654 = arith.divf %652, %653 : vector<16x128xf32>
    %655 = arith.mulf %646, %621 : vector<16x128xf32>
    %656 = arith.mulf %640, %648 : vector<16x128xf32>
    %657 = arith.addf %655, %656 : vector<16x128xf32>
    %658 = math.tanh %657 : vector<16x128xf32>
    %659 = arith.mulf %654, %658 : vector<16x128xf32>
    %660 = vector.broadcast %623 : i32 to vector<16x1xi32>
    %661 = arith.cmpi slt, %660, %5 : vector<16x1xi32>
    %662 = vector.shape_cast %661 : vector<16x1xi1> to vector<16x1xi1>
    %663 = vector.broadcast %662 : vector<16x1xi1> to vector<16x128xi1>
    %664 = arith.select %663, %659, %618 : vector<16x128xi1>, vector<16x128xf32>
    %665 = vector.shape_cast %661 : vector<16x1xi1> to vector<16x1xi1>
    %666 = vector.broadcast %665 : vector<16x1xi1> to vector<16x128xi1>
    %667 = arith.select %666, %657, %621 : vector<16x128xi1>, vector<16x128xf32>
    %c8_i32_183 = arith.constant 8 : i32
    %668 = arith.muli %c0_i32_127, %c8_i32_183 : i32
    %c5_i32_184 = arith.constant 5 : i32
    %669 = arith.addi %668, %c5_i32_184 : i32
    %670 = arith.index_cast %669 : i32 to index
    %c0_185 = arith.constant 0 : index
    %c0_186 = arith.constant 0 : index
    %671 = vector.load %arg11[%670, %c0_185, %c0_186] : memref<8x16x512xbf16, #tpu.memory_space<vmem>>, vector<1x16x512xbf16>
    %672 = vector.shape_cast %671 : vector<1x16x512xbf16> to vector<16x512xbf16>
    %673 = arith.extf %672 : vector<16x512xbf16> to vector<16x512xf32>
    %674 = vector.broadcast %435 : vector<1x512xf32> to vector<16x512xf32>
    %675 = arith.addf %673, %674 : vector<16x512xf32>
    %676 = arith.truncf %664 : vector<16x128xf32> to vector<16x128xbf16>
    %c1_187 = arith.constant 1 : index
    %c0_188 = arith.constant 0 : index
    %c0_189 = arith.constant 0 : index
    %677 = vector.load %arg2[%c1_187, %c0_188, %c0_189] : memref<2x128x512xbf16, #tpu.memory_space<vmem>>, vector<1x128x512xbf16>
    %678 = vector.shape_cast %677 : vector<1x128x512xbf16> to vector<128x512xbf16>
    %cst_190 = arith.constant dense<0.000000e+00> : vector<16x512xf32>
    %679 = tpu.matmul %676, %678, %cst_190 {dimension_numbers = #tpu.dot_dimension_numbers<[1], [0], [0], [1], [0, 0, 1, 1], [], []>} : vector<16x128xbf16>, vector<128x512xbf16>, vector<16x512xf32> -> vector<16x512xf32>
    %680 = arith.addf %675, %679 : vector<16x512xf32>
    %681 = vector.extract_strided_slice %680 {offsets = [0, 0], sizes = [16, 128], strides = [1, 1]} : vector<16x512xf32> to vector<16x128xf32>
    %682 = arith.negf %681 : vector<16x128xf32>
    %683 = math.exp %682 : vector<16x128xf32>
    %cst_191 = arith.constant 1.000000e+00 : f32
    %684 = vector.broadcast %cst_191 : f32 to vector<16x128xf32>
    %685 = arith.addf %684, %683 : vector<16x128xf32>
    %686 = arith.divf %684, %685 : vector<16x128xf32>
    %687 = vector.extract_strided_slice %680 {offsets = [0, 128], sizes = [16, 128], strides = [1, 1]} : vector<16x512xf32> to vector<16x128xf32>
    %688 = arith.negf %687 : vector<16x128xf32>
    %689 = math.exp %688 : vector<16x128xf32>
    %cst_192 = arith.constant 1.000000e+00 : f32
    %690 = vector.broadcast %cst_192 : f32 to vector<16x128xf32>
    %691 = arith.addf %690, %689 : vector<16x128xf32>
    %692 = arith.divf %690, %691 : vector<16x128xf32>
    %693 = vector.extract_strided_slice %680 {offsets = [0, 256], sizes = [16, 128], strides = [1, 1]} : vector<16x512xf32> to vector<16x128xf32>
    %694 = math.tanh %693 : vector<16x128xf32>
    %695 = vector.extract_strided_slice %680 {offsets = [0, 384], sizes = [16, 128], strides = [1, 1]} : vector<16x512xf32> to vector<16x128xf32>
    %696 = arith.negf %695 : vector<16x128xf32>
    %697 = math.exp %696 : vector<16x128xf32>
    %cst_193 = arith.constant 1.000000e+00 : f32
    %698 = vector.broadcast %cst_193 : f32 to vector<16x128xf32>
    %699 = arith.addf %698, %697 : vector<16x128xf32>
    %700 = arith.divf %698, %699 : vector<16x128xf32>
    %701 = arith.mulf %692, %667 : vector<16x128xf32>
    %702 = arith.mulf %686, %694 : vector<16x128xf32>
    %703 = arith.addf %701, %702 : vector<16x128xf32>
    %704 = math.tanh %703 : vector<16x128xf32>
    %705 = arith.mulf %700, %704 : vector<16x128xf32>
    %706 = vector.broadcast %669 : i32 to vector<16x1xi32>
    %707 = arith.cmpi slt, %706, %5 : vector<16x1xi32>
    %708 = vector.shape_cast %707 : vector<16x1xi1> to vector<16x1xi1>
    %709 = vector.broadcast %708 : vector<16x1xi1> to vector<16x128xi1>
    %710 = arith.select %709, %705, %664 : vector<16x128xi1>, vector<16x128xf32>
    %711 = vector.shape_cast %707 : vector<16x1xi1> to vector<16x1xi1>
    %712 = vector.broadcast %711 : vector<16x1xi1> to vector<16x128xi1>
    %713 = arith.select %712, %703, %667 : vector<16x128xi1>, vector<16x128xf32>
    %c8_i32_194 = arith.constant 8 : i32
    %714 = arith.muli %c0_i32_127, %c8_i32_194 : i32
    %c6_i32_195 = arith.constant 6 : i32
    %715 = arith.addi %714, %c6_i32_195 : i32
    %716 = arith.index_cast %715 : i32 to index
    %c0_196 = arith.constant 0 : index
    %c0_197 = arith.constant 0 : index
    %717 = vector.load %arg11[%716, %c0_196, %c0_197] : memref<8x16x512xbf16, #tpu.memory_space<vmem>>, vector<1x16x512xbf16>
    %718 = vector.shape_cast %717 : vector<1x16x512xbf16> to vector<16x512xbf16>
    %719 = arith.extf %718 : vector<16x512xbf16> to vector<16x512xf32>
    %720 = vector.broadcast %435 : vector<1x512xf32> to vector<16x512xf32>
    %721 = arith.addf %719, %720 : vector<16x512xf32>
    %722 = arith.truncf %710 : vector<16x128xf32> to vector<16x128xbf16>
    %c1_198 = arith.constant 1 : index
    %c0_199 = arith.constant 0 : index
    %c0_200 = arith.constant 0 : index
    %723 = vector.load %arg2[%c1_198, %c0_199, %c0_200] : memref<2x128x512xbf16, #tpu.memory_space<vmem>>, vector<1x128x512xbf16>
    %724 = vector.shape_cast %723 : vector<1x128x512xbf16> to vector<128x512xbf16>
    %cst_201 = arith.constant dense<0.000000e+00> : vector<16x512xf32>
    %725 = tpu.matmul %722, %724, %cst_201 {dimension_numbers = #tpu.dot_dimension_numbers<[1], [0], [0], [1], [0, 0, 1, 1], [], []>} : vector<16x128xbf16>, vector<128x512xbf16>, vector<16x512xf32> -> vector<16x512xf32>
    %726 = arith.addf %721, %725 : vector<16x512xf32>
    %727 = vector.extract_strided_slice %726 {offsets = [0, 0], sizes = [16, 128], strides = [1, 1]} : vector<16x512xf32> to vector<16x128xf32>
    %728 = arith.negf %727 : vector<16x128xf32>
    %729 = math.exp %728 : vector<16x128xf32>
    %cst_202 = arith.constant 1.000000e+00 : f32
    %730 = vector.broadcast %cst_202 : f32 to vector<16x128xf32>
    %731 = arith.addf %730, %729 : vector<16x128xf32>
    %732 = arith.divf %730, %731 : vector<16x128xf32>
    %733 = vector.extract_strided_slice %726 {offsets = [0, 128], sizes = [16, 128], strides = [1, 1]} : vector<16x512xf32> to vector<16x128xf32>
    %734 = arith.negf %733 : vector<16x128xf32>
    %735 = math.exp %734 : vector<16x128xf32>
    %cst_203 = arith.constant 1.000000e+00 : f32
    %736 = vector.broadcast %cst_203 : f32 to vector<16x128xf32>
    %737 = arith.addf %736, %735 : vector<16x128xf32>
    %738 = arith.divf %736, %737 : vector<16x128xf32>
    %739 = vector.extract_strided_slice %726 {offsets = [0, 256], sizes = [16, 128], strides = [1, 1]} : vector<16x512xf32> to vector<16x128xf32>
    %740 = math.tanh %739 : vector<16x128xf32>
    %741 = vector.extract_strided_slice %726 {offsets = [0, 384], sizes = [16, 128], strides = [1, 1]} : vector<16x512xf32> to vector<16x128xf32>
    %742 = arith.negf %741 : vector<16x128xf32>
    %743 = math.exp %742 : vector<16x128xf32>
    %cst_204 = arith.constant 1.000000e+00 : f32
    %744 = vector.broadcast %cst_204 : f32 to vector<16x128xf32>
    %745 = arith.addf %744, %743 : vector<16x128xf32>
    %746 = arith.divf %744, %745 : vector<16x128xf32>
    %747 = arith.mulf %738, %713 : vector<16x128xf32>
    %748 = arith.mulf %732, %740 : vector<16x128xf32>
    %749 = arith.addf %747, %748 : vector<16x128xf32>
    %750 = math.tanh %749 : vector<16x128xf32>
    %751 = arith.mulf %746, %750 : vector<16x128xf32>
    %752 = vector.broadcast %715 : i32 to vector<16x1xi32>
    %753 = arith.cmpi slt, %752, %5 : vector<16x1xi32>
    %754 = vector.shape_cast %753 : vector<16x1xi1> to vector<16x1xi1>
    %755 = vector.broadcast %754 : vector<16x1xi1> to vector<16x128xi1>
    %756 = arith.select %755, %751, %710 : vector<16x128xi1>, vector<16x128xf32>
    %757 = vector.shape_cast %753 : vector<16x1xi1> to vector<16x1xi1>
    %758 = vector.broadcast %757 : vector<16x1xi1> to vector<16x128xi1>
    %759 = arith.select %758, %749, %713 : vector<16x128xi1>, vector<16x128xf32>
    %c8_i32_205 = arith.constant 8 : i32
    %760 = arith.muli %c0_i32_127, %c8_i32_205 : i32
    %c7_i32_206 = arith.constant 7 : i32
    %761 = arith.addi %760, %c7_i32_206 : i32
    %762 = arith.index_cast %761 : i32 to index
    %c0_207 = arith.constant 0 : index
    %c0_208 = arith.constant 0 : index
    %763 = vector.load %arg11[%762, %c0_207, %c0_208] : memref<8x16x512xbf16, #tpu.memory_space<vmem>>, vector<1x16x512xbf16>
    %764 = vector.shape_cast %763 : vector<1x16x512xbf16> to vector<16x512xbf16>
    %765 = arith.extf %764 : vector<16x512xbf16> to vector<16x512xf32>
    %766 = vector.broadcast %435 : vector<1x512xf32> to vector<16x512xf32>
    %767 = arith.addf %765, %766 : vector<16x512xf32>
    %768 = arith.truncf %756 : vector<16x128xf32> to vector<16x128xbf16>
    %c1_209 = arith.constant 1 : index
    %c0_210 = arith.constant 0 : index
    %c0_211 = arith.constant 0 : index
    %769 = vector.load %arg2[%c1_209, %c0_210, %c0_211] : memref<2x128x512xbf16, #tpu.memory_space<vmem>>, vector<1x128x512xbf16>
    %770 = vector.shape_cast %769 : vector<1x128x512xbf16> to vector<128x512xbf16>
    %cst_212 = arith.constant dense<0.000000e+00> : vector<16x512xf32>
    %771 = tpu.matmul %768, %770, %cst_212 {dimension_numbers = #tpu.dot_dimension_numbers<[1], [0], [0], [1], [0, 0, 1, 1], [], []>} : vector<16x128xbf16>, vector<128x512xbf16>, vector<16x512xf32> -> vector<16x512xf32>
    %772 = arith.addf %767, %771 : vector<16x512xf32>
    %773 = vector.extract_strided_slice %772 {offsets = [0, 0], sizes = [16, 128], strides = [1, 1]} : vector<16x512xf32> to vector<16x128xf32>
    %774 = arith.negf %773 : vector<16x128xf32>
    %775 = math.exp %774 : vector<16x128xf32>
    %cst_213 = arith.constant 1.000000e+00 : f32
    %776 = vector.broadcast %cst_213 : f32 to vector<16x128xf32>
    %777 = arith.addf %776, %775 : vector<16x128xf32>
    %778 = arith.divf %776, %777 : vector<16x128xf32>
    %779 = vector.extract_strided_slice %772 {offsets = [0, 128], sizes = [16, 128], strides = [1, 1]} : vector<16x512xf32> to vector<16x128xf32>
    %780 = arith.negf %779 : vector<16x128xf32>
    %781 = math.exp %780 : vector<16x128xf32>
    %cst_214 = arith.constant 1.000000e+00 : f32
    %782 = vector.broadcast %cst_214 : f32 to vector<16x128xf32>
    %783 = arith.addf %782, %781 : vector<16x128xf32>
    %784 = arith.divf %782, %783 : vector<16x128xf32>
    %785 = vector.extract_strided_slice %772 {offsets = [0, 256], sizes = [16, 128], strides = [1, 1]} : vector<16x512xf32> to vector<16x128xf32>
    %786 = math.tanh %785 : vector<16x128xf32>
    %787 = vector.extract_strided_slice %772 {offsets = [0, 384], sizes = [16, 128], strides = [1, 1]} : vector<16x512xf32> to vector<16x128xf32>
    %788 = arith.negf %787 : vector<16x128xf32>
    %789 = math.exp %788 : vector<16x128xf32>
    %cst_215 = arith.constant 1.000000e+00 : f32
    %790 = vector.broadcast %cst_215 : f32 to vector<16x128xf32>
    %791 = arith.addf %790, %789 : vector<16x128xf32>
    %792 = arith.divf %790, %791 : vector<16x128xf32>
    %793 = arith.mulf %784, %759 : vector<16x128xf32>
    %794 = arith.mulf %778, %786 : vector<16x128xf32>
    %795 = arith.addf %793, %794 : vector<16x128xf32>
    %796 = math.tanh %795 : vector<16x128xf32>
    %797 = arith.mulf %792, %796 : vector<16x128xf32>
    %798 = vector.broadcast %761 : i32 to vector<16x1xi32>
    %799 = arith.cmpi slt, %798, %5 : vector<16x1xi32>
    %800 = vector.shape_cast %799 : vector<16x1xi1> to vector<16x1xi1>
    %801 = vector.broadcast %800 : vector<16x1xi1> to vector<16x128xi1>
    %802 = arith.select %801, %797, %756 : vector<16x128xi1>, vector<16x128xf32>
    %803 = vector.shape_cast %799 : vector<16x1xi1> to vector<16x1xi1>
    %804 = vector.broadcast %803 : vector<16x1xi1> to vector<16x128xi1>
    %805 = arith.select %804, %795, %759 : vector<16x128xi1>, vector<16x128xf32>
    %c1_i32_216 = arith.constant 1 : i32
    %806 = vector.extract_strided_slice %805 {offsets = [0, 0], sizes = [8, 128], strides = [1, 1]} : vector<16x128xf32> to vector<8x128xf32>
    %807 = arith.truncf %806 : vector<8x128xf32> to vector<8x128xbf16>
    %808 = vector.extract_strided_slice %805 {offsets = [8, 0], sizes = [8, 128], strides = [1, 1]} : vector<16x128xf32> to vector<8x128xf32>
    %809 = arith.truncf %808 : vector<8x128xf32> to vector<8x128xbf16>
    %c0_217 = arith.constant 0 : index
    %c0_218 = arith.constant 0 : index
    %810 = vector.load %arg4[%c0_217, %c0_218] : memref<128x128xbf16, #tpu.memory_space<vmem>>, vector<128x128xbf16>
    %cst_219 = arith.constant dense<0.000000e+00> : vector<8x128xf32>
    %811 = tpu.matmul %807, %810, %cst_219 {dimension_numbers = #tpu.dot_dimension_numbers<[1], [0], [0], [1], [0, 0, 1, 1], [], []>} : vector<8x128xbf16>, vector<128x128xbf16>, vector<8x128xf32> -> vector<8x128xf32>
    %c0_220 = arith.constant 0 : index
    %c0_221 = arith.constant 0 : index
    %812 = vector.load %arg5[%c0_220, %c0_221] : memref<128x128xbf16, #tpu.memory_space<vmem>>, vector<128x128xbf16>
    %cst_222 = arith.constant dense<0.000000e+00> : vector<8x128xf32>
    %813 = tpu.matmul %809, %812, %cst_222 {dimension_numbers = #tpu.dot_dimension_numbers<[1], [0], [0], [1], [0, 0, 1, 1], [], []>} : vector<8x128xbf16>, vector<128x128xbf16>, vector<8x128xf32> -> vector<8x128xf32>
    %814 = arith.addf %811, %813 : vector<8x128xf32>
    %c0_223 = arith.constant 0 : index
    %c0_224 = arith.constant 0 : index
    %815 = vector.load %arg6[%c0_223, %c0_224] : memref<1x128xf32, #tpu.memory_space<vmem>>, vector<1x128xf32>
    %816 = vector.broadcast %815 : vector<1x128xf32> to vector<8x128xf32>
    %817 = arith.addf %814, %816 : vector<8x128xf32>
    %cst_225 = arith.constant 0.000000e+00 : f32
    %818 = vector.broadcast %cst_225 : f32 to vector<8x128xf32>
    %819 = arith.maximumf %817, %818 : vector<8x128xf32>
    %820 = arith.truncf %819 : vector<8x128xf32> to vector<8x128xbf16>
    %c0_226 = arith.constant 0 : index
    %c0_227 = arith.constant 0 : index
    %821 = vector.load %arg7[%c0_226, %c0_227] : memref<128x128xbf16, #tpu.memory_space<vmem>>, vector<128x128xbf16>
    %cst_228 = arith.constant dense<0.000000e+00> : vector<8x128xf32>
    %822 = tpu.matmul %820, %821, %cst_228 {dimension_numbers = #tpu.dot_dimension_numbers<[1], [0], [0], [1], [0, 0, 1, 1], [], []>} : vector<8x128xbf16>, vector<128x128xbf16>, vector<8x128xf32> -> vector<8x128xf32>
    %c0_229 = arith.constant 0 : index
    %c0_230 = arith.constant 0 : index
    %823 = vector.load %arg8[%c0_229, %c0_230] : memref<1x128xf32, #tpu.memory_space<vmem>>, vector<1x128xf32>
    %824 = vector.broadcast %823 : vector<1x128xf32> to vector<8x128xf32>
    %825 = arith.addf %822, %824 : vector<8x128xf32>
    %c0_231 = arith.constant 0 : index
    %c0_232 = arith.constant 0 : index
    %826 = vector.load %arg9[%c0_231, %c0_232] : memref<8x128xf32, #tpu.memory_space<vmem>>, vector<8x128xf32>
    tpu.vector_store %arg9[%c0_231, %c0_232], %825 {strides = array<i32>} : memref<8x128xf32, #tpu.memory_space<vmem>>, vector<8x128xf32>,
    return
  }
}

</mosaic_0001>

<llo_original>
// kernel: uni_lstm_forward_pallas.1
$region0: #{uni_lstm_forward_pallas.1}
  #allocation0 [shape = 'u32[]', space=smem, size = 0x4, offset = 0x4, fixed_abs, tag = 'smem constant byte address 0x4 - core index']
  #allocation1 [shape = 'u32[144,128]{1,0:T(1,128)}', space=vmem, size = 0x12000, scoped, tag = 'internal scratch']
  #allocation2 [shape = 'bf16[8,16,128]{2,1,0:T(8,128)(2,1)}', space=vmem, size = 0x8000, scoped, tag = 'scratch operand']
  #allocation3 [shape = 'bf16[8,16,512]{2,1,0:T(8,128)(2,1)}', space=vmem, size = 0x20000, scoped, tag = 'scratch operand']
  %s0 = inlined_call_operand.vmem [shape: bf16[8,16,128], index: 0, kind: input, shape index: {}]
  %s1 = inlined_call_operand.vmem [shape: bf16[2,128,512], index: 1, kind: input, shape index: {}]
  %s2 = inlined_call_operand.vmem [shape: bf16[2,128,512], index: 2, kind: input, shape index: {}]
  %s3 = inlined_call_operand.vmem [shape: f32[2,1,512], index: 3, kind: input, shape index: {}]
  %s4 = inlined_call_operand.vmem [shape: bf16[128,128], index: 4, kind: input, shape index: {}]
  %s5 = inlined_call_operand.vmem [shape: bf16[128,128], index: 5, kind: input, shape index: {}]
  %s6 = inlined_call_operand.vmem [shape: f32[1,128], index: 6, kind: input, shape index: {}]
  %s7 = inlined_call_operand.vmem [shape: bf16[128,128], index: 7, kind: input, shape index: {}]
  %s8 = inlined_call_operand.vmem [shape: f32[1,128], index: 8, kind: input, shape index: {}]
  %s9 = inlined_call_operand.vmem [shape: f32[8,128], index: 9, kind: output, shape index: {}]
  %s10 = sld [smem:[#allocation0]]
  $region46: #{uni_lstm_forward_pallas.1} parent=0
    _
  %s12 = ssub.s32 1, %s10
  %s13 = scalar_select 0, %s12, %s10
  // Predicated region
  $region2: #{uni_lstm_forward_pallas.1} parent=0 // pred_check
    _
  $region3: #{uni_lstm_forward_pallas.1} parent=0 // pred_check_branch
    %15 = sbr.rel (0) target = $region5
  $region4: #{uni_lstm_forward_pallas.1} parent=0 // pred_region
    _
  $region5: #{uni_lstm_forward_pallas.1} parent=0 // pred_fallthru
    _
  // Predicated region
  $region6: #{uni_lstm_forward_pallas.1} parent=0 // pred_check
    _
  $region7: #{uni_lstm_forward_pallas.1} parent=0 // pred_check_branch
    %17 = sbr.rel (0) target = $region9
  $region8: #{uni_lstm_forward_pallas.1} parent=0 // pred_region
    _
  $region9: #{uni_lstm_forward_pallas.1} parent=0 // pred_fallthru
    _
  // Predicated region
  $region10: #{uni_lstm_forward_pallas.1} parent=0 // pred_check
    _
  $region11: #{uni_lstm_forward_pallas.1} parent=0 // pred_check_branch
    %19 = sbr.rel (0) target = $region13
  $region12: #{uni_lstm_forward_pallas.1} parent=0 // pred_region
    _
  $region13: #{uni_lstm_forward_pallas.1} parent=0 // pred_fallthru
    _
  // Predicated region
  $region14: #{uni_lstm_forward_pallas.1} parent=0 // pred_check
    _
  $region15: #{uni_lstm_forward_pallas.1} parent=0 // pred_check_branch
    %21 = sbr.rel (0) target = $region17
  $region16: #{uni_lstm_forward_pallas.1} parent=0 // pred_region
    _
  $region17: #{uni_lstm_forward_pallas.1} parent=0 // pred_fallthru
    _
  // Predicated region
  $region18: #{uni_lstm_forward_pallas.1} parent=0 // pred_check
    _
  $region19: #{uni_lstm_forward_pallas.1} parent=0 // pred_check_branch
    %23 = sbr.rel (0) target = $region21
  $region20: #{uni_lstm_forward_pallas.1} parent=0 // pred_region
    _
  $region21: #{uni_lstm_forward_pallas.1} parent=0 // pred_fallthru
    _
  // Predicated region
  $region22: #{uni_lstm_forward_pallas.1} parent=0 // pred_check
    _
  $region23: #{uni_lstm_forward_pallas.1} parent=0 // pred_check_branch
    %25 = sbr.rel (0) target = $region25
  $region24: #{uni_lstm_forward_pallas.1} parent=0 // pred_region
    _
  $region25: #{uni_lstm_forward_pallas.1} parent=0 // pred_fallthru
    _
  // Predicated region
  $region26: #{uni_lstm_forward_pallas.1} parent=0 // pred_check
    _
  $region27: #{uni_lstm_forward_pallas.1} parent=0 // pred_check_branch
    %27 = sbr.rel (0) target = $region29
  $region28: #{uni_lstm_forward_pallas.1} parent=0 // pred_region
    _
  $region29: #{uni_lstm_forward_pallas.1} parent=0 // pred_fallthru
    _
  // Predicated region
  $region30: #{uni_lstm_forward_pallas.1} parent=0 // pred_check
    _
  $region31: #{uni_lstm_forward_pallas.1} parent=0 // pred_check_branch
    %29 = sbr.rel (0) target = $region33
  $region32: #{uni_lstm_forward_pallas.1} parent=0 // pred_region
    _
  $region33: #{uni_lstm_forward_pallas.1} parent=0 // pred_fallthru
    _
  // Predicated region
  $region34: #{uni_lstm_forward_pallas.1} parent=0 // pred_check
    _
  $region35: #{uni_lstm_forward_pallas.1} parent=0 // pred_check_branch
    %31 = sbr.rel (0) target = $region37
  $region36: #{uni_lstm_forward_pallas.1} parent=0 // pred_region
    _
  $region37: #{uni_lstm_forward_pallas.1} parent=0 // pred_fallthru
    _
  %v33 = vlaneseq
  %v34 = vshrl.u32 %v33, 7
  %v35 = vadd.s32 %v34, 8
  %vm36 = vcmp.lt.s32.totalorder %v34, 8
  %vm37 = vcmp.lt.s32.totalorder %v35, 8
  %v38 = vsel %vm36, 8, 6
  %v39 = vsel %vm37, 8, 6
  %v40 = vld [vmem:[%s0] sm:$0xf]
  %v41 = vld [vmem:[%s0 + $0x4] sm:$0xf]
  %v42 = vld [vmem:[%s0 + $0x8] sm:$0xf]
  %v43 = vld [vmem:[%s0 + $0xc] sm:$0xf]
  %v44 = vld [vmem:[%s0 + $0x10] sm:$0xf]
  %v45 = vld [vmem:[%s0 + $0x14] sm:$0xf]
  %v46 = vld [vmem:[%s0 + $0x18] sm:$0xf]
  %v47 = vld [vmem:[%s0 + $0x1c] sm:$0xf]
  %v48 = vld [vmem:[%s0 + $0x20] sm:$0xf]
  %v49 = vld [vmem:[%s0 + $0x24] sm:$0xf]
  %v50 = vld [vmem:[%s0 + $0x28] sm:$0xf]
  %v51 = vld [vmem:[%s0 + $0x2c] sm:$0xf]
  %v52 = vld [vmem:[%s0 + $0x30] sm:$0xf]
  %v53 = vld [vmem:[%s0 + $0x34] sm:$0xf]
  %v54 = vld [vmem:[%s0 + $0x38] sm:$0xf]
  %v55 = vld [vmem:[%s0 + $0x3c] sm:$0xf]
  %v56 = vld [vmem:[%s1] sm:$0xff]
  %v57 = vld [vmem:[%s1 + $0x8] sm:$0xff]
  %v58 = vld [vmem:[%s1 + $0x10] sm:$0xff]
  %v59 = vld [vmem:[%s1 + $0x18] sm:$0xff]
  %v60 = vld [vmem:[%s1 + $0x20] sm:$0xff]
  %v61 = vld [vmem:[%s1 + $0x28] sm:$0xff]
  %v62 = vld [vmem:[%s1 + $0x30] sm:$0xff]
  %v63 = vld [vmem:[%s1 + $0x38] sm:$0xff]
  %v64 = vld [vmem:[%s1 + $0x40] sm:$0xff]
  %v65 = vld [vmem:[%s1 + $0x48] sm:$0xff]
  %v66 = vld [vmem:[%s1 + $0x50] sm:$0xff]
  %v67 = vld [vmem:[%s1 + $0x58] sm:$0xff]
  %v68 = vld [vmem:[%s1 + $0x60] sm:$0xff]
  %v69 = vld [vmem:[%s1 + $0x68] sm:$0xff]
  %v70 = vld [vmem:[%s1 + $0x70] sm:$0xff]
  %v71 = vld [vmem:[%s1 + $0x78] sm:$0xff]
  %v72 = vld [vmem:[%s1 + $0x80] sm:$0xff]
  %v73 = vld [vmem:[%s1 + $0x88] sm:$0xff]
  %v74 = vld [vmem:[%s1 + $0x90] sm:$0xff]
  %v75 = vld [vmem:[%s1 + $0x98] sm:$0xff]
  %v76 = vld [vmem:[%s1 + $0xa0] sm:$0xff]
  %v77 = vld [vmem:[%s1 + $0xa8] sm:$0xff]
  %v78 = vld [vmem:[%s1 + $0xb0] sm:$0xff]
  %v79 = vld [vmem:[%s1 + $0xb8] sm:$0xff]
  %v80 = vld [vmem:[%s1 + $0xc0] sm:$0xff]
  %v81 = vld [vmem:[%s1 + $0xc8] sm:$0xff]
  %v82 = vld [vmem:[%s1 + $0xd0] sm:$0xff]
  %v83 = vld [vmem:[%s1 + $0xd8] sm:$0xff]
  %v84 = vld [vmem:[%s1 + $0xe0] sm:$0xff]
  %v85 = vld [vmem:[%s1 + $0xe8] sm:$0xff]
  %v86 = vld [vmem:[%s1 + $0xf0] sm:$0xff]
  %v87 = vld [vmem:[%s1 + $0xf8] sm:$0xff]
  %v104 = vunpack.c.l.b16 %v40
  %v105 = vunpack.c.l.b16 %v41
  %v106 = vunpack.c.l.b16 %v42
  %v107 = vunpack.c.l.b16 %v43
  %v108 = vunpack.c.l.b16 %v44
  %v109 = vunpack.c.l.b16 %v45
  %v110 = vunpack.c.l.b16 %v46
  %v111 = vunpack.c.l.b16 %v47
  %v112 = vunpack.c.l.b16 %v48
  %v113 = vunpack.c.l.b16 %v49
  %v114 = vunpack.c.l.b16 %v50
  %v115 = vunpack.c.l.b16 %v51
  %v116 = vunpack.c.l.b16 %v52
  %v117 = vunpack.c.l.b16 %v53
  %v118 = vunpack.c.l.b16 %v54
  %v119 = vunpack.c.l.b16 %v55
  %v120 = vpack.c.b16 %v105, %v104
  %v121 = vpack.c.b16 %v107, %v106
  %v122 = vpack.c.b16 %v109, %v108
  %v123 = vpack.c.b16 %v111, %v110
  %v124 = vpack.c.b16 %v113, %v112
  %v125 = vpack.c.b16 %v115, %v114
  %v126 = vpack.c.b16 %v117, %v116
  %v127 = vpack.c.b16 %v119, %v118
  %v168 = vunpack.c.l.b16 %v56
  %v169 = vunpack.c.h.b16 %v56
  %v170 = vunpack.c.l.b16 %v57
  %v171 = vunpack.c.h.b16 %v57
  %v172 = vunpack.c.l.b16 %v58
  %v173 = vunpack.c.h.b16 %v58
  %v174 = vunpack.c.l.b16 %v59
  %v175 = vunpack.c.h.b16 %v59
  %v176 = vunpack.c.l.b16 %v60
  %v177 = vunpack.c.h.b16 %v60
  %v178 = vunpack.c.l.b16 %v61
  %v179 = vunpack.c.h.b16 %v61
  %v180 = vunpack.c.l.b16 %v62
  %v181 = vunpack.c.h.b16 %v62
  %v182 = vunpack.c.l.b16 %v63
  %v183 = vunpack.c.h.b16 %v63
  %v184 = vunpack.c.l.b16 %v64
  %v185 = vunpack.c.h.b16 %v64
  %v186 = vunpack.c.l.b16 %v65
  %v187 = vunpack.c.h.b16 %v65
  %v188 = vunpack.c.l.b16 %v66
  %v189 = vunpack.c.h.b16 %v66
  %v190 = vunpack.c.l.b16 %v67
  %v191 = vunpack.c.h.b16 %v67
  %v192 = vunpack.c.l.b16 %v68
  %v193 = vunpack.c.h.b16 %v68
  %v194 = vunpack.c.l.b16 %v69
  %v195 = vunpack.c.h.b16 %v69
  %v196 = vunpack.c.l.b16 %v70
  %v197 = vunpack.c.h.b16 %v70
  %v198 = vunpack.c.l.b16 %v71
  %v199 = vunpack.c.h.b16 %v71
  %v200 = vunpack.c.l.b16 %v72
  %v201 = vunpack.c.h.b16 %v72
  %v202 = vunpack.c.l.b16 %v73
  %v203 = vunpack.c.h.b16 %v73
  %v204 = vunpack.c.l.b16 %v74
  %v205 = vunpack.c.h.b16 %v74
  %v206 = vunpack.c.l.b16 %v75
  %v207 = vunpack.c.h.b16 %v75
  %v208 = vunpack.c.l.b16 %v76
  %v209 = vunpack.c.h.b16 %v76
  %v210 = vunpack.c.l.b16 %v77
  %v211 = vunpack.c.h.b16 %v77
  %v212 = vunpack.c.l.b16 %v78
  %v213 = vunpack.c.h.b16 %v78
  %v214 = vunpack.c.l.b16 %v79
  %v215 = vunpack.c.h.b16 %v79
  %v216 = vunpack.c.l.b16 %v80
  %v217 = vunpack.c.h.b16 %v80
  %v218 = vunpack.c.l.b16 %v81
  %v219 = vunpack.c.h.b16 %v81
  %v220 = vunpack.c.l.b16 %v82
  %v221 = vunpack.c.h.b16 %v82
  %v222 = vunpack.c.l.b16 %v83
  %v223 = vunpack.c.h.b16 %v83
  %v224 = vunpack.c.l.b16 %v84
  %v225 = vunpack.c.h.b16 %v84
  %v226 = vunpack.c.l.b16 %v85
  %v227 = vunpack.c.h.b16 %v85
  %v228 = vunpack.c.l.b16 %v86
  %v229 = vunpack.c.h.b16 %v86
  %v230 = vunpack.c.l.b16 %v87
  %v231 = vunpack.c.h.b16 %v87
  %v232 = vpack.c.b16 %v172, %v168
  %v233 = vpack.c.b16 %v173, %v169
  %v234 = vpack.c.b16 %v174, %v170
  %v235 = vpack.c.b16 %v175, %v171
  %v236 = vpack.c.b16 %v180, %v176
  %v237 = vpack.c.b16 %v181, %v177
  %v238 = vpack.c.b16 %v182, %v178
  %v239 = vpack.c.b16 %v183, %v179
  %v240 = vpack.c.b16 %v188, %v184
  %v241 = vpack.c.b16 %v189, %v185
  %v242 = vpack.c.b16 %v190, %v186
  %v243 = vpack.c.b16 %v191, %v187
  %v244 = vpack.c.b16 %v196, %v192
  %v245 = vpack.c.b16 %v197, %v193
  %v246 = vpack.c.b16 %v198, %v194
  %v247 = vpack.c.b16 %v199, %v195
  %v248 = vpack.c.b16 %v204, %v200
  %v249 = vpack.c.b16 %v205, %v201
  %v250 = vpack.c.b16 %v206, %v202
  %v251 = vpack.c.b16 %v207, %v203
  %v252 = vpack.c.b16 %v212, %v208
  %v253 = vpack.c.b16 %v213, %v209
  %v254 = vpack.c.b16 %v214, %v210
  %v255 = vpack.c.b16 %v215, %v211
  %v256 = vpack.c.b16 %v220, %v216
  %v257 = vpack.c.b16 %v221, %v217
  %v258 = vpack.c.b16 %v222, %v218
  %v259 = vpack.c.b16 %v223, %v219
  %v260 = vpack.c.b16 %v228, %v224
  %v261 = vpack.c.b16 %v229, %v225
  %v262 = vpack.c.b16 %v230, %v226
  %v263 = vpack.c.b16 %v231, %v227
  %296 = vmatprep.subr.bf16.mxu0 %v261
  %297 = vmatpush1.bf16.msra.mxu0 %v260
  %298 = vmatprep.subr.bf16.mxu0 %v257
  %299 = vmatpush1.bf16.msra.mxu0 %v256
  %300 = vmatprep.subr.bf16.mxu0 %v253
  %301 = vmatpush1.bf16.msra.mxu0 %v252
  %302 = vmatprep.subr.bf16.mxu0 %v249
  %303 = vmatpush1.bf16.msra.mxu0 %v248
  %304 = vmatprep.subr.bf16.mxu0 %v245
  %305 = vmatpush1.bf16.msra.mxu0 %v244
  %306 = vmatprep.subr.bf16.mxu0 %v241
  %307 = vmatpush1.bf16.msra.mxu0 %v240
  %308 = vmatprep.subr.bf16.mxu0 %v237
  %309 = vmatpush1.bf16.msra.mxu0 %v236
  %310 = vmatprep.subr.bf16.mxu0 %v233
  %311 = vmatpush1.bf16.msra.mxu0 %v232
  %312 = vmatprep.subr.bf16.mxu0 0
  %313 = vmatpush2.bf16.msra.mxu0 0
  %314 = vmatprep.subr.bf16.mxu0 0
  %315 = vmatpush2.bf16.msra.mxu0 0
  %316 = vmatprep.subr.bf16.mxu0 0
  %317 = vmatpush2.bf16.msra.mxu0 0
  %318 = vmatprep.subr.bf16.mxu0 0
  %319 = vmatpush2.bf16.msra.mxu0 0
  %320 = vmatprep.subr.bf16.mxu0 0
  %321 = vmatpush2.bf16.msra.mxu0 0
  %322 = vmatprep.subr.bf16.mxu0 0
  %323 = vmatpush2.bf16.msra.mxu0 0
  %324 = vmatprep.subr.bf16.mxu0 0
  %325 = vmatpush2.bf16.msra.mxu0 0
  %326 = vmatprep.subr.bf16.mxu0 0
  %327 = vmatpush2.bf16.msra.mxu0 0
  %328 = vmatprep.mubr.bf16.mxu0 0
  %329 = vmatmul.mubr.bf16.gmra.mxu0 %v120
  %v330 = vpop.f32.mrf.mxu0
  %v331 = vadd.f32 0.0, %v330
  %v332 = vpop.f32.mrf.mxu0
  %v333 = vadd.f32 0.0, %v332
  %v334 = vpop.f32.mrf.mxu0
  %v335 = vadd.f32 0.0, %v334
  %v336 = vpop.f32.mrf.mxu0
  %v337 = vadd.f32 0.0, %v336
  %338 = vmatprep.mubr.bf16.mxu0 0
  %339 = vmatmul.mubr.bf16.gmra.mxu0 %v121
  %v340 = vpop.f32.mrf.mxu0
  %v341 = vadd.f32 0.0, %v340
  %v342 = vpop.f32.mrf.mxu0
  %v343 = vadd.f32 0.0, %v342
  %v344 = vpop.f32.mrf.mxu0
  %v345 = vadd.f32 0.0, %v344
  %v346 = vpop.f32.mrf.mxu0
  %v347 = vadd.f32 0.0, %v346
  %348 = vmatprep.mubr.bf16.mxu0 0
  %349 = vmatmul.mubr.bf16.gmra.mxu0 %v122
  %v350 = vpop.f32.mrf.mxu0
  %v351 = vadd.f32 0.0, %v350
  %v352 = vpop.f32.mrf.mxu0
  %v353 = vadd.f32 0.0, %v352
  %v354 = vpop.f32.mrf.mxu0
  %v355 = vadd.f32 0.0, %v354
  %v356 = vpop.f32.mrf.mxu0
  %v357 = vadd.f32 0.0, %v356
  %358 = vmatprep.mubr.bf16.mxu0 0
  %359 = vmatmul.mubr.bf16.gmra.mxu0 %v123
  %v360 = vpop.f32.mrf.mxu0
  %v361 = vadd.f32 0.0, %v360
  %v362 = vpop.f32.mrf.mxu0
  %v363 = vadd.f32 0.0, %v362
  %v364 = vpop.f32.mrf.mxu0
  %v365 = vadd.f32 0.0, %v364
  %v366 = vpop.f32.mrf.mxu0
  %v367 = vadd.f32 0.0, %v366
  %368 = vmatprep.mubr.bf16.mxu0 0
  %369 = vmatmul.mubr.bf16.gmra.mxu0 %v124
  %v370 = vpop.f32.mrf.mxu0
  %v371 = vadd.f32 0.0, %v370
  %v372 = vpop.f32.mrf.mxu0
  %v373 = vadd.f32 0.0, %v372
  %v374 = vpop.f32.mrf.mxu0
  %v375 = vadd.f32 0.0, %v374
  %v376 = vpop.f32.mrf.mxu0
  %v377 = vadd.f32 0.0, %v376
  %378 = vmatprep.mubr.bf16.mxu0 0
  %379 = vmatmul.mubr.bf16.gmra.mxu0 %v125
  %v380 = vpop.f32.mrf.mxu0
  %v381 = vadd.f32 0.0, %v380
  %v382 = vpop.f32.mrf.mxu0
  %v383 = vadd.f32 0.0, %v382
  %v384 = vpop.f32.mrf.mxu0
  %v385 = vadd.f32 0.0, %v384
  %v386 = vpop.f32.mrf.mxu0
  %v387 = vadd.f32 0.0, %v386
  %388 = vmatprep.mubr.bf16.mxu0 0
  %389 = vmatmul.mubr.bf16.gmra.mxu0 %v126
  %v390 = vpop.f32.mrf.mxu0
  %v391 = vadd.f32 0.0, %v390
  %v392 = vpop.f32.mrf.mxu0
  %v393 = vadd.f32 0.0, %v392
  %v394 = vpop.f32.mrf.mxu0
  %v395 = vadd.f32 0.0, %v394
  %v396 = vpop.f32.mrf.mxu0
  %v397 = vadd.f32 0.0, %v396
  %398 = vmatprep.mubr.bf16.mxu0 0
  %399 = vmatmul.mubr.bf16.gmra.mxu0 %v127
  %v400 = vpop.f32.mrf.mxu0
  %v401 = vadd.f32 0.0, %v400
  %v402 = vpop.f32.mrf.mxu0
  %v403 = vadd.f32 0.0, %v402
  %v404 = vpop.f32.mrf.mxu0
  %v405 = vadd.f32 0.0, %v404
  %v406 = vpop.f32.mrf.mxu0
  %v407 = vadd.f32 0.0, %v406
  %408 = vdwg.mxu0
  %409 = vmatprep.subr.bf16.mxu0 %v263
  %410 = vmatpush1.bf16.msra.mxu0 %v262
  %411 = vmatprep.subr.bf16.mxu0 %v259
  %412 = vmatpush1.bf16.msra.mxu0 %v258
  %413 = vmatprep.subr.bf16.mxu0 %v255
  %414 = vmatpush1.bf16.msra.mxu0 %v254
  %415 = vmatprep.subr.bf16.mxu0 %v251
  %416 = vmatpush1.bf16.msra.mxu0 %v250
  %417 = vmatprep.subr.bf16.mxu0 %v247
  %418 = vmatpush1.bf16.msra.mxu0 %v246
  %419 = vmatprep.subr.bf16.mxu0 %v243
  %420 = vmatpush1.bf16.msra.mxu0 %v242
  %421 = vmatprep.subr.bf16.mxu0 %v239
  %422 = vmatpush1.bf16.msra.mxu0 %v238
  %423 = vmatprep.subr.bf16.mxu0 %v235
  %424 = vmatpush1.bf16.msra.mxu0 %v234
  %425 = vmatprep.subr.bf16.mxu0 0
  %426 = vmatpush2.bf16.msra.mxu0 0
  %427 = vmatprep.subr.bf16.mxu0 0
  %428 = vmatpush2.bf16.msra.mxu0 0
  %429 = vmatprep.subr.bf16.mxu0 0
  %430 = vmatpush2.bf16.msra.mxu0 0
  %431 = vmatprep.subr.bf16.mxu0 0
  %432 = vmatpush2.bf16.msra.mxu0 0
  %433 = vmatprep.subr.bf16.mxu0 0
  %434 = vmatpush2.bf16.msra.mxu0 0
  %435 = vmatprep.subr.bf16.mxu0 0
  %436 = vmatpush2.bf16.msra.mxu0 0
  %437 = vmatprep.subr.bf16.mxu0 0
  %438 = vmatpush2.bf16.msra.mxu0 0
  %439 = vmatprep.subr.bf16.mxu0 0
  %440 = vmatpush2.bf16.msra.mxu0 0
  %441 = vmatprep.mubr.bf16.mxu0 0
  %442 = vmatmul.mubr.bf16.gmra.mxu0 %v120
  %v443 = vpop.f32.mrf.mxu0
  %v444 = vadd.f32 0.0, %v443
  %v445 = vpop.f32.mrf.mxu0
  %v446 = vadd.f32 0.0, %v445
  %v447 = vpop.f32.mrf.mxu0
  %v448 = vadd.f32 0.0, %v447
  %v449 = vpop.f32.mrf.mxu0
  %v450 = vadd.f32 0.0, %v449
  %451 = vmatprep.mubr.bf16.mxu0 0
  %452 = vmatmul.mubr.bf16.gmra.mxu0 %v121
  %v453 = vpop.f32.mrf.mxu0
  %v454 = vadd.f32 0.0, %v453
  %v455 = vpop.f32.mrf.mxu0
  %v456 = vadd.f32 0.0, %v455
  %v457 = vpop.f32.mrf.mxu0
  %v458 = vadd.f32 0.0, %v457
  %v459 = vpop.f32.mrf.mxu0
  %v460 = vadd.f32 0.0, %v459
  %461 = vmatprep.mubr.bf16.mxu0 0
  %462 = vmatmul.mubr.bf16.gmra.mxu0 %v122
  %v463 = vpop.f32.mrf.mxu0
  %v464 = vadd.f32 0.0, %v463
  %v465 = vpop.f32.mrf.mxu0
  %v466 = vadd.f32 0.0, %v465
  %v467 = vpop.f32.mrf.mxu0
  %v468 = vadd.f32 0.0, %v467
  %v469 = vpop.f32.mrf.mxu0
  %v470 = vadd.f32 0.0, %v469
  %471 = vmatprep.mubr.bf16.mxu0 0
  %472 = vmatmul.mubr.bf16.gmra.mxu0 %v123
  %v473 = vpop.f32.mrf.mxu0
  %v474 = vadd.f32 0.0, %v473
  %v475 = vpop.f32.mrf.mxu0
  %v476 = vadd.f32 0.0, %v475
  %v477 = vpop.f32.mrf.mxu0
  %v478 = vadd.f32 0.0, %v477
  %v479 = vpop.f32.mrf.mxu0
  %v480 = vadd.f32 0.0, %v479
  %481 = vmatprep.mubr.bf16.mxu0 0
  %482 = vmatmul.mubr.bf16.gmra.mxu0 %v124
  %v483 = vpop.f32.mrf.mxu0
  %v484 = vadd.f32 0.0, %v483
  %v485 = vpop.f32.mrf.mxu0
  %v486 = vadd.f32 0.0, %v485
  %v487 = vpop.f32.mrf.mxu0
  %v488 = vadd.f32 0.0, %v487
  %v489 = vpop.f32.mrf.mxu0
  %v490 = vadd.f32 0.0, %v489
  %491 = vmatprep.mubr.bf16.mxu0 0
  %492 = vmatmul.mubr.bf16.gmra.mxu0 %v125
  %v493 = vpop.f32.mrf.mxu0
  %v494 = vadd.f32 0.0, %v493
  %v495 = vpop.f32.mrf.mxu0
  %v496 = vadd.f32 0.0, %v495
  %v497 = vpop.f32.mrf.mxu0
  %v498 = vadd.f32 0.0, %v497
  %v499 = vpop.f32.mrf.mxu0
  %v500 = vadd.f32 0.0, %v499
  %501 = vmatprep.mubr.bf16.mxu0 0
  %502 = vmatmul.mubr.bf16.gmra.mxu0 %v126
  %v503 = vpop.f32.mrf.mxu0
  %v504 = vadd.f32 0.0, %v503
  %v505 = vpop.f32.mrf.mxu0
  %v506 = vadd.f32 0.0, %v505
  %v507 = vpop.f32.mrf.mxu0
  %v508 = vadd.f32 0.0, %v507
  %v509 = vpop.f32.mrf.mxu0
  %v510 = vadd.f32 0.0, %v509
  %511 = vmatprep.mubr.bf16.mxu0 0
  %512 = vmatmul.mubr.bf16.gmra.mxu0 %v127
  %v513 = vpop.f32.mrf.mxu0
  %v514 = vadd.f32 0.0, %v513
  %v515 = vpop.f32.mrf.mxu0
  %v516 = vadd.f32 0.0, %v515
  %v517 = vpop.f32.mrf.mxu0
  %v518 = vadd.f32 0.0, %v517
  %v519 = vpop.f32.mrf.mxu0
  %v520 = vadd.f32 0.0, %v519
  %521 = vdwg.mxu0
  %v522 = vpack.c.bf16 %v335, %v331
  %v523 = vpack.c.bf16 %v337, %v333
  %v524 = vpack.c.bf16 %v448, %v444
  %v525 = vpack.c.bf16 %v450, %v446
  %v526 = vpack.c.bf16 %v345, %v341
  %v527 = vpack.c.bf16 %v347, %v343
  %v528 = vpack.c.bf16 %v458, %v454
  %v529 = vpack.c.bf16 %v460, %v456
  %v530 = vpack.c.bf16 %v355, %v351
  %v531 = vpack.c.bf16 %v357, %v353
  %v532 = vpack.c.bf16 %v468, %v464
  %v533 = vpack.c.bf16 %v470, %v466
  %v534 = vpack.c.bf16 %v365, %v361
  %v535 = vpack.c.bf16 %v367, %v363
  %v536 = vpack.c.bf16 %v478, %v474
  %v537 = vpack.c.bf16 %v480, %v476
  %v538 = vpack.c.bf16 %v375, %v371
  %v539 = vpack.c.bf16 %v377, %v373
  %v540 = vpack.c.bf16 %v488, %v484
  %v541 = vpack.c.bf16 %v490, %v486
  %v542 = vpack.c.bf16 %v385, %v381
  %v543 = vpack.c.bf16 %v387, %v383
  %v544 = vpack.c.bf16 %v498, %v494
  %v545 = vpack.c.bf16 %v500, %v496
  %v546 = vpack.c.bf16 %v395, %v391
  %v547 = vpack.c.bf16 %v397, %v393
  %v548 = vpack.c.bf16 %v508, %v504
  %v549 = vpack.c.bf16 %v510, %v506
  %v550 = vpack.c.bf16 %v405, %v401
  %v551 = vpack.c.bf16 %v407, %v403
  %v552 = vpack.c.bf16 %v518, %v514
  %v553 = vpack.c.bf16 %v520, %v516
  %v586 = vunpack.c.l.b16 %v522
  %v587 = vunpack.c.l.b16 %v523
  %v588 = vunpack.c.l.b16 %v524
  %v589 = vunpack.c.l.b16 %v525
  %v590 = vunpack.c.h.b16 %v522
  %v591 = vunpack.c.h.b16 %v523
  %v592 = vunpack.c.h.b16 %v524
  %v593 = vunpack.c.h.b16 %v525
  %v594 = vunpack.c.l.b16 %v526
  %v595 = vunpack.c.l.b16 %v527
  %v596 = vunpack.c.l.b16 %v528
  %v597 = vunpack.c.l.b16 %v529
  %v598 = vunpack.c.h.b16 %v526
  %v599 = vunpack.c.h.b16 %v527
  %v600 = vunpack.c.h.b16 %v528
  %v601 = vunpack.c.h.b16 %v529
  %v602 = vunpack.c.l.b16 %v530
  %v603 = vunpack.c.l.b16 %v531
  %v604 = vunpack.c.l.b16 %v532
  %v605 = vunpack.c.l.b16 %v533
  %v606 = vunpack.c.h.b16 %v530
  %v607 = vunpack.c.h.b16 %v531
  %v608 = vunpack.c.h.b16 %v532
  %v609 = vunpack.c.h.b16 %v533
  %v610 = vunpack.c.l.b16 %v534
  %v611 = vunpack.c.l.b16 %v535
  %v612 = vunpack.c.l.b16 %v536
  %v613 = vunpack.c.l.b16 %v537
  %v614 = vunpack.c.h.b16 %v534
  %v615 = vunpack.c.h.b16 %v535
  %v616 = vunpack.c.h.b16 %v536
  %v617 = vunpack.c.h.b16 %v537
  %v618 = vunpack.c.l.b16 %v538
  %v619 = vunpack.c.l.b16 %v539
  %v620 = vunpack.c.l.b16 %v540
  %v621 = vunpack.c.l.b16 %v541
  %v622 = vunpack.c.h.b16 %v538
  %v623 = vunpack.c.h.b16 %v539
  %v624 = vunpack.c.h.b16 %v540
  %v625 = vunpack.c.h.b16 %v541
  %v626 = vunpack.c.l.b16 %v542
  %v627 = vunpack.c.l.b16 %v543
  %v628 = vunpack.c.l.b16 %v544
  %v629 = vunpack.c.l.b16 %v545
  %v630 = vunpack.c.h.b16 %v542
  %v631 = vunpack.c.h.b16 %v543
  %v632 = vunpack.c.h.b16 %v544
  %v633 = vunpack.c.h.b16 %v545
  %v634 = vunpack.c.l.b16 %v546
  %v635 = vunpack.c.l.b16 %v547
  %v636 = vunpack.c.l.b16 %v548
  %v637 = vunpack.c.l.b16 %v549
  %v638 = vunpack.c.h.b16 %v546
  %v639 = vunpack.c.h.b16 %v547
  %v640 = vunpack.c.h.b16 %v548
  %v641 = vunpack.c.h.b16 %v549
  %v642 = vunpack.c.l.b16 %v550
  %v643 = vunpack.c.l.b16 %v551
  %v644 = vunpack.c.l.b16 %v552
  %v645 = vunpack.c.l.b16 %v553
  %v646 = vunpack.c.h.b16 %v550
  %v647 = vunpack.c.h.b16 %v551
  %v648 = vunpack.c.h.b16 %v552
  %v649 = vunpack.c.h.b16 %v553
  %v650 = vpack.c.b16 %v587, %v586
  %v651 = vpack.c.b16 %v589, %v588
  %v652 = vpack.c.b16 %v591, %v590
  %v653 = vpack.c.b16 %v593, %v592
  %v654 = vpack.c.b16 %v595, %v594
  %v655 = vpack.c.b16 %v597, %v596
  %v656 = vpack.c.b16 %v599, %v598
  %v657 = vpack.c.b16 %v601, %v600
  %v658 = vpack.c.b16 %v603, %v602
  %v659 = vpack.c.b16 %v605, %v604
  %v660 = vpack.c.b16 %v607, %v606
  %v661 = vpack.c.b16 %v609, %v608
  %v662 = vpack.c.b16 %v611, %v610
  %v663 = vpack.c.b16 %v613, %v612
  %v664 = vpack.c.b16 %v615, %v614
  %v665 = vpack.c.b16 %v617, %v616
  %v666 = vpack.c.b16 %v619, %v618
  %v667 = vpack.c.b16 %v621, %v620
  %v668 = vpack.c.b16 %v623, %v622
  %v669 = vpack.c.b16 %v625, %v624
  %v670 = vpack.c.b16 %v627, %v626
  %v671 = vpack.c.b16 %v629, %v628
  %v672 = vpack.c.b16 %v631, %v630
  %v673 = vpack.c.b16 %v633, %v632
  %v674 = vpack.c.b16 %v635, %v634
  %v675 = vpack.c.b16 %v637, %v636
  %v676 = vpack.c.b16 %v639, %v638
  %v677 = vpack.c.b16 %v641, %v640
  %v678 = vpack.c.b16 %v643, %v642
  %v679 = vpack.c.b16 %v645, %v644
  %v680 = vpack.c.b16 %v647, %v646
  %v681 = vpack.c.b16 %v649, %v648
  %714 = vst [vmem:[#allocation3] sm:$0xff] %v650
  %715 = vst [vmem:[#allocation3 + $0x8] sm:$0xff] %v651
  %716 = vst [vmem:[#allocation3 + $0x10] sm:$0xff] %v652
  %717 = vst [vmem:[#allocation3 + $0x18] sm:$0xff] %v653
  %718 = vst [vmem:[#allocation3 + $0x20] sm:$0xff] %v654
  %719 = vst [vmem:[#allocation3 + $0x28] sm:$0xff] %v655
  %720 = vst [vmem:[#allocation3 + $0x30] sm:$0xff] %v656
  %721 = vst [vmem:[#allocation3 + $0x38] sm:$0xff] %v657
  %722 = vst [vmem:[#allocation3 + $0x40] sm:$0xff] %v658
  %723 = vst [vmem:[#allocation3 + $0x48] sm:$0xff] %v659
  %724 = vst [vmem:[#allocation3 + $0x50] sm:$0xff] %v660
  %725 = vst [vmem:[#allocation3 + $0x58] sm:$0xff] %v661
  %726 = vst [vmem:[#allocation3 + $0x60] sm:$0xff] %v662
  %727 = vst [vmem:[#allocation3 + $0x68] sm:$0xff] %v663
  %728 = vst [vmem:[#allocation3 + $0x70] sm:$0xff] %v664
  %729 = vst [vmem:[#allocation3 + $0x78] sm:$0xff] %v665
  %730 = vst [vmem:[#allocation3 + $0x80] sm:$0xff] %v666
  %731 = vst [vmem:[#allocation3 + $0x88] sm:$0xff] %v667
  %732 = vst [vmem:[#allocation3 + $0x90] sm:$0xff] %v668
  %733 = vst [vmem:[#allocation3 + $0x98] sm:$0xff] %v669
  %734 = vst [vmem:[#allocation3 + $0xa0] sm:$0xff] %v670
  %735 = vst [vmem:[#allocation3 + $0xa8] sm:$0xff] %v671
  %736 = vst [vmem:[#allocation3 + $0xb0] sm:$0xff] %v672
  %737 = vst [vmem:[#allocation3 + $0xb8] sm:$0xff] %v673
  %738 = vst [vmem:[#allocation3 + $0xc0] sm:$0xff] %v674
  %739 = vst [vmem:[#allocation3 + $0xc8] sm:$0xff] %v675
  %740 = vst [vmem:[#allocation3 + $0xd0] sm:$0xff] %v676
  %741 = vst [vmem:[#allocation3 + $0xd8] sm:$0xff] %v677
  %742 = vst [vmem:[#allocation3 + $0xe0] sm:$0xff] %v678
  %743 = vst [vmem:[#allocation3 + $0xe8] sm:$0xff] %v679
  %744 = vst [vmem:[#allocation3 + $0xf0] sm:$0xff] %v680
  %745 = vst [vmem:[#allocation3 + $0xf8] sm:$0xff] %v681
  %v746 = vld [vmem:[%s3] sm:$0xf]
  %v747 = vld [vmem:[#allocation3] sm:$0xff]
  %v748 = vld [vmem:[#allocation3 + $0x8] sm:$0xff]
  %v749 = vld [vmem:[#allocation3 + $0x10] sm:$0xff]
  %v750 = vld [vmem:[#allocation3 + $0x18] sm:$0xff]
  %v751 = vunpack.c.l.bf16 %v747
  %v752 = vunpack.c.h.bf16 %v747
  %v753 = vunpack.c.l.bf16 %v748
  %v754 = vunpack.c.h.bf16 %v748
  %v755 = vunpack.c.l.bf16 %v749
  %v756 = vunpack.c.h.bf16 %v749
  %v757 = vunpack.c.l.bf16 %v750
  %v758 = vunpack.c.h.bf16 %v750
  %v760 = vlaneseq
  %v761 = vshrl.u32 %v760, 7
  %v762 = vsub.s32 0, %v761
  %v763 = vrot.slane %v746, %v762
  %v764 = vlaneseq
  %v765 = vshrl.u32 %v764, 7
  %v766 = vsub.s32 1, %v765
  %v767 = vrot.slane %v746, %v766
  %v768 = vlaneseq
  %v769 = vshrl.u32 %v768, 7
  %v770 = vsub.s32 2, %v769
  %v771 = vrot.slane %v746, %v770
  %v772 = vlaneseq
  %v773 = vshrl.u32 %v772, 7
  %v774 = vsub.s32 3, %v773
  %v775 = vrot.slane %v746, %v774
  %v780 = vadd.f32 %v751, %v763
  %v781 = vadd.f32 %v752, %v767
  %v782 = vadd.f32 %v753, %v771
  %v783 = vadd.f32 %v754, %v775
  %v784 = vadd.f32 %v755, %v763
  %v785 = vadd.f32 %v756, %v767
  %v786 = vadd.f32 %v757, %v771
  %v787 = vadd.f32 %v758, %v775
  %v788 = vld [vmem:[%s2] sm:$0xff]
  %v789 = vld [vmem:[%s2 + $0x8] sm:$0xff]
  %v790 = vld [vmem:[%s2 + $0x10] sm:$0xff]
  %v791 = vld [vmem:[%s2 + $0x18] sm:$0xff]
  %v792 = vld [vmem:[%s2 + $0x20] sm:$0xff]
  %v793 = vld [vmem:[%s2 + $0x28] sm:$0xff]
  %v794 = vld [vmem:[%s2 + $0x30] sm:$0xff]
  %v795 = vld [vmem:[%s2 + $0x38] sm:$0xff]
  %v796 = vld [vmem:[%s2 + $0x40] sm:$0xff]
  %v797 = vld [vmem:[%s2 + $0x48] sm:$0xff]
  %v798 = vld [vmem:[%s2 + $0x50] sm:$0xff]
  %v799 = vld [vmem:[%s2 + $0x58] sm:$0xff]
  %v800 = vld [vmem:[%s2 + $0x60] sm:$0xff]
  %v801 = vld [vmem:[%s2 + $0x68] sm:$0xff]
  %v802 = vld [vmem:[%s2 + $0x70] sm:$0xff]
  %v803 = vld [vmem:[%s2 + $0x78] sm:$0xff]
  %v804 = vld [vmem:[%s2 + $0x80] sm:$0xff]
  %v805 = vld [vmem:[%s2 + $0x88] sm:$0xff]
  %v806 = vld [vmem:[%s2 + $0x90] sm:$0xff]
  %v807 = vld [vmem:[%s2 + $0x98] sm:$0xff]
  %v808 = vld [vmem:[%s2 + $0xa0] sm:$0xff]
  %v809 = vld [vmem:[%s2 + $0xa8] sm:$0xff]
  %v810 = vld [vmem:[%s2 + $0xb0] sm:$0xff]
  %v811 = vld [vmem:[%s2 + $0xb8] sm:$0xff]
  %v812 = vld [vmem:[%s2 + $0xc0] sm:$0xff]
  %v813 = vld [vmem:[%s2 + $0xc8] sm:$0xff]
  %v814 = vld [vmem:[%s2 + $0xd0] sm:$0xff]
  %v815 = vld [vmem:[%s2 + $0xd8] sm:$0xff]
  %v816 = vld [vmem:[%s2 + $0xe0] sm:$0xff]
  %v817 = vld [vmem:[%s2 + $0xe8] sm:$0xff]
  %v818 = vld [vmem:[%s2 + $0xf0] sm:$0xff]
  %v819 = vld [vmem:[%s2 + $0xf8] sm:$0xff]
  %v852 = vunpack.c.l.b16 %v788
  %v853 = vunpack.c.h.b16 %v788
  %v854 = vunpack.c.l.b16 %v789
  %v855 = vunpack.c.h.b16 %v789
  %v856 = vunpack.c.l.b16 %v790
  %v857 = vunpack.c.h.b16 %v790
  %v858 = vunpack.c.l.b16 %v791
  %v859 = vunpack.c.h.b16 %v791
  %v860 = vunpack.c.l.b16 %v792
  %v861 = vunpack.c.h.b16 %v792
  %v862 = vunpack.c.l.b16 %v793
  %v863 = vunpack.c.h.b16 %v793
  %v864 = vunpack.c.l.b16 %v794
  %v865 = vunpack.c.h.b16 %v794
  %v866 = vunpack.c.l.b16 %v795
  %v867 = vunpack.c.h.b16 %v795
  %v868 = vunpack.c.l.b16 %v796
  %v869 = vunpack.c.h.b16 %v796
  %v870 = vunpack.c.l.b16 %v797
  %v871 = vunpack.c.h.b16 %v797
  %v872 = vunpack.c.l.b16 %v798
  %v873 = vunpack.c.h.b16 %v798
  %v874 = vunpack.c.l.b16 %v799
  %v875 = vunpack.c.h.b16 %v799
  %v876 = vunpack.c.l.b16 %v800
  %v877 = vunpack.c.h.b16 %v800
  %v878 = vunpack.c.l.b16 %v801
  %v879 = vunpack.c.h.b16 %v801
  %v880 = vunpack.c.l.b16 %v802
  %v881 = vunpack.c.h.b16 %v802
  %v882 = vunpack.c.l.b16 %v803
  %v883 = vunpack.c.h.b16 %v803
  %v884 = vunpack.c.l.b16 %v804
  %v885 = vunpack.c.h.b16 %v804
  %v886 = vunpack.c.l.b16 %v805
  %v887 = vunpack.c.h.b16 %v805
  %v888 = vunpack.c.l.b16 %v806
  %v889 = vunpack.c.h.b16 %v806
  %v890 = vunpack.c.l.b16 %v807
  %v891 = vunpack.c.h.b16 %v807
  %v892 = vunpack.c.l.b16 %v808
  %v893 = vunpack.c.h.b16 %v808
  %v894 = vunpack.c.l.b16 %v809
  %v895 = vunpack.c.h.b16 %v809
  %v896 = vunpack.c.l.b16 %v810
  %v897 = vunpack.c.h.b16 %v810
  %v898 = vunpack.c.l.b16 %v811
  %v899 = vunpack.c.h.b16 %v811
  %v900 = vunpack.c.l.b16 %v812
  %v901 = vunpack.c.h.b16 %v812
  %v902 = vunpack.c.l.b16 %v813
  %v903 = vunpack.c.h.b16 %v813
  %v904 = vunpack.c.l.b16 %v814
  %v905 = vunpack.c.h.b16 %v814
  %v906 = vunpack.c.l.b16 %v815
  %v907 = vunpack.c.h.b16 %v815
  %v908 = vunpack.c.l.b16 %v816
  %v909 = vunpack.c.h.b16 %v816
  %v910 = vunpack.c.l.b16 %v817
  %v911 = vunpack.c.h.b16 %v817
  %v912 = vunpack.c.l.b16 %v818
  %v913 = vunpack.c.h.b16 %v818
  %v914 = vunpack.c.l.b16 %v819
  %v915 = vunpack.c.h.b16 %v819
  %v916 = vpack.c.b16 %v856, %v852
  %v917 = vpack.c.b16 %v857, %v853
  %v918 = vpack.c.b16 %v858, %v854
  %v919 = vpack.c.b16 %v859, %v855
  %v920 = vpack.c.b16 %v864, %v860
  %v921 = vpack.c.b16 %v865, %v861
  %v922 = vpack.c.b16 %v866, %v862
  %v923 = vpack.c.b16 %v867, %v863
  %v924 = vpack.c.b16 %v872, %v868
  %v925 = vpack.c.b16 %v873, %v869
  %v926 = vpack.c.b16 %v874, %v870
  %v927 = vpack.c.b16 %v875, %v871
  %v928 = vpack.c.b16 %v880, %v876
  %v929 = vpack.c.b16 %v881, %v877
  %v930 = vpack.c.b16 %v882, %v878
  %v931 = vpack.c.b16 %v883, %v879
  %v932 = vpack.c.b16 %v888, %v884
  %v933 = vpack.c.b16 %v889, %v885
  %v934 = vpack.c.b16 %v890, %v886
  %v935 = vpack.c.b16 %v891, %v887
  %v936 = vpack.c.b16 %v896, %v892
  %v937 = vpack.c.b16 %v897, %v893
  %v938 = vpack.c.b16 %v898, %v894
  %v939 = vpack.c.b16 %v899, %v895
  %v940 = vpack.c.b16 %v904, %v900
  %v941 = vpack.c.b16 %v905, %v901
  %v942 = vpack.c.b16 %v906, %v902
  %v943 = vpack.c.b16 %v907, %v903
  %v944 = vpack.c.b16 %v912, %v908
  %v945 = vpack.c.b16 %v913, %v909
  %v946 = vpack.c.b16 %v914, %v910
  %v947 = vpack.c.b16 %v915, %v911
  %980 = vmatprep.subr.bf16.mxu0 %v945
  %981 = vmatpush1.bf16.msra.mxu0 %v944
  %982 = vmatprep.subr.bf16.mxu0 %v941
  %983 = vmatpush1.bf16.msra.mxu0 %v940
  %984 = vmatprep.subr.bf16.mxu0 %v937
  %985 = vmatpush1.bf16.msra.mxu0 %v936
  %986 = vmatprep.subr.bf16.mxu0 %v933
  %987 = vmatpush1.bf16.msra.mxu0 %v932
  %988 = vmatprep.subr.bf16.mxu0 %v929
  %989 = vmatpush1.bf16.msra.mxu0 %v928
  %990 = vmatprep.subr.bf16.mxu0 %v925
  %991 = vmatpush1.bf16.msra.mxu0 %v924
  %992 = vmatprep.subr.bf16.mxu0 %v921
  %993 = vmatpush1.bf16.msra.mxu0 %v920
  %994 = vmatprep.subr.bf16.mxu0 %v917
  %995 = vmatpush1.bf16.msra.mxu0 %v916
  %996 = vmatprep.subr.bf16.mxu0 0
  %997 = vmatpush2.bf16.msra.mxu0 0
  %998 = vmatprep.subr.bf16.mxu0 0
  %999 = vmatpush2.bf16.msra.mxu0 0
  %1000 = vmatprep.subr.bf16.mxu0 0
  %1001 = vmatpush2.bf16.msra.mxu0 0
  %1002 = vmatprep.subr.bf16.mxu0 0
  %1003 = vmatpush2.bf16.msra.mxu0 0
  %1004 = vmatprep.subr.bf16.mxu0 0
  %1005 = vmatpush2.bf16.msra.mxu0 0
  %1006 = vmatprep.subr.bf16.mxu0 0
  %1007 = vmatpush2.bf16.msra.mxu0 0
  %1008 = vmatprep.subr.bf16.mxu0 0
  %1009 = vmatpush2.bf16.msra.mxu0 0
  %1010 = vmatprep.subr.bf16.mxu0 0
  %1011 = vmatpush2.bf16.msra.mxu0 0
  %1012 = vmatprep.mubr.bf16.mxu0 0
  %1013 = vmatmul.mubr.bf16.gmra.mxu0 0
  %v1014 = vpop.f32.mrf.mxu0
  %v1015 = vadd.f32 0.0, %v1014
  %v1016 = vpop.f32.mrf.mxu0
  %v1017 = vadd.f32 0.0, %v1016
  %v1018 = vpop.f32.mrf.mxu0
  %v1019 = vadd.f32 0.0, %v1018
  %v1020 = vpop.f32.mrf.mxu0
  %v1021 = vadd.f32 0.0, %v1020
  %1022 = vdwg.mxu0
  %1023 = vmatprep.subr.bf16.mxu0 %v947
  %1024 = vmatpush1.bf16.msra.mxu0 %v946
  %1025 = vmatprep.subr.bf16.mxu0 %v943
  %1026 = vmatpush1.bf16.msra.mxu0 %v942
  %1027 = vmatprep.subr.bf16.mxu0 %v939
  %1028 = vmatpush1.bf16.msra.mxu0 %v938
  %1029 = vmatprep.subr.bf16.mxu0 %v935
  %1030 = vmatpush1.bf16.msra.mxu0 %v934
  %1031 = vmatprep.subr.bf16.mxu0 %v931
  %1032 = vmatpush1.bf16.msra.mxu0 %v930
  %1033 = vmatprep.subr.bf16.mxu0 %v927
  %1034 = vmatpush1.bf16.msra.mxu0 %v926
  %1035 = vmatprep.subr.bf16.mxu0 %v923
  %1036 = vmatpush1.bf16.msra.mxu0 %v922
  %1037 = vmatprep.subr.bf16.mxu0 %v919
  %1038 = vmatpush1.bf16.msra.mxu0 %v918
  %1039 = vmatprep.subr.bf16.mxu0 0
  %1040 = vmatpush2.bf16.msra.mxu0 0
  %1041 = vmatprep.subr.bf16.mxu0 0
  %1042 = vmatpush2.bf16.msra.mxu0 0
  %1043 = vmatprep.subr.bf16.mxu0 0
  %1044 = vmatpush2.bf16.msra.mxu0 0
  %1045 = vmatprep.subr.bf16.mxu0 0
  %1046 = vmatpush2.bf16.msra.mxu0 0
  %1047 = vmatprep.subr.bf16.mxu0 0
  %1048 = vmatpush2.bf16.msra.mxu0 0
  %1049 = vmatprep.subr.bf16.mxu0 0
  %1050 = vmatpush2.bf16.msra.mxu0 0
  %1051 = vmatprep.subr.bf16.mxu0 0
  %1052 = vmatpush2.bf16.msra.mxu0 0
  %1053 = vmatprep.subr.bf16.mxu0 0
  %1054 = vmatpush2.bf16.msra.mxu0 0
  %1055 = vmatprep.mubr.bf16.mxu0 0
  %1056 = vmatmul.mubr.bf16.gmra.mxu0 0
  %v1057 = vpop.f32.mrf.mxu0
  %v1058 = vadd.f32 0.0, %v1057
  %v1059 = vpop.f32.mrf.mxu0
  %v1060 = vadd.f32 0.0, %v1059
  %v1061 = vpop.f32.mrf.mxu0
  %v1062 = vadd.f32 0.0, %v1061
  %v1063 = vpop.f32.mrf.mxu0
  %v1064 = vadd.f32 0.0, %v1063
  %1065 = vdwg.mxu0
  %v1066 = vadd.f32 %v780, %v1015
  %v1067 = vadd.f32 %v781, %v1017
  %v1068 = vadd.f32 %v782, %v1058
  %v1069 = vadd.f32 %v783, %v1060
  %v1070 = vadd.f32 %v784, %v1019
  %v1071 = vadd.f32 %v785, %v1021
  %v1072 = vadd.f32 %v786, %v1062
  %v1073 = vadd.f32 %v787, %v1064
  %v1074 = vxor.u32 %v1066, 2147483648
  %v1075 = vxor.u32 %v1070, 2147483648
  %v1076 = vmul.f32 %v1074, 1.442695
  %v1077 = vpow.pop %v1076
  %v1078 = vmul.f32 %v1075, 1.442695
  %v1079 = vpow.pop %v1078
  %v1080 = vadd.f32 %v1077, 1.0
  %v1081 = vadd.f32 %v1079, 1.0
  %v1082 = vrcp.pop %v1080
  %v1083 = vmul.f32 1.0, %v1082
  %v1084 = vrcp.pop %v1081
  %v1085 = vmul.f32 1.0, %v1084
  %v1086 = vxor.u32 %v1067, 2147483648
  %v1087 = vxor.u32 %v1071, 2147483648
  %v1088 = vmul.f32 %v1086, 1.442695
  %v1089 = vpow.pop %v1088
  %v1090 = vmul.f32 %v1087, 1.442695
  %v1091 = vpow.pop %v1090
  %v1092 = vadd.f32 %v1089, 1.0
  %v1093 = vadd.f32 %v1091, 1.0
  %v1094 = vrcp.pop %v1092
  %v1095 = vmul.f32 1.0, %v1094
  %v1096 = vrcp.pop %v1093
  %v1097 = vmul.f32 1.0, %v1096
  %v1098 = vtanh.pop %v1068
  %v1099 = vtanh.pop %v1072
  %v1100 = vxor.u32 %v1069, 2147483648
  %v1101 = vxor.u32 %v1073, 2147483648
  %v1102 = vmul.f32 %v1100, 1.442695
  %v1103 = vpow.pop %v1102
  %v1104 = vmul.f32 %v1101, 1.442695
  %v1105 = vpow.pop %v1104
  %v1106 = vadd.f32 %v1103, 1.0
  %v1107 = vadd.f32 %v1105, 1.0
  %v1108 = vrcp.pop %v1106
  %v1109 = vmul.f32 1.0, %v1108
  %v1110 = vrcp.pop %v1107
  %v1111 = vmul.f32 1.0, %v1110
  %v1112 = vmul.f32 %v1095, 0.0
  %v1113 = vmul.f32 %v1097, 0.0
  %v1114 = vmul.f32 %v1083, %v1098
  %v1115 = vmul.f32 %v1085, %v1099
  %v1116 = vadd.f32 %v1112, %v1114
  %v1117 = vadd.f32 %v1113, %v1115
  %v1118 = vtanh.pop %v1116
  %v1119 = vtanh.pop %v1117
  %v1120 = vmul.f32 %v1109, %v1118
  %v1121 = vmul.f32 %v1111, %v1119
  %vm1122 = vcmp.gt.s32.totalorder %v38, 0
  %vm1123 = vcmp.gt.s32.totalorder %v39, 0
  %v1124 = vsel %vm1122, 1, 0
  %v1125 = vsel %vm1123, 1, 0
  %vm1126 = vcmp.eq.s32.totalorder %v1124, 1
  %vm1127 = vcmp.eq.s32.totalorder %v1125, 1
  %v1128 = vsel %vm1126, %v1120, 0.0
  %v1129 = vsel %vm1127, %v1121, 0.0
  %v1130 = vsel %vm1126, %v1116, 0.0
  %v1131 = vsel %vm1127, %v1117, 0.0
  %v1132 = vpack.c.bf16 %v1129, %v1128
  %v1134 = vunpack.c.l.b16 %v1132
  %v1135 = vunpack.c.h.b16 %v1132
  %v1136 = vpack.c.b16 %v1134, %v1134
  %v1137 = vpack.c.b16 %v1135, %v1135
  %1140 = vst [vmem:[#allocation2] sm:$0xf] %v1136
  %1141 = vst [vmem:[#allocation2 + $0x4] sm:$0xf] %v1137
  %s1142 = scalar_lea.vmem [#allocation3], 32
  %v1143 = vld [vmem:[%s1142] sm:$0xff]
  %v1144 = vld [vmem:[%s1142 + $0x8] sm:$0xff]
  %v1145 = vld [vmem:[%s1142 + $0x10] sm:$0xff]
  %v1146 = vld [vmem:[%s1142 + $0x18] sm:$0xff]
  %v1147 = vunpack.c.l.bf16 %v1143
  %v1148 = vunpack.c.h.bf16 %v1143
  %v1149 = vunpack.c.l.bf16 %v1144
  %v1150 = vunpack.c.h.bf16 %v1144
  %v1151 = vunpack.c.l.bf16 %v1145
  %v1152 = vunpack.c.h.bf16 %v1145
  %v1153 = vunpack.c.l.bf16 %v1146
  %v1154 = vunpack.c.h.bf16 %v1146
  %v1155 = vadd.f32 %v1147, %v763
  %v1156 = vadd.f32 %v1148, %v767
  %v1157 = vadd.f32 %v1149, %v771
  %v1158 = vadd.f32 %v1150, %v775
  %v1159 = vadd.f32 %v1151, %v763
  %v1160 = vadd.f32 %v1152, %v767
  %v1161 = vadd.f32 %v1153, %v771
  %v1162 = vadd.f32 %v1154, %v775
  %v1163 = vld [vmem:[%s2] sm:$0xff]
  %v1164 = vld [vmem:[%s2 + $0x8] sm:$0xff]
  %v1165 = vld [vmem:[%s2 + $0x10] sm:$0xff]
  %v1166 = vld [vmem:[%s2 + $0x18] sm:$0xff]
  %v1167 = vld [vmem:[%s2 + $0x20] sm:$0xff]
  %v1168 = vld [vmem:[%s2 + $0x28] sm:$0xff]
  %v1169 = vld [vmem:[%s2 + $0x30] sm:$0xff]
  %v1170 = vld [vmem:[%s2 + $0x38] sm:$0xff]
  %v1171 = vld [vmem:[%s2 + $0x40] sm:$0xff]
  %v1172 = vld [vmem:[%s2 + $0x48] sm:$0xff]
  %v1173 = vld [vmem:[%s2 + $0x50] sm:$0xff]
  %v1174 = vld [vmem:[%s2 + $0x58] sm:$0xff]
  %v1175 = vld [vmem:[%s2 + $0x60] sm:$0xff]
  %v1176 = vld [vmem:[%s2 + $0x68] sm:$0xff]
  %v1177 = vld [vmem:[%s2 + $0x70] sm:$0xff]
  %v1178 = vld [vmem:[%s2 + $0x78] sm:$0xff]
  %v1179 = vld [vmem:[%s2 + $0x80] sm:$0xff]
  %v1180 = vld [vmem:[%s2 + $0x88] sm:$0xff]
  %v1181 = vld [vmem:[%s2 + $0x90] sm:$0xff]
  %v1182 = vld [vmem:[%s2 + $0x98] sm:$0xff]
  %v1183 = vld [vmem:[%s2 + $0xa0] sm:$0xff]
  %v1184 = vld [vmem:[%s2 + $0xa8] sm:$0xff]
  %v1185 = vld [vmem:[%s2 + $0xb0] sm:$0xff]
  %v1186 = vld [vmem:[%s2 + $0xb8] sm:$0xff]
  %v1187 = vld [vmem:[%s2 + $0xc0] sm:$0xff]
  %v1188 = vld [vmem:[%s2 + $0xc8] sm:$0xff]
  %v1189 = vld [vmem:[%s2 + $0xd0] sm:$0xff]
  %v1190 = vld [vmem:[%s2 + $0xd8] sm:$0xff]
  %v1191 = vld [vmem:[%s2 + $0xe0] sm:$0xff]
  %v1192 = vld [vmem:[%s2 + $0xe8] sm:$0xff]
  %v1193 = vld [vmem:[%s2 + $0xf0] sm:$0xff]
  %v1194 = vld [vmem:[%s2 + $0xf8] sm:$0xff]
  %v1227 = vunpack.c.l.b16 %v1163
  %v1228 = vunpack.c.h.b16 %v1163
  %v1229 = vunpack.c.l.b16 %v1164
  %v1230 = vunpack.c.h.b16 %v1164
  %v1231 = vunpack.c.l.b16 %v1165
  %v1232 = vunpack.c.h.b16 %v1165
  %v1233 = vunpack.c.l.b16 %v1166
  %v1234 = vunpack.c.h.b16 %v1166
  %v1235 = vunpack.c.l.b16 %v1167
  %v1236 = vunpack.c.h.b16 %v1167
  %v1237 = vunpack.c.l.b16 %v1168
  %v1238 = vunpack.c.h.b16 %v1168
  %v1239 = vunpack.c.l.b16 %v1169
  %v1240 = vunpack.c.h.b16 %v1169
  %v1241 = vunpack.c.l.b16 %v1170
  %v1242 = vunpack.c.h.b16 %v1170
  %v1243 = vunpack.c.l.b16 %v1171
  %v1244 = vunpack.c.h.b16 %v1171
  %v1245 = vunpack.c.l.b16 %v1172
  %v1246 = vunpack.c.h.b16 %v1172
  %v1247 = vunpack.c.l.b16 %v1173
  %v1248 = vunpack.c.h.b16 %v1173
  %v1249 = vunpack.c.l.b16 %v1174
  %v1250 = vunpack.c.h.b16 %v1174
  %v1251 = vunpack.c.l.b16 %v1175
  %v1252 = vunpack.c.h.b16 %v1175
  %v1253 = vunpack.c.l.b16 %v1176
  %v1254 = vunpack.c.h.b16 %v1176
  %v1255 = vunpack.c.l.b16 %v1177
  %v1256 = vunpack.c.h.b16 %v1177
  %v1257 = vunpack.c.l.b16 %v1178
  %v1258 = vunpack.c.h.b16 %v1178
  %v1259 = vunpack.c.l.b16 %v1179
  %v1260 = vunpack.c.h.b16 %v1179
  %v1261 = vunpack.c.l.b16 %v1180
  %v1262 = vunpack.c.h.b16 %v1180
  %v1263 = vunpack.c.l.b16 %v1181
  %v1264 = vunpack.c.h.b16 %v1181
  %v1265 = vunpack.c.l.b16 %v1182
  %v1266 = vunpack.c.h.b16 %v1182
  %v1267 = vunpack.c.l.b16 %v1183
  %v1268 = vunpack.c.h.b16 %v1183
  %v1269 = vunpack.c.l.b16 %v1184
  %v1270 = vunpack.c.h.b16 %v1184
  %v1271 = vunpack.c.l.b16 %v1185
  %v1272 = vunpack.c.h.b16 %v1185
  %v1273 = vunpack.c.l.b16 %v1186
  %v1274 = vunpack.c.h.b16 %v1186
  %v1275 = vunpack.c.l.b16 %v1187
  %v1276 = vunpack.c.h.b16 %v1187
  %v1277 = vunpack.c.l.b16 %v1188
  %v1278 = vunpack.c.h.b16 %v1188
  %v1279 = vunpack.c.l.b16 %v1189
  %v1280 = vunpack.c.h.b16 %v1189
  %v1281 = vunpack.c.l.b16 %v1190
  %v1282 = vunpack.c.h.b16 %v1190
  %v1283 = vunpack.c.l.b16 %v1191
  %v1284 = vunpack.c.h.b16 %v1191
  %v1285 = vunpack.c.l.b16 %v1192
  %v1286 = vunpack.c.h.b16 %v1192
  %v1287 = vunpack.c.l.b16 %v1193
  %v1288 = vunpack.c.h.b16 %v1193
  %v1289 = vunpack.c.l.b16 %v1194
  %v1290 = vunpack.c.h.b16 %v1194
  %v1291 = vpack.c.b16 %v1231, %v1227
  %v1292 = vpack.c.b16 %v1232, %v1228
  %v1293 = vpack.c.b16 %v1233, %v1229
  %v1294 = vpack.c.b16 %v1234, %v1230
  %v1295 = vpack.c.b16 %v1239, %v1235
  %v1296 = vpack.c.b16 %v1240, %v1236
  %v1297 = vpack.c.b16 %v1241, %v1237
  %v1298 = vpack.c.b16 %v1242, %v1238
  %v1299 = vpack.c.b16 %v1247, %v1243
  %v1300 = vpack.c.b16 %v1248, %v1244
  %v1301 = vpack.c.b16 %v1249, %v1245
  %v1302 = vpack.c.b16 %v1250, %v1246
  %v1303 = vpack.c.b16 %v1255, %v1251
  %v1304 = vpack.c.b16 %v1256, %v1252
  %v1305 = vpack.c.b16 %v1257, %v1253
  %v1306 = vpack.c.b16 %v1258, %v1254
  %v1307 = vpack.c.b16 %v1263, %v1259
  %v1308 = vpack.c.b16 %v1264, %v1260
  %v1309 = vpack.c.b16 %v1265, %v1261
  %v1310 = vpack.c.b16 %v1266, %v1262
  %v1311 = vpack.c.b16 %v1271, %v1267
  %v1312 = vpack.c.b16 %v1272, %v1268
  %v1313 = vpack.c.b16 %v1273, %v1269
  %v1314 = vpack.c.b16 %v1274, %v1270
  %v1315 = vpack.c.b16 %v1279, %v1275
  %v1316 = vpack.c.b16 %v1280, %v1276
  %v1317 = vpack.c.b16 %v1281, %v1277
  %v1318 = vpack.c.b16 %v1282, %v1278
  %v1319 = vpack.c.b16 %v1287, %v1283
  %v1320 = vpack.c.b16 %v1288, %v1284
  %v1321 = vpack.c.b16 %v1289, %v1285
  %v1322 = vpack.c.b16 %v1290, %v1286
  %1355 = vmatprep.subr.bf16.mxu0 %v1320
  %1356 = vmatpush1.bf16.msra.mxu0 %v1319
  %1357 = vmatprep.subr.bf16.mxu0 %v1316
  %1358 = vmatpush1.bf16.msra.mxu0 %v1315
  %1359 = vmatprep.subr.bf16.mxu0 %v1312
  %1360 = vmatpush1.bf16.msra.mxu0 %v1311
  %1361 = vmatprep.subr.bf16.mxu0 %v1308
  %1362 = vmatpush1.bf16.msra.mxu0 %v1307
  %1363 = vmatprep.subr.bf16.mxu0 %v1304
  %1364 = vmatpush1.bf16.msra.mxu0 %v1303
  %1365 = vmatprep.subr.bf16.mxu0 %v1300
  %1366 = vmatpush1.bf16.msra.mxu0 %v1299
  %1367 = vmatprep.subr.bf16.mxu0 %v1296
  %1368 = vmatpush1.bf16.msra.mxu0 %v1295
  %1369 = vmatprep.subr.bf16.mxu0 %v1292
  %1370 = vmatpush1.bf16.msra.mxu0 %v1291
  %1371 = vmatprep.subr.bf16.mxu0 0
  %1372 = vmatpush2.bf16.msra.mxu0 0
  %1373 = vmatprep.subr.bf16.mxu0 0
  %1374 = vmatpush2.bf16.msra.mxu0 0
  %1375 = vmatprep.subr.bf16.mxu0 0
  %1376 = vmatpush2.bf16.msra.mxu0 0
  %1377 = vmatprep.subr.bf16.mxu0 0
  %1378 = vmatpush2.bf16.msra.mxu0 0
  %1379 = vmatprep.subr.bf16.mxu0 0
  %1380 = vmatpush2.bf16.msra.mxu0 0
  %1381 = vmatprep.subr.bf16.mxu0 0
  %1382 = vmatpush2.bf16.msra.mxu0 0
  %1383 = vmatprep.subr.bf16.mxu0 0
  %1384 = vmatpush2.bf16.msra.mxu0 0
  %1385 = vmatprep.subr.bf16.mxu0 0
  %1386 = vmatpush2.bf16.msra.mxu0 0
  %1387 = vmatprep.mubr.bf16.mxu0 0
  %1388 = vmatmul.mubr.bf16.gmra.mxu0 %v1132
  %v1389 = vpop.f32.mrf.mxu0
  %v1390 = vadd.f32 0.0, %v1389
  %v1391 = vpop.f32.mrf.mxu0
  %v1392 = vadd.f32 0.0, %v1391
  %v1393 = vpop.f32.mrf.mxu0
  %v1394 = vadd.f32 0.0, %v1393
  %v1395 = vpop.f32.mrf.mxu0
  %v1396 = vadd.f32 0.0, %v1395
  %1397 = vdwg.mxu0
  %1398 = vmatprep.subr.bf16.mxu0 %v1322
  %1399 = vmatpush1.bf16.msra.mxu0 %v1321
  %1400 = vmatprep.subr.bf16.mxu0 %v1318
  %1401 = vmatpush1.bf16.msra.mxu0 %v1317
  %1402 = vmatprep.subr.bf16.mxu0 %v1314
  %1403 = vmatpush1.bf16.msra.mxu0 %v1313
  %1404 = vmatprep.subr.bf16.mxu0 %v1310
  %1405 = vmatpush1.bf16.msra.mxu0 %v1309
  %1406 = vmatprep.subr.bf16.mxu0 %v1306
  %1407 = vmatpush1.bf16.msra.mxu0 %v1305
  %1408 = vmatprep.subr.bf16.mxu0 %v1302
  %1409 = vmatpush1.bf16.msra.mxu0 %v1301
  %1410 = vmatprep.subr.bf16.mxu0 %v1298
  %1411 = vmatpush1.bf16.msra.mxu0 %v1297
  %1412 = vmatprep.subr.bf16.mxu0 %v1294
  %1413 = vmatpush1.bf16.msra.mxu0 %v1293
  %1414 = vmatprep.subr.bf16.mxu0 0
  %1415 = vmatpush2.bf16.msra.mxu0 0
  %1416 = vmatprep.subr.bf16.mxu0 0
  %1417 = vmatpush2.bf16.msra.mxu0 0
  %1418 = vmatprep.subr.bf16.mxu0 0
  %1419 = vmatpush2.bf16.msra.mxu0 0
  %1420 = vmatprep.subr.bf16.mxu0 0
  %1421 = vmatpush2.bf16.msra.mxu0 0
  %1422 = vmatprep.subr.bf16.mxu0 0
  %1423 = vmatpush2.bf16.msra.mxu0 0
  %1424 = vmatprep.subr.bf16.mxu0 0
  %1425 = vmatpush2.bf16.msra.mxu0 0
  %1426 = vmatprep.subr.bf16.mxu0 0
  %1427 = vmatpush2.bf16.msra.mxu0 0
  %1428 = vmatprep.subr.bf16.mxu0 0
  %1429 = vmatpush2.bf16.msra.mxu0 0
  %1430 = vmatprep.mubr.bf16.mxu0 0
  %1431 = vmatmul.mubr.bf16.gmra.mxu0 %v1132
  %v1432 = vpop.f32.mrf.mxu0
  %v1433 = vadd.f32 0.0, %v1432
  %v1434 = vpop.f32.mrf.mxu0
  %v1435 = vadd.f32 0.0, %v1434
  %v1436 = vpop.f32.mrf.mxu0
  %v1437 = vadd.f32 0.0, %v1436
  %v1438 = vpop.f32.mrf.mxu0
  %v1439 = vadd.f32 0.0, %v1438
  %1440 = vdwg.mxu0
  %v1441 = vadd.f32 %v1155, %v1390
  %v1442 = vadd.f32 %v1156, %v1392
  %v1443 = vadd.f32 %v1157, %v1433
  %v1444 = vadd.f32 %v1158, %v1435
  %v1445 = vadd.f32 %v1159, %v1394
  %v1446 = vadd.f32 %v1160, %v1396
  %v1447 = vadd.f32 %v1161, %v1437
  %v1448 = vadd.f32 %v1162, %v1439
  %v1449 = vxor.u32 %v1441, 2147483648
  %v1450 = vxor.u32 %v1445, 2147483648
  %v1451 = vmul.f32 %v1449, 1.442695
  %v1452 = vpow.pop %v1451
  %v1453 = vmul.f32 %v1450, 1.442695
  %v1454 = vpow.pop %v1453
  %v1455 = vadd.f32 %v1452, 1.0
  %v1456 = vadd.f32 %v1454, 1.0
  %v1457 = vrcp.pop %v1455
  %v1458 = vmul.f32 1.0, %v1457
  %v1459 = vrcp.pop %v1456
  %v1460 = vmul.f32 1.0, %v1459
  %v1461 = vxor.u32 %v1442, 2147483648
  %v1462 = vxor.u32 %v1446, 2147483648
  %v1463 = vmul.f32 %v1461, 1.442695
  %v1464 = vpow.pop %v1463
  %v1465 = vmul.f32 %v1462, 1.442695
  %v1466 = vpow.pop %v1465
  %v1467 = vadd.f32 %v1464, 1.0
  %v1468 = vadd.f32 %v1466, 1.0
  %v1469 = vrcp.pop %v1467
  %v1470 = vmul.f32 1.0, %v1469
  %v1471 = vrcp.pop %v1468
  %v1472 = vmul.f32 1.0, %v1471
  %v1473 = vtanh.pop %v1443
  %v1474 = vtanh.pop %v1447
  %v1475 = vxor.u32 %v1444, 2147483648
  %v1476 = vxor.u32 %v1448, 2147483648
  %v1477 = vmul.f32 %v1475, 1.442695
  %v1478 = vpow.pop %v1477
  %v1479 = vmul.f32 %v1476, 1.442695
  %v1480 = vpow.pop %v1479
  %v1481 = vadd.f32 %v1478, 1.0
  %v1482 = vadd.f32 %v1480, 1.0
  %v1483 = vrcp.pop %v1481
  %v1484 = vmul.f32 1.0, %v1483
  %v1485 = vrcp.pop %v1482
  %v1486 = vmul.f32 1.0, %v1485
  %v1487 = vmul.f32 %v1470, %v1130
  %v1488 = vmul.f32 %v1472, %v1131
  %v1489 = vmul.f32 %v1458, %v1473
  %v1490 = vmul.f32 %v1460, %v1474
  %v1491 = vadd.f32 %v1487, %v1489
  %v1492 = vadd.f32 %v1488, %v1490
  %v1493 = vtanh.pop %v1491
  %v1494 = vtanh.pop %v1492
  %v1495 = vmul.f32 %v1484, %v1493
  %v1496 = vmul.f32 %v1486, %v1494
  %vm1497 = vcmp.gt.s32.totalorder %v38, 1
  %vm1498 = vcmp.gt.s32.totalorder %v39, 1
  %v1499 = vsel %vm1497, 1, 0
  %v1500 = vsel %vm1498, 1, 0
  %vm1501 = vcmp.eq.s32.totalorder %v1499, 1
  %vm1502 = vcmp.eq.s32.totalorder %v1500, 1
  %v1503 = vsel %vm1501, %v1495, %v1128
  %v1504 = vsel %vm1502, %v1496, %v1129
  %v1505 = vsel %vm1501, %v1491, %v1130
  %v1506 = vsel %vm1502, %v1492, %v1131
  %v1507 = vpack.c.bf16 %v1504, %v1503
  %v1509 = vunpack.c.l.b16 %v1507
  %v1510 = vunpack.c.h.b16 %v1507
  %v1511 = vpack.c.b16 %v1509, %v1509
  %v1512 = vpack.c.b16 %v1510, %v1510
  %s1515 = scalar_lea.vmem [#allocation2], 8
  %1516 = vst [vmem:[%s1515] sm:$0xf] %v1511
  %1517 = vst [vmem:[%s1515 + $0x4] sm:$0xf] %v1512
  %s1518 = scalar_lea.vmem [#allocation3], 64
  %v1519 = vld [vmem:[%s1518] sm:$0xff]
  %v1520 = vld [vmem:[%s1518 + $0x8] sm:$0xff]
  %v1521 = vld [vmem:[%s1518 + $0x10] sm:$0xff]
  %v1522 = vld [vmem:[%s1518 + $0x18] sm:$0xff]
  %v1523 = vunpack.c.l.bf16 %v1519
  %v1524 = vunpack.c.h.bf16 %v1519
  %v1525 = vunpack.c.l.bf16 %v1520
  %v1526 = vunpack.c.h.bf16 %v1520
  %v1527 = vunpack.c.l.bf16 %v1521
  %v1528 = vunpack.c.h.bf16 %v1521
  %v1529 = vunpack.c.l.bf16 %v1522
  %v1530 = vunpack.c.h.bf16 %v1522
  %v1531 = vadd.f32 %v1523, %v763
  %v1532 = vadd.f32 %v1524, %v767
  %v1533 = vadd.f32 %v1525, %v771
  %v1534 = vadd.f32 %v1526, %v775
  %v1535 = vadd.f32 %v1527, %v763
  %v1536 = vadd.f32 %v1528, %v767
  %v1537 = vadd.f32 %v1529, %v771
  %v1538 = vadd.f32 %v1530, %v775
  %v1539 = vld [vmem:[%s2] sm:$0xff]
  %v1540 = vld [vmem:[%s2 + $0x8] sm:$0xff]
  %v1541 = vld [vmem:[%s2 + $0x10] sm:$0xff]
  %v1542 = vld [vmem:[%s2 + $0x18] sm:$0xff]
  %v1543 = vld [vmem:[%s2 + $0x20] sm:$0xff]
  %v1544 = vld [vmem:[%s2 + $0x28] sm:$0xff]
  %v1545 = vld [vmem:[%s2 + $0x30] sm:$0xff]
  %v1546 = vld [vmem:[%s2 + $0x38] sm:$0xff]
  %v1547 = vld [vmem:[%s2 + $0x40] sm:$0xff]
  %v1548 = vld [vmem:[%s2 + $0x48] sm:$0xff]
  %v1549 = vld [vmem:[%s2 + $0x50] sm:$0xff]
  %v1550 = vld [vmem:[%s2 + $0x58] sm:$0xff]
  %v1551 = vld [vmem:[%s2 + $0x60] sm:$0xff]
  %v1552 = vld [vmem:[%s2 + $0x68] sm:$0xff]
  %v1553 = vld [vmem:[%s2 + $0x70] sm:$0xff]
  %v1554 = vld [vmem:[%s2 + $0x78] sm:$0xff]
  %v1555 = vld [vmem:[%s2 + $0x80] sm:$0xff]
  %v1556 = vld [vmem:[%s2 + $0x88] sm:$0xff]
  %v1557 = vld [vmem:[%s2 + $0x90] sm:$0xff]
  %v1558 = vld [vmem:[%s2 + $0x98] sm:$0xff]
  %v1559 = vld [vmem:[%s2 + $0xa0] sm:$0xff]
  %v1560 = vld [vmem:[%s2 + $0xa8] sm:$0xff]
  %v1561 = vld [vmem:[%s2 + $0xb0] sm:$0xff]
  %v1562 = vld [vmem:[%s2 + $0xb8] sm:$0xff]
  %v1563 = vld [vmem:[%s2 + $0xc0] sm:$0xff]
  %v1564 = vld [vmem:[%s2 + $0xc8] sm:$0xff]
  %v1565 = vld [vmem:[%s2 + $0xd0] sm:$0xff]
  %v1566 = vld [vmem:[%s2 + $0xd8] sm:$0xff]
  %v1567 = vld [vmem:[%s2 + $0xe0] sm:$0xff]
  %v1568 = vld [vmem:[%s2 + $0xe8] sm:$0xff]
  %v1569 = vld [vmem:[%s2 + $0xf0] sm:$0xff]
  %v1570 = vld [vmem:[%s2 + $0xf8] sm:$0xff]
  %v1603 = vunpack.c.l.b16 %v1539
  %v1604 = vunpack.c.h.b16 %v1539
  %v1605 = vunpack.c.l.b16 %v1540
  %v1606 = vunpack.c.h.b16 %v1540
  %v1607 = vunpack.c.l.b16 %v1541
  %v1608 = vunpack.c.h.b16 %v1541
  %v1609 = vunpack.c.l.b16 %v1542
  %v1610 = vunpack.c.h.b16 %v1542
  %v1611 = vunpack.c.l.b16 %v1543
  %v1612 = vunpack.c.h.b16 %v1543
  %v1613 = vunpack.c.l.b16 %v1544
  %v1614 = vunpack.c.h.b16 %v1544
  %v1615 = vunpack.c.l.b16 %v1545
  %v1616 = vunpack.c.h.b16 %v1545
  %v1617 = vunpack.c.l.b16 %v1546
  %v1618 = vunpack.c.h.b16 %v1546
  %v1619 = vunpack.c.l.b16 %v1547
  %v1620 = vunpack.c.h.b16 %v1547
  %v1621 = vunpack.c.l.b16 %v1548
  %v1622 = vunpack.c.h.b16 %v1548
  %v1623 = vunpack.c.l.b16 %v1549
  %v1624 = vunpack.c.h.b16 %v1549
  %v1625 = vunpack.c.l.b16 %v1550
  %v1626 = vunpack.c.h.b16 %v1550
  %v1627 = vunpack.c.l.b16 %v1551
  %v1628 = vunpack.c.h.b16 %v1551
  %v1629 = vunpack.c.l.b16 %v1552
  %v1630 = vunpack.c.h.b16 %v1552
  %v1631 = vunpack.c.l.b16 %v1553
  %v1632 = vunpack.c.h.b16 %v1553
  %v1633 = vunpack.c.l.b16 %v1554
  %v1634 = vunpack.c.h.b16 %v1554
  %v1635 = vunpack.c.l.b16 %v1555
  %v1636 = vunpack.c.h.b16 %v1555
  %v1637 = vunpack.c.l.b16 %v1556
  %v1638 = vunpack.c.h.b16 %v1556
  %v1639 = vunpack.c.l.b16 %v1557
  %v1640 = vunpack.c.h.b16 %v1557
  %v1641 = vunpack.c.l.b16 %v1558
  %v1642 = vunpack.c.h.b16 %v1558
  %v1643 = vunpack.c.l.b16 %v1559
  %v1644 = vunpack.c.h.b16 %v1559
  %v1645 = vunpack.c.l.b16 %v1560
  %v1646 = vunpack.c.h.b16 %v1560
  %v1647 = vunpack.c.l.b16 %v1561
  %v1648 = vunpack.c.h.b16 %v1561
  %v1649 = vunpack.c.l.b16 %v1562
  %v1650 = vunpack.c.h.b16 %v1562
  %v1651 = vunpack.c.l.b16 %v1563
  %v1652 = vunpack.c.h.b16 %v1563
  %v1653 = vunpack.c.l.b16 %v1564
  %v1654 = vunpack.c.h.b16 %v1564
  %v1655 = vunpack.c.l.b16 %v1565
  %v1656 = vunpack.c.h.b16 %v1565
  %v1657 = vunpack.c.l.b16 %v1566
  %v1658 = vunpack.c.h.b16 %v1566
  %v1659 = vunpack.c.l.b16 %v1567
  %v1660 = vunpack.c.h.b16 %v1567
  %v1661 = vunpack.c.l.b16 %v1568
  %v1662 = vunpack.c.h.b16 %v1568
  %v1663 = vunpack.c.l.b16 %v1569
  %v1664 = vunpack.c.h.b16 %v1569
  %v1665 = vunpack.c.l.b16 %v1570
  %v1666 = vunpack.c.h.b16 %v1570
  %v1667 = vpack.c.b16 %v1607, %v1603
  %v1668 = vpack.c.b16 %v1608, %v1604
  %v1669 = vpack.c.b16 %v1609, %v1605
  %v1670 = vpack.c.b16 %v1610, %v1606
  %v1671 = vpack.c.b16 %v1615, %v1611
  %v1672 = vpack.c.b16 %v1616, %v1612
  %v1673 = vpack.c.b16 %v1617, %v1613
  %v1674 = vpack.c.b16 %v1618, %v1614
  %v1675 = vpack.c.b16 %v1623, %v1619
  %v1676 = vpack.c.b16 %v1624, %v1620
  %v1677 = vpack.c.b16 %v1625, %v1621
  %v1678 = vpack.c.b16 %v1626, %v1622
  %v1679 = vpack.c.b16 %v1631, %v1627
  %v1680 = vpack.c.b16 %v1632, %v1628
  %v1681 = vpack.c.b16 %v1633, %v1629
  %v1682 = vpack.c.b16 %v1634, %v1630
  %v1683 = vpack.c.b16 %v1639, %v1635
  %v1684 = vpack.c.b16 %v1640, %v1636
  %v1685 = vpack.c.b16 %v1641, %v1637
  %v1686 = vpack.c.b16 %v1642, %v1638
  %v1687 = vpack.c.b16 %v1647, %v1643
  %v1688 = vpack.c.b16 %v1648, %v1644
  %v1689 = vpack.c.b16 %v1649, %v1645
  %v1690 = vpack.c.b16 %v1650, %v1646
  %v1691 = vpack.c.b16 %v1655, %v1651
  %v1692 = vpack.c.b16 %v1656, %v1652
  %v1693 = vpack.c.b16 %v1657, %v1653
  %v1694 = vpack.c.b16 %v1658, %v1654
  %v1695 = vpack.c.b16 %v1663, %v1659
  %v1696 = vpack.c.b16 %v1664, %v1660
  %v1697 = vpack.c.b16 %v1665, %v1661
  %v1698 = vpack.c.b16 %v1666, %v1662
  %1731 = vmatprep.subr.bf16.mxu0 %v1696
  %1732 = vmatpush1.bf16.msra.mxu0 %v1695
  %1733 = vmatprep.subr.bf16.mxu0 %v1692
  %1734 = vmatpush1.bf16.msra.mxu0 %v1691
  %1735 = vmatprep.subr.bf16.mxu0 %v1688
  %1736 = vmatpush1.bf16.msra.mxu0 %v1687
  %1737 = vmatprep.subr.bf16.mxu0 %v1684
  %1738 = vmatpush1.bf16.msra.mxu0 %v1683
  %1739 = vmatprep.subr.bf16.mxu0 %v1680
  %1740 = vmatpush1.bf16.msra.mxu0 %v1679
  %1741 = vmatprep.subr.bf16.mxu0 %v1676
  %1742 = vmatpush1.bf16.msra.mxu0 %v1675
  %1743 = vmatprep.subr.bf16.mxu0 %v1672
  %1744 = vmatpush1.bf16.msra.mxu0 %v1671
  %1745 = vmatprep.subr.bf16.mxu0 %v1668
  %1746 = vmatpush1.bf16.msra.mxu0 %v1667
  %1747 = vmatprep.subr.bf16.mxu0 0
  %1748 = vmatpush2.bf16.msra.mxu0 0
  %1749 = vmatprep.subr.bf16.mxu0 0
  %1750 = vmatpush2.bf16.msra.mxu0 0
  %1751 = vmatprep.subr.bf16.mxu0 0
  %1752 = vmatpush2.bf16.msra.mxu0 0
  %1753 = vmatprep.subr.bf16.mxu0 0
  %1754 = vmatpush2.bf16.msra.mxu0 0
  %1755 = vmatprep.subr.bf16.mxu0 0
  %1756 = vmatpush2.bf16.msra.mxu0 0
  %1757 = vmatprep.subr.bf16.mxu0 0
  %1758 = vmatpush2.bf16.msra.mxu0 0
  %1759 = vmatprep.subr.bf16.mxu0 0
  %1760 = vmatpush2.bf16.msra.mxu0 0
  %1761 = vmatprep.subr.bf16.mxu0 0
  %1762 = vmatpush2.bf16.msra.mxu0 0
  %1763 = vmatprep.mubr.bf16.mxu0 0
  %1764 = vmatmul.mubr.bf16.gmra.mxu0 %v1507
  %v1765 = vpop.f32.mrf.mxu0
  %v1766 = vadd.f32 0.0, %v1765
  %v1767 = vpop.f32.mrf.mxu0
  %v1768 = vadd.f32 0.0, %v1767
  %v1769 = vpop.f32.mrf.mxu0
  %v1770 = vadd.f32 0.0, %v1769
  %v1771 = vpop.f32.mrf.mxu0
  %v1772 = vadd.f32 0.0, %v1771
  %1773 = vdwg.mxu0
  %1774 = vmatprep.subr.bf16.mxu0 %v1698
  %1775 = vmatpush1.bf16.msra.mxu0 %v1697
  %1776 = vmatprep.subr.bf16.mxu0 %v1694
  %1777 = vmatpush1.bf16.msra.mxu0 %v1693
  %1778 = vmatprep.subr.bf16.mxu0 %v1690
  %1779 = vmatpush1.bf16.msra.mxu0 %v1689
  %1780 = vmatprep.subr.bf16.mxu0 %v1686
  %1781 = vmatpush1.bf16.msra.mxu0 %v1685
  %1782 = vmatprep.subr.bf16.mxu0 %v1682
  %1783 = vmatpush1.bf16.msra.mxu0 %v1681
  %1784 = vmatprep.subr.bf16.mxu0 %v1678
  %1785 = vmatpush1.bf16.msra.mxu0 %v1677
  %1786 = vmatprep.subr.bf16.mxu0 %v1674
  %1787 = vmatpush1.bf16.msra.mxu0 %v1673
  %1788 = vmatprep.subr.bf16.mxu0 %v1670
  %1789 = vmatpush1.bf16.msra.mxu0 %v1669
  %1790 = vmatprep.subr.bf16.mxu0 0
  %1791 = vmatpush2.bf16.msra.mxu0 0
  %1792 = vmatprep.subr.bf16.mxu0 0
  %1793 = vmatpush2.bf16.msra.mxu0 0
  %1794 = vmatprep.subr.bf16.mxu0 0
  %1795 = vmatpush2.bf16.msra.mxu0 0
  %1796 = vmatprep.subr.bf16.mxu0 0
  %1797 = vmatpush2.bf16.msra.mxu0 0
  %1798 = vmatprep.subr.bf16.mxu0 0
  %1799 = vmatpush2.bf16.msra.mxu0 0
  %1800 = vmatprep.subr.bf16.mxu0 0
  %1801 = vmatpush2.bf16.msra.mxu0 0
  %1802 = vmatprep.subr.bf16.mxu0 0
  %1803 = vmatpush2.bf16.msra.mxu0 0
  %1804 = vmatprep.subr.bf16.mxu0 0
  %1805 = vmatpush2.bf16.msra.mxu0 0
  %1806 = vmatprep.mubr.bf16.mxu0 0
  %1807 = vmatmul.mubr.bf16.gmra.mxu0 %v1507
  %v1808 = vpop.f32.mrf.mxu0
  %v1809 = vadd.f32 0.0, %v1808
  %v1810 = vpop.f32.mrf.mxu0
  %v1811 = vadd.f32 0.0, %v1810
  %v1812 = vpop.f32.mrf.mxu0
  %v1813 = vadd.f32 0.0, %v1812
  %v1814 = vpop.f32.mrf.mxu0
  %v1815 = vadd.f32 0.0, %v1814
  %1816 = vdwg.mxu0
  %v1817 = vadd.f32 %v1531, %v1766
  %v1818 = vadd.f32 %v1532, %v1768
  %v1819 = vadd.f32 %v1533, %v1809
  %v1820 = vadd.f32 %v1534, %v1811
  %v1821 = vadd.f32 %v1535, %v1770
  %v1822 = vadd.f32 %v1536, %v1772
  %v1823 = vadd.f32 %v1537, %v1813
  %v1824 = vadd.f32 %v1538, %v1815
  %v1825 = vxor.u32 %v1817, 2147483648
  %v1826 = vxor.u32 %v1821, 2147483648
  %v1827 = vmul.f32 %v1825, 1.442695
  %v1828 = vpow.pop %v1827
  %v1829 = vmul.f32 %v1826, 1.442695
  %v1830 = vpow.pop %v1829
  %v1831 = vadd.f32 %v1828, 1.0
  %v1832 = vadd.f32 %v1830, 1.0
  %v1833 = vrcp.pop %v1831
  %v1834 = vmul.f32 1.0, %v1833
  %v1835 = vrcp.pop %v1832
  %v1836 = vmul.f32 1.0, %v1835
  %v1837 = vxor.u32 %v1818, 2147483648
  %v1838 = vxor.u32 %v1822, 2147483648
  %v1839 = vmul.f32 %v1837, 1.442695
  %v1840 = vpow.pop %v1839
  %v1841 = vmul.f32 %v1838, 1.442695
  %v1842 = vpow.pop %v1841
  %v1843 = vadd.f32 %v1840, 1.0
  %v1844 = vadd.f32 %v1842, 1.0
  %v1845 = vrcp.pop %v1843
  %v1846 = vmul.f32 1.0, %v1845
  %v1847 = vrcp.pop %v1844
  %v1848 = vmul.f32 1.0, %v1847
  %v1849 = vtanh.pop %v1819
  %v1850 = vtanh.pop %v1823
  %v1851 = vxor.u32 %v1820, 2147483648
  %v1852 = vxor.u32 %v1824, 2147483648
  %v1853 = vmul.f32 %v1851, 1.442695
  %v1854 = vpow.pop %v1853
  %v1855 = vmul.f32 %v1852, 1.442695
  %v1856 = vpow.pop %v1855
  %v1857 = vadd.f32 %v1854, 1.0
  %v1858 = vadd.f32 %v1856, 1.0
  %v1859 = vrcp.pop %v1857
  %v1860 = vmul.f32 1.0, %v1859
  %v1861 = vrcp.pop %v1858
  %v1862 = vmul.f32 1.0, %v1861
  %v1863 = vmul.f32 %v1846, %v1505
  %v1864 = vmul.f32 %v1848, %v1506
  %v1865 = vmul.f32 %v1834, %v1849
  %v1866 = vmul.f32 %v1836, %v1850
  %v1867 = vadd.f32 %v1863, %v1865
  %v1868 = vadd.f32 %v1864, %v1866
  %v1869 = vtanh.pop %v1867
  %v1870 = vtanh.pop %v1868
  %v1871 = vmul.f32 %v1860, %v1869
  %v1872 = vmul.f32 %v1862, %v1870
  %vm1873 = vcmp.gt.s32.totalorder %v38, 2
  %vm1874 = vcmp.gt.s32.totalorder %v39, 2
  %v1875 = vsel %vm1873, 1, 0
  %v1876 = vsel %vm1874, 1, 0
  %vm1877 = vcmp.eq.s32.totalorder %v1875, 1
  %vm1878 = vcmp.eq.s32.totalorder %v1876, 1
  %v1879 = vsel %vm1877, %v1871, %v1503
  %v1880 = vsel %vm1878, %v1872, %v1504
  %v1881 = vsel %vm1877, %v1867, %v1505
  %v1882 = vsel %vm1878, %v1868, %v1506
  %v1883 = vpack.c.bf16 %v1880, %v1879
  %v1885 = vunpack.c.l.b16 %v1883
  %v1886 = vunpack.c.h.b16 %v1883
  %v1887 = vpack.c.b16 %v1885, %v1885
  %v1888 = vpack.c.b16 %v1886, %v1886
  %s1891 = scalar_lea.vmem [#allocation2], 16
  %1892 = vst [vmem:[%s1891] sm:$0xf] %v1887
  %1893 = vst [vmem:[%s1891 + $0x4] sm:$0xf] %v1888
  %s1894 = scalar_lea.vmem [#allocation3], 96
  %v1895 = vld [vmem:[%s1894] sm:$0xff]
  %v1896 = vld [vmem:[%s1894 + $0x8] sm:$0xff]
  %v1897 = vld [vmem:[%s1894 + $0x10] sm:$0xff]
  %v1898 = vld [vmem:[%s1894 + $0x18] sm:$0xff]
  %v1899 = vunpack.c.l.bf16 %v1895
  %v1900 = vunpack.c.h.bf16 %v1895
  %v1901 = vunpack.c.l.bf16 %v1896
  %v1902 = vunpack.c.h.bf16 %v1896
  %v1903 = vunpack.c.l.bf16 %v1897
  %v1904 = vunpack.c.h.bf16 %v1897
  %v1905 = vunpack.c.l.bf16 %v1898
  %v1906 = vunpack.c.h.bf16 %v1898
  %v1907 = vadd.f32 %v1899, %v763
  %v1908 = vadd.f32 %v1900, %v767
  %v1909 = vadd.f32 %v1901, %v771
  %v1910 = vadd.f32 %v1902, %v775
  %v1911 = vadd.f32 %v1903, %v763
  %v1912 = vadd.f32 %v1904, %v767
  %v1913 = vadd.f32 %v1905, %v771
  %v1914 = vadd.f32 %v1906, %v775
  %v1915 = vld [vmem:[%s2] sm:$0xff]
  %v1916 = vld [vmem:[%s2 + $0x8] sm:$0xff]
  %v1917 = vld [vmem:[%s2 + $0x10] sm:$0xff]
  %v1918 = vld [vmem:[%s2 + $0x18] sm:$0xff]
  %v1919 = vld [vmem:[%s2 + $0x20] sm:$0xff]
  %v1920 = vld [vmem:[%s2 + $0x28] sm:$0xff]
  %v1921 = vld [vmem:[%s2 + $0x30] sm:$0xff]
  %v1922 = vld [vmem:[%s2 + $0x38] sm:$0xff]
  %v1923 = vld [vmem:[%s2 + $0x40] sm:$0xff]
  %v1924 = vld [vmem:[%s2 + $0x48] sm:$0xff]
  %v1925 = vld [vmem:[%s2 + $0x50] sm:$0xff]
  %v1926 = vld [vmem:[%s2 + $0x58] sm:$0xff]
  %v1927 = vld [vmem:[%s2 + $0x60] sm:$0xff]
  %v1928 = vld [vmem:[%s2 + $0x68] sm:$0xff]
  %v1929 = vld [vmem:[%s2 + $0x70] sm:$0xff]
  %v1930 = vld [vmem:[%s2 + $0x78] sm:$0xff]
  %v1931 = vld [vmem:[%s2 + $0x80] sm:$0xff]
  %v1932 = vld [vmem:[%s2 + $0x88] sm:$0xff]
  %v1933 = vld [vmem:[%s2 + $0x90] sm:$0xff]
  %v1934 = vld [vmem:[%s2 + $0x98] sm:$0xff]
  %v1935 = vld [vmem:[%s2 + $0xa0] sm:$0xff]
  %v1936 = vld [vmem:[%s2 + $0xa8] sm:$0xff]
  %v1937 = vld [vmem:[%s2 + $0xb0] sm:$0xff]
  %v1938 = vld [vmem:[%s2 + $0xb8] sm:$0xff]
  %v1939 = vld [vmem:[%s2 + $0xc0] sm:$0xff]
  %v1940 = vld [vmem:[%s2 + $0xc8] sm:$0xff]
  %v1941 = vld [vmem:[%s2 + $0xd0] sm:$0xff]
  %v1942 = vld [vmem:[%s2 + $0xd8] sm:$0xff]
  %v1943 = vld [vmem:[%s2 + $0xe0] sm:$0xff]
  %v1944 = vld [vmem:[%s2 + $0xe8] sm:$0xff]
  %v1945 = vld [vmem:[%s2 + $0xf0] sm:$0xff]
  %v1946 = vld [vmem:[%s2 + $0xf8] sm:$0xff]
  %v1979 = vunpack.c.l.b16 %v1915
  %v1980 = vunpack.c.h.b16 %v1915
  %v1981 = vunpack.c.l.b16 %v1916
  %v1982 = vunpack.c.h.b16 %v1916
  %v1983 = vunpack.c.l.b16 %v1917
  %v1984 = vunpack.c.h.b16 %v1917
  %v1985 = vunpack.c.l.b16 %v1918
  %v1986 = vunpack.c.h.b16 %v1918
  %v1987 = vunpack.c.l.b16 %v1919
  %v1988 = vunpack.c.h.b16 %v1919
  %v1989 = vunpack.c.l.b16 %v1920
  %v1990 = vunpack.c.h.b16 %v1920
  %v1991 = vunpack.c.l.b16 %v1921
  %v1992 = vunpack.c.h.b16 %v1921
  %v1993 = vunpack.c.l.b16 %v1922
  %v1994 = vunpack.c.h.b16 %v1922
  %v1995 = vunpack.c.l.b16 %v1923
  %v1996 = vunpack.c.h.b16 %v1923
  %v1997 = vunpack.c.l.b16 %v1924
  %v1998 = vunpack.c.h.b16 %v1924
  %v1999 = vunpack.c.l.b16 %v1925
  %v2000 = vunpack.c.h.b16 %v1925
  %v2001 = vunpack.c.l.b16 %v1926
  %v2002 = vunpack.c.h.b16 %v1926
  %v2003 = vunpack.c.l.b16 %v1927
  %v2004 = vunpack.c.h.b16 %v1927
  %v2005 = vunpack.c.l.b16 %v1928
  %v2006 = vunpack.c.h.b16 %v1928
  %v2007 = vunpack.c.l.b16 %v1929
  %v2008 = vunpack.c.h.b16 %v1929
  %v2009 = vunpack.c.l.b16 %v1930
  %v2010 = vunpack.c.h.b16 %v1930
  %v2011 = vunpack.c.l.b16 %v1931
  %v2012 = vunpack.c.h.b16 %v1931
  %v2013 = vunpack.c.l.b16 %v1932
  %v2014 = vunpack.c.h.b16 %v1932
  %v2015 = vunpack.c.l.b16 %v1933
  %v2016 = vunpack.c.h.b16 %v1933
  %v2017 = vunpack.c.l.b16 %v1934
  %v2018 = vunpack.c.h.b16 %v1934
  %v2019 = vunpack.c.l.b16 %v1935
  %v2020 = vunpack.c.h.b16 %v1935
  %v2021 = vunpack.c.l.b16 %v1936
  %v2022 = vunpack.c.h.b16 %v1936
  %v2023 = vunpack.c.l.b16 %v1937
  %v2024 = vunpack.c.h.b16 %v1937
  %v2025 = vunpack.c.l.b16 %v1938
  %v2026 = vunpack.c.h.b16 %v1938
  %v2027 = vunpack.c.l.b16 %v1939
  %v2028 = vunpack.c.h.b16 %v1939
  %v2029 = vunpack.c.l.b16 %v1940
  %v2030 = vunpack.c.h.b16 %v1940
  %v2031 = vunpack.c.l.b16 %v1941
  %v2032 = vunpack.c.h.b16 %v1941
  %v2033 = vunpack.c.l.b16 %v1942
  %v2034 = vunpack.c.h.b16 %v1942
  %v2035 = vunpack.c.l.b16 %v1943
  %v2036 = vunpack.c.h.b16 %v1943
  %v2037 = vunpack.c.l.b16 %v1944
  %v2038 = vunpack.c.h.b16 %v1944
  %v2039 = vunpack.c.l.b16 %v1945
  %v2040 = vunpack.c.h.b16 %v1945
  %v2041 = vunpack.c.l.b16 %v1946
  %v2042 = vunpack.c.h.b16 %v1946
  %v2043 = vpack.c.b16 %v1983, %v1979
  %v2044 = vpack.c.b16 %v1984, %v1980
  %v2045 = vpack.c.b16 %v1985, %v1981
  %v2046 = vpack.c.b16 %v1986, %v1982
  %v2047 = vpack.c.b16 %v1991, %v1987
  %v2048 = vpack.c.b16 %v1992, %v1988
  %v2049 = vpack.c.b16 %v1993, %v1989
  %v2050 = vpack.c.b16 %v1994, %v1990
  %v2051 = vpack.c.b16 %v1999, %v1995
  %v2052 = vpack.c.b16 %v2000, %v1996
  %v2053 = vpack.c.b16 %v2001, %v1997
  %v2054 = vpack.c.b16 %v2002, %v1998
  %v2055 = vpack.c.b16 %v2007, %v2003
  %v2056 = vpack.c.b16 %v2008, %v2004
  %v2057 = vpack.c.b16 %v2009, %v2005
  %v2058 = vpack.c.b16 %v2010, %v2006
  %v2059 = vpack.c.b16 %v2015, %v2011
  %v2060 = vpack.c.b16 %v2016, %v2012
  %v2061 = vpack.c.b16 %v2017, %v2013
  %v2062 = vpack.c.b16 %v2018, %v2014
  %v2063 = vpack.c.b16 %v2023, %v2019
  %v2064 = vpack.c.b16 %v2024, %v2020
  %v2065 = vpack.c.b16 %v2025, %v2021
  %v2066 = vpack.c.b16 %v2026, %v2022
  %v2067 = vpack.c.b16 %v2031, %v2027
  %v2068 = vpack.c.b16 %v2032, %v2028
  %v2069 = vpack.c.b16 %v2033, %v2029
  %v2070 = vpack.c.b16 %v2034, %v2030
  %v2071 = vpack.c.b16 %v2039, %v2035
  %v2072 = vpack.c.b16 %v2040, %v2036
  %v2073 = vpack.c.b16 %v2041, %v2037
  %v2074 = vpack.c.b16 %v2042, %v2038
  %2107 = vmatprep.subr.bf16.mxu0 %v2072
  %2108 = vmatpush1.bf16.msra.mxu0 %v2071
  %2109 = vmatprep.subr.bf16.mxu0 %v2068
  %2110 = vmatpush1.bf16.msra.mxu0 %v2067
  %2111 = vmatprep.subr.bf16.mxu0 %v2064
  %2112 = vmatpush1.bf16.msra.mxu0 %v2063
  %2113 = vmatprep.subr.bf16.mxu0 %v2060
  %2114 = vmatpush1.bf16.msra.mxu0 %v2059
  %2115 = vmatprep.subr.bf16.mxu0 %v2056
  %2116 = vmatpush1.bf16.msra.mxu0 %v2055
  %2117 = vmatprep.subr.bf16.mxu0 %v2052
  %2118 = vmatpush1.bf16.msra.mxu0 %v2051
  %2119 = vmatprep.subr.bf16.mxu0 %v2048
  %2120 = vmatpush1.bf16.msra.mxu0 %v2047
  %2121 = vmatprep.subr.bf16.mxu0 %v2044
  %2122 = vmatpush1.bf16.msra.mxu0 %v2043
  %2123 = vmatprep.subr.bf16.mxu0 0
  %2124 = vmatpush2.bf16.msra.mxu0 0
  %2125 = vmatprep.subr.bf16.mxu0 0
  %2126 = vmatpush2.bf16.msra.mxu0 0
  %2127 = vmatprep.subr.bf16.mxu0 0
  %2128 = vmatpush2.bf16.msra.mxu0 0
  %2129 = vmatprep.subr.bf16.mxu0 0
  %2130 = vmatpush2.bf16.msra.mxu0 0
  %2131 = vmatprep.subr.bf16.mxu0 0
  %2132 = vmatpush2.bf16.msra.mxu0 0
  %2133 = vmatprep.subr.bf16.mxu0 0
  %2134 = vmatpush2.bf16.msra.mxu0 0
  %2135 = vmatprep.subr.bf16.mxu0 0
  %2136 = vmatpush2.bf16.msra.mxu0 0
  %2137 = vmatprep.subr.bf16.mxu0 0
  %2138 = vmatpush2.bf16.msra.mxu0 0
  %2139 = vmatprep.mubr.bf16.mxu0 0
  %2140 = vmatmul.mubr.bf16.gmra.mxu0 %v1883
  %v2141 = vpop.f32.mrf.mxu0
  %v2142 = vadd.f32 0.0, %v2141
  %v2143 = vpop.f32.mrf.mxu0
  %v2144 = vadd.f32 0.0, %v2143
  %v2145 = vpop.f32.mrf.mxu0
  %v2146 = vadd.f32 0.0, %v2145
  %v2147 = vpop.f32.mrf.mxu0
  %v2148 = vadd.f32 0.0, %v2147
  %2149 = vdwg.mxu0
  %2150 = vmatprep.subr.bf16.mxu0 %v2074
  %2151 = vmatpush1.bf16.msra.mxu0 %v2073
  %2152 = vmatprep.subr.bf16.mxu0 %v2070
  %2153 = vmatpush1.bf16.msra.mxu0 %v2069
  %2154 = vmatprep.subr.bf16.mxu0 %v2066
  %2155 = vmatpush1.bf16.msra.mxu0 %v2065
  %2156 = vmatprep.subr.bf16.mxu0 %v2062
  %2157 = vmatpush1.bf16.msra.mxu0 %v2061
  %2158 = vmatprep.subr.bf16.mxu0 %v2058
  %2159 = vmatpush1.bf16.msra.mxu0 %v2057
  %2160 = vmatprep.subr.bf16.mxu0 %v2054
  %2161 = vmatpush1.bf16.msra.mxu0 %v2053
  %2162 = vmatprep.subr.bf16.mxu0 %v2050
  %2163 = vmatpush1.bf16.msra.mxu0 %v2049
  %2164 = vmatprep.subr.bf16.mxu0 %v2046
  %2165 = vmatpush1.bf16.msra.mxu0 %v2045
  %2166 = vmatprep.subr.bf16.mxu0 0
  %2167 = vmatpush2.bf16.msra.mxu0 0
  %2168 = vmatprep.subr.bf16.mxu0 0
  %2169 = vmatpush2.bf16.msra.mxu0 0
  %2170 = vmatprep.subr.bf16.mxu0 0
  %2171 = vmatpush2.bf16.msra.mxu0 0
  %2172 = vmatprep.subr.bf16.mxu0 0
  %2173 = vmatpush2.bf16.msra.mxu0 0
  %2174 = vmatprep.subr.bf16.mxu0 0
  %2175 = vmatpush2.bf16.msra.mxu0 0
  %2176 = vmatprep.subr.bf16.mxu0 0
  %2177 = vmatpush2.bf16.msra.mxu0 0
  %2178 = vmatprep.subr.bf16.mxu0 0
  %2179 = vmatpush2.bf16.msra.mxu0 0
  %2180 = vmatprep.subr.bf16.mxu0 0
  %2181 = vmatpush2.bf16.msra.mxu0 0
  %2182 = vmatprep.mubr.bf16.mxu0 0
  %2183 = vmatmul.mubr.bf16.gmra.mxu0 %v1883
  %v2184 = vpop.f32.mrf.mxu0
  %v2185 = vadd.f32 0.0, %v2184
  %v2186 = vpop.f32.mrf.mxu0
  %v2187 = vadd.f32 0.0, %v2186
  %v2188 = vpop.f32.mrf.mxu0
  %v2189 = vadd.f32 0.0, %v2188
  %v2190 = vpop.f32.mrf.mxu0
  %v2191 = vadd.f32 0.0, %v2190
  %2192 = vdwg.mxu0
  %v2193 = vadd.f32 %v1907, %v2142
  %v2194 = vadd.f32 %v1908, %v2144
  %v2195 = vadd.f32 %v1909, %v2185
  %v2196 = vadd.f32 %v1910, %v2187
  %v2197 = vadd.f32 %v1911, %v2146
  %v2198 = vadd.f32 %v1912, %v2148
  %v2199 = vadd.f32 %v1913, %v2189
  %v2200 = vadd.f32 %v1914, %v2191
  %v2201 = vxor.u32 %v2193, 2147483648
  %v2202 = vxor.u32 %v2197, 2147483648
  %v2203 = vmul.f32 %v2201, 1.442695
  %v2204 = vpow.pop %v2203
  %v2205 = vmul.f32 %v2202, 1.442695
  %v2206 = vpow.pop %v2205
  %v2207 = vadd.f32 %v2204, 1.0
  %v2208 = vadd.f32 %v2206, 1.0
  %v2209 = vrcp.pop %v2207
  %v2210 = vmul.f32 1.0, %v2209
  %v2211 = vrcp.pop %v2208
  %v2212 = vmul.f32 1.0, %v2211
  %v2213 = vxor.u32 %v2194, 2147483648
  %v2214 = vxor.u32 %v2198, 2147483648
  %v2215 = vmul.f32 %v2213, 1.442695
  %v2216 = vpow.pop %v2215
  %v2217 = vmul.f32 %v2214, 1.442695
  %v2218 = vpow.pop %v2217
  %v2219 = vadd.f32 %v2216, 1.0
  %v2220 = vadd.f32 %v2218, 1.0
  %v2221 = vrcp.pop %v2219
  %v2222 = vmul.f32 1.0, %v2221
  %v2223 = vrcp.pop %v2220
  %v2224 = vmul.f32 1.0, %v2223
  %v2225 = vtanh.pop %v2195
  %v2226 = vtanh.pop %v2199
  %v2227 = vxor.u32 %v2196, 2147483648
  %v2228 = vxor.u32 %v2200, 2147483648
  %v2229 = vmul.f32 %v2227, 1.442695
  %v2230 = vpow.pop %v2229
  %v2231 = vmul.f32 %v2228, 1.442695
  %v2232 = vpow.pop %v2231
  %v2233 = vadd.f32 %v2230, 1.0
  %v2234 = vadd.f32 %v2232, 1.0
  %v2235 = vrcp.pop %v2233
  %v2236 = vmul.f32 1.0, %v2235
  %v2237 = vrcp.pop %v2234
  %v2238 = vmul.f32 1.0, %v2237
  %v2239 = vmul.f32 %v2222, %v1881
  %v2240 = vmul.f32 %v2224, %v1882
  %v2241 = vmul.f32 %v2210, %v2225
  %v2242 = vmul.f32 %v2212, %v2226
  %v2243 = vadd.f32 %v2239, %v2241
  %v2244 = vadd.f32 %v2240, %v2242
  %v2245 = vtanh.pop %v2243
  %v2246 = vtanh.pop %v2244
  %v2247 = vmul.f32 %v2236, %v2245
  %v2248 = vmul.f32 %v2238, %v2246
  %vm2249 = vcmp.gt.s32.totalorder %v38, 3
  %vm2250 = vcmp.gt.s32.totalorder %v39, 3
  %v2251 = vsel %vm2249, 1, 0
  %v2252 = vsel %vm2250, 1, 0
  %vm2253 = vcmp.eq.s32.totalorder %v2251, 1
  %vm2254 = vcmp.eq.s32.totalorder %v2252, 1
  %v2255 = vsel %vm2253, %v2247, %v1879
  %v2256 = vsel %vm2254, %v2248, %v1880
  %v2257 = vsel %vm2253, %v2243, %v1881
  %v2258 = vsel %vm2254, %v2244, %v1882
  %v2259 = vpack.c.bf16 %v2256, %v2255
  %v2261 = vunpack.c.l.b16 %v2259
  %v2262 = vunpack.c.h.b16 %v2259
  %v2263 = vpack.c.b16 %v2261, %v2261
  %v2264 = vpack.c.b16 %v2262, %v2262
  %s2267 = scalar_lea.vmem [#allocation2], 24
  %2268 = vst [vmem:[%s2267] sm:$0xf] %v2263
  %2269 = vst [vmem:[%s2267 + $0x4] sm:$0xf] %v2264
  %s2270 = scalar_lea.vmem [#allocation3], 128
  %v2271 = vld [vmem:[%s2270] sm:$0xff]
  %v2272 = vld [vmem:[%s2270 + $0x8] sm:$0xff]
  %v2273 = vld [vmem:[%s2270 + $0x10] sm:$0xff]
  %v2274 = vld [vmem:[%s2270 + $0x18] sm:$0xff]
  %v2275 = vunpack.c.l.bf16 %v2271
  %v2276 = vunpack.c.h.bf16 %v2271
  %v2277 = vunpack.c.l.bf16 %v2272
  %v2278 = vunpack.c.h.bf16 %v2272
  %v2279 = vunpack.c.l.bf16 %v2273
  %v2280 = vunpack.c.h.bf16 %v2273
  %v2281 = vunpack.c.l.bf16 %v2274
  %v2282 = vunpack.c.h.bf16 %v2274
  %v2283 = vadd.f32 %v2275, %v763
  %v2284 = vadd.f32 %v2276, %v767
  %v2285 = vadd.f32 %v2277, %v771
  %v2286 = vadd.f32 %v2278, %v775
  %v2287 = vadd.f32 %v2279, %v763
  %v2288 = vadd.f32 %v2280, %v767
  %v2289 = vadd.f32 %v2281, %v771
  %v2290 = vadd.f32 %v2282, %v775
  %v2291 = vld [vmem:[%s2] sm:$0xff]
  %v2292 = vld [vmem:[%s2 + $0x8] sm:$0xff]
  %v2293 = vld [vmem:[%s2 + $0x10] sm:$0xff]
  %v2294 = vld [vmem:[%s2 + $0x18] sm:$0xff]
  %v2295 = vld [vmem:[%s2 + $0x20] sm:$0xff]
  %v2296 = vld [vmem:[%s2 + $0x28] sm:$0xff]
  %v2297 = vld [vmem:[%s2 + $0x30] sm:$0xff]
  %v2298 = vld [vmem:[%s2 + $0x38] sm:$0xff]
  %v2299 = vld [vmem:[%s2 + $0x40] sm:$0xff]
  %v2300 = vld [vmem:[%s2 + $0x48] sm:$0xff]
  %v2301 = vld [vmem:[%s2 + $0x50] sm:$0xff]
  %v2302 = vld [vmem:[%s2 + $0x58] sm:$0xff]
  %v2303 = vld [vmem:[%s2 + $0x60] sm:$0xff]
  %v2304 = vld [vmem:[%s2 + $0x68] sm:$0xff]
  %v2305 = vld [vmem:[%s2 + $0x70] sm:$0xff]
  %v2306 = vld [vmem:[%s2 + $0x78] sm:$0xff]
  %v2307 = vld [vmem:[%s2 + $0x80] sm:$0xff]
  %v2308 = vld [vmem:[%s2 + $0x88] sm:$0xff]
  %v2309 = vld [vmem:[%s2 + $0x90] sm:$0xff]
  %v2310 = vld [vmem:[%s2 + $0x98] sm:$0xff]
  %v2311 = vld [vmem:[%s2 + $0xa0] sm:$0xff]
  %v2312 = vld [vmem:[%s2 + $0xa8] sm:$0xff]
  %v2313 = vld [vmem:[%s2 + $0xb0] sm:$0xff]
  %v2314 = vld [vmem:[%s2 + $0xb8] sm:$0xff]
  %v2315 = vld [vmem:[%s2 + $0xc0] sm:$0xff]
  %v2316 = vld [vmem:[%s2 + $0xc8] sm:$0xff]
  %v2317 = vld [vmem:[%s2 + $0xd0] sm:$0xff]
  %v2318 = vld [vmem:[%s2 + $0xd8] sm:$0xff]
  %v2319 = vld [vmem:[%s2 + $0xe0] sm:$0xff]
  %v2320 = vld [vmem:[%s2 + $0xe8] sm:$0xff]
  %v2321 = vld [vmem:[%s2 + $0xf0] sm:$0xff]
  %v2322 = vld [vmem:[%s2 + $0xf8] sm:$0xff]
  %v2355 = vunpack.c.l.b16 %v2291
  %v2356 = vunpack.c.h.b16 %v2291
  %v2357 = vunpack.c.l.b16 %v2292
  %v2358 = vunpack.c.h.b16 %v2292
  %v2359 = vunpack.c.l.b16 %v2293
  %v2360 = vunpack.c.h.b16 %v2293
  %v2361 = vunpack.c.l.b16 %v2294
  %v2362 = vunpack.c.h.b16 %v2294
  %v2363 = vunpack.c.l.b16 %v2295
  %v2364 = vunpack.c.h.b16 %v2295
  %v2365 = vunpack.c.l.b16 %v2296
  %v2366 = vunpack.c.h.b16 %v2296
  %v2367 = vunpack.c.l.b16 %v2297
  %v2368 = vunpack.c.h.b16 %v2297
  %v2369 = vunpack.c.l.b16 %v2298
  %v2370 = vunpack.c.h.b16 %v2298
  %v2371 = vunpack.c.l.b16 %v2299
  %v2372 = vunpack.c.h.b16 %v2299
  %v2373 = vunpack.c.l.b16 %v2300
  %v2374 = vunpack.c.h.b16 %v2300
  %v2375 = vunpack.c.l.b16 %v2301
  %v2376 = vunpack.c.h.b16 %v2301
  %v2377 = vunpack.c.l.b16 %v2302
  %v2378 = vunpack.c.h.b16 %v2302
  %v2379 = vunpack.c.l.b16 %v2303
  %v2380 = vunpack.c.h.b16 %v2303
  %v2381 = vunpack.c.l.b16 %v2304
  %v2382 = vunpack.c.h.b16 %v2304
  %v2383 = vunpack.c.l.b16 %v2305
  %v2384 = vunpack.c.h.b16 %v2305
  %v2385 = vunpack.c.l.b16 %v2306
  %v2386 = vunpack.c.h.b16 %v2306
  %v2387 = vunpack.c.l.b16 %v2307
  %v2388 = vunpack.c.h.b16 %v2307
  %v2389 = vunpack.c.l.b16 %v2308
  %v2390 = vunpack.c.h.b16 %v2308
  %v2391 = vunpack.c.l.b16 %v2309
  %v2392 = vunpack.c.h.b16 %v2309
  %v2393 = vunpack.c.l.b16 %v2310
  %v2394 = vunpack.c.h.b16 %v2310
  %v2395 = vunpack.c.l.b16 %v2311
  %v2396 = vunpack.c.h.b16 %v2311
  %v2397 = vunpack.c.l.b16 %v2312
  %v2398 = vunpack.c.h.b16 %v2312
  %v2399 = vunpack.c.l.b16 %v2313
  %v2400 = vunpack.c.h.b16 %v2313
  %v2401 = vunpack.c.l.b16 %v2314
  %v2402 = vunpack.c.h.b16 %v2314
  %v2403 = vunpack.c.l.b16 %v2315
  %v2404 = vunpack.c.h.b16 %v2315
  %v2405 = vunpack.c.l.b16 %v2316
  %v2406 = vunpack.c.h.b16 %v2316
  %v2407 = vunpack.c.l.b16 %v2317
  %v2408 = vunpack.c.h.b16 %v2317
  %v2409 = vunpack.c.l.b16 %v2318
  %v2410 = vunpack.c.h.b16 %v2318
  %v2411 = vunpack.c.l.b16 %v2319
  %v2412 = vunpack.c.h.b16 %v2319
  %v2413 = vunpack.c.l.b16 %v2320
  %v2414 = vunpack.c.h.b16 %v2320
  %v2415 = vunpack.c.l.b16 %v2321
  %v2416 = vunpack.c.h.b16 %v2321
  %v2417 = vunpack.c.l.b16 %v2322
  %v2418 = vunpack.c.h.b16 %v2322
  %v2419 = vpack.c.b16 %v2359, %v2355
  %v2420 = vpack.c.b16 %v2360, %v2356
  %v2421 = vpack.c.b16 %v2361, %v2357
  %v2422 = vpack.c.b16 %v2362, %v2358
  %v2423 = vpack.c.b16 %v2367, %v2363
  %v2424 = vpack.c.b16 %v2368, %v2364
  %v2425 = vpack.c.b16 %v2369, %v2365
  %v2426 = vpack.c.b16 %v2370, %v2366
  %v2427 = vpack.c.b16 %v2375, %v2371
  %v2428 = vpack.c.b16 %v2376, %v2372
  %v2429 = vpack.c.b16 %v2377, %v2373
  %v2430 = vpack.c.b16 %v2378, %v2374
  %v2431 = vpack.c.b16 %v2383, %v2379
  %v2432 = vpack.c.b16 %v2384, %v2380
  %v2433 = vpack.c.b16 %v2385, %v2381
  %v2434 = vpack.c.b16 %v2386, %v2382
  %v2435 = vpack.c.b16 %v2391, %v2387
  %v2436 = vpack.c.b16 %v2392, %v2388
  %v2437 = vpack.c.b16 %v2393, %v2389
  %v2438 = vpack.c.b16 %v2394, %v2390
  %v2439 = vpack.c.b16 %v2399, %v2395
  %v2440 = vpack.c.b16 %v2400, %v2396
  %v2441 = vpack.c.b16 %v2401, %v2397
  %v2442 = vpack.c.b16 %v2402, %v2398
  %v2443 = vpack.c.b16 %v2407, %v2403
  %v2444 = vpack.c.b16 %v2408, %v2404
  %v2445 = vpack.c.b16 %v2409, %v2405
  %v2446 = vpack.c.b16 %v2410, %v2406
  %v2447 = vpack.c.b16 %v2415, %v2411
  %v2448 = vpack.c.b16 %v2416, %v2412
  %v2449 = vpack.c.b16 %v2417, %v2413
  %v2450 = vpack.c.b16 %v2418, %v2414
  %2483 = vmatprep.subr.bf16.mxu0 %v2448
  %2484 = vmatpush1.bf16.msra.mxu0 %v2447
  %2485 = vmatprep.subr.bf16.mxu0 %v2444
  %2486 = vmatpush1.bf16.msra.mxu0 %v2443
  %2487 = vmatprep.subr.bf16.mxu0 %v2440
  %2488 = vmatpush1.bf16.msra.mxu0 %v2439
  %2489 = vmatprep.subr.bf16.mxu0 %v2436
  %2490 = vmatpush1.bf16.msra.mxu0 %v2435
  %2491 = vmatprep.subr.bf16.mxu0 %v2432
  %2492 = vmatpush1.bf16.msra.mxu0 %v2431
  %2493 = vmatprep.subr.bf16.mxu0 %v2428
  %2494 = vmatpush1.bf16.msra.mxu0 %v2427
  %2495 = vmatprep.subr.bf16.mxu0 %v2424
  %2496 = vmatpush1.bf16.msra.mxu0 %v2423
  %2497 = vmatprep.subr.bf16.mxu0 %v2420
  %2498 = vmatpush1.bf16.msra.mxu0 %v2419
  %2499 = vmatprep.subr.bf16.mxu0 0
  %2500 = vmatpush2.bf16.msra.mxu0 0
  %2501 = vmatprep.subr.bf16.mxu0 0
  %2502 = vmatpush2.bf16.msra.mxu0 0
  %2503 = vmatprep.subr.bf16.mxu0 0
  %2504 = vmatpush2.bf16.msra.mxu0 0
  %2505 = vmatprep.subr.bf16.mxu0 0
  %2506 = vmatpush2.bf16.msra.mxu0 0
  %2507 = vmatprep.subr.bf16.mxu0 0
  %2508 = vmatpush2.bf16.msra.mxu0 0
  %2509 = vmatprep.subr.bf16.mxu0 0
  %2510 = vmatpush2.bf16.msra.mxu0 0
  %2511 = vmatprep.subr.bf16.mxu0 0
  %2512 = vmatpush2.bf16.msra.mxu0 0
  %2513 = vmatprep.subr.bf16.mxu0 0
  %2514 = vmatpush2.bf16.msra.mxu0 0
  %2515 = vmatprep.mubr.bf16.mxu0 0
  %2516 = vmatmul.mubr.bf16.gmra.mxu0 %v2259
  %v2517 = vpop.f32.mrf.mxu0
  %v2518 = vadd.f32 0.0, %v2517
  %v2519 = vpop.f32.mrf.mxu0
  %v2520 = vadd.f32 0.0, %v2519
  %v2521 = vpop.f32.mrf.mxu0
  %v2522 = vadd.f32 0.0, %v2521
  %v2523 = vpop.f32.mrf.mxu0
  %v2524 = vadd.f32 0.0, %v2523
  %2525 = vdwg.mxu0
  %2526 = vmatprep.subr.bf16.mxu0 %v2450
  %2527 = vmatpush1.bf16.msra.mxu0 %v2449
  %2528 = vmatprep.subr.bf16.mxu0 %v2446
  %2529 = vmatpush1.bf16.msra.mxu0 %v2445
  %2530 = vmatprep.subr.bf16.mxu0 %v2442
  %2531 = vmatpush1.bf16.msra.mxu0 %v2441
  %2532 = vmatprep.subr.bf16.mxu0 %v2438
  %2533 = vmatpush1.bf16.msra.mxu0 %v2437
  %2534 = vmatprep.subr.bf16.mxu0 %v2434
  %2535 = vmatpush1.bf16.msra.mxu0 %v2433
  %2536 = vmatprep.subr.bf16.mxu0 %v2430
  %2537 = vmatpush1.bf16.msra.mxu0 %v2429
  %2538 = vmatprep.subr.bf16.mxu0 %v2426
  %2539 = vmatpush1.bf16.msra.mxu0 %v2425
  %2540 = vmatprep.subr.bf16.mxu0 %v2422
  %2541 = vmatpush1.bf16.msra.mxu0 %v2421
  %2542 = vmatprep.subr.bf16.mxu0 0
  %2543 = vmatpush2.bf16.msra.mxu0 0
  %2544 = vmatprep.subr.bf16.mxu0 0
  %2545 = vmatpush2.bf16.msra.mxu0 0
  %2546 = vmatprep.subr.bf16.mxu0 0
  %2547 = vmatpush2.bf16.msra.mxu0 0
  %2548 = vmatprep.subr.bf16.mxu0 0
  %2549 = vmatpush2.bf16.msra.mxu0 0
  %2550 = vmatprep.subr.bf16.mxu0 0
  %2551 = vmatpush2.bf16.msra.mxu0 0
  %2552 = vmatprep.subr.bf16.mxu0 0
  %2553 = vmatpush2.bf16.msra.mxu0 0
  %2554 = vmatprep.subr.bf16.mxu0 0
  %2555 = vmatpush2.bf16.msra.mxu0 0
  %2556 = vmatprep.subr.bf16.mxu0 0
  %2557 = vmatpush2.bf16.msra.mxu0 0
  %2558 = vmatprep.mubr.bf16.mxu0 0
  %2559 = vmatmul.mubr.bf16.gmra.mxu0 %v2259
  %v2560 = vpop.f32.mrf.mxu0
  %v2561 = vadd.f32 0.0, %v2560
  %v2562 = vpop.f32.mrf.mxu0
  %v2563 = vadd.f32 0.0, %v2562
  %v2564 = vpop.f32.mrf.mxu0
  %v2565 = vadd.f32 0.0, %v2564
  %v2566 = vpop.f32.mrf.mxu0
  %v2567 = vadd.f32 0.0, %v2566
  %2568 = vdwg.mxu0
  %v2569 = vadd.f32 %v2283, %v2518
  %v2570 = vadd.f32 %v2284, %v2520
  %v2571 = vadd.f32 %v2285, %v2561
  %v2572 = vadd.f32 %v2286, %v2563
  %v2573 = vadd.f32 %v2287, %v2522
  %v2574 = vadd.f32 %v2288, %v2524
  %v2575 = vadd.f32 %v2289, %v2565
  %v2576 = vadd.f32 %v2290, %v2567
  %v2577 = vxor.u32 %v2569, 2147483648
  %v2578 = vxor.u32 %v2573, 2147483648
  %v2579 = vmul.f32 %v2577, 1.442695
  %v2580 = vpow.pop %v2579
  %v2581 = vmul.f32 %v2578, 1.442695
  %v2582 = vpow.pop %v2581
  %v2583 = vadd.f32 %v2580, 1.0
  %v2584 = vadd.f32 %v2582, 1.0
  %v2585 = vrcp.pop %v2583
  %v2586 = vmul.f32 1.0, %v2585
  %v2587 = vrcp.pop %v2584
  %v2588 = vmul.f32 1.0, %v2587
  %v2589 = vxor.u32 %v2570, 2147483648
  %v2590 = vxor.u32 %v2574, 2147483648
  %v2591 = vmul.f32 %v2589, 1.442695
  %v2592 = vpow.pop %v2591
  %v2593 = vmul.f32 %v2590, 1.442695
  %v2594 = vpow.pop %v2593
  %v2595 = vadd.f32 %v2592, 1.0
  %v2596 = vadd.f32 %v2594, 1.0
  %v2597 = vrcp.pop %v2595
  %v2598 = vmul.f32 1.0, %v2597
  %v2599 = vrcp.pop %v2596
  %v2600 = vmul.f32 1.0, %v2599
  %v2601 = vtanh.pop %v2571
  %v2602 = vtanh.pop %v2575
  %v2603 = vxor.u32 %v2572, 2147483648
  %v2604 = vxor.u32 %v2576, 2147483648
  %v2605 = vmul.f32 %v2603, 1.442695
  %v2606 = vpow.pop %v2605
  %v2607 = vmul.f32 %v2604, 1.442695
  %v2608 = vpow.pop %v2607
  %v2609 = vadd.f32 %v2606, 1.0
  %v2610 = vadd.f32 %v2608, 1.0
  %v2611 = vrcp.pop %v2609
  %v2612 = vmul.f32 1.0, %v2611
  %v2613 = vrcp.pop %v2610
  %v2614 = vmul.f32 1.0, %v2613
  %v2615 = vmul.f32 %v2598, %v2257
  %v2616 = vmul.f32 %v2600, %v2258
  %v2617 = vmul.f32 %v2586, %v2601
  %v2618 = vmul.f32 %v2588, %v2602
  %v2619 = vadd.f32 %v2615, %v2617
  %v2620 = vadd.f32 %v2616, %v2618
  %v2621 = vtanh.pop %v2619
  %v2622 = vtanh.pop %v2620
  %v2623 = vmul.f32 %v2612, %v2621
  %v2624 = vmul.f32 %v2614, %v2622
  %vm2625 = vcmp.gt.s32.totalorder %v38, 4
  %vm2626 = vcmp.gt.s32.totalorder %v39, 4
  %v2627 = vsel %vm2625, 1, 0
  %v2628 = vsel %vm2626, 1, 0
  %vm2629 = vcmp.eq.s32.totalorder %v2627, 1
  %vm2630 = vcmp.eq.s32.totalorder %v2628, 1
  %v2631 = vsel %vm2629, %v2623, %v2255
  %v2632 = vsel %vm2630, %v2624, %v2256
  %v2633 = vsel %vm2629, %v2619, %v2257
  %v2634 = vsel %vm2630, %v2620, %v2258
  %v2635 = vpack.c.bf16 %v2632, %v2631
  %v2637 = vunpack.c.l.b16 %v2635
  %v2638 = vunpack.c.h.b16 %v2635
  %v2639 = vpack.c.b16 %v2637, %v2637
  %v2640 = vpack.c.b16 %v2638, %v2638
  %s2643 = scalar_lea.vmem [#allocation2], 32
  %2644 = vst [vmem:[%s2643] sm:$0xf] %v2639
  %2645 = vst [vmem:[%s2643 + $0x4] sm:$0xf] %v2640
  %s2646 = scalar_lea.vmem [#allocation3], 160
  %v2647 = vld [vmem:[%s2646] sm:$0xff]
  %v2648 = vld [vmem:[%s2646 + $0x8] sm:$0xff]
  %v2649 = vld [vmem:[%s2646 + $0x10] sm:$0xff]
  %v2650 = vld [vmem:[%s2646 + $0x18] sm:$0xff]
  %v2651 = vunpack.c.l.bf16 %v2647
  %v2652 = vunpack.c.h.bf16 %v2647
  %v2653 = vunpack.c.l.bf16 %v2648
  %v2654 = vunpack.c.h.bf16 %v2648
  %v2655 = vunpack.c.l.bf16 %v2649
  %v2656 = vunpack.c.h.bf16 %v2649
  %v2657 = vunpack.c.l.bf16 %v2650
  %v2658 = vunpack.c.h.bf16 %v2650
  %v2659 = vadd.f32 %v2651, %v763
  %v2660 = vadd.f32 %v2652, %v767
  %v2661 = vadd.f32 %v2653, %v771
  %v2662 = vadd.f32 %v2654, %v775
  %v2663 = vadd.f32 %v2655, %v763
  %v2664 = vadd.f32 %v2656, %v767
  %v2665 = vadd.f32 %v2657, %v771
  %v2666 = vadd.f32 %v2658, %v775
  %v2667 = vld [vmem:[%s2] sm:$0xff]
  %v2668 = vld [vmem:[%s2 + $0x8] sm:$0xff]
  %v2669 = vld [vmem:[%s2 + $0x10] sm:$0xff]
  %v2670 = vld [vmem:[%s2 + $0x18] sm:$0xff]
  %v2671 = vld [vmem:[%s2 + $0x20] sm:$0xff]
  %v2672 = vld [vmem:[%s2 + $0x28] sm:$0xff]
  %v2673 = vld [vmem:[%s2 + $0x30] sm:$0xff]
  %v2674 = vld [vmem:[%s2 + $0x38] sm:$0xff]
  %v2675 = vld [vmem:[%s2 + $0x40] sm:$0xff]
  %v2676 = vld [vmem:[%s2 + $0x48] sm:$0xff]
  %v2677 = vld [vmem:[%s2 + $0x50] sm:$0xff]
  %v2678 = vld [vmem:[%s2 + $0x58] sm:$0xff]
  %v2679 = vld [vmem:[%s2 + $0x60] sm:$0xff]
  %v2680 = vld [vmem:[%s2 + $0x68] sm:$0xff]
  %v2681 = vld [vmem:[%s2 + $0x70] sm:$0xff]
  %v2682 = vld [vmem:[%s2 + $0x78] sm:$0xff]
  %v2683 = vld [vmem:[%s2 + $0x80] sm:$0xff]
  %v2684 = vld [vmem:[%s2 + $0x88] sm:$0xff]
  %v2685 = vld [vmem:[%s2 + $0x90] sm:$0xff]
  %v2686 = vld [vmem:[%s2 + $0x98] sm:$0xff]
  %v2687 = vld [vmem:[%s2 + $0xa0] sm:$0xff]
  %v2688 = vld [vmem:[%s2 + $0xa8] sm:$0xff]
  %v2689 = vld [vmem:[%s2 + $0xb0] sm:$0xff]
  %v2690 = vld [vmem:[%s2 + $0xb8] sm:$0xff]
  %v2691 = vld [vmem:[%s2 + $0xc0] sm:$0xff]
  %v2692 = vld [vmem:[%s2 + $0xc8] sm:$0xff]
  %v2693 = vld [vmem:[%s2 + $0xd0] sm:$0xff]
  %v2694 = vld [vmem:[%s2 + $0xd8] sm:$0xff]
  %v2695 = vld [vmem:[%s2 + $0xe0] sm:$0xff]
  %v2696 = vld [vmem:[%s2 + $0xe8] sm:$0xff]
  %v2697 = vld [vmem:[%s2 + $0xf0] sm:$0xff]
  %v2698 = vld [vmem:[%s2 + $0xf8] sm:$0xff]
  %v2731 = vunpack.c.l.b16 %v2667
  %v2732 = vunpack.c.h.b16 %v2667
  %v2733 = vunpack.c.l.b16 %v2668
  %v2734 = vunpack.c.h.b16 %v2668
  %v2735 = vunpack.c.l.b16 %v2669
  %v2736 = vunpack.c.h.b16 %v2669
  %v2737 = vunpack.c.l.b16 %v2670
  %v2738 = vunpack.c.h.b16 %v2670
  %v2739 = vunpack.c.l.b16 %v2671
  %v2740 = vunpack.c.h.b16 %v2671
  %v2741 = vunpack.c.l.b16 %v2672
  %v2742 = vunpack.c.h.b16 %v2672
  %v2743 = vunpack.c.l.b16 %v2673
  %v2744 = vunpack.c.h.b16 %v2673
  %v2745 = vunpack.c.l.b16 %v2674
  %v2746 = vunpack.c.h.b16 %v2674
  %v2747 = vunpack.c.l.b16 %v2675
  %v2748 = vunpack.c.h.b16 %v2675
  %v2749 = vunpack.c.l.b16 %v2676
  %v2750 = vunpack.c.h.b16 %v2676
  %v2751 = vunpack.c.l.b16 %v2677
  %v2752 = vunpack.c.h.b16 %v2677
  %v2753 = vunpack.c.l.b16 %v2678
  %v2754 = vunpack.c.h.b16 %v2678
  %v2755 = vunpack.c.l.b16 %v2679
  %v2756 = vunpack.c.h.b16 %v2679
  %v2757 = vunpack.c.l.b16 %v2680
  %v2758 = vunpack.c.h.b16 %v2680
  %v2759 = vunpack.c.l.b16 %v2681
  %v2760 = vunpack.c.h.b16 %v2681
  %v2761 = vunpack.c.l.b16 %v2682
  %v2762 = vunpack.c.h.b16 %v2682
  %v2763 = vunpack.c.l.b16 %v2683
  %v2764 = vunpack.c.h.b16 %v2683
  %v2765 = vunpack.c.l.b16 %v2684
  %v2766 = vunpack.c.h.b16 %v2684
  %v2767 = vunpack.c.l.b16 %v2685
  %v2768 = vunpack.c.h.b16 %v2685
  %v2769 = vunpack.c.l.b16 %v2686
  %v2770 = vunpack.c.h.b16 %v2686
  %v2771 = vunpack.c.l.b16 %v2687
  %v2772 = vunpack.c.h.b16 %v2687
  %v2773 = vunpack.c.l.b16 %v2688
  %v2774 = vunpack.c.h.b16 %v2688
  %v2775 = vunpack.c.l.b16 %v2689
  %v2776 = vunpack.c.h.b16 %v2689
  %v2777 = vunpack.c.l.b16 %v2690
  %v2778 = vunpack.c.h.b16 %v2690
  %v2779 = vunpack.c.l.b16 %v2691
  %v2780 = vunpack.c.h.b16 %v2691
  %v2781 = vunpack.c.l.b16 %v2692
  %v2782 = vunpack.c.h.b16 %v2692
  %v2783 = vunpack.c.l.b16 %v2693
  %v2784 = vunpack.c.h.b16 %v2693
  %v2785 = vunpack.c.l.b16 %v2694
  %v2786 = vunpack.c.h.b16 %v2694
  %v2787 = vunpack.c.l.b16 %v2695
  %v2788 = vunpack.c.h.b16 %v2695
  %v2789 = vunpack.c.l.b16 %v2696
  %v2790 = vunpack.c.h.b16 %v2696
  %v2791 = vunpack.c.l.b16 %v2697
  %v2792 = vunpack.c.h.b16 %v2697
  %v2793 = vunpack.c.l.b16 %v2698
  %v2794 = vunpack.c.h.b16 %v2698
  %v2795 = vpack.c.b16 %v2735, %v2731
  %v2796 = vpack.c.b16 %v2736, %v2732
  %v2797 = vpack.c.b16 %v2737, %v2733
  %v2798 = vpack.c.b16 %v2738, %v2734
  %v2799 = vpack.c.b16 %v2743, %v2739
  %v2800 = vpack.c.b16 %v2744, %v2740
  %v2801 = vpack.c.b16 %v2745, %v2741
  %v2802 = vpack.c.b16 %v2746, %v2742
  %v2803 = vpack.c.b16 %v2751, %v2747
  %v2804 = vpack.c.b16 %v2752, %v2748
  %v2805 = vpack.c.b16 %v2753, %v2749
  %v2806 = vpack.c.b16 %v2754, %v2750
  %v2807 = vpack.c.b16 %v2759, %v2755
  %v2808 = vpack.c.b16 %v2760, %v2756
  %v2809 = vpack.c.b16 %v2761, %v2757
  %v2810 = vpack.c.b16 %v2762, %v2758
  %v2811 = vpack.c.b16 %v2767, %v2763
  %v2812 = vpack.c.b16 %v2768, %v2764
  %v2813 = vpack.c.b16 %v2769, %v2765
  %v2814 = vpack.c.b16 %v2770, %v2766
  %v2815 = vpack.c.b16 %v2775, %v2771
  %v2816 = vpack.c.b16 %v2776, %v2772
  %v2817 = vpack.c.b16 %v2777, %v2773
  %v2818 = vpack.c.b16 %v2778, %v2774
  %v2819 = vpack.c.b16 %v2783, %v2779
  %v2820 = vpack.c.b16 %v2784, %v2780
  %v2821 = vpack.c.b16 %v2785, %v2781
  %v2822 = vpack.c.b16 %v2786, %v2782
  %v2823 = vpack.c.b16 %v2791, %v2787
  %v2824 = vpack.c.b16 %v2792, %v2788
  %v2825 = vpack.c.b16 %v2793, %v2789
  %v2826 = vpack.c.b16 %v2794, %v2790
  %2859 = vmatprep.subr.bf16.mxu0 %v2824
  %2860 = vmatpush1.bf16.msra.mxu0 %v2823
  %2861 = vmatprep.subr.bf16.mxu0 %v2820
  %2862 = vmatpush1.bf16.msra.mxu0 %v2819
  %2863 = vmatprep.subr.bf16.mxu0 %v2816
  %2864 = vmatpush1.bf16.msra.mxu0 %v2815
  %2865 = vmatprep.subr.bf16.mxu0 %v2812
  %2866 = vmatpush1.bf16.msra.mxu0 %v2811
  %2867 = vmatprep.subr.bf16.mxu0 %v2808
  %2868 = vmatpush1.bf16.msra.mxu0 %v2807
  %2869 = vmatprep.subr.bf16.mxu0 %v2804
  %2870 = vmatpush1.bf16.msra.mxu0 %v2803
  %2871 = vmatprep.subr.bf16.mxu0 %v2800
  %2872 = vmatpush1.bf16.msra.mxu0 %v2799
  %2873 = vmatprep.subr.bf16.mxu0 %v2796
  %2874 = vmatpush1.bf16.msra.mxu0 %v2795
  %2875 = vmatprep.subr.bf16.mxu0 0
  %2876 = vmatpush2.bf16.msra.mxu0 0
  %2877 = vmatprep.subr.bf16.mxu0 0
  %2878 = vmatpush2.bf16.msra.mxu0 0
  %2879 = vmatprep.subr.bf16.mxu0 0
  %2880 = vmatpush2.bf16.msra.mxu0 0
  %2881 = vmatprep.subr.bf16.mxu0 0
  %2882 = vmatpush2.bf16.msra.mxu0 0
  %2883 = vmatprep.subr.bf16.mxu0 0
  %2884 = vmatpush2.bf16.msra.mxu0 0
  %2885 = vmatprep.subr.bf16.mxu0 0
  %2886 = vmatpush2.bf16.msra.mxu0 0
  %2887 = vmatprep.subr.bf16.mxu0 0
  %2888 = vmatpush2.bf16.msra.mxu0 0
  %2889 = vmatprep.subr.bf16.mxu0 0
  %2890 = vmatpush2.bf16.msra.mxu0 0
  %2891 = vmatprep.mubr.bf16.mxu0 0
  %2892 = vmatmul.mubr.bf16.gmra.mxu0 %v2635
  %v2893 = vpop.f32.mrf.mxu0
  %v2894 = vadd.f32 0.0, %v2893
  %v2895 = vpop.f32.mrf.mxu0
  %v2896 = vadd.f32 0.0, %v2895
  %v2897 = vpop.f32.mrf.mxu0
  %v2898 = vadd.f32 0.0, %v2897
  %v2899 = vpop.f32.mrf.mxu0
  %v2900 = vadd.f32 0.0, %v2899
  %2901 = vdwg.mxu0
  %2902 = vmatprep.subr.bf16.mxu0 %v2826
  %2903 = vmatpush1.bf16.msra.mxu0 %v2825
  %2904 = vmatprep.subr.bf16.mxu0 %v2822
  %2905 = vmatpush1.bf16.msra.mxu0 %v2821
  %2906 = vmatprep.subr.bf16.mxu0 %v2818
  %2907 = vmatpush1.bf16.msra.mxu0 %v2817
  %2908 = vmatprep.subr.bf16.mxu0 %v2814
  %2909 = vmatpush1.bf16.msra.mxu0 %v2813
  %2910 = vmatprep.subr.bf16.mxu0 %v2810
  %2911 = vmatpush1.bf16.msra.mxu0 %v2809
  %2912 = vmatprep.subr.bf16.mxu0 %v2806
  %2913 = vmatpush1.bf16.msra.mxu0 %v2805
  %2914 = vmatprep.subr.bf16.mxu0 %v2802
  %2915 = vmatpush1.bf16.msra.mxu0 %v2801
  %2916 = vmatprep.subr.bf16.mxu0 %v2798
  %2917 = vmatpush1.bf16.msra.mxu0 %v2797
  %2918 = vmatprep.subr.bf16.mxu0 0
  %2919 = vmatpush2.bf16.msra.mxu0 0
  %2920 = vmatprep.subr.bf16.mxu0 0
  %2921 = vmatpush2.bf16.msra.mxu0 0
  %2922 = vmatprep.subr.bf16.mxu0 0
  %2923 = vmatpush2.bf16.msra.mxu0 0
  %2924 = vmatprep.subr.bf16.mxu0 0
  %2925 = vmatpush2.bf16.msra.mxu0 0
  %2926 = vmatprep.subr.bf16.mxu0 0
  %2927 = vmatpush2.bf16.msra.mxu0 0
  %2928 = vmatprep.subr.bf16.mxu0 0
  %2929 = vmatpush2.bf16.msra.mxu0 0
  %2930 = vmatprep.subr.bf16.mxu0 0
  %2931 = vmatpush2.bf16.msra.mxu0 0
  %2932 = vmatprep.subr.bf16.mxu0 0
  %2933 = vmatpush2.bf16.msra.mxu0 0
  %2934 = vmatprep.mubr.bf16.mxu0 0
  %2935 = vmatmul.mubr.bf16.gmra.mxu0 %v2635
  %v2936 = vpop.f32.mrf.mxu0
  %v2937 = vadd.f32 0.0, %v2936
  %v2938 = vpop.f32.mrf.mxu0
  %v2939 = vadd.f32 0.0, %v2938
  %v2940 = vpop.f32.mrf.mxu0
  %v2941 = vadd.f32 0.0, %v2940
  %v2942 = vpop.f32.mrf.mxu0
  %v2943 = vadd.f32 0.0, %v2942
  %2944 = vdwg.mxu0
  %v2945 = vadd.f32 %v2659, %v2894
  %v2946 = vadd.f32 %v2660, %v2896
  %v2947 = vadd.f32 %v2661, %v2937
  %v2948 = vadd.f32 %v2662, %v2939
  %v2949 = vadd.f32 %v2663, %v2898
  %v2950 = vadd.f32 %v2664, %v2900
  %v2951 = vadd.f32 %v2665, %v2941
  %v2952 = vadd.f32 %v2666, %v2943
  %v2953 = vxor.u32 %v2945, 2147483648
  %v2954 = vxor.u32 %v2949, 2147483648
  %v2955 = vmul.f32 %v2953, 1.442695
  %v2956 = vpow.pop %v2955
  %v2957 = vmul.f32 %v2954, 1.442695
  %v2958 = vpow.pop %v2957
  %v2959 = vadd.f32 %v2956, 1.0
  %v2960 = vadd.f32 %v2958, 1.0
  %v2961 = vrcp.pop %v2959
  %v2962 = vmul.f32 1.0, %v2961
  %v2963 = vrcp.pop %v2960
  %v2964 = vmul.f32 1.0, %v2963
  %v2965 = vxor.u32 %v2946, 2147483648
  %v2966 = vxor.u32 %v2950, 2147483648
  %v2967 = vmul.f32 %v2965, 1.442695
  %v2968 = vpow.pop %v2967
  %v2969 = vmul.f32 %v2966, 1.442695
  %v2970 = vpow.pop %v2969
  %v2971 = vadd.f32 %v2968, 1.0
  %v2972 = vadd.f32 %v2970, 1.0
  %v2973 = vrcp.pop %v2971
  %v2974 = vmul.f32 1.0, %v2973
  %v2975 = vrcp.pop %v2972
  %v2976 = vmul.f32 1.0, %v2975
  %v2977 = vtanh.pop %v2947
  %v2978 = vtanh.pop %v2951
  %v2979 = vxor.u32 %v2948, 2147483648
  %v2980 = vxor.u32 %v2952, 2147483648
  %v2981 = vmul.f32 %v2979, 1.442695
  %v2982 = vpow.pop %v2981
  %v2983 = vmul.f32 %v2980, 1.442695
  %v2984 = vpow.pop %v2983
  %v2985 = vadd.f32 %v2982, 1.0
  %v2986 = vadd.f32 %v2984, 1.0
  %v2987 = vrcp.pop %v2985
  %v2988 = vmul.f32 1.0, %v2987
  %v2989 = vrcp.pop %v2986
  %v2990 = vmul.f32 1.0, %v2989
  %v2991 = vmul.f32 %v2974, %v2633
  %v2992 = vmul.f32 %v2976, %v2634
  %v2993 = vmul.f32 %v2962, %v2977
  %v2994 = vmul.f32 %v2964, %v2978
  %v2995 = vadd.f32 %v2991, %v2993
  %v2996 = vadd.f32 %v2992, %v2994
  %v2997 = vtanh.pop %v2995
  %v2998 = vtanh.pop %v2996
  %v2999 = vmul.f32 %v2988, %v2997
  %v3000 = vmul.f32 %v2990, %v2998
  %vm3001 = vcmp.gt.s32.totalorder %v38, 5
  %vm3002 = vcmp.gt.s32.totalorder %v39, 5
  %v3003 = vsel %vm3001, 1, 0
  %v3004 = vsel %vm3002, 1, 0
  %vm3005 = vcmp.eq.s32.totalorder %v3003, 1
  %vm3006 = vcmp.eq.s32.totalorder %v3004, 1
  %v3007 = vsel %vm3005, %v2999, %v2631
  %v3008 = vsel %vm3006, %v3000, %v2632
  %v3009 = vsel %vm3005, %v2995, %v2633
  %v3010 = vsel %vm3006, %v2996, %v2634
  %v3011 = vpack.c.bf16 %v3008, %v3007
  %v3013 = vunpack.c.l.b16 %v3011
  %v3014 = vunpack.c.h.b16 %v3011
  %v3015 = vpack.c.b16 %v3013, %v3013
  %v3016 = vpack.c.b16 %v3014, %v3014
  %s3019 = scalar_lea.vmem [#allocation2], 40
  %3020 = vst [vmem:[%s3019] sm:$0xf] %v3015
  %3021 = vst [vmem:[%s3019 + $0x4] sm:$0xf] %v3016
  %s3022 = scalar_lea.vmem [#allocation3], 192
  %v3023 = vld [vmem:[%s3022] sm:$0xff]
  %v3024 = vld [vmem:[%s3022 + $0x8] sm:$0xff]
  %v3025 = vld [vmem:[%s3022 + $0x10] sm:$0xff]
  %v3026 = vld [vmem:[%s3022 + $0x18] sm:$0xff]
  %v3027 = vunpack.c.l.bf16 %v3023
  %v3028 = vunpack.c.h.bf16 %v3023
  %v3029 = vunpack.c.l.bf16 %v3024
  %v3030 = vunpack.c.h.bf16 %v3024
  %v3031 = vunpack.c.l.bf16 %v3025
  %v3032 = vunpack.c.h.bf16 %v3025
  %v3033 = vunpack.c.l.bf16 %v3026
  %v3034 = vunpack.c.h.bf16 %v3026
  %v3035 = vadd.f32 %v3027, %v763
  %v3036 = vadd.f32 %v3028, %v767
  %v3037 = vadd.f32 %v3029, %v771
  %v3038 = vadd.f32 %v3030, %v775
  %v3039 = vadd.f32 %v3031, %v763
  %v3040 = vadd.f32 %v3032, %v767
  %v3041 = vadd.f32 %v3033, %v771
  %v3042 = vadd.f32 %v3034, %v775
  %v3043 = vld [vmem:[%s2] sm:$0xff]
  %v3044 = vld [vmem:[%s2 + $0x8] sm:$0xff]
  %v3045 = vld [vmem:[%s2 + $0x10] sm:$0xff]
  %v3046 = vld [vmem:[%s2 + $0x18] sm:$0xff]
  %v3047 = vld [vmem:[%s2 + $0x20] sm:$0xff]
  %v3048 = vld [vmem:[%s2 + $0x28] sm:$0xff]
  %v3049 = vld [vmem:[%s2 + $0x30] sm:$0xff]
  %v3050 = vld [vmem:[%s2 + $0x38] sm:$0xff]
  %v3051 = vld [vmem:[%s2 + $0x40] sm:$0xff]
  %v3052 = vld [vmem:[%s2 + $0x48] sm:$0xff]
  %v3053 = vld [vmem:[%s2 + $0x50] sm:$0xff]
  %v3054 = vld [vmem:[%s2 + $0x58] sm:$0xff]
  %v3055 = vld [vmem:[%s2 + $0x60] sm:$0xff]
  %v3056 = vld [vmem:[%s2 + $0x68] sm:$0xff]
  %v3057 = vld [vmem:[%s2 + $0x70] sm:$0xff]
  %v3058 = vld [vmem:[%s2 + $0x78] sm:$0xff]
  %v3059 = vld [vmem:[%s2 + $0x80] sm:$0xff]
  %v3060 = vld [vmem:[%s2 + $0x88] sm:$0xff]
  %v3061 = vld [vmem:[%s2 + $0x90] sm:$0xff]
  %v3062 = vld [vmem:[%s2 + $0x98] sm:$0xff]
  %v3063 = vld [vmem:[%s2 + $0xa0] sm:$0xff]
  %v3064 = vld [vmem:[%s2 + $0xa8] sm:$0xff]
  %v3065 = vld [vmem:[%s2 + $0xb0] sm:$0xff]
  %v3066 = vld [vmem:[%s2 + $0xb8] sm:$0xff]
  %v3067 = vld [vmem:[%s2 + $0xc0] sm:$0xff]
  %v3068 = vld [vmem:[%s2 + $0xc8] sm:$0xff]
  %v3069 = vld [vmem:[%s2 + $0xd0] sm:$0xff]
  %v3070 = vld [vmem:[%s2 + $0xd8] sm:$0xff]
  %v3071 = vld [vmem:[%s2 + $0xe0] sm:$0xff]
  %v3072 = vld [vmem:[%s2 + $0xe8] sm:$0xff]
  %v3073 = vld [vmem:[%s2 + $0xf0] sm:$0xff]
  %v3074 = vld [vmem:[%s2 + $0xf8] sm:$0xff]
  %v3107 = vunpack.c.l.b16 %v3043
  %v3108 = vunpack.c.h.b16 %v3043
  %v3109 = vunpack.c.l.b16 %v3044
  %v3110 = vunpack.c.h.b16 %v3044
  %v3111 = vunpack.c.l.b16 %v3045
  %v3112 = vunpack.c.h.b16 %v3045
  %v3113 = vunpack.c.l.b16 %v3046
  %v3114 = vunpack.c.h.b16 %v3046
  %v3115 = vunpack.c.l.b16 %v3047
  %v3116 = vunpack.c.h.b16 %v3047
  %v3117 = vunpack.c.l.b16 %v3048
  %v3118 = vunpack.c.h.b16 %v3048
  %v3119 = vunpack.c.l.b16 %v3049
  %v3120 = vunpack.c.h.b16 %v3049
  %v3121 = vunpack.c.l.b16 %v3050
  %v3122 = vunpack.c.h.b16 %v3050
  %v3123 = vunpack.c.l.b16 %v3051
  %v3124 = vunpack.c.h.b16 %v3051
  %v3125 = vunpack.c.l.b16 %v3052
  %v3126 = vunpack.c.h.b16 %v3052
  %v3127 = vunpack.c.l.b16 %v3053
  %v3128 = vunpack.c.h.b16 %v3053
  %v3129 = vunpack.c.l.b16 %v3054
  %v3130 = vunpack.c.h.b16 %v3054
  %v3131 = vunpack.c.l.b16 %v3055
  %v3132 = vunpack.c.h.b16 %v3055
  %v3133 = vunpack.c.l.b16 %v3056
  %v3134 = vunpack.c.h.b16 %v3056
  %v3135 = vunpack.c.l.b16 %v3057
  %v3136 = vunpack.c.h.b16 %v3057
  %v3137 = vunpack.c.l.b16 %v3058
  %v3138 = vunpack.c.h.b16 %v3058
  %v3139 = vunpack.c.l.b16 %v3059
  %v3140 = vunpack.c.h.b16 %v3059
  %v3141 = vunpack.c.l.b16 %v3060
  %v3142 = vunpack.c.h.b16 %v3060
  %v3143 = vunpack.c.l.b16 %v3061
  %v3144 = vunpack.c.h.b16 %v3061
  %v3145 = vunpack.c.l.b16 %v3062
  %v3146 = vunpack.c.h.b16 %v3062
  %v3147 = vunpack.c.l.b16 %v3063
  %v3148 = vunpack.c.h.b16 %v3063
  %v3149 = vunpack.c.l.b16 %v3064
  %v3150 = vunpack.c.h.b16 %v3064
  %v3151 = vunpack.c.l.b16 %v3065
  %v3152 = vunpack.c.h.b16 %v3065
  %v3153 = vunpack.c.l.b16 %v3066
  %v3154 = vunpack.c.h.b16 %v3066
  %v3155 = vunpack.c.l.b16 %v3067
  %v3156 = vunpack.c.h.b16 %v3067
  %v3157 = vunpack.c.l.b16 %v3068
  %v3158 = vunpack.c.h.b16 %v3068
  %v3159 = vunpack.c.l.b16 %v3069
  %v3160 = vunpack.c.h.b16 %v3069
  %v3161 = vunpack.c.l.b16 %v3070
  %v3162 = vunpack.c.h.b16 %v3070
  %v3163 = vunpack.c.l.b16 %v3071
  %v3164 = vunpack.c.h.b16 %v3071
  %v3165 = vunpack.c.l.b16 %v3072
  %v3166 = vunpack.c.h.b16 %v3072
  %v3167 = vunpack.c.l.b16 %v3073
  %v3168 = vunpack.c.h.b16 %v3073
  %v3169 = vunpack.c.l.b16 %v3074
  %v3170 = vunpack.c.h.b16 %v3074
  %v3171 = vpack.c.b16 %v3111, %v3107
  %v3172 = vpack.c.b16 %v3112, %v3108
  %v3173 = vpack.c.b16 %v3113, %v3109
  %v3174 = vpack.c.b16 %v3114, %v3110
  %v3175 = vpack.c.b16 %v3119, %v3115
  %v3176 = vpack.c.b16 %v3120, %v3116
  %v3177 = vpack.c.b16 %v3121, %v3117
  %v3178 = vpack.c.b16 %v3122, %v3118
  %v3179 = vpack.c.b16 %v3127, %v3123
  %v3180 = vpack.c.b16 %v3128, %v3124
  %v3181 = vpack.c.b16 %v3129, %v3125
  %v3182 = vpack.c.b16 %v3130, %v3126
  %v3183 = vpack.c.b16 %v3135, %v3131
  %v3184 = vpack.c.b16 %v3136, %v3132
  %v3185 = vpack.c.b16 %v3137, %v3133
  %v3186 = vpack.c.b16 %v3138, %v3134
  %v3187 = vpack.c.b16 %v3143, %v3139
  %v3188 = vpack.c.b16 %v3144, %v3140
  %v3189 = vpack.c.b16 %v3145, %v3141
  %v3190 = vpack.c.b16 %v3146, %v3142
  %v3191 = vpack.c.b16 %v3151, %v3147
  %v3192 = vpack.c.b16 %v3152, %v3148
  %v3193 = vpack.c.b16 %v3153, %v3149
  %v3194 = vpack.c.b16 %v3154, %v3150
  %v3195 = vpack.c.b16 %v3159, %v3155
  %v3196 = vpack.c.b16 %v3160, %v3156
  %v3197 = vpack.c.b16 %v3161, %v3157
  %v3198 = vpack.c.b16 %v3162, %v3158
  %v3199 = vpack.c.b16 %v3167, %v3163
  %v3200 = vpack.c.b16 %v3168, %v3164
  %v3201 = vpack.c.b16 %v3169, %v3165
  %v3202 = vpack.c.b16 %v3170, %v3166
  %3235 = vmatprep.subr.bf16.mxu0 %v3200
  %3236 = vmatpush1.bf16.msra.mxu0 %v3199
  %3237 = vmatprep.subr.bf16.mxu0 %v3196
  %3238 = vmatpush1.bf16.msra.mxu0 %v3195
  %3239 = vmatprep.subr.bf16.mxu0 %v3192
  %3240 = vmatpush1.bf16.msra.mxu0 %v3191
  %3241 = vmatprep.subr.bf16.mxu0 %v3188
  %3242 = vmatpush1.bf16.msra.mxu0 %v3187
  %3243 = vmatprep.subr.bf16.mxu0 %v3184
  %3244 = vmatpush1.bf16.msra.mxu0 %v3183
  %3245 = vmatprep.subr.bf16.mxu0 %v3180
  %3246 = vmatpush1.bf16.msra.mxu0 %v3179
  %3247 = vmatprep.subr.bf16.mxu0 %v3176
  %3248 = vmatpush1.bf16.msra.mxu0 %v3175
  %3249 = vmatprep.subr.bf16.mxu0 %v3172
  %3250 = vmatpush1.bf16.msra.mxu0 %v3171
  %3251 = vmatprep.subr.bf16.mxu0 0
  %3252 = vmatpush2.bf16.msra.mxu0 0
  %3253 = vmatprep.subr.bf16.mxu0 0
  %3254 = vmatpush2.bf16.msra.mxu0 0
  %3255 = vmatprep.subr.bf16.mxu0 0
  %3256 = vmatpush2.bf16.msra.mxu0 0
  %3257 = vmatprep.subr.bf16.mxu0 0
  %3258 = vmatpush2.bf16.msra.mxu0 0
  %3259 = vmatprep.subr.bf16.mxu0 0
  %3260 = vmatpush2.bf16.msra.mxu0 0
  %3261 = vmatprep.subr.bf16.mxu0 0
  %3262 = vmatpush2.bf16.msra.mxu0 0
  %3263 = vmatprep.subr.bf16.mxu0 0
  %3264 = vmatpush2.bf16.msra.mxu0 0
  %3265 = vmatprep.subr.bf16.mxu0 0
  %3266 = vmatpush2.bf16.msra.mxu0 0
  %3267 = vmatprep.mubr.bf16.mxu0 0
  %3268 = vmatmul.mubr.bf16.gmra.mxu0 %v3011
  %v3269 = vpop.f32.mrf.mxu0
  %v3270 = vadd.f32 0.0, %v3269
  %v3271 = vpop.f32.mrf.mxu0
  %v3272 = vadd.f32 0.0, %v3271
  %v3273 = vpop.f32.mrf.mxu0
  %v3274 = vadd.f32 0.0, %v3273
  %v3275 = vpop.f32.mrf.mxu0
  %v3276 = vadd.f32 0.0, %v3275
  %3277 = vdwg.mxu0
  %3278 = vmatprep.subr.bf16.mxu0 %v3202
  %3279 = vmatpush1.bf16.msra.mxu0 %v3201
  %3280 = vmatprep.subr.bf16.mxu0 %v3198
  %3281 = vmatpush1.bf16.msra.mxu0 %v3197
  %3282 = vmatprep.subr.bf16.mxu0 %v3194
  %3283 = vmatpush1.bf16.msra.mxu0 %v3193
  %3284 = vmatprep.subr.bf16.mxu0 %v3190
  %3285 = vmatpush1.bf16.msra.mxu0 %v3189
  %3286 = vmatprep.subr.bf16.mxu0 %v3186
  %3287 = vmatpush1.bf16.msra.mxu0 %v3185
  %3288 = vmatprep.subr.bf16.mxu0 %v3182
  %3289 = vmatpush1.bf16.msra.mxu0 %v3181
  %3290 = vmatprep.subr.bf16.mxu0 %v3178
  %3291 = vmatpush1.bf16.msra.mxu0 %v3177
  %3292 = vmatprep.subr.bf16.mxu0 %v3174
  %3293 = vmatpush1.bf16.msra.mxu0 %v3173
  %3294 = vmatprep.subr.bf16.mxu0 0
  %3295 = vmatpush2.bf16.msra.mxu0 0
  %3296 = vmatprep.subr.bf16.mxu0 0
  %3297 = vmatpush2.bf16.msra.mxu0 0
  %3298 = vmatprep.subr.bf16.mxu0 0
  %3299 = vmatpush2.bf16.msra.mxu0 0
  %3300 = vmatprep.subr.bf16.mxu0 0
  %3301 = vmatpush2.bf16.msra.mxu0 0
  %3302 = vmatprep.subr.bf16.mxu0 0
  %3303 = vmatpush2.bf16.msra.mxu0 0
  %3304 = vmatprep.subr.bf16.mxu0 0
  %3305 = vmatpush2.bf16.msra.mxu0 0
  %3306 = vmatprep.subr.bf16.mxu0 0
  %3307 = vmatpush2.bf16.msra.mxu0 0
  %3308 = vmatprep.subr.bf16.mxu0 0
  %3309 = vmatpush2.bf16.msra.mxu0 0
  %3310 = vmatprep.mubr.bf16.mxu0 0
  %3311 = vmatmul.mubr.bf16.gmra.mxu0 %v3011
  %v3312 = vpop.f32.mrf.mxu0
  %v3313 = vadd.f32 0.0, %v3312
  %v3314 = vpop.f32.mrf.mxu0
  %v3315 = vadd.f32 0.0, %v3314
  %v3316 = vpop.f32.mrf.mxu0
  %v3317 = vadd.f32 0.0, %v3316
  %v3318 = vpop.f32.mrf.mxu0
  %v3319 = vadd.f32 0.0, %v3318
  %3320 = vdwg.mxu0
  %v3321 = vadd.f32 %v3035, %v3270
  %v3322 = vadd.f32 %v3036, %v3272
  %v3323 = vadd.f32 %v3037, %v3313
  %v3324 = vadd.f32 %v3038, %v3315
  %v3325 = vadd.f32 %v3039, %v3274
  %v3326 = vadd.f32 %v3040, %v3276
  %v3327 = vadd.f32 %v3041, %v3317
  %v3328 = vadd.f32 %v3042, %v3319
  %v3329 = vxor.u32 %v3321, 2147483648
  %v3330 = vxor.u32 %v3325, 2147483648
  %v3331 = vmul.f32 %v3329, 1.442695
  %v3332 = vpow.pop %v3331
  %v3333 = vmul.f32 %v3330, 1.442695
  %v3334 = vpow.pop %v3333
  %v3335 = vadd.f32 %v3332, 1.0
  %v3336 = vadd.f32 %v3334, 1.0
  %v3337 = vrcp.pop %v3335
  %v3338 = vmul.f32 1.0, %v3337
  %v3339 = vrcp.pop %v3336
  %v3340 = vmul.f32 1.0, %v3339
  %v3341 = vxor.u32 %v3322, 2147483648
  %v3342 = vxor.u32 %v3326, 2147483648
  %v3343 = vmul.f32 %v3341, 1.442695
  %v3344 = vpow.pop %v3343
  %v3345 = vmul.f32 %v3342, 1.442695
  %v3346 = vpow.pop %v3345
  %v3347 = vadd.f32 %v3344, 1.0
  %v3348 = vadd.f32 %v3346, 1.0
  %v3349 = vrcp.pop %v3347
  %v3350 = vmul.f32 1.0, %v3349
  %v3351 = vrcp.pop %v3348
  %v3352 = vmul.f32 1.0, %v3351
  %v3353 = vtanh.pop %v3323
  %v3354 = vtanh.pop %v3327
  %v3355 = vxor.u32 %v3324, 2147483648
  %v3356 = vxor.u32 %v3328, 2147483648
  %v3357 = vmul.f32 %v3355, 1.442695
  %v3358 = vpow.pop %v3357
  %v3359 = vmul.f32 %v3356, 1.442695
  %v3360 = vpow.pop %v3359
  %v3361 = vadd.f32 %v3358, 1.0
  %v3362 = vadd.f32 %v3360, 1.0
  %v3363 = vrcp.pop %v3361
  %v3364 = vmul.f32 1.0, %v3363
  %v3365 = vrcp.pop %v3362
  %v3366 = vmul.f32 1.0, %v3365
  %v3367 = vmul.f32 %v3350, %v3009
  %v3368 = vmul.f32 %v3352, %v3010
  %v3369 = vmul.f32 %v3338, %v3353
  %v3370 = vmul.f32 %v3340, %v3354
  %v3371 = vadd.f32 %v3367, %v3369
  %v3372 = vadd.f32 %v3368, %v3370
  %v3373 = vtanh.pop %v3371
  %v3374 = vtanh.pop %v3372
  %v3375 = vmul.f32 %v3364, %v3373
  %v3376 = vmul.f32 %v3366, %v3374
  %vm3377 = vcmp.gt.s32.totalorder %v38, 6
  %vm3378 = vcmp.gt.s32.totalorder %v39, 6
  %v3379 = vsel %vm3377, 1, 0
  %v3380 = vsel %vm3378, 1, 0
  %vm3381 = vcmp.eq.s32.totalorder %v3379, 1
  %vm3382 = vcmp.eq.s32.totalorder %v3380, 1
  %v3383 = vsel %vm3381, %v3375, %v3007
  %v3384 = vsel %vm3382, %v3376, %v3008
  %v3385 = vsel %vm3381, %v3371, %v3009
  %v3386 = vsel %vm3382, %v3372, %v3010
  %v3387 = vpack.c.bf16 %v3384, %v3383
  %v3389 = vunpack.c.l.b16 %v3387
  %v3390 = vunpack.c.h.b16 %v3387
  %v3391 = vpack.c.b16 %v3389, %v3389
  %v3392 = vpack.c.b16 %v3390, %v3390
  %s3395 = scalar_lea.vmem [#allocation2], 48
  %3396 = vst [vmem:[%s3395] sm:$0xf] %v3391
  %3397 = vst [vmem:[%s3395 + $0x4] sm:$0xf] %v3392
  %s3398 = scalar_lea.vmem [#allocation3], 224
  %v3399 = vld [vmem:[%s3398] sm:$0xff]
  %v3400 = vld [vmem:[%s3398 + $0x8] sm:$0xff]
  %v3401 = vld [vmem:[%s3398 + $0x10] sm:$0xff]
  %v3402 = vld [vmem:[%s3398 + $0x18] sm:$0xff]
  %v3403 = vunpack.c.l.bf16 %v3399
  %v3404 = vunpack.c.h.bf16 %v3399
  %v3405 = vunpack.c.l.bf16 %v3400
  %v3406 = vunpack.c.h.bf16 %v3400
  %v3407 = vunpack.c.l.bf16 %v3401
  %v3408 = vunpack.c.h.bf16 %v3401
  %v3409 = vunpack.c.l.bf16 %v3402
  %v3410 = vunpack.c.h.bf16 %v3402
  %v3411 = vadd.f32 %v3403, %v763
  %v3412 = vadd.f32 %v3404, %v767
  %v3413 = vadd.f32 %v3405, %v771
  %v3414 = vadd.f32 %v3406, %v775
  %v3415 = vadd.f32 %v3407, %v763
  %v3416 = vadd.f32 %v3408, %v767
  %v3417 = vadd.f32 %v3409, %v771
  %v3418 = vadd.f32 %v3410, %v775
  %v3419 = vld [vmem:[%s2] sm:$0xff]
  %v3420 = vld [vmem:[%s2 + $0x8] sm:$0xff]
  %v3421 = vld [vmem:[%s2 + $0x10] sm:$0xff]
  %v3422 = vld [vmem:[%s2 + $0x18] sm:$0xff]
  %v3423 = vld [vmem:[%s2 + $0x20] sm:$0xff]
  %v3424 = vld [vmem:[%s2 + $0x28] sm:$0xff]
  %v3425 = vld [vmem:[%s2 + $0x30] sm:$0xff]
  %v3426 = vld [vmem:[%s2 + $0x38] sm:$0xff]
  %v3427 = vld [vmem:[%s2 + $0x40] sm:$0xff]
  %v3428 = vld [vmem:[%s2 + $0x48] sm:$0xff]
  %v3429 = vld [vmem:[%s2 + $0x50] sm:$0xff]
  %v3430 = vld [vmem:[%s2 + $0x58] sm:$0xff]
  %v3431 = vld [vmem:[%s2 + $0x60] sm:$0xff]
  %v3432 = vld [vmem:[%s2 + $0x68] sm:$0xff]
  %v3433 = vld [vmem:[%s2 + $0x70] sm:$0xff]
  %v3434 = vld [vmem:[%s2 + $0x78] sm:$0xff]
  %v3435 = vld [vmem:[%s2 + $0x80] sm:$0xff]
  %v3436 = vld [vmem:[%s2 + $0x88] sm:$0xff]
  %v3437 = vld [vmem:[%s2 + $0x90] sm:$0xff]
  %v3438 = vld [vmem:[%s2 + $0x98] sm:$0xff]
  %v3439 = vld [vmem:[%s2 + $0xa0] sm:$0xff]
  %v3440 = vld [vmem:[%s2 + $0xa8] sm:$0xff]
  %v3441 = vld [vmem:[%s2 + $0xb0] sm:$0xff]
  %v3442 = vld [vmem:[%s2 + $0xb8] sm:$0xff]
  %v3443 = vld [vmem:[%s2 + $0xc0] sm:$0xff]
  %v3444 = vld [vmem:[%s2 + $0xc8] sm:$0xff]
  %v3445 = vld [vmem:[%s2 + $0xd0] sm:$0xff]
  %v3446 = vld [vmem:[%s2 + $0xd8] sm:$0xff]
  %v3447 = vld [vmem:[%s2 + $0xe0] sm:$0xff]
  %v3448 = vld [vmem:[%s2 + $0xe8] sm:$0xff]
  %v3449 = vld [vmem:[%s2 + $0xf0] sm:$0xff]
  %v3450 = vld [vmem:[%s2 + $0xf8] sm:$0xff]
  %v3483 = vunpack.c.l.b16 %v3419
  %v3484 = vunpack.c.h.b16 %v3419
  %v3485 = vunpack.c.l.b16 %v3420
  %v3486 = vunpack.c.h.b16 %v3420
  %v3487 = vunpack.c.l.b16 %v3421
  %v3488 = vunpack.c.h.b16 %v3421
  %v3489 = vunpack.c.l.b16 %v3422
  %v3490 = vunpack.c.h.b16 %v3422
  %v3491 = vunpack.c.l.b16 %v3423
  %v3492 = vunpack.c.h.b16 %v3423
  %v3493 = vunpack.c.l.b16 %v3424
  %v3494 = vunpack.c.h.b16 %v3424
  %v3495 = vunpack.c.l.b16 %v3425
  %v3496 = vunpack.c.h.b16 %v3425
  %v3497 = vunpack.c.l.b16 %v3426
  %v3498 = vunpack.c.h.b16 %v3426
  %v3499 = vunpack.c.l.b16 %v3427
  %v3500 = vunpack.c.h.b16 %v3427
  %v3501 = vunpack.c.l.b16 %v3428
  %v3502 = vunpack.c.h.b16 %v3428
  %v3503 = vunpack.c.l.b16 %v3429
  %v3504 = vunpack.c.h.b16 %v3429
  %v3505 = vunpack.c.l.b16 %v3430
  %v3506 = vunpack.c.h.b16 %v3430
  %v3507 = vunpack.c.l.b16 %v3431
  %v3508 = vunpack.c.h.b16 %v3431
  %v3509 = vunpack.c.l.b16 %v3432
  %v3510 = vunpack.c.h.b16 %v3432
  %v3511 = vunpack.c.l.b16 %v3433
  %v3512 = vunpack.c.h.b16 %v3433
  %v3513 = vunpack.c.l.b16 %v3434
  %v3514 = vunpack.c.h.b16 %v3434
  %v3515 = vunpack.c.l.b16 %v3435
  %v3516 = vunpack.c.h.b16 %v3435
  %v3517 = vunpack.c.l.b16 %v3436
  %v3518 = vunpack.c.h.b16 %v3436
  %v3519 = vunpack.c.l.b16 %v3437
  %v3520 = vunpack.c.h.b16 %v3437
  %v3521 = vunpack.c.l.b16 %v3438
  %v3522 = vunpack.c.h.b16 %v3438
  %v3523 = vunpack.c.l.b16 %v3439
  %v3524 = vunpack.c.h.b16 %v3439
  %v3525 = vunpack.c.l.b16 %v3440
  %v3526 = vunpack.c.h.b16 %v3440
  %v3527 = vunpack.c.l.b16 %v3441
  %v3528 = vunpack.c.h.b16 %v3441
  %v3529 = vunpack.c.l.b16 %v3442
  %v3530 = vunpack.c.h.b16 %v3442
  %v3531 = vunpack.c.l.b16 %v3443
  %v3532 = vunpack.c.h.b16 %v3443
  %v3533 = vunpack.c.l.b16 %v3444
  %v3534 = vunpack.c.h.b16 %v3444
  %v3535 = vunpack.c.l.b16 %v3445
  %v3536 = vunpack.c.h.b16 %v3445
  %v3537 = vunpack.c.l.b16 %v3446
  %v3538 = vunpack.c.h.b16 %v3446
  %v3539 = vunpack.c.l.b16 %v3447
  %v3540 = vunpack.c.h.b16 %v3447
  %v3541 = vunpack.c.l.b16 %v3448
  %v3542 = vunpack.c.h.b16 %v3448
  %v3543 = vunpack.c.l.b16 %v3449
  %v3544 = vunpack.c.h.b16 %v3449
  %v3545 = vunpack.c.l.b16 %v3450
  %v3546 = vunpack.c.h.b16 %v3450
  %v3547 = vpack.c.b16 %v3487, %v3483
  %v3548 = vpack.c.b16 %v3488, %v3484
  %v3549 = vpack.c.b16 %v3489, %v3485
  %v3550 = vpack.c.b16 %v3490, %v3486
  %v3551 = vpack.c.b16 %v3495, %v3491
  %v3552 = vpack.c.b16 %v3496, %v3492
  %v3553 = vpack.c.b16 %v3497, %v3493
  %v3554 = vpack.c.b16 %v3498, %v3494
  %v3555 = vpack.c.b16 %v3503, %v3499
  %v3556 = vpack.c.b16 %v3504, %v3500
  %v3557 = vpack.c.b16 %v3505, %v3501
  %v3558 = vpack.c.b16 %v3506, %v3502
  %v3559 = vpack.c.b16 %v3511, %v3507
  %v3560 = vpack.c.b16 %v3512, %v3508
  %v3561 = vpack.c.b16 %v3513, %v3509
  %v3562 = vpack.c.b16 %v3514, %v3510
  %v3563 = vpack.c.b16 %v3519, %v3515
  %v3564 = vpack.c.b16 %v3520, %v3516
  %v3565 = vpack.c.b16 %v3521, %v3517
  %v3566 = vpack.c.b16 %v3522, %v3518
  %v3567 = vpack.c.b16 %v3527, %v3523
  %v3568 = vpack.c.b16 %v3528, %v3524
  %v3569 = vpack.c.b16 %v3529, %v3525
  %v3570 = vpack.c.b16 %v3530, %v3526
  %v3571 = vpack.c.b16 %v3535, %v3531
  %v3572 = vpack.c.b16 %v3536, %v3532
  %v3573 = vpack.c.b16 %v3537, %v3533
  %v3574 = vpack.c.b16 %v3538, %v3534
  %v3575 = vpack.c.b16 %v3543, %v3539
  %v3576 = vpack.c.b16 %v3544, %v3540
  %v3577 = vpack.c.b16 %v3545, %v3541
  %v3578 = vpack.c.b16 %v3546, %v3542
  %3611 = vmatprep.subr.bf16.mxu0 %v3576
  %3612 = vmatpush1.bf16.msra.mxu0 %v3575
  %3613 = vmatprep.subr.bf16.mxu0 %v3572
  %3614 = vmatpush1.bf16.msra.mxu0 %v3571
  %3615 = vmatprep.subr.bf16.mxu0 %v3568
  %3616 = vmatpush1.bf16.msra.mxu0 %v3567
  %3617 = vmatprep.subr.bf16.mxu0 %v3564
  %3618 = vmatpush1.bf16.msra.mxu0 %v3563
  %3619 = vmatprep.subr.bf16.mxu0 %v3560
  %3620 = vmatpush1.bf16.msra.mxu0 %v3559
  %3621 = vmatprep.subr.bf16.mxu0 %v3556
  %3622 = vmatpush1.bf16.msra.mxu0 %v3555
  %3623 = vmatprep.subr.bf16.mxu0 %v3552
  %3624 = vmatpush1.bf16.msra.mxu0 %v3551
  %3625 = vmatprep.subr.bf16.mxu0 %v3548
  %3626 = vmatpush1.bf16.msra.mxu0 %v3547
  %3627 = vmatprep.subr.bf16.mxu0 0
  %3628 = vmatpush2.bf16.msra.mxu0 0
  %3629 = vmatprep.subr.bf16.mxu0 0
  %3630 = vmatpush2.bf16.msra.mxu0 0
  %3631 = vmatprep.subr.bf16.mxu0 0
  %3632 = vmatpush2.bf16.msra.mxu0 0
  %3633 = vmatprep.subr.bf16.mxu0 0
  %3634 = vmatpush2.bf16.msra.mxu0 0
  %3635 = vmatprep.subr.bf16.mxu0 0
  %3636 = vmatpush2.bf16.msra.mxu0 0
  %3637 = vmatprep.subr.bf16.mxu0 0
  %3638 = vmatpush2.bf16.msra.mxu0 0
  %3639 = vmatprep.subr.bf16.mxu0 0
  %3640 = vmatpush2.bf16.msra.mxu0 0
  %3641 = vmatprep.subr.bf16.mxu0 0
  %3642 = vmatpush2.bf16.msra.mxu0 0
  %3643 = vmatprep.mubr.bf16.mxu0 0
  %3644 = vmatmul.mubr.bf16.gmra.mxu0 %v3387
  %v3645 = vpop.f32.mrf.mxu0
  %v3646 = vadd.f32 0.0, %v3645
  %v3647 = vpop.f32.mrf.mxu0
  %v3648 = vadd.f32 0.0, %v3647
  %v3649 = vpop.f32.mrf.mxu0
  %v3650 = vadd.f32 0.0, %v3649
  %v3651 = vpop.f32.mrf.mxu0
  %v3652 = vadd.f32 0.0, %v3651
  %3653 = vdwg.mxu0
  %3654 = vmatprep.subr.bf16.mxu0 %v3578
  %3655 = vmatpush1.bf16.msra.mxu0 %v3577
  %3656 = vmatprep.subr.bf16.mxu0 %v3574
  %3657 = vmatpush1.bf16.msra.mxu0 %v3573
  %3658 = vmatprep.subr.bf16.mxu0 %v3570
  %3659 = vmatpush1.bf16.msra.mxu0 %v3569
  %3660 = vmatprep.subr.bf16.mxu0 %v3566
  %3661 = vmatpush1.bf16.msra.mxu0 %v3565
  %3662 = vmatprep.subr.bf16.mxu0 %v3562
  %3663 = vmatpush1.bf16.msra.mxu0 %v3561
  %3664 = vmatprep.subr.bf16.mxu0 %v3558
  %3665 = vmatpush1.bf16.msra.mxu0 %v3557
  %3666 = vmatprep.subr.bf16.mxu0 %v3554
  %3667 = vmatpush1.bf16.msra.mxu0 %v3553
  %3668 = vmatprep.subr.bf16.mxu0 %v3550
  %3669 = vmatpush1.bf16.msra.mxu0 %v3549
  %3670 = vmatprep.subr.bf16.mxu0 0
  %3671 = vmatpush2.bf16.msra.mxu0 0
  %3672 = vmatprep.subr.bf16.mxu0 0
  %3673 = vmatpush2.bf16.msra.mxu0 0
  %3674 = vmatprep.subr.bf16.mxu0 0
  %3675 = vmatpush2.bf16.msra.mxu0 0
  %3676 = vmatprep.subr.bf16.mxu0 0
  %3677 = vmatpush2.bf16.msra.mxu0 0
  %3678 = vmatprep.subr.bf16.mxu0 0
  %3679 = vmatpush2.bf16.msra.mxu0 0
  %3680 = vmatprep.subr.bf16.mxu0 0
  %3681 = vmatpush2.bf16.msra.mxu0 0
  %3682 = vmatprep.subr.bf16.mxu0 0
  %3683 = vmatpush2.bf16.msra.mxu0 0
  %3684 = vmatprep.subr.bf16.mxu0 0
  %3685 = vmatpush2.bf16.msra.mxu0 0
  %3686 = vmatprep.mubr.bf16.mxu0 0
  %3687 = vmatmul.mubr.bf16.gmra.mxu0 %v3387
  %v3688 = vpop.f32.mrf.mxu0
  %v3689 = vadd.f32 0.0, %v3688
  %v3690 = vpop.f32.mrf.mxu0
  %v3691 = vadd.f32 0.0, %v3690
  %v3692 = vpop.f32.mrf.mxu0
  %v3693 = vadd.f32 0.0, %v3692
  %v3694 = vpop.f32.mrf.mxu0
  %v3695 = vadd.f32 0.0, %v3694
  %3696 = vdwg.mxu0
  %v3697 = vadd.f32 %v3411, %v3646
  %v3698 = vadd.f32 %v3412, %v3648
  %v3699 = vadd.f32 %v3413, %v3689
  %v3700 = vadd.f32 %v3414, %v3691
  %v3701 = vadd.f32 %v3415, %v3650
  %v3702 = vadd.f32 %v3416, %v3652
  %v3703 = vadd.f32 %v3417, %v3693
  %v3704 = vadd.f32 %v3418, %v3695
  %v3705 = vxor.u32 %v3697, 2147483648
  %v3706 = vxor.u32 %v3701, 2147483648
  %v3707 = vmul.f32 %v3705, 1.442695
  %v3708 = vpow.pop %v3707
  %v3709 = vmul.f32 %v3706, 1.442695
  %v3710 = vpow.pop %v3709
  %v3711 = vadd.f32 %v3708, 1.0
  %v3712 = vadd.f32 %v3710, 1.0
  %v3713 = vrcp.pop %v3711
  %v3714 = vmul.f32 1.0, %v3713
  %v3715 = vrcp.pop %v3712
  %v3716 = vmul.f32 1.0, %v3715
  %v3717 = vxor.u32 %v3698, 2147483648
  %v3718 = vxor.u32 %v3702, 2147483648
  %v3719 = vmul.f32 %v3717, 1.442695
  %v3720 = vpow.pop %v3719
  %v3721 = vmul.f32 %v3718, 1.442695
  %v3722 = vpow.pop %v3721
  %v3723 = vadd.f32 %v3720, 1.0
  %v3724 = vadd.f32 %v3722, 1.0
  %v3725 = vrcp.pop %v3723
  %v3726 = vmul.f32 1.0, %v3725
  %v3727 = vrcp.pop %v3724
  %v3728 = vmul.f32 1.0, %v3727
  %v3729 = vtanh.pop %v3699
  %v3730 = vtanh.pop %v3703
  %v3731 = vxor.u32 %v3700, 2147483648
  %v3732 = vxor.u32 %v3704, 2147483648
  %v3733 = vmul.f32 %v3731, 1.442695
  %v3734 = vpow.pop %v3733
  %v3735 = vmul.f32 %v3732, 1.442695
  %v3736 = vpow.pop %v3735
  %v3737 = vadd.f32 %v3734, 1.0
  %v3738 = vadd.f32 %v3736, 1.0
  %v3739 = vrcp.pop %v3737
  %v3740 = vmul.f32 1.0, %v3739
  %v3741 = vrcp.pop %v3738
  %v3742 = vmul.f32 1.0, %v3741
  %v3743 = vmul.f32 %v3726, %v3385
  %v3744 = vmul.f32 %v3728, %v3386
  %v3745 = vmul.f32 %v3714, %v3729
  %v3746 = vmul.f32 %v3716, %v3730
  %v3747 = vadd.f32 %v3743, %v3745
  %v3748 = vadd.f32 %v3744, %v3746
  %v3749 = vtanh.pop %v3747
  %v3750 = vtanh.pop %v3748
  %v3751 = vmul.f32 %v3740, %v3749
  %v3752 = vmul.f32 %v3742, %v3750
  %vm3753 = vcmp.gt.s32.totalorder %v38, 7
  %vm3754 = vcmp.gt.s32.totalorder %v39, 7
  %v3755 = vsel %vm3753, 1, 0
  %v3756 = vsel %vm3754, 1, 0
  %vm3757 = vcmp.eq.s32.totalorder %v3755, 1
  %vm3758 = vcmp.eq.s32.totalorder %v3756, 1
  %v3759 = vsel %vm3757, %v3751, %v3383
  %v3760 = vsel %vm3758, %v3752, %v3384
  %v3761 = vpack.c.bf16 %v3760, %v3759
  %v3763 = vunpack.c.l.b16 %v3761
  %v3764 = vunpack.c.h.b16 %v3761
  %v3765 = vpack.c.b16 %v3763, %v3763
  %v3766 = vpack.c.b16 %v3764, %v3764
  %s3769 = scalar_lea.vmem [#allocation2], 56
  %3770 = vst [vmem:[%s3769] sm:$0xf] %v3765
  %3771 = vst [vmem:[%s3769 + $0x4] sm:$0xf] %v3766
  %v3772 = vld [vmem:[#allocation2] sm:$0xf]
  %v3773 = vld [vmem:[#allocation2 + $0x4] sm:$0xf]
  %v3774 = vld [vmem:[#allocation2 + $0x8] sm:$0xf]
  %v3775 = vld [vmem:[#allocation2 + $0xc] sm:$0xf]
  %v3776 = vld [vmem:[#allocation2 + $0x10] sm:$0xf]
  %v3777 = vld [vmem:[#allocation2 + $0x14] sm:$0xf]
  %v3778 = vld [vmem:[#allocation2 + $0x18] sm:$0xf]
  %v3779 = vld [vmem:[#allocation2 + $0x1c] sm:$0xf]
  %v3780 = vld [vmem:[#allocation2 + $0x20] sm:$0xf]
  %v3781 = vld [vmem:[#allocation2 + $0x24] sm:$0xf]
  %v3782 = vld [vmem:[#allocation2 + $0x28] sm:$0xf]
  %v3783 = vld [vmem:[#allocation2 + $0x2c] sm:$0xf]
  %v3784 = vld [vmem:[#allocation2 + $0x30] sm:$0xf]
  %v3785 = vld [vmem:[#allocation2 + $0x34] sm:$0xf]
  %v3786 = vld [vmem:[#allocation2 + $0x38] sm:$0xf]
  %v3787 = vld [vmem:[#allocation2 + $0x3c] sm:$0xf]
  %s3788 = scalar_lea.vmem %s1, 256
  %v3789 = vld [vmem:[%s3788] sm:$0xff]
  %v3790 = vld [vmem:[%s3788 + $0x8] sm:$0xff]
  %v3791 = vld [vmem:[%s3788 + $0x10] sm:$0xff]
  %v3792 = vld [vmem:[%s3788 + $0x18] sm:$0xff]
  %v3793 = vld [vmem:[%s3788 + $0x20] sm:$0xff]
  %v3794 = vld [vmem:[%s3788 + $0x28] sm:$0xff]
  %v3795 = vld [vmem:[%s3788 + $0x30] sm:$0xff]
  %v3796 = vld [vmem:[%s3788 + $0x38] sm:$0xff]
  %v3797 = vld [vmem:[%s3788 + $0x40] sm:$0xff]
  %v3798 = vld [vmem:[%s3788 + $0x48] sm:$0xff]
  %v3799 = vld [vmem:[%s3788 + $0x50] sm:$0xff]
  %v3800 = vld [vmem:[%s3788 + $0x58] sm:$0xff]
  %v3801 = vld [vmem:[%s3788 + $0x60] sm:$0xff]
  %v3802 = vld [vmem:[%s3788 + $0x68] sm:$0xff]
  %v3803 = vld [vmem:[%s3788 + $0x70] sm:$0xff]
  %v3804 = vld [vmem:[%s3788 + $0x78] sm:$0xff]
  %v3805 = vld [vmem:[%s3788 + $0x80] sm:$0xff]
  %v3806 = vld [vmem:[%s3788 + $0x88] sm:$0xff]
  %v3807 = vld [vmem:[%s3788 + $0x90] sm:$0xff]
  %v3808 = vld [vmem:[%s3788 + $0x98] sm:$0xff]
  %v3809 = vld [vmem:[%s3788 + $0xa0] sm:$0xff]
  %v3810 = vld [vmem:[%s3788 + $0xa8] sm:$0xff]
  %v3811 = vld [vmem:[%s3788 + $0xb0] sm:$0xff]
  %v3812 = vld [vmem:[%s3788 + $0xb8] sm:$0xff]
  %v3813 = vld [vmem:[%s3788 + $0xc0] sm:$0xff]
  %v3814 = vld [vmem:[%s3788 + $0xc8] sm:$0xff]
  %v3815 = vld [vmem:[%s3788 + $0xd0] sm:$0xff]
  %v3816 = vld [vmem:[%s3788 + $0xd8] sm:$0xff]
  %v3817 = vld [vmem:[%s3788 + $0xe0] sm:$0xff]
  %v3818 = vld [vmem:[%s3788 + $0xe8] sm:$0xff]
  %v3819 = vld [vmem:[%s3788 + $0xf0] sm:$0xff]
  %v3820 = vld [vmem:[%s3788 + $0xf8] sm:$0xff]
  %v3837 = vunpack.c.l.b16 %v3772
  %v3838 = vunpack.c.l.b16 %v3773
  %v3839 = vunpack.c.l.b16 %v3774
  %v3840 = vunpack.c.l.b16 %v3775
  %v3841 = vunpack.c.l.b16 %v3776
  %v3842 = vunpack.c.l.b16 %v3777
  %v3843 = vunpack.c.l.b16 %v3778
  %v3844 = vunpack.c.l.b16 %v3779
  %v3845 = vunpack.c.l.b16 %v3780
  %v3846 = vunpack.c.l.b16 %v3781
  %v3847 = vunpack.c.l.b16 %v3782
  %v3848 = vunpack.c.l.b16 %v3783
  %v3849 = vunpack.c.l.b16 %v3784
  %v3850 = vunpack.c.l.b16 %v3785
  %v3851 = vunpack.c.l.b16 %v3786
  %v3852 = vunpack.c.l.b16 %v3787
  %v3853 = vpack.c.b16 %v3838, %v3837
  %v3854 = vpack.c.b16 %v3840, %v3839
  %v3855 = vpack.c.b16 %v3842, %v3841
  %v3856 = vpack.c.b16 %v3844, %v3843
  %v3857 = vpack.c.b16 %v3846, %v3845
  %v3858 = vpack.c.b16 %v3848, %v3847
  %v3859 = vpack.c.b16 %v3850, %v3849
  %v3860 = vpack.c.b16 %v3852, %v3851
  %v3901 = vunpack.c.l.b16 %v3789
  %v3902 = vunpack.c.h.b16 %v3789
  %v3903 = vunpack.c.l.b16 %v3790
  %v3904 = vunpack.c.h.b16 %v3790
  %v3905 = vunpack.c.l.b16 %v3791
  %v3906 = vunpack.c.h.b16 %v3791
  %v3907 = vunpack.c.l.b16 %v3792
  %v3908 = vunpack.c.h.b16 %v3792
  %v3909 = vunpack.c.l.b16 %v3793
  %v3910 = vunpack.c.h.b16 %v3793
  %v3911 = vunpack.c.l.b16 %v3794
  %v3912 = vunpack.c.h.b16 %v3794
  %v3913 = vunpack.c.l.b16 %v3795
  %v3914 = vunpack.c.h.b16 %v3795
  %v3915 = vunpack.c.l.b16 %v3796
  %v3916 = vunpack.c.h.b16 %v3796
  %v3917 = vunpack.c.l.b16 %v3797
  %v3918 = vunpack.c.h.b16 %v3797
  %v3919 = vunpack.c.l.b16 %v3798
  %v3920 = vunpack.c.h.b16 %v3798
  %v3921 = vunpack.c.l.b16 %v3799
  %v3922 = vunpack.c.h.b16 %v3799
  %v3923 = vunpack.c.l.b16 %v3800
  %v3924 = vunpack.c.h.b16 %v3800
  %v3925 = vunpack.c.l.b16 %v3801
  %v3926 = vunpack.c.h.b16 %v3801
  %v3927 = vunpack.c.l.b16 %v3802
  %v3928 = vunpack.c.h.b16 %v3802
  %v3929 = vunpack.c.l.b16 %v3803
  %v3930 = vunpack.c.h.b16 %v3803
  %v3931 = vunpack.c.l.b16 %v3804
  %v3932 = vunpack.c.h.b16 %v3804
  %v3933 = vunpack.c.l.b16 %v3805
  %v3934 = vunpack.c.h.b16 %v3805
  %v3935 = vunpack.c.l.b16 %v3806
  %v3936 = vunpack.c.h.b16 %v3806
  %v3937 = vunpack.c.l.b16 %v3807
  %v3938 = vunpack.c.h.b16 %v3807
  %v3939 = vunpack.c.l.b16 %v3808
  %v3940 = vunpack.c.h.b16 %v3808
  %v3941 = vunpack.c.l.b16 %v3809
  %v3942 = vunpack.c.h.b16 %v3809
  %v3943 = vunpack.c.l.b16 %v3810
  %v3944 = vunpack.c.h.b16 %v3810
  %v3945 = vunpack.c.l.b16 %v3811
  %v3946 = vunpack.c.h.b16 %v3811
  %v3947 = vunpack.c.l.b16 %v3812
  %v3948 = vunpack.c.h.b16 %v3812
  %v3949 = vunpack.c.l.b16 %v3813
  %v3950 = vunpack.c.h.b16 %v3813
  %v3951 = vunpack.c.l.b16 %v3814
  %v3952 = vunpack.c.h.b16 %v3814
  %v3953 = vunpack.c.l.b16 %v3815
  %v3954 = vunpack.c.h.b16 %v3815
  %v3955 = vunpack.c.l.b16 %v3816
  %v3956 = vunpack.c.h.b16 %v3816
  %v3957 = vunpack.c.l.b16 %v3817
  %v3958 = vunpack.c.h.b16 %v3817
  %v3959 = vunpack.c.l.b16 %v3818
  %v3960 = vunpack.c.h.b16 %v3818
  %v3961 = vunpack.c.l.b16 %v3819
  %v3962 = vunpack.c.h.b16 %v3819
  %v3963 = vunpack.c.l.b16 %v3820
  %v3964 = vunpack.c.h.b16 %v3820
  %v3965 = vpack.c.b16 %v3905, %v3901
  %v3966 = vpack.c.b16 %v3906, %v3902
  %v3967 = vpack.c.b16 %v3907, %v3903
  %v3968 = vpack.c.b16 %v3908, %v3904
  %v3969 = vpack.c.b16 %v3913, %v3909
  %v3970 = vpack.c.b16 %v3914, %v3910
  %v3971 = vpack.c.b16 %v3915, %v3911
  %v3972 = vpack.c.b16 %v3916, %v3912
  %v3973 = vpack.c.b16 %v3921, %v3917
  %v3974 = vpack.c.b16 %v3922, %v3918
  %v3975 = vpack.c.b16 %v3923, %v3919
  %v3976 = vpack.c.b16 %v3924, %v3920
  %v3977 = vpack.c.b16 %v3929, %v3925
  %v3978 = vpack.c.b16 %v3930, %v3926
  %v3979 = vpack.c.b16 %v3931, %v3927
  %v3980 = vpack.c.b16 %v3932, %v3928
  %v3981 = vpack.c.b16 %v3937, %v3933
  %v3982 = vpack.c.b16 %v3938, %v3934
  %v3983 = vpack.c.b16 %v3939, %v3935
  %v3984 = vpack.c.b16 %v3940, %v3936
  %v3985 = vpack.c.b16 %v3945, %v3941
  %v3986 = vpack.c.b16 %v3946, %v3942
  %v3987 = vpack.c.b16 %v3947, %v3943
  %v3988 = vpack.c.b16 %v3948, %v3944
  %v3989 = vpack.c.b16 %v3953, %v3949
  %v3990 = vpack.c.b16 %v3954, %v3950
  %v3991 = vpack.c.b16 %v3955, %v3951
  %v3992 = vpack.c.b16 %v3956, %v3952
  %v3993 = vpack.c.b16 %v3961, %v3957
  %v3994 = vpack.c.b16 %v3962, %v3958
  %v3995 = vpack.c.b16 %v3963, %v3959
  %v3996 = vpack.c.b16 %v3964, %v3960
  %4029 = vmatprep.subr.bf16.mxu0 %v3994
  %4030 = vmatpush1.bf16.msra.mxu0 %v3993
  %4031 = vmatprep.subr.bf16.mxu0 %v3990
  %4032 = vmatpush1.bf16.msra.mxu0 %v3989
  %4033 = vmatprep.subr.bf16.mxu0 %v3986
  %4034 = vmatpush1.bf16.msra.mxu0 %v3985
  %4035 = vmatprep.subr.bf16.mxu0 %v3982
  %4036 = vmatpush1.bf16.msra.mxu0 %v3981
  %4037 = vmatprep.subr.bf16.mxu0 %v3978
  %4038 = vmatpush1.bf16.msra.mxu0 %v3977
  %4039 = vmatprep.subr.bf16.mxu0 %v3974
  %4040 = vmatpush1.bf16.msra.mxu0 %v3973
  %4041 = vmatprep.subr.bf16.mxu0 %v3970
  %4042 = vmatpush1.bf16.msra.mxu0 %v3969
  %4043 = vmatprep.subr.bf16.mxu0 %v3966
  %4044 = vmatpush1.bf16.msra.mxu0 %v3965
  %4045 = vmatprep.subr.bf16.mxu0 0
  %4046 = vmatpush2.bf16.msra.mxu0 0
  %4047 = vmatprep.subr.bf16.mxu0 0
  %4048 = vmatpush2.bf16.msra.mxu0 0
  %4049 = vmatprep.subr.bf16.mxu0 0
  %4050 = vmatpush2.bf16.msra.mxu0 0
  %4051 = vmatprep.subr.bf16.mxu0 0
  %4052 = vmatpush2.bf16.msra.mxu0 0
  %4053 = vmatprep.subr.bf16.mxu0 0
  %4054 = vmatpush2.bf16.msra.mxu0 0
  %4055 = vmatprep.subr.bf16.mxu0 0
  %4056 = vmatpush2.bf16.msra.mxu0 0
  %4057 = vmatprep.subr.bf16.mxu0 0
  %4058 = vmatpush2.bf16.msra.mxu0 0
  %4059 = vmatprep.subr.bf16.mxu0 0
  %4060 = vmatpush2.bf16.msra.mxu0 0
  %4061 = vmatprep.mubr.bf16.mxu0 0
  %4062 = vmatmul.mubr.bf16.gmra.mxu0 %v3853
  %v4063 = vpop.f32.mrf.mxu0
  %v4064 = vadd.f32 0.0, %v4063
  %v4065 = vpop.f32.mrf.mxu0
  %v4066 = vadd.f32 0.0, %v4065
  %v4067 = vpop.f32.mrf.mxu0
  %v4068 = vadd.f32 0.0, %v4067
  %v4069 = vpop.f32.mrf.mxu0
  %v4070 = vadd.f32 0.0, %v4069
  %4071 = vmatprep.mubr.bf16.mxu0 0
  %4072 = vmatmul.mubr.bf16.gmra.mxu0 %v3854
  %v4073 = vpop.f32.mrf.mxu0
  %v4074 = vadd.f32 0.0, %v4073
  %v4075 = vpop.f32.mrf.mxu0
  %v4076 = vadd.f32 0.0, %v4075
  %v4077 = vpop.f32.mrf.mxu0
  %v4078 = vadd.f32 0.0, %v4077
  %v4079 = vpop.f32.mrf.mxu0
  %v4080 = vadd.f32 0.0, %v4079
  %4081 = vmatprep.mubr.bf16.mxu0 0
  %4082 = vmatmul.mubr.bf16.gmra.mxu0 %v3855
  %v4083 = vpop.f32.mrf.mxu0
  %v4084 = vadd.f32 0.0, %v4083
  %v4085 = vpop.f32.mrf.mxu0
  %v4086 = vadd.f32 0.0, %v4085
  %v4087 = vpop.f32.mrf.mxu0
  %v4088 = vadd.f32 0.0, %v4087
  %v4089 = vpop.f32.mrf.mxu0
  %v4090 = vadd.f32 0.0, %v4089
  %4091 = vmatprep.mubr.bf16.mxu0 0
  %4092 = vmatmul.mubr.bf16.gmra.mxu0 %v3856
  %v4093 = vpop.f32.mrf.mxu0
  %v4094 = vadd.f32 0.0, %v4093
  %v4095 = vpop.f32.mrf.mxu0
  %v4096 = vadd.f32 0.0, %v4095
  %v4097 = vpop.f32.mrf.mxu0
  %v4098 = vadd.f32 0.0, %v4097
  %v4099 = vpop.f32.mrf.mxu0
  %v4100 = vadd.f32 0.0, %v4099
  %4101 = vmatprep.mubr.bf16.mxu0 0
  %4102 = vmatmul.mubr.bf16.gmra.mxu0 %v3857
  %v4103 = vpop.f32.mrf.mxu0
  %v4104 = vadd.f32 0.0, %v4103
  %v4105 = vpop.f32.mrf.mxu0
  %v4106 = vadd.f32 0.0, %v4105
  %v4107 = vpop.f32.mrf.mxu0
  %v4108 = vadd.f32 0.0, %v4107
  %v4109 = vpop.f32.mrf.mxu0
  %v4110 = vadd.f32 0.0, %v4109
  %4111 = vmatprep.mubr.bf16.mxu0 0
  %4112 = vmatmul.mubr.bf16.gmra.mxu0 %v3858
  %v4113 = vpop.f32.mrf.mxu0
  %v4114 = vadd.f32 0.0, %v4113
  %v4115 = vpop.f32.mrf.mxu0
  %v4116 = vadd.f32 0.0, %v4115
  %v4117 = vpop.f32.mrf.mxu0
  %v4118 = vadd.f32 0.0, %v4117
  %v4119 = vpop.f32.mrf.mxu0
  %v4120 = vadd.f32 0.0, %v4119
  %4121 = vmatprep.mubr.bf16.mxu0 0
  %4122 = vmatmul.mubr.bf16.gmra.mxu0 %v3859
  %v4123 = vpop.f32.mrf.mxu0
  %v4124 = vadd.f32 0.0, %v4123
  %v4125 = vpop.f32.mrf.mxu0
  %v4126 = vadd.f32 0.0, %v4125
  %v4127 = vpop.f32.mrf.mxu0
  %v4128 = vadd.f32 0.0, %v4127
  %v4129 = vpop.f32.mrf.mxu0
  %v4130 = vadd.f32 0.0, %v4129
  %4131 = vmatprep.mubr.bf16.mxu0 0
  %4132 = vmatmul.mubr.bf16.gmra.mxu0 %v3860
  %v4133 = vpop.f32.mrf.mxu0
  %v4134 = vadd.f32 0.0, %v4133
  %v4135 = vpop.f32.mrf.mxu0
  %v4136 = vadd.f32 0.0, %v4135
  %v4137 = vpop.f32.mrf.mxu0
  %v4138 = vadd.f32 0.0, %v4137
  %v4139 = vpop.f32.mrf.mxu0
  %v4140 = vadd.f32 0.0, %v4139
  %4141 = vdwg.mxu0
  %4142 = vmatprep.subr.bf16.mxu0 %v3996
  %4143 = vmatpush1.bf16.msra.mxu0 %v3995
  %4144 = vmatprep.subr.bf16.mxu0 %v3992
  %4145 = vmatpush1.bf16.msra.mxu0 %v3991
  %4146 = vmatprep.subr.bf16.mxu0 %v3988
  %4147 = vmatpush1.bf16.msra.mxu0 %v3987
  %4148 = vmatprep.subr.bf16.mxu0 %v3984
  %4149 = vmatpush1.bf16.msra.mxu0 %v3983
  %4150 = vmatprep.subr.bf16.mxu0 %v3980
  %4151 = vmatpush1.bf16.msra.mxu0 %v3979
  %4152 = vmatprep.subr.bf16.mxu0 %v3976
  %4153 = vmatpush1.bf16.msra.mxu0 %v3975
  %4154 = vmatprep.subr.bf16.mxu0 %v3972
  %4155 = vmatpush1.bf16.msra.mxu0 %v3971
  %4156 = vmatprep.subr.bf16.mxu0 %v3968
  %4157 = vmatpush1.bf16.msra.mxu0 %v3967
  %4158 = vmatprep.subr.bf16.mxu0 0
  %4159 = vmatpush2.bf16.msra.mxu0 0
  %4160 = vmatprep.subr.bf16.mxu0 0
  %4161 = vmatpush2.bf16.msra.mxu0 0
  %4162 = vmatprep.subr.bf16.mxu0 0
  %4163 = vmatpush2.bf16.msra.mxu0 0
  %4164 = vmatprep.subr.bf16.mxu0 0
  %4165 = vmatpush2.bf16.msra.mxu0 0
  %4166 = vmatprep.subr.bf16.mxu0 0
  %4167 = vmatpush2.bf16.msra.mxu0 0
  %4168 = vmatprep.subr.bf16.mxu0 0
  %4169 = vmatpush2.bf16.msra.mxu0 0
  %4170 = vmatprep.subr.bf16.mxu0 0
  %4171 = vmatpush2.bf16.msra.mxu0 0
  %4172 = vmatprep.subr.bf16.mxu0 0
  %4173 = vmatpush2.bf16.msra.mxu0 0
  %4174 = vmatprep.mubr.bf16.mxu0 0
  %4175 = vmatmul.mubr.bf16.gmra.mxu0 %v3853
  %v4176 = vpop.f32.mrf.mxu0
  %v4177 = vadd.f32 0.0, %v4176
  %v4178 = vpop.f32.mrf.mxu0
  %v4179 = vadd.f32 0.0, %v4178
  %v4180 = vpop.f32.mrf.mxu0
  %v4181 = vadd.f32 0.0, %v4180
  %v4182 = vpop.f32.mrf.mxu0
  %v4183 = vadd.f32 0.0, %v4182
  %4184 = vmatprep.mubr.bf16.mxu0 0
  %4185 = vmatmul.mubr.bf16.gmra.mxu0 %v3854
  %v4186 = vpop.f32.mrf.mxu0
  %v4187 = vadd.f32 0.0, %v4186
  %v4188 = vpop.f32.mrf.mxu0
  %v4189 = vadd.f32 0.0, %v4188
  %v4190 = vpop.f32.mrf.mxu0
  %v4191 = vadd.f32 0.0, %v4190
  %v4192 = vpop.f32.mrf.mxu0
  %v4193 = vadd.f32 0.0, %v4192
  %4194 = vmatprep.mubr.bf16.mxu0 0
  %4195 = vmatmul.mubr.bf16.gmra.mxu0 %v3855
  %v4196 = vpop.f32.mrf.mxu0
  %v4197 = vadd.f32 0.0, %v4196
  %v4198 = vpop.f32.mrf.mxu0
  %v4199 = vadd.f32 0.0, %v4198
  %v4200 = vpop.f32.mrf.mxu0
  %v4201 = vadd.f32 0.0, %v4200
  %v4202 = vpop.f32.mrf.mxu0
  %v4203 = vadd.f32 0.0, %v4202
  %4204 = vmatprep.mubr.bf16.mxu0 0
  %4205 = vmatmul.mubr.bf16.gmra.mxu0 %v3856
  %v4206 = vpop.f32.mrf.mxu0
  %v4207 = vadd.f32 0.0, %v4206
  %v4208 = vpop.f32.mrf.mxu0
  %v4209 = vadd.f32 0.0, %v4208
  %v4210 = vpop.f32.mrf.mxu0
  %v4211 = vadd.f32 0.0, %v4210
  %v4212 = vpop.f32.mrf.mxu0
  %v4213 = vadd.f32 0.0, %v4212
  %4214 = vmatprep.mubr.bf16.mxu0 0
  %4215 = vmatmul.mubr.bf16.gmra.mxu0 %v3857
  %v4216 = vpop.f32.mrf.mxu0
  %v4217 = vadd.f32 0.0, %v4216
  %v4218 = vpop.f32.mrf.mxu0
  %v4219 = vadd.f32 0.0, %v4218
  %v4220 = vpop.f32.mrf.mxu0
  %v4221 = vadd.f32 0.0, %v4220
  %v4222 = vpop.f32.mrf.mxu0
  %v4223 = vadd.f32 0.0, %v4222
  %4224 = vmatprep.mubr.bf16.mxu0 0
  %4225 = vmatmul.mubr.bf16.gmra.mxu0 %v3858
  %v4226 = vpop.f32.mrf.mxu0
  %v4227 = vadd.f32 0.0, %v4226
  %v4228 = vpop.f32.mrf.mxu0
  %v4229 = vadd.f32 0.0, %v4228
  %v4230 = vpop.f32.mrf.mxu0
  %v4231 = vadd.f32 0.0, %v4230
  %v4232 = vpop.f32.mrf.mxu0
  %v4233 = vadd.f32 0.0, %v4232
  %4234 = vmatprep.mubr.bf16.mxu0 0
  %4235 = vmatmul.mubr.bf16.gmra.mxu0 %v3859
  %v4236 = vpop.f32.mrf.mxu0
  %v4237 = vadd.f32 0.0, %v4236
  %v4238 = vpop.f32.mrf.mxu0
  %v4239 = vadd.f32 0.0, %v4238
  %v4240 = vpop.f32.mrf.mxu0
  %v4241 = vadd.f32 0.0, %v4240
  %v4242 = vpop.f32.mrf.mxu0
  %v4243 = vadd.f32 0.0, %v4242
  %4244 = vmatprep.mubr.bf16.mxu0 0
  %4245 = vmatmul.mubr.bf16.gmra.mxu0 %v3860
  %v4246 = vpop.f32.mrf.mxu0
  %v4247 = vadd.f32 0.0, %v4246
  %v4248 = vpop.f32.mrf.mxu0
  %v4249 = vadd.f32 0.0, %v4248
  %v4250 = vpop.f32.mrf.mxu0
  %v4251 = vadd.f32 0.0, %v4250
  %v4252 = vpop.f32.mrf.mxu0
  %v4253 = vadd.f32 0.0, %v4252
  %4254 = vdwg.mxu0
  %v4255 = vpack.c.bf16 %v4068, %v4064
  %v4256 = vpack.c.bf16 %v4070, %v4066
  %v4257 = vpack.c.bf16 %v4181, %v4177
  %v4258 = vpack.c.bf16 %v4183, %v4179
  %v4259 = vpack.c.bf16 %v4078, %v4074
  %v4260 = vpack.c.bf16 %v4080, %v4076
  %v4261 = vpack.c.bf16 %v4191, %v4187
  %v4262 = vpack.c.bf16 %v4193, %v4189
  %v4263 = vpack.c.bf16 %v4088, %v4084
  %v4264 = vpack.c.bf16 %v4090, %v4086
  %v4265 = vpack.c.bf16 %v4201, %v4197
  %v4266 = vpack.c.bf16 %v4203, %v4199
  %v4267 = vpack.c.bf16 %v4098, %v4094
  %v4268 = vpack.c.bf16 %v4100, %v4096
  %v4269 = vpack.c.bf16 %v4211, %v4207
  %v4270 = vpack.c.bf16 %v4213, %v4209
  %v4271 = vpack.c.bf16 %v4108, %v4104
  %v4272 = vpack.c.bf16 %v4110, %v4106
  %v4273 = vpack.c.bf16 %v4221, %v4217
  %v4274 = vpack.c.bf16 %v4223, %v4219
  %v4275 = vpack.c.bf16 %v4118, %v4114
  %v4276 = vpack.c.bf16 %v4120, %v4116
  %v4277 = vpack.c.bf16 %v4231, %v4227
  %v4278 = vpack.c.bf16 %v4233, %v4229
  %v4279 = vpack.c.bf16 %v4128, %v4124
  %v4280 = vpack.c.bf16 %v4130, %v4126
  %v4281 = vpack.c.bf16 %v4241, %v4237
  %v4282 = vpack.c.bf16 %v4243, %v4239
  %v4283 = vpack.c.bf16 %v4138, %v4134
  %v4284 = vpack.c.bf16 %v4140, %v4136
  %v4285 = vpack.c.bf16 %v4251, %v4247
  %v4286 = vpack.c.bf16 %v4253, %v4249
  %v4319 = vunpack.c.l.b16 %v4255
  %v4320 = vunpack.c.l.b16 %v4256
  %v4321 = vunpack.c.l.b16 %v4257
  %v4322 = vunpack.c.l.b16 %v4258
  %v4323 = vunpack.c.h.b16 %v4255
  %v4324 = vunpack.c.h.b16 %v4256
  %v4325 = vunpack.c.h.b16 %v4257
  %v4326 = vunpack.c.h.b16 %v4258
  %v4327 = vunpack.c.l.b16 %v4259
  %v4328 = vunpack.c.l.b16 %v4260
  %v4329 = vunpack.c.l.b16 %v4261
  %v4330 = vunpack.c.l.b16 %v4262
  %v4331 = vunpack.c.h.b16 %v4259
  %v4332 = vunpack.c.h.b16 %v4260
  %v4333 = vunpack.c.h.b16 %v4261
  %v4334 = vunpack.c.h.b16 %v4262
  %v4335 = vunpack.c.l.b16 %v4263
  %v4336 = vunpack.c.l.b16 %v4264
  %v4337 = vunpack.c.l.b16 %v4265
  %v4338 = vunpack.c.l.b16 %v4266
  %v4339 = vunpack.c.h.b16 %v4263
  %v4340 = vunpack.c.h.b16 %v4264
  %v4341 = vunpack.c.h.b16 %v4265
  %v4342 = vunpack.c.h.b16 %v4266
  %v4343 = vunpack.c.l.b16 %v4267
  %v4344 = vunpack.c.l.b16 %v4268
  %v4345 = vunpack.c.l.b16 %v4269
  %v4346 = vunpack.c.l.b16 %v4270
  %v4347 = vunpack.c.h.b16 %v4267
  %v4348 = vunpack.c.h.b16 %v4268
  %v4349 = vunpack.c.h.b16 %v4269
  %v4350 = vunpack.c.h.b16 %v4270
  %v4351 = vunpack.c.l.b16 %v4271
  %v4352 = vunpack.c.l.b16 %v4272
  %v4353 = vunpack.c.l.b16 %v4273
  %v4354 = vunpack.c.l.b16 %v4274
  %v4355 = vunpack.c.h.b16 %v4271
  %v4356 = vunpack.c.h.b16 %v4272
  %v4357 = vunpack.c.h.b16 %v4273
  %v4358 = vunpack.c.h.b16 %v4274
  %v4359 = vunpack.c.l.b16 %v4275
  %v4360 = vunpack.c.l.b16 %v4276
  %v4361 = vunpack.c.l.b16 %v4277
  %v4362 = vunpack.c.l.b16 %v4278
  %v4363 = vunpack.c.h.b16 %v4275
  %v4364 = vunpack.c.h.b16 %v4276
  %v4365 = vunpack.c.h.b16 %v4277
  %v4366 = vunpack.c.h.b16 %v4278
  %v4367 = vunpack.c.l.b16 %v4279
  %v4368 = vunpack.c.l.b16 %v4280
  %v4369 = vunpack.c.l.b16 %v4281
  %v4370 = vunpack.c.l.b16 %v4282
  %v4371 = vunpack.c.h.b16 %v4279
  %v4372 = vunpack.c.h.b16 %v4280
  %v4373 = vunpack.c.h.b16 %v4281
  %v4374 = vunpack.c.h.b16 %v4282
  %v4375 = vunpack.c.l.b16 %v4283
  %v4376 = vunpack.c.l.b16 %v4284
  %v4377 = vunpack.c.l.b16 %v4285
  %v4378 = vunpack.c.l.b16 %v4286
  %v4379 = vunpack.c.h.b16 %v4283
  %v4380 = vunpack.c.h.b16 %v4284
  %v4381 = vunpack.c.h.b16 %v4285
  %v4382 = vunpack.c.h.b16 %v4286
  %v4383 = vpack.c.b16 %v4320, %v4319
  %v4384 = vpack.c.b16 %v4322, %v4321
  %v4385 = vpack.c.b16 %v4324, %v4323
  %v4386 = vpack.c.b16 %v4326, %v4325
  %v4387 = vpack.c.b16 %v4328, %v4327
  %v4388 = vpack.c.b16 %v4330, %v4329
  %v4389 = vpack.c.b16 %v4332, %v4331
  %v4390 = vpack.c.b16 %v4334, %v4333
  %v4391 = vpack.c.b16 %v4336, %v4335
  %v4392 = vpack.c.b16 %v4338, %v4337
  %v4393 = vpack.c.b16 %v4340, %v4339
  %v4394 = vpack.c.b16 %v4342, %v4341
  %v4395 = vpack.c.b16 %v4344, %v4343
  %v4396 = vpack.c.b16 %v4346, %v4345
  %v4397 = vpack.c.b16 %v4348, %v4347
  %v4398 = vpack.c.b16 %v4350, %v4349
  %v4399 = vpack.c.b16 %v4352, %v4351
  %v4400 = vpack.c.b16 %v4354, %v4353
  %v4401 = vpack.c.b16 %v4356, %v4355
  %v4402 = vpack.c.b16 %v4358, %v4357
  %v4403 = vpack.c.b16 %v4360, %v4359
  %v4404 = vpack.c.b16 %v4362, %v4361
  %v4405 = vpack.c.b16 %v4364, %v4363
  %v4406 = vpack.c.b16 %v4366, %v4365
  %v4407 = vpack.c.b16 %v4368, %v4367
  %v4408 = vpack.c.b16 %v4370, %v4369
  %v4409 = vpack.c.b16 %v4372, %v4371
  %v4410 = vpack.c.b16 %v4374, %v4373
  %v4411 = vpack.c.b16 %v4376, %v4375
  %v4412 = vpack.c.b16 %v4378, %v4377
  %v4413 = vpack.c.b16 %v4380, %v4379
  %v4414 = vpack.c.b16 %v4382, %v4381
  %4447 = vst [vmem:[#allocation3] sm:$0xff] %v4383
  %4448 = vst [vmem:[#allocation3 + $0x8] sm:$0xff] %v4384
  %4449 = vst [vmem:[#allocation3 + $0x10] sm:$0xff] %v4385
  %4450 = vst [vmem:[#allocation3 + $0x18] sm:$0xff] %v4386
  %4451 = vst [vmem:[#allocation3 + $0x20] sm:$0xff] %v4387
  %4452 = vst [vmem:[#allocation3 + $0x28] sm:$0xff] %v4388
  %4453 = vst [vmem:[#allocation3 + $0x30] sm:$0xff] %v4389
  %4454 = vst [vmem:[#allocation3 + $0x38] sm:$0xff] %v4390
  %4455 = vst [vmem:[#allocation3 + $0x40] sm:$0xff] %v4391
  %4456 = vst [vmem:[#allocation3 + $0x48] sm:$0xff] %v4392
  %4457 = vst [vmem:[#allocation3 + $0x50] sm:$0xff] %v4393
  %4458 = vst [vmem:[#allocation3 + $0x58] sm:$0xff] %v4394
  %4459 = vst [vmem:[#allocation3 + $0x60] sm:$0xff] %v4395
  %4460 = vst [vmem:[#allocation3 + $0x68] sm:$0xff] %v4396
  %4461 = vst [vmem:[#allocation3 + $0x70] sm:$0xff] %v4397
  %4462 = vst [vmem:[#allocation3 + $0x78] sm:$0xff] %v4398
  %4463 = vst [vmem:[#allocation3 + $0x80] sm:$0xff] %v4399
  %4464 = vst [vmem:[#allocation3 + $0x88] sm:$0xff] %v4400
  %4465 = vst [vmem:[#allocation3 + $0x90] sm:$0xff] %v4401
  %4466 = vst [vmem:[#allocation3 + $0x98] sm:$0xff] %v4402
  %4467 = vst [vmem:[#allocation3 + $0xa0] sm:$0xff] %v4403
  %4468 = vst [vmem:[#allocation3 + $0xa8] sm:$0xff] %v4404
  %4469 = vst [vmem:[#allocation3 + $0xb0] sm:$0xff] %v4405
  %4470 = vst [vmem:[#allocation3 + $0xb8] sm:$0xff] %v4406
  %4471 = vst [vmem:[#allocation3 + $0xc0] sm:$0xff] %v4407
  %4472 = vst [vmem:[#allocation3 + $0xc8] sm:$0xff] %v4408
  %4473 = vst [vmem:[#allocation3 + $0xd0] sm:$0xff] %v4409
  %4474 = vst [vmem:[#allocation3 + $0xd8] sm:$0xff] %v4410
  %4475 = vst [vmem:[#allocation3 + $0xe0] sm:$0xff] %v4411
  %4476 = vst [vmem:[#allocation3 + $0xe8] sm:$0xff] %v4412
  %4477 = vst [vmem:[#allocation3 + $0xf0] sm:$0xff] %v4413
  %4478 = vst [vmem:[#allocation3 + $0xf8] sm:$0xff] %v4414
  %s4479 = scalar_lea.vmem %s3, 4
  %v4480 = vld [vmem:[%s4479] sm:$0xf]
  %v4481 = vld [vmem:[#allocation3] sm:$0xff]
  %v4482 = vld [vmem:[#allocation3 + $0x8] sm:$0xff]
  %v4483 = vld [vmem:[#allocation3 + $0x10] sm:$0xff]
  %v4484 = vld [vmem:[#allocation3 + $0x18] sm:$0xff]
  %v4485 = vunpack.c.l.bf16 %v4481
  %v4486 = vunpack.c.h.bf16 %v4481
  %v4487 = vunpack.c.l.bf16 %v4482
  %v4488 = vunpack.c.h.bf16 %v4482
  %v4489 = vunpack.c.l.bf16 %v4483
  %v4490 = vunpack.c.h.bf16 %v4483
  %v4491 = vunpack.c.l.bf16 %v4484
  %v4492 = vunpack.c.h.bf16 %v4484
  %v4494 = vlaneseq
  %v4495 = vshrl.u32 %v4494, 7
  %v4496 = vsub.s32 0, %v4495
  %v4497 = vrot.slane %v4480, %v4496
  %v4498 = vlaneseq
  %v4499 = vshrl.u32 %v4498, 7
  %v4500 = vsub.s32 1, %v4499
  %v4501 = vrot.slane %v4480, %v4500
  %v4502 = vlaneseq
  %v4503 = vshrl.u32 %v4502, 7
  %v4504 = vsub.s32 2, %v4503
  %v4505 = vrot.slane %v4480, %v4504
  %v4506 = vlaneseq
  %v4507 = vshrl.u32 %v4506, 7
  %v4508 = vsub.s32 3, %v4507
  %v4509 = vrot.slane %v4480, %v4508
  %v4514 = vadd.f32 %v4485, %v4497
  %v4515 = vadd.f32 %v4486, %v4501
  %v4516 = vadd.f32 %v4487, %v4505
  %v4517 = vadd.f32 %v4488, %v4509
  %v4518 = vadd.f32 %v4489, %v4497
  %v4519 = vadd.f32 %v4490, %v4501
  %v4520 = vadd.f32 %v4491, %v4505
  %v4521 = vadd.f32 %v4492, %v4509
  %s4522 = scalar_lea.vmem %s2, 256
  %v4523 = vld [vmem:[%s4522] sm:$0xff]
  %v4524 = vld [vmem:[%s4522 + $0x8] sm:$0xff]
  %v4525 = vld [vmem:[%s4522 + $0x10] sm:$0xff]
  %v4526 = vld [vmem:[%s4522 + $0x18] sm:$0xff]
  %v4527 = vld [vmem:[%s4522 + $0x20] sm:$0xff]
  %v4528 = vld [vmem:[%s4522 + $0x28] sm:$0xff]
  %v4529 = vld [vmem:[%s4522 + $0x30] sm:$0xff]
  %v4530 = vld [vmem:[%s4522 + $0x38] sm:$0xff]
  %v4531 = vld [vmem:[%s4522 + $0x40] sm:$0xff]
  %v4532 = vld [vmem:[%s4522 + $0x48] sm:$0xff]
  %v4533 = vld [vmem:[%s4522 + $0x50] sm:$0xff]
  %v4534 = vld [vmem:[%s4522 + $0x58] sm:$0xff]
  %v4535 = vld [vmem:[%s4522 + $0x60] sm:$0xff]
  %v4536 = vld [vmem:[%s4522 + $0x68] sm:$0xff]
  %v4537 = vld [vmem:[%s4522 + $0x70] sm:$0xff]
  %v4538 = vld [vmem:[%s4522 + $0x78] sm:$0xff]
  %v4539 = vld [vmem:[%s4522 + $0x80] sm:$0xff]
  %v4540 = vld [vmem:[%s4522 + $0x88] sm:$0xff]
  %v4541 = vld [vmem:[%s4522 + $0x90] sm:$0xff]
  %v4542 = vld [vmem:[%s4522 + $0x98] sm:$0xff]
  %v4543 = vld [vmem:[%s4522 + $0xa0] sm:$0xff]
  %v4544 = vld [vmem:[%s4522 + $0xa8] sm:$0xff]
  %v4545 = vld [vmem:[%s4522 + $0xb0] sm:$0xff]
  %v4546 = vld [vmem:[%s4522 + $0xb8] sm:$0xff]
  %v4547 = vld [vmem:[%s4522 + $0xc0] sm:$0xff]
  %v4548 = vld [vmem:[%s4522 + $0xc8] sm:$0xff]
  %v4549 = vld [vmem:[%s4522 + $0xd0] sm:$0xff]
  %v4550 = vld [vmem:[%s4522 + $0xd8] sm:$0xff]
  %v4551 = vld [vmem:[%s4522 + $0xe0] sm:$0xff]
  %v4552 = vld [vmem:[%s4522 + $0xe8] sm:$0xff]
  %v4553 = vld [vmem:[%s4522 + $0xf0] sm:$0xff]
  %v4554 = vld [vmem:[%s4522 + $0xf8] sm:$0xff]
  %v4587 = vunpack.c.l.b16 %v4523
  %v4588 = vunpack.c.h.b16 %v4523
  %v4589 = vunpack.c.l.b16 %v4524
  %v4590 = vunpack.c.h.b16 %v4524
  %v4591 = vunpack.c.l.b16 %v4525
  %v4592 = vunpack.c.h.b16 %v4525
  %v4593 = vunpack.c.l.b16 %v4526
  %v4594 = vunpack.c.h.b16 %v4526
  %v4595 = vunpack.c.l.b16 %v4527
  %v4596 = vunpack.c.h.b16 %v4527
  %v4597 = vunpack.c.l.b16 %v4528
  %v4598 = vunpack.c.h.b16 %v4528
  %v4599 = vunpack.c.l.b16 %v4529
  %v4600 = vunpack.c.h.b16 %v4529
  %v4601 = vunpack.c.l.b16 %v4530
  %v4602 = vunpack.c.h.b16 %v4530
  %v4603 = vunpack.c.l.b16 %v4531
  %v4604 = vunpack.c.h.b16 %v4531
  %v4605 = vunpack.c.l.b16 %v4532
  %v4606 = vunpack.c.h.b16 %v4532
  %v4607 = vunpack.c.l.b16 %v4533
  %v4608 = vunpack.c.h.b16 %v4533
  %v4609 = vunpack.c.l.b16 %v4534
  %v4610 = vunpack.c.h.b16 %v4534
  %v4611 = vunpack.c.l.b16 %v4535
  %v4612 = vunpack.c.h.b16 %v4535
  %v4613 = vunpack.c.l.b16 %v4536
  %v4614 = vunpack.c.h.b16 %v4536
  %v4615 = vunpack.c.l.b16 %v4537
  %v4616 = vunpack.c.h.b16 %v4537
  %v4617 = vunpack.c.l.b16 %v4538
  %v4618 = vunpack.c.h.b16 %v4538
  %v4619 = vunpack.c.l.b16 %v4539
  %v4620 = vunpack.c.h.b16 %v4539
  %v4621 = vunpack.c.l.b16 %v4540
  %v4622 = vunpack.c.h.b16 %v4540
  %v4623 = vunpack.c.l.b16 %v4541
  %v4624 = vunpack.c.h.b16 %v4541
  %v4625 = vunpack.c.l.b16 %v4542
  %v4626 = vunpack.c.h.b16 %v4542
  %v4627 = vunpack.c.l.b16 %v4543
  %v4628 = vunpack.c.h.b16 %v4543
  %v4629 = vunpack.c.l.b16 %v4544
  %v4630 = vunpack.c.h.b16 %v4544
  %v4631 = vunpack.c.l.b16 %v4545
  %v4632 = vunpack.c.h.b16 %v4545
  %v4633 = vunpack.c.l.b16 %v4546
  %v4634 = vunpack.c.h.b16 %v4546
  %v4635 = vunpack.c.l.b16 %v4547
  %v4636 = vunpack.c.h.b16 %v4547
  %v4637 = vunpack.c.l.b16 %v4548
  %v4638 = vunpack.c.h.b16 %v4548
  %v4639 = vunpack.c.l.b16 %v4549
  %v4640 = vunpack.c.h.b16 %v4549
  %v4641 = vunpack.c.l.b16 %v4550
  %v4642 = vunpack.c.h.b16 %v4550
  %v4643 = vunpack.c.l.b16 %v4551
  %v4644 = vunpack.c.h.b16 %v4551
  %v4645 = vunpack.c.l.b16 %v4552
  %v4646 = vunpack.c.h.b16 %v4552
  %v4647 = vunpack.c.l.b16 %v4553
  %v4648 = vunpack.c.h.b16 %v4553
  %v4649 = vunpack.c.l.b16 %v4554
  %v4650 = vunpack.c.h.b16 %v4554
  %v4651 = vpack.c.b16 %v4591, %v4587
  %v4652 = vpack.c.b16 %v4592, %v4588
  %v4653 = vpack.c.b16 %v4593, %v4589
  %v4654 = vpack.c.b16 %v4594, %v4590
  %v4655 = vpack.c.b16 %v4599, %v4595
  %v4656 = vpack.c.b16 %v4600, %v4596
  %v4657 = vpack.c.b16 %v4601, %v4597
  %v4658 = vpack.c.b16 %v4602, %v4598
  %v4659 = vpack.c.b16 %v4607, %v4603
  %v4660 = vpack.c.b16 %v4608, %v4604
  %v4661 = vpack.c.b16 %v4609, %v4605
  %v4662 = vpack.c.b16 %v4610, %v4606
  %v4663 = vpack.c.b16 %v4615, %v4611
  %v4664 = vpack.c.b16 %v4616, %v4612
  %v4665 = vpack.c.b16 %v4617, %v4613
  %v4666 = vpack.c.b16 %v4618, %v4614
  %v4667 = vpack.c.b16 %v4623, %v4619
  %v4668 = vpack.c.b16 %v4624, %v4620
  %v4669 = vpack.c.b16 %v4625, %v4621
  %v4670 = vpack.c.b16 %v4626, %v4622
  %v4671 = vpack.c.b16 %v4631, %v4627
  %v4672 = vpack.c.b16 %v4632, %v4628
  %v4673 = vpack.c.b16 %v4633, %v4629
  %v4674 = vpack.c.b16 %v4634, %v4630
  %v4675 = vpack.c.b16 %v4639, %v4635
  %v4676 = vpack.c.b16 %v4640, %v4636
  %v4677 = vpack.c.b16 %v4641, %v4637
  %v4678 = vpack.c.b16 %v4642, %v4638
  %v4679 = vpack.c.b16 %v4647, %v4643
  %v4680 = vpack.c.b16 %v4648, %v4644
  %v4681 = vpack.c.b16 %v4649, %v4645
  %v4682 = vpack.c.b16 %v4650, %v4646
  %4715 = vmatprep.subr.bf16.mxu0 %v4680
  %4716 = vmatpush1.bf16.msra.mxu0 %v4679
  %4717 = vmatprep.subr.bf16.mxu0 %v4676
  %4718 = vmatpush1.bf16.msra.mxu0 %v4675
  %4719 = vmatprep.subr.bf16.mxu0 %v4672
  %4720 = vmatpush1.bf16.msra.mxu0 %v4671
  %4721 = vmatprep.subr.bf16.mxu0 %v4668
  %4722 = vmatpush1.bf16.msra.mxu0 %v4667
  %4723 = vmatprep.subr.bf16.mxu0 %v4664
  %4724 = vmatpush1.bf16.msra.mxu0 %v4663
  %4725 = vmatprep.subr.bf16.mxu0 %v4660
  %4726 = vmatpush1.bf16.msra.mxu0 %v4659
  %4727 = vmatprep.subr.bf16.mxu0 %v4656
  %4728 = vmatpush1.bf16.msra.mxu0 %v4655
  %4729 = vmatprep.subr.bf16.mxu0 %v4652
  %4730 = vmatpush1.bf16.msra.mxu0 %v4651
  %4731 = vmatprep.subr.bf16.mxu0 0
  %4732 = vmatpush2.bf16.msra.mxu0 0
  %4733 = vmatprep.subr.bf16.mxu0 0
  %4734 = vmatpush2.bf16.msra.mxu0 0
  %4735 = vmatprep.subr.bf16.mxu0 0
  %4736 = vmatpush2.bf16.msra.mxu0 0
  %4737 = vmatprep.subr.bf16.mxu0 0
  %4738 = vmatpush2.bf16.msra.mxu0 0
  %4739 = vmatprep.subr.bf16.mxu0 0
  %4740 = vmatpush2.bf16.msra.mxu0 0
  %4741 = vmatprep.subr.bf16.mxu0 0
  %4742 = vmatpush2.bf16.msra.mxu0 0
  %4743 = vmatprep.subr.bf16.mxu0 0
  %4744 = vmatpush2.bf16.msra.mxu0 0
  %4745 = vmatprep.subr.bf16.mxu0 0
  %4746 = vmatpush2.bf16.msra.mxu0 0
  %4747 = vmatprep.mubr.bf16.mxu0 0
  %4748 = vmatmul.mubr.bf16.gmra.mxu0 0
  %v4749 = vpop.f32.mrf.mxu0
  %v4750 = vadd.f32 0.0, %v4749
  %v4751 = vpop.f32.mrf.mxu0
  %v4752 = vadd.f32 0.0, %v4751
  %v4753 = vpop.f32.mrf.mxu0
  %v4754 = vadd.f32 0.0, %v4753
  %v4755 = vpop.f32.mrf.mxu0
  %v4756 = vadd.f32 0.0, %v4755
  %4757 = vdwg.mxu0
  %4758 = vmatprep.subr.bf16.mxu0 %v4682
  %4759 = vmatpush1.bf16.msra.mxu0 %v4681
  %4760 = vmatprep.subr.bf16.mxu0 %v4678
  %4761 = vmatpush1.bf16.msra.mxu0 %v4677
  %4762 = vmatprep.subr.bf16.mxu0 %v4674
  %4763 = vmatpush1.bf16.msra.mxu0 %v4673
  %4764 = vmatprep.subr.bf16.mxu0 %v4670
  %4765 = vmatpush1.bf16.msra.mxu0 %v4669
  %4766 = vmatprep.subr.bf16.mxu0 %v4666
  %4767 = vmatpush1.bf16.msra.mxu0 %v4665
  %4768 = vmatprep.subr.bf16.mxu0 %v4662
  %4769 = vmatpush1.bf16.msra.mxu0 %v4661
  %4770 = vmatprep.subr.bf16.mxu0 %v4658
  %4771 = vmatpush1.bf16.msra.mxu0 %v4657
  %4772 = vmatprep.subr.bf16.mxu0 %v4654
  %4773 = vmatpush1.bf16.msra.mxu0 %v4653
  %4774 = vmatprep.subr.bf16.mxu0 0
  %4775 = vmatpush2.bf16.msra.mxu0 0
  %4776 = vmatprep.subr.bf16.mxu0 0
  %4777 = vmatpush2.bf16.msra.mxu0 0
  %4778 = vmatprep.subr.bf16.mxu0 0
  %4779 = vmatpush2.bf16.msra.mxu0 0
  %4780 = vmatprep.subr.bf16.mxu0 0
  %4781 = vmatpush2.bf16.msra.mxu0 0
  %4782 = vmatprep.subr.bf16.mxu0 0
  %4783 = vmatpush2.bf16.msra.mxu0 0
  %4784 = vmatprep.subr.bf16.mxu0 0
  %4785 = vmatpush2.bf16.msra.mxu0 0
  %4786 = vmatprep.subr.bf16.mxu0 0
  %4787 = vmatpush2.bf16.msra.mxu0 0
  %4788 = vmatprep.subr.bf16.mxu0 0
  %4789 = vmatpush2.bf16.msra.mxu0 0
  %4790 = vmatprep.mubr.bf16.mxu0 0
  %4791 = vmatmul.mubr.bf16.gmra.mxu0 0
  %v4792 = vpop.f32.mrf.mxu0
  %v4793 = vadd.f32 0.0, %v4792
  %v4794 = vpop.f32.mrf.mxu0
  %v4795 = vadd.f32 0.0, %v4794
  %v4796 = vpop.f32.mrf.mxu0
  %v4797 = vadd.f32 0.0, %v4796
  %v4798 = vpop.f32.mrf.mxu0
  %v4799 = vadd.f32 0.0, %v4798
  %4800 = vdwg.mxu0
  %v4801 = vadd.f32 %v4514, %v4750
  %v4802 = vadd.f32 %v4515, %v4752
  %v4803 = vadd.f32 %v4516, %v4793
  %v4804 = vadd.f32 %v4517, %v4795
  %v4805 = vadd.f32 %v4518, %v4754
  %v4806 = vadd.f32 %v4519, %v4756
  %v4807 = vadd.f32 %v4520, %v4797
  %v4808 = vadd.f32 %v4521, %v4799
  %v4809 = vxor.u32 %v4801, 2147483648
  %v4810 = vxor.u32 %v4805, 2147483648
  %v4811 = vmul.f32 %v4809, 1.442695
  %v4812 = vpow.pop %v4811
  %v4813 = vmul.f32 %v4810, 1.442695
  %v4814 = vpow.pop %v4813
  %v4815 = vadd.f32 %v4812, 1.0
  %v4816 = vadd.f32 %v4814, 1.0
  %v4817 = vrcp.pop %v4815
  %v4818 = vmul.f32 1.0, %v4817
  %v4819 = vrcp.pop %v4816
  %v4820 = vmul.f32 1.0, %v4819
  %v4821 = vxor.u32 %v4802, 2147483648
  %v4822 = vxor.u32 %v4806, 2147483648
  %v4823 = vmul.f32 %v4821, 1.442695
  %v4824 = vpow.pop %v4823
  %v4825 = vmul.f32 %v4822, 1.442695
  %v4826 = vpow.pop %v4825
  %v4827 = vadd.f32 %v4824, 1.0
  %v4828 = vadd.f32 %v4826, 1.0
  %v4829 = vrcp.pop %v4827
  %v4830 = vmul.f32 1.0, %v4829
  %v4831 = vrcp.pop %v4828
  %v4832 = vmul.f32 1.0, %v4831
  %v4833 = vtanh.pop %v4803
  %v4834 = vtanh.pop %v4807
  %v4835 = vxor.u32 %v4804, 2147483648
  %v4836 = vxor.u32 %v4808, 2147483648
  %v4837 = vmul.f32 %v4835, 1.442695
  %v4838 = vpow.pop %v4837
  %v4839 = vmul.f32 %v4836, 1.442695
  %v4840 = vpow.pop %v4839
  %v4841 = vadd.f32 %v4838, 1.0
  %v4842 = vadd.f32 %v4840, 1.0
  %v4843 = vrcp.pop %v4841
  %v4844 = vmul.f32 1.0, %v4843
  %v4845 = vrcp.pop %v4842
  %v4846 = vmul.f32 1.0, %v4845
  %v4847 = vmul.f32 %v4830, 0.0
  %v4848 = vmul.f32 %v4832, 0.0
  %v4849 = vmul.f32 %v4818, %v4833
  %v4850 = vmul.f32 %v4820, %v4834
  %v4851 = vadd.f32 %v4847, %v4849
  %v4852 = vadd.f32 %v4848, %v4850
  %v4853 = vtanh.pop %v4851
  %v4854 = vtanh.pop %v4852
  %v4855 = vmul.f32 %v4844, %v4853
  %v4856 = vmul.f32 %v4846, %v4854
  %v4857 = vsel %vm1126, %v4855, 0.0
  %v4858 = vsel %vm1127, %v4856, 0.0
  %v4859 = vsel %vm1126, %v4851, 0.0
  %v4860 = vsel %vm1127, %v4852, 0.0
  %v4861 = vld [vmem:[%s1142] sm:$0xff]
  %v4862 = vld [vmem:[%s1142 + $0x8] sm:$0xff]
  %v4863 = vld [vmem:[%s1142 + $0x10] sm:$0xff]
  %v4864 = vld [vmem:[%s1142 + $0x18] sm:$0xff]
  %v4865 = vunpack.c.l.bf16 %v4861
  %v4866 = vunpack.c.h.bf16 %v4861
  %v4867 = vunpack.c.l.bf16 %v4862
  %v4868 = vunpack.c.h.bf16 %v4862
  %v4869 = vunpack.c.l.bf16 %v4863
  %v4870 = vunpack.c.h.bf16 %v4863
  %v4871 = vunpack.c.l.bf16 %v4864
  %v4872 = vunpack.c.h.bf16 %v4864
  %v4873 = vadd.f32 %v4865, %v4497
  %v4874 = vadd.f32 %v4866, %v4501
  %v4875 = vadd.f32 %v4867, %v4505
  %v4876 = vadd.f32 %v4868, %v4509
  %v4877 = vadd.f32 %v4869, %v4497
  %v4878 = vadd.f32 %v4870, %v4501
  %v4879 = vadd.f32 %v4871, %v4505
  %v4880 = vadd.f32 %v4872, %v4509
  %v4881 = vpack.c.bf16 %v4858, %v4857
  %4882 = vmatprep.subr.bf16.mxu0 %v4680
  %4883 = vmatpush1.bf16.msra.mxu0 %v4679
  %4884 = vmatprep.subr.bf16.mxu0 %v4676
  %4885 = vmatpush1.bf16.msra.mxu0 %v4675
  %4886 = vmatprep.subr.bf16.mxu0 %v4672
  %4887 = vmatpush1.bf16.msra.mxu0 %v4671
  %4888 = vmatprep.subr.bf16.mxu0 %v4668
  %4889 = vmatpush1.bf16.msra.mxu0 %v4667
  %4890 = vmatprep.subr.bf16.mxu0 %v4664
  %4891 = vmatpush1.bf16.msra.mxu0 %v4663
  %4892 = vmatprep.subr.bf16.mxu0 %v4660
  %4893 = vmatpush1.bf16.msra.mxu0 %v4659
  %4894 = vmatprep.subr.bf16.mxu0 %v4656
  %4895 = vmatpush1.bf16.msra.mxu0 %v4655
  %4896 = vmatprep.subr.bf16.mxu0 %v4652
  %4897 = vmatpush1.bf16.msra.mxu0 %v4651
  %4898 = vmatprep.subr.bf16.mxu0 0
  %4899 = vmatpush2.bf16.msra.mxu0 0
  %4900 = vmatprep.subr.bf16.mxu0 0
  %4901 = vmatpush2.bf16.msra.mxu0 0
  %4902 = vmatprep.subr.bf16.mxu0 0
  %4903 = vmatpush2.bf16.msra.mxu0 0
  %4904 = vmatprep.subr.bf16.mxu0 0
  %4905 = vmatpush2.bf16.msra.mxu0 0
  %4906 = vmatprep.subr.bf16.mxu0 0
  %4907 = vmatpush2.bf16.msra.mxu0 0
  %4908 = vmatprep.subr.bf16.mxu0 0
  %4909 = vmatpush2.bf16.msra.mxu0 0
  %4910 = vmatprep.subr.bf16.mxu0 0
  %4911 = vmatpush2.bf16.msra.mxu0 0
  %4912 = vmatprep.subr.bf16.mxu0 0
  %4913 = vmatpush2.bf16.msra.mxu0 0
  %4914 = vmatprep.mubr.bf16.mxu0 0
  %4915 = vmatmul.mubr.bf16.gmra.mxu0 %v4881
  %v4916 = vpop.f32.mrf.mxu0
  %v4917 = vadd.f32 0.0, %v4916
  %v4918 = vpop.f32.mrf.mxu0
  %v4919 = vadd.f32 0.0, %v4918
  %v4920 = vpop.f32.mrf.mxu0
  %v4921 = vadd.f32 0.0, %v4920
  %v4922 = vpop.f32.mrf.mxu0
  %v4923 = vadd.f32 0.0, %v4922
  %4924 = vdwg.mxu0
  %4925 = vmatprep.subr.bf16.mxu0 %v4682
  %4926 = vmatpush1.bf16.msra.mxu0 %v4681
  %4927 = vmatprep.subr.bf16.mxu0 %v4678
  %4928 = vmatpush1.bf16.msra.mxu0 %v4677
  %4929 = vmatprep.subr.bf16.mxu0 %v4674
  %4930 = vmatpush1.bf16.msra.mxu0 %v4673
  %4931 = vmatprep.subr.bf16.mxu0 %v4670
  %4932 = vmatpush1.bf16.msra.mxu0 %v4669
  %4933 = vmatprep.subr.bf16.mxu0 %v4666
  %4934 = vmatpush1.bf16.msra.mxu0 %v4665
  %4935 = vmatprep.subr.bf16.mxu0 %v4662
  %4936 = vmatpush1.bf16.msra.mxu0 %v4661
  %4937 = vmatprep.subr.bf16.mxu0 %v4658
  %4938 = vmatpush1.bf16.msra.mxu0 %v4657
  %4939 = vmatprep.subr.bf16.mxu0 %v4654
  %4940 = vmatpush1.bf16.msra.mxu0 %v4653
  %4941 = vmatprep.subr.bf16.mxu0 0
  %4942 = vmatpush2.bf16.msra.mxu0 0
  %4943 = vmatprep.subr.bf16.mxu0 0
  %4944 = vmatpush2.bf16.msra.mxu0 0
  %4945 = vmatprep.subr.bf16.mxu0 0
  %4946 = vmatpush2.bf16.msra.mxu0 0
  %4947 = vmatprep.subr.bf16.mxu0 0
  %4948 = vmatpush2.bf16.msra.mxu0 0
  %4949 = vmatprep.subr.bf16.mxu0 0
  %4950 = vmatpush2.bf16.msra.mxu0 0
  %4951 = vmatprep.subr.bf16.mxu0 0
  %4952 = vmatpush2.bf16.msra.mxu0 0
  %4953 = vmatprep.subr.bf16.mxu0 0
  %4954 = vmatpush2.bf16.msra.mxu0 0
  %4955 = vmatprep.subr.bf16.mxu0 0
  %4956 = vmatpush2.bf16.msra.mxu0 0
  %4957 = vmatprep.mubr.bf16.mxu0 0
  %4958 = vmatmul.mubr.bf16.gmra.mxu0 %v4881
  %v4959 = vpop.f32.mrf.mxu0
  %v4960 = vadd.f32 0.0, %v4959
  %v4961 = vpop.f32.mrf.mxu0
  %v4962 = vadd.f32 0.0, %v4961
  %v4963 = vpop.f32.mrf.mxu0
  %v4964 = vadd.f32 0.0, %v4963
  %v4965 = vpop.f32.mrf.mxu0
  %v4966 = vadd.f32 0.0, %v4965
  %4967 = vdwg.mxu0
  %v4968 = vadd.f32 %v4873, %v4917
  %v4969 = vadd.f32 %v4874, %v4919
  %v4970 = vadd.f32 %v4875, %v4960
  %v4971 = vadd.f32 %v4876, %v4962
  %v4972 = vadd.f32 %v4877, %v4921
  %v4973 = vadd.f32 %v4878, %v4923
  %v4974 = vadd.f32 %v4879, %v4964
  %v4975 = vadd.f32 %v4880, %v4966
  %v4976 = vxor.u32 %v4968, 2147483648
  %v4977 = vxor.u32 %v4972, 2147483648
  %v4978 = vmul.f32 %v4976, 1.442695
  %v4979 = vpow.pop %v4978
  %v4980 = vmul.f32 %v4977, 1.442695
  %v4981 = vpow.pop %v4980
  %v4982 = vadd.f32 %v4979, 1.0
  %v4983 = vadd.f32 %v4981, 1.0
  %v4984 = vrcp.pop %v4982
  %v4985 = vmul.f32 1.0, %v4984
  %v4986 = vrcp.pop %v4983
  %v4987 = vmul.f32 1.0, %v4986
  %v4988 = vxor.u32 %v4969, 2147483648
  %v4989 = vxor.u32 %v4973, 2147483648
  %v4990 = vmul.f32 %v4988, 1.442695
  %v4991 = vpow.pop %v4990
  %v4992 = vmul.f32 %v4989, 1.442695
  %v4993 = vpow.pop %v4992
  %v4994 = vadd.f32 %v4991, 1.0
  %v4995 = vadd.f32 %v4993, 1.0
  %v4996 = vrcp.pop %v4994
  %v4997 = vmul.f32 1.0, %v4996
  %v4998 = vrcp.pop %v4995
  %v4999 = vmul.f32 1.0, %v4998
  %v5000 = vtanh.pop %v4970
  %v5001 = vtanh.pop %v4974
  %v5002 = vxor.u32 %v4971, 2147483648
  %v5003 = vxor.u32 %v4975, 2147483648
  %v5004 = vmul.f32 %v5002, 1.442695
  %v5005 = vpow.pop %v5004
  %v5006 = vmul.f32 %v5003, 1.442695
  %v5007 = vpow.pop %v5006
  %v5008 = vadd.f32 %v5005, 1.0
  %v5009 = vadd.f32 %v5007, 1.0
  %v5010 = vrcp.pop %v5008
  %v5011 = vmul.f32 1.0, %v5010
  %v5012 = vrcp.pop %v5009
  %v5013 = vmul.f32 1.0, %v5012
  %v5014 = vmul.f32 %v4997, %v4859
  %v5015 = vmul.f32 %v4999, %v4860
  %v5016 = vmul.f32 %v4985, %v5000
  %v5017 = vmul.f32 %v4987, %v5001
  %v5018 = vadd.f32 %v5014, %v5016
  %v5019 = vadd.f32 %v5015, %v5017
  %v5020 = vtanh.pop %v5018
  %v5021 = vtanh.pop %v5019
  %v5022 = vmul.f32 %v5011, %v5020
  %v5023 = vmul.f32 %v5013, %v5021
  %v5024 = vsel %vm1501, %v5022, %v4857
  %v5025 = vsel %vm1502, %v5023, %v4858
  %v5026 = vsel %vm1501, %v5018, %v4859
  %v5027 = vsel %vm1502, %v5019, %v4860
  %v5028 = vld [vmem:[%s1518] sm:$0xff]
  %v5029 = vld [vmem:[%s1518 + $0x8] sm:$0xff]
  %v5030 = vld [vmem:[%s1518 + $0x10] sm:$0xff]
  %v5031 = vld [vmem:[%s1518 + $0x18] sm:$0xff]
  %v5032 = vunpack.c.l.bf16 %v5028
  %v5033 = vunpack.c.h.bf16 %v5028
  %v5034 = vunpack.c.l.bf16 %v5029
  %v5035 = vunpack.c.h.bf16 %v5029
  %v5036 = vunpack.c.l.bf16 %v5030
  %v5037 = vunpack.c.h.bf16 %v5030
  %v5038 = vunpack.c.l.bf16 %v5031
  %v5039 = vunpack.c.h.bf16 %v5031
  %v5040 = vadd.f32 %v5032, %v4497
  %v5041 = vadd.f32 %v5033, %v4501
  %v5042 = vadd.f32 %v5034, %v4505
  %v5043 = vadd.f32 %v5035, %v4509
  %v5044 = vadd.f32 %v5036, %v4497
  %v5045 = vadd.f32 %v5037, %v4501
  %v5046 = vadd.f32 %v5038, %v4505
  %v5047 = vadd.f32 %v5039, %v4509
  %v5048 = vpack.c.bf16 %v5025, %v5024
  %5049 = vmatprep.subr.bf16.mxu0 %v4680
  %5050 = vmatpush1.bf16.msra.mxu0 %v4679
  %5051 = vmatprep.subr.bf16.mxu0 %v4676
  %5052 = vmatpush1.bf16.msra.mxu0 %v4675
  %5053 = vmatprep.subr.bf16.mxu0 %v4672
  %5054 = vmatpush1.bf16.msra.mxu0 %v4671
  %5055 = vmatprep.subr.bf16.mxu0 %v4668
  %5056 = vmatpush1.bf16.msra.mxu0 %v4667
  %5057 = vmatprep.subr.bf16.mxu0 %v4664
  %5058 = vmatpush1.bf16.msra.mxu0 %v4663
  %5059 = vmatprep.subr.bf16.mxu0 %v4660
  %5060 = vmatpush1.bf16.msra.mxu0 %v4659
  %5061 = vmatprep.subr.bf16.mxu0 %v4656
  %5062 = vmatpush1.bf16.msra.mxu0 %v4655
  %5063 = vmatprep.subr.bf16.mxu0 %v4652
  %5064 = vmatpush1.bf16.msra.mxu0 %v4651
  %5065 = vmatprep.subr.bf16.mxu0 0
  %5066 = vmatpush2.bf16.msra.mxu0 0
  %5067 = vmatprep.subr.bf16.mxu0 0
  %5068 = vmatpush2.bf16.msra.mxu0 0
  %5069 = vmatprep.subr.bf16.mxu0 0
  %5070 = vmatpush2.bf16.msra.mxu0 0
  %5071 = vmatprep.subr.bf16.mxu0 0
  %5072 = vmatpush2.bf16.msra.mxu0 0
  %5073 = vmatprep.subr.bf16.mxu0 0
  %5074 = vmatpush2.bf16.msra.mxu0 0
  %5075 = vmatprep.subr.bf16.mxu0 0
  %5076 = vmatpush2.bf16.msra.mxu0 0
  %5077 = vmatprep.subr.bf16.mxu0 0
  %5078 = vmatpush2.bf16.msra.mxu0 0
  %5079 = vmatprep.subr.bf16.mxu0 0
  %5080 = vmatpush2.bf16.msra.mxu0 0
  %5081 = vmatprep.mubr.bf16.mxu0 0
  %5082 = vmatmul.mubr.bf16.gmra.mxu0 %v5048
  %v5083 = vpop.f32.mrf.mxu0
  %v5084 = vadd.f32 0.0, %v5083
  %v5085 = vpop.f32.mrf.mxu0
  %v5086 = vadd.f32 0.0, %v5085
  %v5087 = vpop.f32.mrf.mxu0
  %v5088 = vadd.f32 0.0, %v5087
  %v5089 = vpop.f32.mrf.mxu0
  %v5090 = vadd.f32 0.0, %v5089
  %5091 = vdwg.mxu0
  %5092 = vmatprep.subr.bf16.mxu0 %v4682
  %5093 = vmatpush1.bf16.msra.mxu0 %v4681
  %5094 = vmatprep.subr.bf16.mxu0 %v4678
  %5095 = vmatpush1.bf16.msra.mxu0 %v4677
  %5096 = vmatprep.subr.bf16.mxu0 %v4674
  %5097 = vmatpush1.bf16.msra.mxu0 %v4673
  %5098 = vmatprep.subr.bf16.mxu0 %v4670
  %5099 = vmatpush1.bf16.msra.mxu0 %v4669
  %5100 = vmatprep.subr.bf16.mxu0 %v4666
  %5101 = vmatpush1.bf16.msra.mxu0 %v4665
  %5102 = vmatprep.subr.bf16.mxu0 %v4662
  %5103 = vmatpush1.bf16.msra.mxu0 %v4661
  %5104 = vmatprep.subr.bf16.mxu0 %v4658
  %5105 = vmatpush1.bf16.msra.mxu0 %v4657
  %5106 = vmatprep.subr.bf16.mxu0 %v4654
  %5107 = vmatpush1.bf16.msra.mxu0 %v4653
  %5108 = vmatprep.subr.bf16.mxu0 0
  %5109 = vmatpush2.bf16.msra.mxu0 0
  %5110 = vmatprep.subr.bf16.mxu0 0
  %5111 = vmatpush2.bf16.msra.mxu0 0
  %5112 = vmatprep.subr.bf16.mxu0 0
  %5113 = vmatpush2.bf16.msra.mxu0 0
  %5114 = vmatprep.subr.bf16.mxu0 0
  %5115 = vmatpush2.bf16.msra.mxu0 0
  %5116 = vmatprep.subr.bf16.mxu0 0
  %5117 = vmatpush2.bf16.msra.mxu0 0
  %5118 = vmatprep.subr.bf16.mxu0 0
  %5119 = vmatpush2.bf16.msra.mxu0 0
  %5120 = vmatprep.subr.bf16.mxu0 0
  %5121 = vmatpush2.bf16.msra.mxu0 0
  %5122 = vmatprep.subr.bf16.mxu0 0
  %5123 = vmatpush2.bf16.msra.mxu0 0
  %5124 = vmatprep.mubr.bf16.mxu0 0
  %5125 = vmatmul.mubr.bf16.gmra.mxu0 %v5048
  %v5126 = vpop.f32.mrf.mxu0
  %v5127 = vadd.f32 0.0, %v5126
  %v5128 = vpop.f32.mrf.mxu0
  %v5129 = vadd.f32 0.0, %v5128
  %v5130 = vpop.f32.mrf.mxu0
  %v5131 = vadd.f32 0.0, %v5130
  %v5132 = vpop.f32.mrf.mxu0
  %v5133 = vadd.f32 0.0, %v5132
  %5134 = vdwg.mxu0
  %v5135 = vadd.f32 %v5040, %v5084
  %v5136 = vadd.f32 %v5041, %v5086
  %v5137 = vadd.f32 %v5042, %v5127
  %v5138 = vadd.f32 %v5043, %v5129
  %v5139 = vadd.f32 %v5044, %v5088
  %v5140 = vadd.f32 %v5045, %v5090
  %v5141 = vadd.f32 %v5046, %v5131
  %v5142 = vadd.f32 %v5047, %v5133
  %v5143 = vxor.u32 %v5135, 2147483648
  %v5144 = vxor.u32 %v5139, 2147483648
  %v5145 = vmul.f32 %v5143, 1.442695
  %v5146 = vpow.pop %v5145
  %v5147 = vmul.f32 %v5144, 1.442695
  %v5148 = vpow.pop %v5147
  %v5149 = vadd.f32 %v5146, 1.0
  %v5150 = vadd.f32 %v5148, 1.0
  %v5151 = vrcp.pop %v5149
  %v5152 = vmul.f32 1.0, %v5151
  %v5153 = vrcp.pop %v5150
  %v5154 = vmul.f32 1.0, %v5153
  %v5155 = vxor.u32 %v5136, 2147483648
  %v5156 = vxor.u32 %v5140, 2147483648
  %v5157 = vmul.f32 %v5155, 1.442695
  %v5158 = vpow.pop %v5157
  %v5159 = vmul.f32 %v5156, 1.442695
  %v5160 = vpow.pop %v5159
  %v5161 = vadd.f32 %v5158, 1.0
  %v5162 = vadd.f32 %v5160, 1.0
  %v5163 = vrcp.pop %v5161
  %v5164 = vmul.f32 1.0, %v5163
  %v5165 = vrcp.pop %v5162
  %v5166 = vmul.f32 1.0, %v5165
  %v5167 = vtanh.pop %v5137
  %v5168 = vtanh.pop %v5141
  %v5169 = vxor.u32 %v5138, 2147483648
  %v5170 = vxor.u32 %v5142, 2147483648
  %v5171 = vmul.f32 %v5169, 1.442695
  %v5172 = vpow.pop %v5171
  %v5173 = vmul.f32 %v5170, 1.442695
  %v5174 = vpow.pop %v5173
  %v5175 = vadd.f32 %v5172, 1.0
  %v5176 = vadd.f32 %v5174, 1.0
  %v5177 = vrcp.pop %v5175
  %v5178 = vmul.f32 1.0, %v5177
  %v5179 = vrcp.pop %v5176
  %v5180 = vmul.f32 1.0, %v5179
  %v5181 = vmul.f32 %v5164, %v5026
  %v5182 = vmul.f32 %v5166, %v5027
  %v5183 = vmul.f32 %v5152, %v5167
  %v5184 = vmul.f32 %v5154, %v5168
  %v5185 = vadd.f32 %v5181, %v5183
  %v5186 = vadd.f32 %v5182, %v5184
  %v5187 = vtanh.pop %v5185
  %v5188 = vtanh.pop %v5186
  %v5189 = vmul.f32 %v5178, %v5187
  %v5190 = vmul.f32 %v5180, %v5188
  %v5191 = vsel %vm1877, %v5189, %v5024
  %v5192 = vsel %vm1878, %v5190, %v5025
  %v5193 = vsel %vm1877, %v5185, %v5026
  %v5194 = vsel %vm1878, %v5186, %v5027
  %v5195 = vld [vmem:[%s1894] sm:$0xff]
  %v5196 = vld [vmem:[%s1894 + $0x8] sm:$0xff]
  %v5197 = vld [vmem:[%s1894 + $0x10] sm:$0xff]
  %v5198 = vld [vmem:[%s1894 + $0x18] sm:$0xff]
  %v5199 = vunpack.c.l.bf16 %v5195
  %v5200 = vunpack.c.h.bf16 %v5195
  %v5201 = vunpack.c.l.bf16 %v5196
  %v5202 = vunpack.c.h.bf16 %v5196
  %v5203 = vunpack.c.l.bf16 %v5197
  %v5204 = vunpack.c.h.bf16 %v5197
  %v5205 = vunpack.c.l.bf16 %v5198
  %v5206 = vunpack.c.h.bf16 %v5198
  %v5207 = vadd.f32 %v5199, %v4497
  %v5208 = vadd.f32 %v5200, %v4501
  %v5209 = vadd.f32 %v5201, %v4505
  %v5210 = vadd.f32 %v5202, %v4509
  %v5211 = vadd.f32 %v5203, %v4497
  %v5212 = vadd.f32 %v5204, %v4501
  %v5213 = vadd.f32 %v5205, %v4505
  %v5214 = vadd.f32 %v5206, %v4509
  %v5215 = vpack.c.bf16 %v5192, %v5191
  %5216 = vmatprep.subr.bf16.mxu0 %v4680
  %5217 = vmatpush1.bf16.msra.mxu0 %v4679
  %5218 = vmatprep.subr.bf16.mxu0 %v4676
  %5219 = vmatpush1.bf16.msra.mxu0 %v4675
  %5220 = vmatprep.subr.bf16.mxu0 %v4672
  %5221 = vmatpush1.bf16.msra.mxu0 %v4671
  %5222 = vmatprep.subr.bf16.mxu0 %v4668
  %5223 = vmatpush1.bf16.msra.mxu0 %v4667
  %5224 = vmatprep.subr.bf16.mxu0 %v4664
  %5225 = vmatpush1.bf16.msra.mxu0 %v4663
  %5226 = vmatprep.subr.bf16.mxu0 %v4660
  %5227 = vmatpush1.bf16.msra.mxu0 %v4659
  %5228 = vmatprep.subr.bf16.mxu0 %v4656
  %5229 = vmatpush1.bf16.msra.mxu0 %v4655
  %5230 = vmatprep.subr.bf16.mxu0 %v4652
  %5231 = vmatpush1.bf16.msra.mxu0 %v4651
  %5232 = vmatprep.subr.bf16.mxu0 0
  %5233 = vmatpush2.bf16.msra.mxu0 0
  %5234 = vmatprep.subr.bf16.mxu0 0
  %5235 = vmatpush2.bf16.msra.mxu0 0
  %5236 = vmatprep.subr.bf16.mxu0 0
  %5237 = vmatpush2.bf16.msra.mxu0 0
  %5238 = vmatprep.subr.bf16.mxu0 0
  %5239 = vmatpush2.bf16.msra.mxu0 0
  %5240 = vmatprep.subr.bf16.mxu0 0
  %5241 = vmatpush2.bf16.msra.mxu0 0
  %5242 = vmatprep.subr.bf16.mxu0 0
  %5243 = vmatpush2.bf16.msra.mxu0 0
  %5244 = vmatprep.subr.bf16.mxu0 0
  %5245 = vmatpush2.bf16.msra.mxu0 0
  %5246 = vmatprep.subr.bf16.mxu0 0
  %5247 = vmatpush2.bf16.msra.mxu0 0
  %5248 = vmatprep.mubr.bf16.mxu0 0
  %5249 = vmatmul.mubr.bf16.gmra.mxu0 %v5215
  %v5250 = vpop.f32.mrf.mxu0
  %v5251 = vadd.f32 0.0, %v5250
  %v5252 = vpop.f32.mrf.mxu0
  %v5253 = vadd.f32 0.0, %v5252
  %v5254 = vpop.f32.mrf.mxu0
  %v5255 = vadd.f32 0.0, %v5254
  %v5256 = vpop.f32.mrf.mxu0
  %v5257 = vadd.f32 0.0, %v5256
  %5258 = vdwg.mxu0
  %5259 = vmatprep.subr.bf16.mxu0 %v4682
  %5260 = vmatpush1.bf16.msra.mxu0 %v4681
  %5261 = vmatprep.subr.bf16.mxu0 %v4678
  %5262 = vmatpush1.bf16.msra.mxu0 %v4677
  %5263 = vmatprep.subr.bf16.mxu0 %v4674
  %5264 = vmatpush1.bf16.msra.mxu0 %v4673
  %5265 = vmatprep.subr.bf16.mxu0 %v4670
  %5266 = vmatpush1.bf16.msra.mxu0 %v4669
  %5267 = vmatprep.subr.bf16.mxu0 %v4666
  %5268 = vmatpush1.bf16.msra.mxu0 %v4665
  %5269 = vmatprep.subr.bf16.mxu0 %v4662
  %5270 = vmatpush1.bf16.msra.mxu0 %v4661
  %5271 = vmatprep.subr.bf16.mxu0 %v4658
  %5272 = vmatpush1.bf16.msra.mxu0 %v4657
  %5273 = vmatprep.subr.bf16.mxu0 %v4654
  %5274 = vmatpush1.bf16.msra.mxu0 %v4653
  %5275 = vmatprep.subr.bf16.mxu0 0
  %5276 = vmatpush2.bf16.msra.mxu0 0
  %5277 = vmatprep.subr.bf16.mxu0 0
  %5278 = vmatpush2.bf16.msra.mxu0 0
  %5279 = vmatprep.subr.bf16.mxu0 0
  %5280 = vmatpush2.bf16.msra.mxu0 0
  %5281 = vmatprep.subr.bf16.mxu0 0
  %5282 = vmatpush2.bf16.msra.mxu0 0
  %5283 = vmatprep.subr.bf16.mxu0 0
  %5284 = vmatpush2.bf16.msra.mxu0 0
  %5285 = vmatprep.subr.bf16.mxu0 0
  %5286 = vmatpush2.bf16.msra.mxu0 0
  %5287 = vmatprep.subr.bf16.mxu0 0
  %5288 = vmatpush2.bf16.msra.mxu0 0
  %5289 = vmatprep.subr.bf16.mxu0 0
  %5290 = vmatpush2.bf16.msra.mxu0 0
  %5291 = vmatprep.mubr.bf16.mxu0 0
  %5292 = vmatmul.mubr.bf16.gmra.mxu0 %v5215
  %v5293 = vpop.f32.mrf.mxu0
  %v5294 = vadd.f32 0.0, %v5293
  %v5295 = vpop.f32.mrf.mxu0
  %v5296 = vadd.f32 0.0, %v5295
  %v5297 = vpop.f32.mrf.mxu0
  %v5298 = vadd.f32 0.0, %v5297
  %v5299 = vpop.f32.mrf.mxu0
  %v5300 = vadd.f32 0.0, %v5299
  %5301 = vdwg.mxu0
  %v5302 = vadd.f32 %v5207, %v5251
  %v5303 = vadd.f32 %v5208, %v5253
  %v5304 = vadd.f32 %v5209, %v5294
  %v5305 = vadd.f32 %v5210, %v5296
  %v5306 = vadd.f32 %v5211, %v5255
  %v5307 = vadd.f32 %v5212, %v5257
  %v5308 = vadd.f32 %v5213, %v5298
  %v5309 = vadd.f32 %v5214, %v5300
  %v5310 = vxor.u32 %v5302, 2147483648
  %v5311 = vxor.u32 %v5306, 2147483648
  %v5312 = vmul.f32 %v5310, 1.442695
  %v5313 = vpow.pop %v5312
  %v5314 = vmul.f32 %v5311, 1.442695
  %v5315 = vpow.pop %v5314
  %v5316 = vadd.f32 %v5313, 1.0
  %v5317 = vadd.f32 %v5315, 1.0
  %v5318 = vrcp.pop %v5316
  %v5319 = vmul.f32 1.0, %v5318
  %v5320 = vrcp.pop %v5317
  %v5321 = vmul.f32 1.0, %v5320
  %v5322 = vxor.u32 %v5303, 2147483648
  %v5323 = vxor.u32 %v5307, 2147483648
  %v5324 = vmul.f32 %v5322, 1.442695
  %v5325 = vpow.pop %v5324
  %v5326 = vmul.f32 %v5323, 1.442695
  %v5327 = vpow.pop %v5326
  %v5328 = vadd.f32 %v5325, 1.0
  %v5329 = vadd.f32 %v5327, 1.0
  %v5330 = vrcp.pop %v5328
  %v5331 = vmul.f32 1.0, %v5330
  %v5332 = vrcp.pop %v5329
  %v5333 = vmul.f32 1.0, %v5332
  %v5334 = vtanh.pop %v5304
  %v5335 = vtanh.pop %v5308
  %v5336 = vxor.u32 %v5305, 2147483648
  %v5337 = vxor.u32 %v5309, 2147483648
  %v5338 = vmul.f32 %v5336, 1.442695
  %v5339 = vpow.pop %v5338
  %v5340 = vmul.f32 %v5337, 1.442695
  %v5341 = vpow.pop %v5340
  %v5342 = vadd.f32 %v5339, 1.0
  %v5343 = vadd.f32 %v5341, 1.0
  %v5344 = vrcp.pop %v5342
  %v5345 = vmul.f32 1.0, %v5344
  %v5346 = vrcp.pop %v5343
  %v5347 = vmul.f32 1.0, %v5346
  %v5348 = vmul.f32 %v5331, %v5193
  %v5349 = vmul.f32 %v5333, %v5194
  %v5350 = vmul.f32 %v5319, %v5334
  %v5351 = vmul.f32 %v5321, %v5335
  %v5352 = vadd.f32 %v5348, %v5350
  %v5353 = vadd.f32 %v5349, %v5351
  %v5354 = vtanh.pop %v5352
  %v5355 = vtanh.pop %v5353
  %v5356 = vmul.f32 %v5345, %v5354
  %v5357 = vmul.f32 %v5347, %v5355
  %v5358 = vsel %vm2253, %v5356, %v5191
  %v5359 = vsel %vm2254, %v5357, %v5192
  %v5360 = vsel %vm2253, %v5352, %v5193
  %v5361 = vsel %vm2254, %v5353, %v5194
  %v5362 = vld [vmem:[%s2270] sm:$0xff]
  %v5363 = vld [vmem:[%s2270 + $0x8] sm:$0xff]
  %v5364 = vld [vmem:[%s2270 + $0x10] sm:$0xff]
  %v5365 = vld [vmem:[%s2270 + $0x18] sm:$0xff]
  %v5366 = vunpack.c.l.bf16 %v5362
  %v5367 = vunpack.c.h.bf16 %v5362
  %v5368 = vunpack.c.l.bf16 %v5363
  %v5369 = vunpack.c.h.bf16 %v5363
  %v5370 = vunpack.c.l.bf16 %v5364
  %v5371 = vunpack.c.h.bf16 %v5364
  %v5372 = vunpack.c.l.bf16 %v5365
  %v5373 = vunpack.c.h.bf16 %v5365
  %v5374 = vadd.f32 %v5366, %v4497
  %v5375 = vadd.f32 %v5367, %v4501
  %v5376 = vadd.f32 %v5368, %v4505
  %v5377 = vadd.f32 %v5369, %v4509
  %v5378 = vadd.f32 %v5370, %v4497
  %v5379 = vadd.f32 %v5371, %v4501
  %v5380 = vadd.f32 %v5372, %v4505
  %v5381 = vadd.f32 %v5373, %v4509
  %v5382 = vpack.c.bf16 %v5359, %v5358
  %5383 = vmatprep.subr.bf16.mxu0 %v4680
  %5384 = vmatpush1.bf16.msra.mxu0 %v4679
  %5385 = vmatprep.subr.bf16.mxu0 %v4676
  %5386 = vmatpush1.bf16.msra.mxu0 %v4675
  %5387 = vmatprep.subr.bf16.mxu0 %v4672
  %5388 = vmatpush1.bf16.msra.mxu0 %v4671
  %5389 = vmatprep.subr.bf16.mxu0 %v4668
  %5390 = vmatpush1.bf16.msra.mxu0 %v4667
  %5391 = vmatprep.subr.bf16.mxu0 %v4664
  %5392 = vmatpush1.bf16.msra.mxu0 %v4663
  %5393 = vmatprep.subr.bf16.mxu0 %v4660
  %5394 = vmatpush1.bf16.msra.mxu0 %v4659
  %5395 = vmatprep.subr.bf16.mxu0 %v4656
  %5396 = vmatpush1.bf16.msra.mxu0 %v4655
  %5397 = vmatprep.subr.bf16.mxu0 %v4652
  %5398 = vmatpush1.bf16.msra.mxu0 %v4651
  %5399 = vmatprep.subr.bf16.mxu0 0
  %5400 = vmatpush2.bf16.msra.mxu0 0
  %5401 = vmatprep.subr.bf16.mxu0 0
  %5402 = vmatpush2.bf16.msra.mxu0 0
  %5403 = vmatprep.subr.bf16.mxu0 0
  %5404 = vmatpush2.bf16.msra.mxu0 0
  %5405 = vmatprep.subr.bf16.mxu0 0
  %5406 = vmatpush2.bf16.msra.mxu0 0
  %5407 = vmatprep.subr.bf16.mxu0 0
  %5408 = vmatpush2.bf16.msra.mxu0 0
  %5409 = vmatprep.subr.bf16.mxu0 0
  %5410 = vmatpush2.bf16.msra.mxu0 0
  %5411 = vmatprep.subr.bf16.mxu0 0
  %5412 = vmatpush2.bf16.msra.mxu0 0
  %5413 = vmatprep.subr.bf16.mxu0 0
  %5414 = vmatpush2.bf16.msra.mxu0 0
  %5415 = vmatprep.mubr.bf16.mxu0 0
  %5416 = vmatmul.mubr.bf16.gmra.mxu0 %v5382
  %v5417 = vpop.f32.mrf.mxu0
  %v5418 = vadd.f32 0.0, %v5417
  %v5419 = vpop.f32.mrf.mxu0
  %v5420 = vadd.f32 0.0, %v5419
  %v5421 = vpop.f32.mrf.mxu0
  %v5422 = vadd.f32 0.0, %v5421
  %v5423 = vpop.f32.mrf.mxu0
  %v5424 = vadd.f32 0.0, %v5423
  %5425 = vdwg.mxu0
  %5426 = vmatprep.subr.bf16.mxu0 %v4682
  %5427 = vmatpush1.bf16.msra.mxu0 %v4681
  %5428 = vmatprep.subr.bf16.mxu0 %v4678
  %5429 = vmatpush1.bf16.msra.mxu0 %v4677
  %5430 = vmatprep.subr.bf16.mxu0 %v4674
  %5431 = vmatpush1.bf16.msra.mxu0 %v4673
  %5432 = vmatprep.subr.bf16.mxu0 %v4670
  %5433 = vmatpush1.bf16.msra.mxu0 %v4669
  %5434 = vmatprep.subr.bf16.mxu0 %v4666
  %5435 = vmatpush1.bf16.msra.mxu0 %v4665
  %5436 = vmatprep.subr.bf16.mxu0 %v4662
  %5437 = vmatpush1.bf16.msra.mxu0 %v4661
  %5438 = vmatprep.subr.bf16.mxu0 %v4658
  %5439 = vmatpush1.bf16.msra.mxu0 %v4657
  %5440 = vmatprep.subr.bf16.mxu0 %v4654
  %5441 = vmatpush1.bf16.msra.mxu0 %v4653
  %5442 = vmatprep.subr.bf16.mxu0 0
  %5443 = vmatpush2.bf16.msra.mxu0 0
  %5444 = vmatprep.subr.bf16.mxu0 0
  %5445 = vmatpush2.bf16.msra.mxu0 0
  %5446 = vmatprep.subr.bf16.mxu0 0
  %5447 = vmatpush2.bf16.msra.mxu0 0
  %5448 = vmatprep.subr.bf16.mxu0 0
  %5449 = vmatpush2.bf16.msra.mxu0 0
  %5450 = vmatprep.subr.bf16.mxu0 0
  %5451 = vmatpush2.bf16.msra.mxu0 0
  %5452 = vmatprep.subr.bf16.mxu0 0
  %5453 = vmatpush2.bf16.msra.mxu0 0
  %5454 = vmatprep.subr.bf16.mxu0 0
  %5455 = vmatpush2.bf16.msra.mxu0 0
  %5456 = vmatprep.subr.bf16.mxu0 0
  %5457 = vmatpush2.bf16.msra.mxu0 0
  %5458 = vmatprep.mubr.bf16.mxu0 0
  %5459 = vmatmul.mubr.bf16.gmra.mxu0 %v5382
  %v5460 = vpop.f32.mrf.mxu0
  %v5461 = vadd.f32 0.0, %v5460
  %v5462 = vpop.f32.mrf.mxu0
  %v5463 = vadd.f32 0.0, %v5462
  %v5464 = vpop.f32.mrf.mxu0
  %v5465 = vadd.f32 0.0, %v5464
  %v5466 = vpop.f32.mrf.mxu0
  %v5467 = vadd.f32 0.0, %v5466
  %5468 = vdwg.mxu0
  %v5469 = vadd.f32 %v5374, %v5418
  %v5470 = vadd.f32 %v5375, %v5420
  %v5471 = vadd.f32 %v5376, %v5461
  %v5472 = vadd.f32 %v5377, %v5463
  %v5473 = vadd.f32 %v5378, %v5422
  %v5474 = vadd.f32 %v5379, %v5424
  %v5475 = vadd.f32 %v5380, %v5465
  %v5476 = vadd.f32 %v5381, %v5467
  %v5477 = vxor.u32 %v5469, 2147483648
  %v5478 = vxor.u32 %v5473, 2147483648
  %v5479 = vmul.f32 %v5477, 1.442695
  %v5480 = vpow.pop %v5479
  %v5481 = vmul.f32 %v5478, 1.442695
  %v5482 = vpow.pop %v5481
  %v5483 = vadd.f32 %v5480, 1.0
  %v5484 = vadd.f32 %v5482, 1.0
  %v5485 = vrcp.pop %v5483
  %v5486 = vmul.f32 1.0, %v5485
  %v5487 = vrcp.pop %v5484
  %v5488 = vmul.f32 1.0, %v5487
  %v5489 = vxor.u32 %v5470, 2147483648
  %v5490 = vxor.u32 %v5474, 2147483648
  %v5491 = vmul.f32 %v5489, 1.442695
  %v5492 = vpow.pop %v5491
  %v5493 = vmul.f32 %v5490, 1.442695
  %v5494 = vpow.pop %v5493
  %v5495 = vadd.f32 %v5492, 1.0
  %v5496 = vadd.f32 %v5494, 1.0
  %v5497 = vrcp.pop %v5495
  %v5498 = vmul.f32 1.0, %v5497
  %v5499 = vrcp.pop %v5496
  %v5500 = vmul.f32 1.0, %v5499
  %v5501 = vtanh.pop %v5471
  %v5502 = vtanh.pop %v5475
  %v5503 = vxor.u32 %v5472, 2147483648
  %v5504 = vxor.u32 %v5476, 2147483648
  %v5505 = vmul.f32 %v5503, 1.442695
  %v5506 = vpow.pop %v5505
  %v5507 = vmul.f32 %v5504, 1.442695
  %v5508 = vpow.pop %v5507
  %v5509 = vadd.f32 %v5506, 1.0
  %v5510 = vadd.f32 %v5508, 1.0
  %v5511 = vrcp.pop %v5509
  %v5512 = vmul.f32 1.0, %v5511
  %v5513 = vrcp.pop %v5510
  %v5514 = vmul.f32 1.0, %v5513
  %v5515 = vmul.f32 %v5498, %v5360
  %v5516 = vmul.f32 %v5500, %v5361
  %v5517 = vmul.f32 %v5486, %v5501
  %v5518 = vmul.f32 %v5488, %v5502
  %v5519 = vadd.f32 %v5515, %v5517
  %v5520 = vadd.f32 %v5516, %v5518
  %v5521 = vtanh.pop %v5519
  %v5522 = vtanh.pop %v5520
  %v5523 = vmul.f32 %v5512, %v5521
  %v5524 = vmul.f32 %v5514, %v5522
  %v5525 = vsel %vm2629, %v5523, %v5358
  %v5526 = vsel %vm2630, %v5524, %v5359
  %v5527 = vsel %vm2629, %v5519, %v5360
  %v5528 = vsel %vm2630, %v5520, %v5361
  %v5529 = vld [vmem:[%s2646] sm:$0xff]
  %v5530 = vld [vmem:[%s2646 + $0x8] sm:$0xff]
  %v5531 = vld [vmem:[%s2646 + $0x10] sm:$0xff]
  %v5532 = vld [vmem:[%s2646 + $0x18] sm:$0xff]
  %v5533 = vunpack.c.l.bf16 %v5529
  %v5534 = vunpack.c.h.bf16 %v5529
  %v5535 = vunpack.c.l.bf16 %v5530
  %v5536 = vunpack.c.h.bf16 %v5530
  %v5537 = vunpack.c.l.bf16 %v5531
  %v5538 = vunpack.c.h.bf16 %v5531
  %v5539 = vunpack.c.l.bf16 %v5532
  %v5540 = vunpack.c.h.bf16 %v5532
  %v5541 = vadd.f32 %v5533, %v4497
  %v5542 = vadd.f32 %v5534, %v4501
  %v5543 = vadd.f32 %v5535, %v4505
  %v5544 = vadd.f32 %v5536, %v4509
  %v5545 = vadd.f32 %v5537, %v4497
  %v5546 = vadd.f32 %v5538, %v4501
  %v5547 = vadd.f32 %v5539, %v4505
  %v5548 = vadd.f32 %v5540, %v4509
  %v5549 = vpack.c.bf16 %v5526, %v5525
  %5550 = vmatprep.subr.bf16.mxu0 %v4680
  %5551 = vmatpush1.bf16.msra.mxu0 %v4679
  %5552 = vmatprep.subr.bf16.mxu0 %v4676
  %5553 = vmatpush1.bf16.msra.mxu0 %v4675
  %5554 = vmatprep.subr.bf16.mxu0 %v4672
  %5555 = vmatpush1.bf16.msra.mxu0 %v4671
  %5556 = vmatprep.subr.bf16.mxu0 %v4668
  %5557 = vmatpush1.bf16.msra.mxu0 %v4667
  %5558 = vmatprep.subr.bf16.mxu0 %v4664
  %5559 = vmatpush1.bf16.msra.mxu0 %v4663
  %5560 = vmatprep.subr.bf16.mxu0 %v4660
  %5561 = vmatpush1.bf16.msra.mxu0 %v4659
  %5562 = vmatprep.subr.bf16.mxu0 %v4656
  %5563 = vmatpush1.bf16.msra.mxu0 %v4655
  %5564 = vmatprep.subr.bf16.mxu0 %v4652
  %5565 = vmatpush1.bf16.msra.mxu0 %v4651
  %5566 = vmatprep.subr.bf16.mxu0 0
  %5567 = vmatpush2.bf16.msra.mxu0 0
  %5568 = vmatprep.subr.bf16.mxu0 0
  %5569 = vmatpush2.bf16.msra.mxu0 0
  %5570 = vmatprep.subr.bf16.mxu0 0
  %5571 = vmatpush2.bf16.msra.mxu0 0
  %5572 = vmatprep.subr.bf16.mxu0 0
  %5573 = vmatpush2.bf16.msra.mxu0 0
  %5574 = vmatprep.subr.bf16.mxu0 0
  %5575 = vmatpush2.bf16.msra.mxu0 0
  %5576 = vmatprep.subr.bf16.mxu0 0
  %5577 = vmatpush2.bf16.msra.mxu0 0
  %5578 = vmatprep.subr.bf16.mxu0 0
  %5579 = vmatpush2.bf16.msra.mxu0 0
  %5580 = vmatprep.subr.bf16.mxu0 0
  %5581 = vmatpush2.bf16.msra.mxu0 0
  %5582 = vmatprep.mubr.bf16.mxu0 0
  %5583 = vmatmul.mubr.bf16.gmra.mxu0 %v5549
  %v5584 = vpop.f32.mrf.mxu0
  %v5585 = vadd.f32 0.0, %v5584
  %v5586 = vpop.f32.mrf.mxu0
  %v5587 = vadd.f32 0.0, %v5586
  %v5588 = vpop.f32.mrf.mxu0
  %v5589 = vadd.f32 0.0, %v5588
  %v5590 = vpop.f32.mrf.mxu0
  %v5591 = vadd.f32 0.0, %v5590
  %5592 = vdwg.mxu0
  %5593 = vmatprep.subr.bf16.mxu0 %v4682
  %5594 = vmatpush1.bf16.msra.mxu0 %v4681
  %5595 = vmatprep.subr.bf16.mxu0 %v4678
  %5596 = vmatpush1.bf16.msra.mxu0 %v4677
  %5597 = vmatprep.subr.bf16.mxu0 %v4674
  %5598 = vmatpush1.bf16.msra.mxu0 %v4673
  %5599 = vmatprep.subr.bf16.mxu0 %v4670
  %5600 = vmatpush1.bf16.msra.mxu0 %v4669
  %5601 = vmatprep.subr.bf16.mxu0 %v4666
  %5602 = vmatpush1.bf16.msra.mxu0 %v4665
  %5603 = vmatprep.subr.bf16.mxu0 %v4662
  %5604 = vmatpush1.bf16.msra.mxu0 %v4661
  %5605 = vmatprep.subr.bf16.mxu0 %v4658
  %5606 = vmatpush1.bf16.msra.mxu0 %v4657
  %5607 = vmatprep.subr.bf16.mxu0 %v4654
  %5608 = vmatpush1.bf16.msra.mxu0 %v4653
  %5609 = vmatprep.subr.bf16.mxu0 0
  %5610 = vmatpush2.bf16.msra.mxu0 0
  %5611 = vmatprep.subr.bf16.mxu0 0
  %5612 = vmatpush2.bf16.msra.mxu0 0
  %5613 = vmatprep.subr.bf16.mxu0 0
  %5614 = vmatpush2.bf16.msra.mxu0 0
  %5615 = vmatprep.subr.bf16.mxu0 0
  %5616 = vmatpush2.bf16.msra.mxu0 0
  %5617 = vmatprep.subr.bf16.mxu0 0
  %5618 = vmatpush2.bf16.msra.mxu0 0
  %5619 = vmatprep.subr.bf16.mxu0 0
  %5620 = vmatpush2.bf16.msra.mxu0 0
  %5621 = vmatprep.subr.bf16.mxu0 0
  %5622 = vmatpush2.bf16.msra.mxu0 0
  %5623 = vmatprep.subr.bf16.mxu0 0
  %5624 = vmatpush2.bf16.msra.mxu0 0
  %5625 = vmatprep.mubr.bf16.mxu0 0
  %5626 = vmatmul.mubr.bf16.gmra.mxu0 %v5549
  %v5627 = vpop.f32.mrf.mxu0
  %v5628 = vadd.f32 0.0, %v5627
  %v5629 = vpop.f32.mrf.mxu0
  %v5630 = vadd.f32 0.0, %v5629
  %v5631 = vpop.f32.mrf.mxu0
  %v5632 = vadd.f32 0.0, %v5631
  %v5633 = vpop.f32.mrf.mxu0
  %v5634 = vadd.f32 0.0, %v5633
  %5635 = vdwg.mxu0
  %v5636 = vadd.f32 %v5541, %v5585
  %v5637 = vadd.f32 %v5542, %v5587
  %v5638 = vadd.f32 %v5543, %v5628
  %v5639 = vadd.f32 %v5544, %v5630
  %v5640 = vadd.f32 %v5545, %v5589
  %v5641 = vadd.f32 %v5546, %v5591
  %v5642 = vadd.f32 %v5547, %v5632
  %v5643 = vadd.f32 %v5548, %v5634
  %v5644 = vxor.u32 %v5636, 2147483648
  %v5645 = vxor.u32 %v5640, 2147483648
  %v5646 = vmul.f32 %v5644, 1.442695
  %v5647 = vpow.pop %v5646
  %v5648 = vmul.f32 %v5645, 1.442695
  %v5649 = vpow.pop %v5648
  %v5650 = vadd.f32 %v5647, 1.0
  %v5651 = vadd.f32 %v5649, 1.0
  %v5652 = vrcp.pop %v5650
  %v5653 = vmul.f32 1.0, %v5652
  %v5654 = vrcp.pop %v5651
  %v5655 = vmul.f32 1.0, %v5654
  %v5656 = vxor.u32 %v5637, 2147483648
  %v5657 = vxor.u32 %v5641, 2147483648
  %v5658 = vmul.f32 %v5656, 1.442695
  %v5659 = vpow.pop %v5658
  %v5660 = vmul.f32 %v5657, 1.442695
  %v5661 = vpow.pop %v5660
  %v5662 = vadd.f32 %v5659, 1.0
  %v5663 = vadd.f32 %v5661, 1.0
  %v5664 = vrcp.pop %v5662
  %v5665 = vmul.f32 1.0, %v5664
  %v5666 = vrcp.pop %v5663
  %v5667 = vmul.f32 1.0, %v5666
  %v5668 = vtanh.pop %v5638
  %v5669 = vtanh.pop %v5642
  %v5670 = vxor.u32 %v5639, 2147483648
  %v5671 = vxor.u32 %v5643, 2147483648
  %v5672 = vmul.f32 %v5670, 1.442695
  %v5673 = vpow.pop %v5672
  %v5674 = vmul.f32 %v5671, 1.442695
  %v5675 = vpow.pop %v5674
  %v5676 = vadd.f32 %v5673, 1.0
  %v5677 = vadd.f32 %v5675, 1.0
  %v5678 = vrcp.pop %v5676
  %v5679 = vmul.f32 1.0, %v5678
  %v5680 = vrcp.pop %v5677
  %v5681 = vmul.f32 1.0, %v5680
  %v5682 = vmul.f32 %v5665, %v5527
  %v5683 = vmul.f32 %v5667, %v5528
  %v5684 = vmul.f32 %v5653, %v5668
  %v5685 = vmul.f32 %v5655, %v5669
  %v5686 = vadd.f32 %v5682, %v5684
  %v5687 = vadd.f32 %v5683, %v5685
  %v5688 = vtanh.pop %v5686
  %v5689 = vtanh.pop %v5687
  %v5690 = vmul.f32 %v5679, %v5688
  %v5691 = vmul.f32 %v5681, %v5689
  %v5692 = vsel %vm3005, %v5690, %v5525
  %v5693 = vsel %vm3006, %v5691, %v5526
  %v5694 = vsel %vm3005, %v5686, %v5527
  %v5695 = vsel %vm3006, %v5687, %v5528
  %v5696 = vld [vmem:[%s3022] sm:$0xff]
  %v5697 = vld [vmem:[%s3022 + $0x8] sm:$0xff]
  %v5698 = vld [vmem:[%s3022 + $0x10] sm:$0xff]
  %v5699 = vld [vmem:[%s3022 + $0x18] sm:$0xff]
  %v5700 = vunpack.c.l.bf16 %v5696
  %v5701 = vunpack.c.h.bf16 %v5696
  %v5702 = vunpack.c.l.bf16 %v5697
  %v5703 = vunpack.c.h.bf16 %v5697
  %v5704 = vunpack.c.l.bf16 %v5698
  %v5705 = vunpack.c.h.bf16 %v5698
  %v5706 = vunpack.c.l.bf16 %v5699
  %v5707 = vunpack.c.h.bf16 %v5699
  %v5708 = vadd.f32 %v5700, %v4497
  %v5709 = vadd.f32 %v5701, %v4501
  %v5710 = vadd.f32 %v5702, %v4505
  %v5711 = vadd.f32 %v5703, %v4509
  %v5712 = vadd.f32 %v5704, %v4497
  %v5713 = vadd.f32 %v5705, %v4501
  %v5714 = vadd.f32 %v5706, %v4505
  %v5715 = vadd.f32 %v5707, %v4509
  %v5716 = vpack.c.bf16 %v5693, %v5692
  %5717 = vmatprep.subr.bf16.mxu0 %v4680
  %5718 = vmatpush1.bf16.msra.mxu0 %v4679
  %5719 = vmatprep.subr.bf16.mxu0 %v4676
  %5720 = vmatpush1.bf16.msra.mxu0 %v4675
  %5721 = vmatprep.subr.bf16.mxu0 %v4672
  %5722 = vmatpush1.bf16.msra.mxu0 %v4671
  %5723 = vmatprep.subr.bf16.mxu0 %v4668
  %5724 = vmatpush1.bf16.msra.mxu0 %v4667
  %5725 = vmatprep.subr.bf16.mxu0 %v4664
  %5726 = vmatpush1.bf16.msra.mxu0 %v4663
  %5727 = vmatprep.subr.bf16.mxu0 %v4660
  %5728 = vmatpush1.bf16.msra.mxu0 %v4659
  %5729 = vmatprep.subr.bf16.mxu0 %v4656
  %5730 = vmatpush1.bf16.msra.mxu0 %v4655
  %5731 = vmatprep.subr.bf16.mxu0 %v4652
  %5732 = vmatpush1.bf16.msra.mxu0 %v4651
  %5733 = vmatprep.subr.bf16.mxu0 0
  %5734 = vmatpush2.bf16.msra.mxu0 0
  %5735 = vmatprep.subr.bf16.mxu0 0
  %5736 = vmatpush2.bf16.msra.mxu0 0
  %5737 = vmatprep.subr.bf16.mxu0 0
  %5738 = vmatpush2.bf16.msra.mxu0 0
  %5739 = vmatprep.subr.bf16.mxu0 0
  %5740 = vmatpush2.bf16.msra.mxu0 0
  %5741 = vmatprep.subr.bf16.mxu0 0
  %5742 = vmatpush2.bf16.msra.mxu0 0
  %5743 = vmatprep.subr.bf16.mxu0 0
  %5744 = vmatpush2.bf16.msra.mxu0 0
  %5745 = vmatprep.subr.bf16.mxu0 0
  %5746 = vmatpush2.bf16.msra.mxu0 0
  %5747 = vmatprep.subr.bf16.mxu0 0
  %5748 = vmatpush2.bf16.msra.mxu0 0
  %5749 = vmatprep.mubr.bf16.mxu0 0
  %5750 = vmatmul.mubr.bf16.gmra.mxu0 %v5716
  %v5751 = vpop.f32.mrf.mxu0
  %v5752 = vadd.f32 0.0, %v5751
  %v5753 = vpop.f32.mrf.mxu0
  %v5754 = vadd.f32 0.0, %v5753
  %v5755 = vpop.f32.mrf.mxu0
  %v5756 = vadd.f32 0.0, %v5755
  %v5757 = vpop.f32.mrf.mxu0
  %v5758 = vadd.f32 0.0, %v5757
  %5759 = vdwg.mxu0
  %5760 = vmatprep.subr.bf16.mxu0 %v4682
  %5761 = vmatpush1.bf16.msra.mxu0 %v4681
  %5762 = vmatprep.subr.bf16.mxu0 %v4678
  %5763 = vmatpush1.bf16.msra.mxu0 %v4677
  %5764 = vmatprep.subr.bf16.mxu0 %v4674
  %5765 = vmatpush1.bf16.msra.mxu0 %v4673
  %5766 = vmatprep.subr.bf16.mxu0 %v4670
  %5767 = vmatpush1.bf16.msra.mxu0 %v4669
  %5768 = vmatprep.subr.bf16.mxu0 %v4666
  %5769 = vmatpush1.bf16.msra.mxu0 %v4665
  %5770 = vmatprep.subr.bf16.mxu0 %v4662
  %5771 = vmatpush1.bf16.msra.mxu0 %v4661
  %5772 = vmatprep.subr.bf16.mxu0 %v4658
  %5773 = vmatpush1.bf16.msra.mxu0 %v4657
  %5774 = vmatprep.subr.bf16.mxu0 %v4654
  %5775 = vmatpush1.bf16.msra.mxu0 %v4653
  %5776 = vmatprep.subr.bf16.mxu0 0
  %5777 = vmatpush2.bf16.msra.mxu0 0
  %5778 = vmatprep.subr.bf16.mxu0 0
  %5779 = vmatpush2.bf16.msra.mxu0 0
  %5780 = vmatprep.subr.bf16.mxu0 0
  %5781 = vmatpush2.bf16.msra.mxu0 0
  %5782 = vmatprep.subr.bf16.mxu0 0
  %5783 = vmatpush2.bf16.msra.mxu0 0
  %5784 = vmatprep.subr.bf16.mxu0 0
  %5785 = vmatpush2.bf16.msra.mxu0 0
  %5786 = vmatprep.subr.bf16.mxu0 0
  %5787 = vmatpush2.bf16.msra.mxu0 0
  %5788 = vmatprep.subr.bf16.mxu0 0
  %5789 = vmatpush2.bf16.msra.mxu0 0
  %5790 = vmatprep.subr.bf16.mxu0 0
  %5791 = vmatpush2.bf16.msra.mxu0 0
  %5792 = vmatprep.mubr.bf16.mxu0 0
  %5793 = vmatmul.mubr.bf16.gmra.mxu0 %v5716
  %v5794 = vpop.f32.mrf.mxu0
  %v5795 = vadd.f32 0.0, %v5794
  %v5796 = vpop.f32.mrf.mxu0
  %v5797 = vadd.f32 0.0, %v5796
  %v5798 = vpop.f32.mrf.mxu0
  %v5799 = vadd.f32 0.0, %v5798
  %v5800 = vpop.f32.mrf.mxu0
  %v5801 = vadd.f32 0.0, %v5800
  %5802 = vdwg.mxu0
  %v5803 = vadd.f32 %v5708, %v5752
  %v5804 = vadd.f32 %v5709, %v5754
  %v5805 = vadd.f32 %v5710, %v5795
  %v5806 = vadd.f32 %v5711, %v5797
  %v5807 = vadd.f32 %v5712, %v5756
  %v5808 = vadd.f32 %v5713, %v5758
  %v5809 = vadd.f32 %v5714, %v5799
  %v5810 = vadd.f32 %v5715, %v5801
  %v5811 = vxor.u32 %v5803, 2147483648
  %v5812 = vxor.u32 %v5807, 2147483648
  %v5813 = vmul.f32 %v5811, 1.442695
  %v5814 = vpow.pop %v5813
  %v5815 = vmul.f32 %v5812, 1.442695
  %v5816 = vpow.pop %v5815
  %v5817 = vadd.f32 %v5814, 1.0
  %v5818 = vadd.f32 %v5816, 1.0
  %v5819 = vrcp.pop %v5817
  %v5820 = vmul.f32 1.0, %v5819
  %v5821 = vrcp.pop %v5818
  %v5822 = vmul.f32 1.0, %v5821
  %v5823 = vxor.u32 %v5804, 2147483648
  %v5824 = vxor.u32 %v5808, 2147483648
  %v5825 = vmul.f32 %v5823, 1.442695
  %v5826 = vpow.pop %v5825
  %v5827 = vmul.f32 %v5824, 1.442695
  %v5828 = vpow.pop %v5827
  %v5829 = vadd.f32 %v5826, 1.0
  %v5830 = vadd.f32 %v5828, 1.0
  %v5831 = vrcp.pop %v5829
  %v5832 = vmul.f32 1.0, %v5831
  %v5833 = vrcp.pop %v5830
  %v5834 = vmul.f32 1.0, %v5833
  %v5835 = vtanh.pop %v5805
  %v5836 = vtanh.pop %v5809
  %v5837 = vxor.u32 %v5806, 2147483648
  %v5838 = vxor.u32 %v5810, 2147483648
  %v5839 = vmul.f32 %v5837, 1.442695
  %v5840 = vpow.pop %v5839
  %v5841 = vmul.f32 %v5838, 1.442695
  %v5842 = vpow.pop %v5841
  %v5843 = vadd.f32 %v5840, 1.0
  %v5844 = vadd.f32 %v5842, 1.0
  %v5845 = vrcp.pop %v5843
  %v5846 = vmul.f32 1.0, %v5845
  %v5847 = vrcp.pop %v5844
  %v5848 = vmul.f32 1.0, %v5847
  %v5849 = vmul.f32 %v5832, %v5694
  %v5850 = vmul.f32 %v5834, %v5695
  %v5851 = vmul.f32 %v5820, %v5835
  %v5852 = vmul.f32 %v5822, %v5836
  %v5853 = vadd.f32 %v5849, %v5851
  %v5854 = vadd.f32 %v5850, %v5852
  %v5855 = vtanh.pop %v5853
  %v5856 = vtanh.pop %v5854
  %v5857 = vmul.f32 %v5846, %v5855
  %v5858 = vmul.f32 %v5848, %v5856
  %v5859 = vsel %vm3381, %v5857, %v5692
  %v5860 = vsel %vm3382, %v5858, %v5693
  %v5861 = vsel %vm3381, %v5853, %v5694
  %v5862 = vsel %vm3382, %v5854, %v5695
  %v5863 = vld [vmem:[%s3398] sm:$0xff]
  %v5864 = vld [vmem:[%s3398 + $0x8] sm:$0xff]
  %v5865 = vld [vmem:[%s3398 + $0x10] sm:$0xff]
  %v5866 = vld [vmem:[%s3398 + $0x18] sm:$0xff]
  %v5867 = vunpack.c.l.bf16 %v5863
  %v5868 = vunpack.c.h.bf16 %v5863
  %v5869 = vunpack.c.l.bf16 %v5864
  %v5870 = vunpack.c.l.bf16 %v5865
  %v5871 = vunpack.c.h.bf16 %v5865
  %v5872 = vunpack.c.l.bf16 %v5866
  %v5873 = vadd.f32 %v5867, %v4497
  %v5874 = vadd.f32 %v5868, %v4501
  %v5875 = vadd.f32 %v5869, %v4505
  %v5876 = vadd.f32 %v5870, %v4497
  %v5877 = vadd.f32 %v5871, %v4501
  %v5878 = vadd.f32 %v5872, %v4505
  %v5879 = vpack.c.bf16 %v5860, %v5859
  %5880 = vmatprep.subr.bf16.mxu0 %v4680
  %5881 = vmatpush1.bf16.msra.mxu0 %v4679
  %5882 = vmatprep.subr.bf16.mxu0 %v4676
  %5883 = vmatpush1.bf16.msra.mxu0 %v4675
  %5884 = vmatprep.subr.bf16.mxu0 %v4672
  %5885 = vmatpush1.bf16.msra.mxu0 %v4671
  %5886 = vmatprep.subr.bf16.mxu0 %v4668
  %5887 = vmatpush1.bf16.msra.mxu0 %v4667
  %5888 = vmatprep.subr.bf16.mxu0 %v4664
  %5889 = vmatpush1.bf16.msra.mxu0 %v4663
  %5890 = vmatprep.subr.bf16.mxu0 %v4660
  %5891 = vmatpush1.bf16.msra.mxu0 %v4659
  %5892 = vmatprep.subr.bf16.mxu0 %v4656
  %5893 = vmatpush1.bf16.msra.mxu0 %v4655
  %5894 = vmatprep.subr.bf16.mxu0 %v4652
  %5895 = vmatpush1.bf16.msra.mxu0 %v4651
  %5896 = vmatprep.subr.bf16.mxu0 0
  %5897 = vmatpush2.bf16.msra.mxu0 0
  %5898 = vmatprep.subr.bf16.mxu0 0
  %5899 = vmatpush2.bf16.msra.mxu0 0
  %5900 = vmatprep.subr.bf16.mxu0 0
  %5901 = vmatpush2.bf16.msra.mxu0 0
  %5902 = vmatprep.subr.bf16.mxu0 0
  %5903 = vmatpush2.bf16.msra.mxu0 0
  %5904 = vmatprep.subr.bf16.mxu0 0
  %5905 = vmatpush2.bf16.msra.mxu0 0
  %5906 = vmatprep.subr.bf16.mxu0 0
  %5907 = vmatpush2.bf16.msra.mxu0 0
  %5908 = vmatprep.subr.bf16.mxu0 0
  %5909 = vmatpush2.bf16.msra.mxu0 0
  %5910 = vmatprep.subr.bf16.mxu0 0
  %5911 = vmatpush2.bf16.msra.mxu0 0
  %5912 = vmatprep.mubr.bf16.mxu0 0
  %5913 = vmatmul.mubr.bf16.gmra.mxu0 %v5879
  %v5914 = vpop.f32.mrf.mxu0
  %v5915 = vadd.f32 0.0, %v5914
  %v5916 = vpop.f32.mrf.mxu0
  %v5917 = vadd.f32 0.0, %v5916
  %v5918 = vpop.f32.mrf.mxu0
  %v5919 = vadd.f32 0.0, %v5918
  %v5920 = vpop.f32.mrf.mxu0
  %v5921 = vadd.f32 0.0, %v5920
  %5922 = vdwg.mxu0
  %5923 = vmatprep.subr.bf16.mxu0 %v4682
  %5924 = vmatpush1.bf16.msra.mxu0 %v4681
  %5925 = vmatprep.subr.bf16.mxu0 %v4678
  %5926 = vmatpush1.bf16.msra.mxu0 %v4677
  %5927 = vmatprep.subr.bf16.mxu0 %v4674
  %5928 = vmatpush1.bf16.msra.mxu0 %v4673
  %5929 = vmatprep.subr.bf16.mxu0 %v4670
  %5930 = vmatpush1.bf16.msra.mxu0 %v4669
  %5931 = vmatprep.subr.bf16.mxu0 %v4666
  %5932 = vmatpush1.bf16.msra.mxu0 %v4665
  %5933 = vmatprep.subr.bf16.mxu0 %v4662
  %5934 = vmatpush1.bf16.msra.mxu0 %v4661
  %5935 = vmatprep.subr.bf16.mxu0 %v4658
  %5936 = vmatpush1.bf16.msra.mxu0 %v4657
  %5937 = vmatprep.subr.bf16.mxu0 %v4654
  %5938 = vmatpush1.bf16.msra.mxu0 %v4653
  %5939 = vmatprep.subr.bf16.mxu0 0
  %5940 = vmatpush2.bf16.msra.mxu0 0
  %5941 = vmatprep.subr.bf16.mxu0 0
  %5942 = vmatpush2.bf16.msra.mxu0 0
  %5943 = vmatprep.subr.bf16.mxu0 0
  %5944 = vmatpush2.bf16.msra.mxu0 0
  %5945 = vmatprep.subr.bf16.mxu0 0
  %5946 = vmatpush2.bf16.msra.mxu0 0
  %5947 = vmatprep.subr.bf16.mxu0 0
  %5948 = vmatpush2.bf16.msra.mxu0 0
  %5949 = vmatprep.subr.bf16.mxu0 0
  %5950 = vmatpush2.bf16.msra.mxu0 0
  %5951 = vmatprep.subr.bf16.mxu0 0
  %5952 = vmatpush2.bf16.msra.mxu0 0
  %5953 = vmatprep.subr.bf16.mxu0 0
  %5954 = vmatpush2.bf16.msra.mxu0 0
  %5955 = vmatprep.mubr.bf16.mxu0 0
  %5956 = vmatmul.mubr.bf16.gmra.mxu0 %v5879
  %v5957 = vpop.f32.mrf.mxu0
  %v5958 = vadd.f32 0.0, %v5957
  %v5959 = vpop.f32.mrf.mxu0
  %v5960 = vpop.f32.mrf.mxu0
  %v5961 = vadd.f32 0.0, %v5960
  %v5962 = vpop.f32.mrf.mxu0
  %5963 = vdwg.mxu0
  %v5964 = vadd.f32 %v5873, %v5915
  %v5965 = vadd.f32 %v5874, %v5917
  %v5966 = vadd.f32 %v5875, %v5958
  %v5967 = vadd.f32 %v5876, %v5919
  %v5968 = vadd.f32 %v5877, %v5921
  %v5969 = vadd.f32 %v5878, %v5961
  %v5970 = vxor.u32 %v5964, 2147483648
  %v5971 = vxor.u32 %v5967, 2147483648
  %v5972 = vmul.f32 %v5970, 1.442695
  %v5973 = vpow.pop %v5972
  %v5974 = vmul.f32 %v5971, 1.442695
  %v5975 = vpow.pop %v5974
  %v5976 = vadd.f32 %v5973, 1.0
  %v5977 = vadd.f32 %v5975, 1.0
  %v5978 = vrcp.pop %v5976
  %v5979 = vmul.f32 1.0, %v5978
  %v5980 = vrcp.pop %v5977
  %v5981 = vmul.f32 1.0, %v5980
  %v5982 = vxor.u32 %v5965, 2147483648
  %v5983 = vxor.u32 %v5968, 2147483648
  %v5984 = vmul.f32 %v5982, 1.442695
  %v5985 = vpow.pop %v5984
  %v5986 = vmul.f32 %v5983, 1.442695
  %v5987 = vpow.pop %v5986
  %v5988 = vadd.f32 %v5985, 1.0
  %v5989 = vadd.f32 %v5987, 1.0
  %v5990 = vrcp.pop %v5988
  %v5991 = vmul.f32 1.0, %v5990
  %v5992 = vrcp.pop %v5989
  %v5993 = vmul.f32 1.0, %v5992
  %v5994 = vtanh.pop %v5966
  %v5995 = vtanh.pop %v5969
  %v5996 = vmul.f32 %v5991, %v5861
  %v5997 = vmul.f32 %v5993, %v5862
  %v5998 = vmul.f32 %v5979, %v5994
  %v5999 = vmul.f32 %v5981, %v5995
  %v6000 = vadd.f32 %v5996, %v5998
  %v6001 = vadd.f32 %v5997, %v5999
  %v6002 = vsel %vm3757, %v6000, %v5861
  %v6003 = vsel %vm3758, %v6001, %v5862
  %v6004 = vpack.c.bf16 %v6002, %v6002
  %v6005 = vpack.c.bf16 %v6003, %v6003
  %v6006 = vld [vmem:[%s4] sm:$0xf]
  %v6007 = vld [vmem:[%s4 + $0x4] sm:$0xf]
  %v6008 = vld [vmem:[%s4 + $0x8] sm:$0xf]
  %v6009 = vld [vmem:[%s4 + $0xc] sm:$0xf]
  %v6010 = vld [vmem:[%s4 + $0x10] sm:$0xf]
  %v6011 = vld [vmem:[%s4 + $0x14] sm:$0xf]
  %v6012 = vld [vmem:[%s4 + $0x18] sm:$0xf]
  %v6013 = vld [vmem:[%s4 + $0x1c] sm:$0xf]
  %v6014 = vld [vmem:[%s4 + $0x20] sm:$0xf]
  %v6015 = vld [vmem:[%s4 + $0x24] sm:$0xf]
  %v6016 = vld [vmem:[%s4 + $0x28] sm:$0xf]
  %v6017 = vld [vmem:[%s4 + $0x2c] sm:$0xf]
  %v6018 = vld [vmem:[%s4 + $0x30] sm:$0xf]
  %v6019 = vld [vmem:[%s4 + $0x34] sm:$0xf]
  %v6020 = vld [vmem:[%s4 + $0x38] sm:$0xf]
  %v6021 = vld [vmem:[%s4 + $0x3c] sm:$0xf]
  %v6022 = vld [vmem:[%s5] sm:$0xf]
  %v6023 = vld [vmem:[%s5 + $0x4] sm:$0xf]
  %v6024 = vld [vmem:[%s5 + $0x8] sm:$0xf]
  %v6025 = vld [vmem:[%s5 + $0xc] sm:$0xf]
  %v6026 = vld [vmem:[%s5 + $0x10] sm:$0xf]
  %v6027 = vld [vmem:[%s5 + $0x14] sm:$0xf]
  %v6028 = vld [vmem:[%s5 + $0x18] sm:$0xf]
  %v6029 = vld [vmem:[%s5 + $0x1c] sm:$0xf]
  %v6030 = vld [vmem:[%s5 + $0x20] sm:$0xf]
  %v6031 = vld [vmem:[%s5 + $0x24] sm:$0xf]
  %v6032 = vld [vmem:[%s5 + $0x28] sm:$0xf]
  %v6033 = vld [vmem:[%s5 + $0x2c] sm:$0xf]
  %v6034 = vld [vmem:[%s5 + $0x30] sm:$0xf]
  %v6035 = vld [vmem:[%s5 + $0x34] sm:$0xf]
  %v6036 = vld [vmem:[%s5 + $0x38] sm:$0xf]
  %v6037 = vld [vmem:[%s5 + $0x3c] sm:$0xf]
  %v6054 = vunpack.c.l.b16 %v6022
  %v6055 = vunpack.c.l.b16 %v6023
  %v6056 = vunpack.c.l.b16 %v6024
  %v6057 = vunpack.c.l.b16 %v6025
  %v6058 = vunpack.c.l.b16 %v6026
  %v6059 = vunpack.c.l.b16 %v6027
  %v6060 = vunpack.c.l.b16 %v6028
  %v6061 = vunpack.c.l.b16 %v6029
  %v6062 = vunpack.c.l.b16 %v6030
  %v6063 = vunpack.c.l.b16 %v6031
  %v6064 = vunpack.c.l.b16 %v6032
  %v6065 = vunpack.c.l.b16 %v6033
  %v6066 = vunpack.c.l.b16 %v6034
  %v6067 = vunpack.c.l.b16 %v6035
  %v6068 = vunpack.c.l.b16 %v6036
  %v6069 = vunpack.c.l.b16 %v6037
  %v6070 = vpack.c.b16 %v6055, %v6054
  %v6071 = vpack.c.b16 %v6057, %v6056
  %v6072 = vpack.c.b16 %v6059, %v6058
  %v6073 = vpack.c.b16 %v6061, %v6060
  %v6074 = vpack.c.b16 %v6063, %v6062
  %v6075 = vpack.c.b16 %v6065, %v6064
  %v6076 = vpack.c.b16 %v6067, %v6066
  %v6077 = vpack.c.b16 %v6069, %v6068
  %6086 = vmatprep.subr.bf16.mxu0 0
  %6087 = vmatpush1.bf16.msra.mxu0 %v6077
  %6088 = vmatprep.subr.bf16.mxu0 0
  %6089 = vmatpush1.bf16.msra.mxu0 %v6076
  %6090 = vmatprep.subr.bf16.mxu0 0
  %6091 = vmatpush1.bf16.msra.mxu0 %v6075
  %6092 = vmatprep.subr.bf16.mxu0 0
  %6093 = vmatpush1.bf16.msra.mxu0 %v6074
  %6094 = vmatprep.subr.bf16.mxu0 0
  %6095 = vmatpush1.bf16.msra.mxu0 %v6073
  %6096 = vmatprep.subr.bf16.mxu0 0
  %6097 = vmatpush1.bf16.msra.mxu0 %v6072
  %6098 = vmatprep.subr.bf16.mxu0 0
  %6099 = vmatpush1.bf16.msra.mxu0 %v6071
  %6100 = vmatprep.subr.bf16.mxu0 0
  %6101 = vmatpush1.bf16.msra.mxu0 %v6070
  %6102 = vmatprep.subr.bf16.mxu0 0
  %6103 = vmatpush2.bf16.msra.mxu0 0
  %6104 = vmatprep.subr.bf16.mxu0 0
  %6105 = vmatpush2.bf16.msra.mxu0 0
  %6106 = vmatprep.subr.bf16.mxu0 0
  %6107 = vmatpush2.bf16.msra.mxu0 0
  %6108 = vmatprep.subr.bf16.mxu0 0
  %6109 = vmatpush2.bf16.msra.mxu0 0
  %6110 = vmatprep.subr.bf16.mxu0 0
  %6111 = vmatpush2.bf16.msra.mxu0 0
  %6112 = vmatprep.subr.bf16.mxu0 0
  %6113 = vmatpush2.bf16.msra.mxu0 0
  %6114 = vmatprep.subr.bf16.mxu0 0
  %6115 = vmatpush2.bf16.msra.mxu0 0
  %6116 = vmatprep.subr.bf16.mxu0 0
  %6117 = vmatpush2.bf16.msra.mxu0 0
  %6118 = vmatprep.mubr.bf16.mxu0 0
  %6119 = vmatmul.mubr.bf16.gmra.mxu0 %v6005
  %v6120 = vpop.f32.mrf.mxu0
  %v6121 = vadd.f32 0.0, %v6120
  %v6122 = vpop.f32.mrf.mxu0
  %v6123 = vpop.f32.mrf.mxu0
  %v6124 = vpop.f32.mrf.mxu0
  %6125 = vdwg.mxu0
  %v6142 = vunpack.c.l.b16 %v6006
  %v6143 = vunpack.c.l.b16 %v6007
  %v6144 = vunpack.c.l.b16 %v6008
  %v6145 = vunpack.c.l.b16 %v6009
  %v6146 = vunpack.c.l.b16 %v6010
  %v6147 = vunpack.c.l.b16 %v6011
  %v6148 = vunpack.c.l.b16 %v6012
  %v6149 = vunpack.c.l.b16 %v6013
  %v6150 = vunpack.c.l.b16 %v6014
  %v6151 = vunpack.c.l.b16 %v6015
  %v6152 = vunpack.c.l.b16 %v6016
  %v6153 = vunpack.c.l.b16 %v6017
  %v6154 = vunpack.c.l.b16 %v6018
  %v6155 = vunpack.c.l.b16 %v6019
  %v6156 = vunpack.c.l.b16 %v6020
  %v6157 = vunpack.c.l.b16 %v6021
  %v6158 = vpack.c.b16 %v6143, %v6142
  %v6159 = vpack.c.b16 %v6145, %v6144
  %v6160 = vpack.c.b16 %v6147, %v6146
  %v6161 = vpack.c.b16 %v6149, %v6148
  %v6162 = vpack.c.b16 %v6151, %v6150
  %v6163 = vpack.c.b16 %v6153, %v6152
  %v6164 = vpack.c.b16 %v6155, %v6154
  %v6165 = vpack.c.b16 %v6157, %v6156
  %6174 = vmatprep.subr.bf16.mxu0 0
  %6175 = vmatpush1.bf16.msra.mxu0 %v6165
  %6176 = vmatprep.subr.bf16.mxu0 0
  %6177 = vmatpush1.bf16.msra.mxu0 %v6164
  %6178 = vmatprep.subr.bf16.mxu0 0
  %6179 = vmatpush1.bf16.msra.mxu0 %v6163
  %6180 = vmatprep.subr.bf16.mxu0 0
  %6181 = vmatpush1.bf16.msra.mxu0 %v6162
  %6182 = vmatprep.subr.bf16.mxu0 0
  %6183 = vmatpush1.bf16.msra.mxu0 %v6161
  %6184 = vmatprep.subr.bf16.mxu0 0
  %6185 = vmatpush1.bf16.msra.mxu0 %v6160
  %6186 = vmatprep.subr.bf16.mxu0 0
  %6187 = vmatpush1.bf16.msra.mxu0 %v6159
  %6188 = vmatprep.subr.bf16.mxu0 0
  %6189 = vmatpush1.bf16.msra.mxu0 %v6158
  %6190 = vmatprep.subr.bf16.mxu0 0
  %6191 = vmatpush2.bf16.msra.mxu0 0
  %6192 = vmatprep.subr.bf16.mxu0 0
  %6193 = vmatpush2.bf16.msra.mxu0 0
  %6194 = vmatprep.subr.bf16.mxu0 0
  %6195 = vmatpush2.bf16.msra.mxu0 0
  %6196 = vmatprep.subr.bf16.mxu0 0
  %6197 = vmatpush2.bf16.msra.mxu0 0
  %6198 = vmatprep.subr.bf16.mxu0 0
  %6199 = vmatpush2.bf16.msra.mxu0 0
  %6200 = vmatprep.subr.bf16.mxu0 0
  %6201 = vmatpush2.bf16.msra.mxu0 0
  %6202 = vmatprep.subr.bf16.mxu0 0
  %6203 = vmatpush2.bf16.msra.mxu0 0
  %6204 = vmatprep.subr.bf16.mxu0 0
  %6205 = vmatpush2.bf16.msra.mxu0 0
  %6206 = vmatprep.mubr.bf16.mxu0 0
  %6207 = vmatmul.mubr.bf16.gmra.mxu0 %v6004
  %v6208 = vpop.f32.mrf.mxu0
  %v6209 = vadd.f32 %v6121, %v6208
  %v6210 = vpop.f32.mrf.mxu0
  %v6211 = vpop.f32.mrf.mxu0
  %v6212 = vpop.f32.mrf.mxu0
  %6213 = vdwg.mxu0
  %v6214 = vld [vmem:[%s6] sm:$0x1]
  %v6216 = vlaneseq
  %v6217 = vshrl.u32 %v6216, 7
  %v6218 = vsub.s32 0, %v6217
  %v6219 = vrot.slane %v6214, %v6218
  %v6221 = vadd.f32 %v6209, %v6219
  %v6222 = vmax.f32 %v6221, 0.0
  %v6223 = vpack.c.bf16 %v6222, %v6222
  %v6224 = vld [vmem:[%s7] sm:$0xf]
  %v6225 = vld [vmem:[%s7 + $0x4] sm:$0xf]
  %v6226 = vld [vmem:[%s7 + $0x8] sm:$0xf]
  %v6227 = vld [vmem:[%s7 + $0xc] sm:$0xf]
  %v6228 = vld [vmem:[%s7 + $0x10] sm:$0xf]
  %v6229 = vld [vmem:[%s7 + $0x14] sm:$0xf]
  %v6230 = vld [vmem:[%s7 + $0x18] sm:$0xf]
  %v6231 = vld [vmem:[%s7 + $0x1c] sm:$0xf]
  %v6232 = vld [vmem:[%s7 + $0x20] sm:$0xf]
  %v6233 = vld [vmem:[%s7 + $0x24] sm:$0xf]
  %v6234 = vld [vmem:[%s7 + $0x28] sm:$0xf]
  %v6235 = vld [vmem:[%s7 + $0x2c] sm:$0xf]
  %v6236 = vld [vmem:[%s7 + $0x30] sm:$0xf]
  %v6237 = vld [vmem:[%s7 + $0x34] sm:$0xf]
  %v6238 = vld [vmem:[%s7 + $0x38] sm:$0xf]
  %v6239 = vld [vmem:[%s7 + $0x3c] sm:$0xf]
  %v6240 = vld [vmem:[%s8] sm:$0x1]
  %v6242 = vlaneseq
  %v6243 = vshrl.u32 %v6242, 7
  %v6244 = vsub.s32 0, %v6243
  %v6245 = vrot.slane %v6240, %v6244
  %v6263 = vunpack.c.l.b16 %v6224
  %v6264 = vunpack.c.l.b16 %v6225
  %v6265 = vunpack.c.l.b16 %v6226
  %v6266 = vunpack.c.l.b16 %v6227
  %v6267 = vunpack.c.l.b16 %v6228
  %v6268 = vunpack.c.l.b16 %v6229
  %v6269 = vunpack.c.l.b16 %v6230
  %v6270 = vunpack.c.l.b16 %v6231
  %v6271 = vunpack.c.l.b16 %v6232
  %v6272 = vunpack.c.l.b16 %v6233
  %v6273 = vunpack.c.l.b16 %v6234
  %v6274 = vunpack.c.l.b16 %v6235
  %v6275 = vunpack.c.l.b16 %v6236
  %v6276 = vunpack.c.l.b16 %v6237
  %v6277 = vunpack.c.l.b16 %v6238
  %v6278 = vunpack.c.l.b16 %v6239
  %v6279 = vpack.c.b16 %v6264, %v6263
  %v6280 = vpack.c.b16 %v6266, %v6265
  %v6281 = vpack.c.b16 %v6268, %v6267
  %v6282 = vpack.c.b16 %v6270, %v6269
  %v6283 = vpack.c.b16 %v6272, %v6271
  %v6284 = vpack.c.b16 %v6274, %v6273
  %v6285 = vpack.c.b16 %v6276, %v6275
  %v6286 = vpack.c.b16 %v6278, %v6277
  %6295 = vmatprep.subr.bf16.mxu0 0
  %6296 = vmatpush1.bf16.msra.mxu0 %v6286
  %6297 = vmatprep.subr.bf16.mxu0 0
  %6298 = vmatpush1.bf16.msra.mxu0 %v6285
  %6299 = vmatprep.subr.bf16.mxu0 0
  %6300 = vmatpush1.bf16.msra.mxu0 %v6284
  %6301 = vmatprep.subr.bf16.mxu0 0
  %6302 = vmatpush1.bf16.msra.mxu0 %v6283
  %6303 = vmatprep.subr.bf16.mxu0 0
  %6304 = vmatpush1.bf16.msra.mxu0 %v6282
  %6305 = vmatprep.subr.bf16.mxu0 0
  %6306 = vmatpush1.bf16.msra.mxu0 %v6281
  %6307 = vmatprep.subr.bf16.mxu0 0
  %6308 = vmatpush1.bf16.msra.mxu0 %v6280
  %6309 = vmatprep.subr.bf16.mxu0 0
  %6310 = vmatpush1.bf16.msra.mxu0 %v6279
  %6311 = vmatprep.subr.bf16.mxu0 0
  %6312 = vmatpush2.bf16.msra.mxu0 0
  %6313 = vmatprep.subr.bf16.mxu0 0
  %6314 = vmatpush2.bf16.msra.mxu0 0
  %6315 = vmatprep.subr.bf16.mxu0 0
  %6316 = vmatpush2.bf16.msra.mxu0 0
  %6317 = vmatprep.subr.bf16.mxu0 0
  %6318 = vmatpush2.bf16.msra.mxu0 0
  %6319 = vmatprep.subr.bf16.mxu0 0
  %6320 = vmatpush2.bf16.msra.mxu0 0
  %6321 = vmatprep.subr.bf16.mxu0 0
  %6322 = vmatpush2.bf16.msra.mxu0 0
  %6323 = vmatprep.subr.bf16.mxu0 0
  %6324 = vmatpush2.bf16.msra.mxu0 0
  %6325 = vmatprep.subr.bf16.mxu0 0
  %6326 = vmatpush2.bf16.msra.mxu0 0
  %6327 = vmatprep.mubr.bf16.mxu0 0
  %6328 = vmatmul.mubr.bf16.gmra.mxu0 %v6223
  %v6329 = vpop.f32.mrf.mxu0
  %v6330 = vadd.f32 %v6245, %v6329
  %v6331 = vpop.f32.mrf.mxu0
  %v6332 = vpop.f32.mrf.mxu0
  %v6333 = vpop.f32.mrf.mxu0
  %6334 = vdwg.mxu0
  %6335 = vst [vmem:[%s9] sm:$0xff] %v6330
  // Predicated region
  $region38: #{uni_lstm_forward_pallas.1} parent=0 // pred_check
    _
  $region39: #{uni_lstm_forward_pallas.1} parent=0 // pred_check_branch
    %6337 = sbr.rel (0) target = $region41
  $region40: #{uni_lstm_forward_pallas.1} parent=0 // pred_region
    _
  $region41: #{uni_lstm_forward_pallas.1} parent=0 // pred_fallthru
    _
  // Predicated region
  $region42: #{uni_lstm_forward_pallas.1} parent=0 // pred_check
    _
  $region43: #{uni_lstm_forward_pallas.1} parent=0 // pred_check_branch
    %6339 = sbr.rel (0) target = $region45
  $region44: #{uni_lstm_forward_pallas.1} parent=0 // pred_region
    _
  $region45: #{uni_lstm_forward_pallas.1} parent=0 // pred_fallthru
    _

</llo_original>
